<compile_context>
chip_gen: v7x
topology: tpu7x:2x2x1
jax: 0.10.0
libtpu: 0.0.40
codegen_flags: <defaults>
</compile_context>

<pallas_src>
import numpy as np
import jax
import jax.numpy as jnp
from jax import lax
from jax.experimental import pallas as pl
from jax.experimental.pallas import tpu as pltpu

TB = 128   # batch tile = lane width per grid step
JP = 16    # conv1 pooled width padded 12 -> 16 (one packed bf16 sublane tile)


# ------------------------------ fused kernel ------------------------------

def _fused_net_kernel(xp_ref, w1_ref, m2_ref, b2c_ref, fc1w_ref, fc1b_ref,
                      fc2w_ref, fc2b_ref, out_ref, p1_ref):
    # xp_ref : [2, 2, 14, 14, TB] f32   xp[rh,rw,u,v,b] = x[b, 2u+rh, 2v+rw]
    # w1_ref : [10, 26]           f32   SMEM: 25 conv1 taps + bias per channel
    # m2_ref : [160, 800]         bf16  Toeplitz conv2 (row = pw*80+j2*20+co2,
    #                                   col = ci*80 + kh*16 + wv)
    # p1_ref : [10, 12, 16, TB]   bf16  scratch: pooled+relu conv1 output

    # ---- conv1 (5x5, 1->10) + maxpool(2x2) + relu, batch on lanes (VPU) ----
    def conv1_channel(co, carry):
        pooled = None
        for dh in range(2):                  # output-row parity (pool pair)
            for dw in range(2):              # output-col parity (pool pair)
                acc = None
                for kh in range(5):
                    for kw in range(5):
                        ah = dh + kh
                        aw = dw + kw
                        s = xp_ref[ah % 2, aw % 2,
                                   ah // 2: ah // 2 + 12,
                                   aw // 2: aw // 2 + 12, :]     # [12,12,TB]
                        term = s * w1_ref[co, kh * 5 + kw]
                        acc = term if acc is None else acc + term
                # fold the 2x2 pool incrementally -> only 2 big values live
                pooled = acc if pooled is None else jnp.maximum(pooled, acc)
        act = jnp.maximum(pooled + w1_ref[co, 25], 0.0)          # bias + relu
        pad = jnp.zeros((12, JP - 12, TB), jnp.float32)          # zero K-pad
        p1_ref[co] = jnp.concatenate([act, pad], axis=1).astype(p1_ref.dtype)
        return carry

    lax.fori_loop(0, 10, conv1_channel, 0)

    # ---- conv2 (5x5,10->20) as ONE Toeplitz MXU matmul + maxpool(2x2)+relu ----
    # TODO(synk): Dropout2d / F.dropout are identity here (inference mode).
    m2 = m2_ref[...]                                              # [160, 800]
    rhs = jnp.concatenate(
        [p1_ref[:, oh2:oh2 + 5, :, :].reshape(800, TB) for oh2 in range(8)],
        axis=1)                                                   # [800, 8*TB] bf16
    o = jnp.dot(m2, rhs, preferred_element_type=jnp.float32)      # [160, 8*TB]
    pooled_w = jnp.maximum(o[:80, :], o[80:, :])                  # pool over ow parity
    feat = jnp.concatenate(
        [jnp.maximum(pooled_w[:, (2 * r) * TB:(2 * r + 1) * TB],
                     pooled_w[:, (2 * r + 1) * TB:(2 * r + 2) * TB])
         for r in range(4)], axis=0)                              # [320, TB]
    feat = jnp.maximum(feat + b2c_ref[...], 0.0)                  # bias + relu

    # ---- fc1 + relu, fc2, log_softmax (features on sublanes, batch on lanes) ----
    h1 = jnp.dot(fc1w_ref[...], feat.astype(jnp.bfloat16),
                 preferred_element_type=jnp.float32) + fc1b_ref[...]
    h1 = jnp.maximum(h1, 0.0)                                     # [50, TB]
    logits = jnp.dot(fc2w_ref[...], h1.astype(jnp.bfloat16),
                     preferred_element_type=jnp.float32) + fc2b_ref[...]  # [10, TB]
    m = jnp.max(logits, axis=0, keepdims=True)
    z = logits - m
    lse = jnp.log(jnp.sum(jnp.exp(z), axis=0, keepdims=True))
    out_ref[...] = (z - lse).astype(out_ref.dtype)


# --------------------------- weight pre-packing ----------------------------

def _build_conv2_matrix(conv2_w):
    """conv2_w [co2=20, ci=10, kh=5, kw=5] -> Toeplitz matrix [160, 800].

    Row = pw*80 + j2*20 + co2 (conv2 output col ow2 = 2*j2 + pw).
    Col = ci*80 + kh*16 + wv  (wv = p1 column, 0..11; 12..15 are zero pad).
    """
    w2 = np.asarray(conv2_w, np.float32)
    m = np.zeros((160, 800), np.float32)
    for pw in range(2):
        for j2 in range(4):
            ow = 2 * j2 + pw
            for co in range(20):
                row = pw * 80 + j2 * 20 + co
                for ci in range(10):
                    for kh in range(5):
                        for kw in range(5):
                            m[row, ci * 80 + kh * 16 + ow + kw] = w2[co, ci, kh, kw]
    return jnp.asarray(m)


def pack_params(params):
    """PyTorch-layout params -> kernel layout (SMEM taps / Toeplitz / permuted)."""
    w1 = jnp.concatenate(
        [params["conv1_w"][:, 0].reshape(10, 25),
         params["conv1_b"].reshape(10, 1)], axis=1).astype(jnp.float32)   # [10, 26]
    # fold PyTorch's NCHW view(-1, 320) into fc1 weight column order (r, j2, co2):
    fc1w = jnp.transpose(params["fc1_w"].reshape(50, 20, 4, 4),
                         (0, 2, 3, 1)).reshape(50, 320)
    return {
        "w1s": w1,
        "m2": _build_conv2_matrix(params["conv2_w"]).astype(jnp.bfloat16),   # [160,800]
        "b2c": jnp.tile(params["conv2_b"], 16).reshape(320, 1).astype(jnp.float32),
        "fc1w": fc1w.astype(jnp.bfloat16),                                   # [50, 320]
        "fc1b": params["fc1_b"].reshape(50, 1).astype(jnp.float32),
        "fc2w": params["fc2_w"].astype(jnp.bfloat16),                        # [10, 50]
        "fc2b": params["fc2_b"].reshape(10, 1).astype(jnp.float32),
    }


# ------------------------------ forward pass -------------------------------

def net_forward(packed, x_nchw):
    B = x_nchw.shape[0]
    x = x_nchw.reshape(B, 28, 28).astype(jnp.float32)             # Cin = 1
    Bp = ((B + TB - 1) // TB) * TB
    if Bp != B:
        x = jnp.concatenate([x, jnp.zeros((Bp - B, 28, 28), x.dtype)], axis=0)

    # Polyphase (stride-2) split in H and W, batch-minor: xp[rh,rw,u,v,b].
    # Same bytes/image as the raw input (no replication).
    xp = jnp.transpose(x.reshape(Bp, 14, 2, 14, 2), (2, 4, 1, 3, 0))   # [2,2,14,14,Bp]

    grid = (Bp // TB,)

    def full(shape):
        return pl.BlockSpec(shape, lambda b, _n=len(shape): (0,) * _n)

    in_specs = [
        pl.BlockSpec((2, 2, 14, 14, TB), lambda b: (0, 0, 0, 0, b)),
        pl.BlockSpec(memory_space=pltpu.MemorySpace.SMEM),        # conv1 taps+bias
        full((160, 800)), full((320, 1)),
        full((50, 320)), full((50, 1)),
        full((10, 50)), full((10, 1)),
    ]
    out_specs = pl.BlockSpec((10, TB), lambda b: (0, b))

    flops_per_img = 2 * (24 * 24 * 25 * 10 + 160 * 800 * 8 + 320 * 50 + 50 * 10)
    cost = pl.CostEstimate(
        flops=int(Bp * flops_per_img),
        transcendentals=int(Bp * 11),
        bytes_accessed=int(xp.size * 4 + Bp * 40 + 160 * 800 * 2 +
                           50 * 320 * 2 + 10 * 26 * 4 + 500 * 4),
    )

    out = pl.pallas_call(
        _fused_net_kernel,
        out_shape=jax.ShapeDtypeStruct((10, Bp), jnp.float32),
        grid=grid,
        in_specs=in_specs,
        out_specs=out_specs,
        scratch_shapes=[pltpu.VMEM((10, 12, JP, TB), jnp.bfloat16)],
        compiler_params=pltpu.CompilerParams(dimension_semantics=("parallel",)),
        cost_estimate=cost,
    )(xp, packed["w1s"], packed["m2"], packed["b2c"],
      packed["fc1w"], packed["fc1b"], packed["fc2w"], packed["fc2b"])
    return jnp.transpose(out[:, :B])                              # [B, 10]


# --------------------------- reference & params ----------------------------

def init_params(key):
    ks = jax.random.split(key, 8)

    def u(k, shape, fan_in):
        bound = 1.0 / jnp.sqrt(jnp.float32(fan_in))
        return jax.random.uniform(k, shape, jnp.float32, -bound, bound)

    return {
        "conv1_w": u(ks[0], (10, 1, 5, 5), 25),
        "conv1_b": u(ks[1], (10,), 25),
        "conv2_w": u(ks[2], (20, 10, 5, 5), 250),
        "conv2_b": u(ks[3], (20,), 250),
        "fc1_w": u(ks[4], (50, 320), 320),
        "fc1_b": u(ks[5], (50,), 320),
        "fc2_w": u(ks[6], (10, 50), 50),
        "fc2_b": u(ks[7], (10,), 50),
    }


def reference_forward(params, x):
    """Pure-JAX reference matching the PyTorch Net (inference mode)."""
    dn = ("NCHW", "OIHW", "NCHW")
    y = lax.conv_general_dilated(x, params["conv1_w"], (1, 1), "VALID",
                                 dimension_numbers=dn)
    y = y + params["conv1_b"].reshape(1, -1, 1, 1)
    y = lax.reduce_window(y, -jnp.inf, lax.max, (1, 1, 2, 2), (1, 1, 2, 2), "VALID")
    y = jnp.maximum(y, 0.0)
    y = lax.conv_general_dilated(y, params["conv2_w"], (1, 1), "VALID",
                                 dimension_numbers=dn)
    y = y + params["conv2_b"].reshape(1, -1, 1, 1)
    y = lax.reduce_window(y, -jnp.inf, lax.max, (1, 1, 2, 2), (1, 1, 2, 2), "VALID")
    y = jnp.maximum(y, 0.0)
    y = y.reshape(y.shape[0], 320)
    y = jnp.maximum(y @ params["fc1_w"].T + params["fc1_b"], 0.0)
    y = y @ params["fc2_w"].T + params["fc2_b"]
    return jax.nn.log_softmax(y, axis=1)


if __name__ == "__main__":
    key = jax.random.PRNGKey(0)
    pkey, xkey = jax.random.split(key)
    params = init_params(pkey)
    packed = pack_params(params)
    # fc1 expects 320 = 20*4*4 features, which pins the input at 1x28x28 (MNIST).
    x = jax.random.normal(xkey, (2, 1, 28, 28), jnp.float32)   # NCHW, like PyTorch

    out = jax.jit(net_forward)(packed, x)
    out = jax.block_until_ready(out)
    assert out.shape == (2, 10)
    assert bool(jnp.all(jnp.isfinite(out)))

    ref = jax.block_until_ready(jax.jit(reference_forward)(params, x))
    max_err = float(jnp.max(jnp.abs(out - ref)))
    assert max_err < 5e-2, f"mismatch vs reference: {max_err}"
    print("KERNEL_OK")
</pallas_src>

<mosaic_0001>
module attributes {stable_mosaic.version = 11 : i64} {
  func.func @_fused_net_kernel(%arg0: i32, %arg1: memref<2x2x14x14x128xf32, #tpu.memory_space<vmem>>, %arg2: memref<10x26xf32, #tpu.memory_space<smem>>, %arg3: memref<160x800xbf16, #tpu.memory_space<vmem>>, %arg4: memref<320x1xf32, #tpu.memory_space<vmem>>, %arg5: memref<50x320xbf16, #tpu.memory_space<vmem>>, %arg6: memref<50x1xf32, #tpu.memory_space<vmem>>, %arg7: memref<10x50xbf16, #tpu.memory_space<vmem>>, %arg8: memref<10x1xf32, #tpu.memory_space<vmem>>, %arg9: memref<10x128xf32, #tpu.memory_space<vmem>>, %arg10: memref<10x12x16x128xbf16, #tpu.memory_space<vmem>>) attributes {dimension_semantics = [#tpu.dimension_semantics<parallel>], iteration_bounds = array<i64: 1>, scalar_prefetch = 0 : i64, scratch_operands = 1 : i64, tpu.core_type = #tpu.core_type<tc>, window_params = [{transform_indices = @transform_0, window_bounds = array<i64: 2, 2, 14, 14, 128>}, {transform_indices = @transform_1, window_bounds = array<i64: 10, 26>}, {pipeline_mode = #tpu.pipeline_mode<synchronous>, transform_indices = @transform_2, window_bounds = array<i64: 160, 800>}, {pipeline_mode = #tpu.pipeline_mode<synchronous>, transform_indices = @transform_3, window_bounds = array<i64: 320, 1>}, {pipeline_mode = #tpu.pipeline_mode<synchronous>, transform_indices = @transform_4, window_bounds = array<i64: 50, 320>}, {pipeline_mode = #tpu.pipeline_mode<synchronous>, transform_indices = @transform_5, window_bounds = array<i64: 50, 1>}, {pipeline_mode = #tpu.pipeline_mode<synchronous>, transform_indices = @transform_6, window_bounds = array<i64: 10, 50>}, {pipeline_mode = #tpu.pipeline_mode<synchronous>, transform_indices = @transform_7, window_bounds = array<i64: 10, 1>}, {transform_indices = @transform_8, window_bounds = array<i64: 10, 128>}]} {
    %c0_i32 = arith.constant 0 : i32
    %c10_i32 = arith.constant 10 : i32
    %0 = arith.addi %c0_i32, %c10_i32 : i32
    %c1_i32 = arith.constant 1 : i32
    scf.for %arg11 = %c0_i32 to %0 step %c1_i32  : i32 {
      %c0_45 = arith.constant 0 : index
      %c0_46 = arith.constant 0 : index
      %c0_47 = arith.constant 0 : index
      %c0_48 = arith.constant 0 : index
      %c0_49 = arith.constant 0 : index
      %66 = vector.load %arg1[%c0_45, %c0_46, %c0_47, %c0_48, %c0_49] : memref<2x2x14x14x128xf32, #tpu.memory_space<vmem>>, vector<1x1x12x12x128xf32>
      %67 = vector.shape_cast %66 : vector<1x1x12x12x128xf32> to vector<12x12x128xf32>
      %68 = arith.index_cast %arg11 : i32 to index
      %c0_50 = arith.constant 0 : index
      %69 = memref.load %arg2[%68, %c0_50] : memref<10x26xf32, #tpu.memory_space<smem>>
      %70 = vector.broadcast %69 : f32 to vector<12x12x128xf32>
      %71 = arith.mulf %67, %70 : vector<12x12x128xf32>
      %c0_51 = arith.constant 0 : index
      %c1_52 = arith.constant 1 : index
      %c0_53 = arith.constant 0 : index
      %c0_54 = arith.constant 0 : index
      %c0_55 = arith.constant 0 : index
      %72 = vector.load %arg1[%c0_51, %c1_52, %c0_53, %c0_54, %c0_55] : memref<2x2x14x14x128xf32, #tpu.memory_space<vmem>>, vector<1x1x12x12x128xf32>
      %73 = vector.shape_cast %72 : vector<1x1x12x12x128xf32> to vector<12x12x128xf32>
      %74 = arith.index_cast %arg11 : i32 to index
      %c1_56 = arith.constant 1 : index
      %75 = memref.load %arg2[%74, %c1_56] : memref<10x26xf32, #tpu.memory_space<smem>>
      %76 = vector.broadcast %75 : f32 to vector<12x12x128xf32>
      %77 = arith.mulf %73, %76 : vector<12x12x128xf32>
      %78 = arith.addf %71, %77 : vector<12x12x128xf32>
      %c0_57 = arith.constant 0 : index
      %c0_58 = arith.constant 0 : index
      %c0_59 = arith.constant 0 : index
      %c1_60 = arith.constant 1 : index
      %c0_61 = arith.constant 0 : index
      %79 = vector.load %arg1[%c0_57, %c0_58, %c0_59, %c1_60, %c0_61] : memref<2x2x14x14x128xf32, #tpu.memory_space<vmem>>, vector<1x1x12x12x128xf32>
      %80 = vector.shape_cast %79 : vector<1x1x12x12x128xf32> to vector<12x12x128xf32>
      %81 = arith.index_cast %arg11 : i32 to index
      %c2_62 = arith.constant 2 : index
      %82 = memref.load %arg2[%81, %c2_62] : memref<10x26xf32, #tpu.memory_space<smem>>
      %83 = vector.broadcast %82 : f32 to vector<12x12x128xf32>
      %84 = arith.mulf %80, %83 : vector<12x12x128xf32>
      %85 = arith.addf %78, %84 : vector<12x12x128xf32>
      %c0_63 = arith.constant 0 : index
      %c1_64 = arith.constant 1 : index
      %c0_65 = arith.constant 0 : index
      %c1_66 = arith.constant 1 : index
      %c0_67 = arith.constant 0 : index
      %86 = vector.load %arg1[%c0_63, %c1_64, %c0_65, %c1_66, %c0_67] : memref<2x2x14x14x128xf32, #tpu.memory_space<vmem>>, vector<1x1x12x12x128xf32>
      %87 = vector.shape_cast %86 : vector<1x1x12x12x128xf32> to vector<12x12x128xf32>
      %88 = arith.index_cast %arg11 : i32 to index
      %c3_68 = arith.constant 3 : index
      %89 = memref.load %arg2[%88, %c3_68] : memref<10x26xf32, #tpu.memory_space<smem>>
      %90 = vector.broadcast %89 : f32 to vector<12x12x128xf32>
      %91 = arith.mulf %87, %90 : vector<12x12x128xf32>
      %92 = arith.addf %85, %91 : vector<12x12x128xf32>
      %c0_69 = arith.constant 0 : index
      %c0_70 = arith.constant 0 : index
      %c0_71 = arith.constant 0 : index
      %c2_72 = arith.constant 2 : index
      %c0_73 = arith.constant 0 : index
      %93 = vector.load %arg1[%c0_69, %c0_70, %c0_71, %c2_72, %c0_73] : memref<2x2x14x14x128xf32, #tpu.memory_space<vmem>>, vector<1x1x12x12x128xf32>
      %94 = vector.shape_cast %93 : vector<1x1x12x12x128xf32> to vector<12x12x128xf32>
      %95 = arith.index_cast %arg11 : i32 to index
      %c4_74 = arith.constant 4 : index
      %96 = memref.load %arg2[%95, %c4_74] : memref<10x26xf32, #tpu.memory_space<smem>>
      %97 = vector.broadcast %96 : f32 to vector<12x12x128xf32>
      %98 = arith.mulf %94, %97 : vector<12x12x128xf32>
      %99 = arith.addf %92, %98 : vector<12x12x128xf32>
      %c1_75 = arith.constant 1 : index
      %c0_76 = arith.constant 0 : index
      %c0_77 = arith.constant 0 : index
      %c0_78 = arith.constant 0 : index
      %c0_79 = arith.constant 0 : index
      %100 = vector.load %arg1[%c1_75, %c0_76, %c0_77, %c0_78, %c0_79] : memref<2x2x14x14x128xf32, #tpu.memory_space<vmem>>, vector<1x1x12x12x128xf32>
      %101 = vector.shape_cast %100 : vector<1x1x12x12x128xf32> to vector<12x12x128xf32>
      %102 = arith.index_cast %arg11 : i32 to index
      %c5_80 = arith.constant 5 : index
      %103 = memref.load %arg2[%102, %c5_80] : memref<10x26xf32, #tpu.memory_space<smem>>
      %104 = vector.broadcast %103 : f32 to vector<12x12x128xf32>
      %105 = arith.mulf %101, %104 : vector<12x12x128xf32>
      %106 = arith.addf %99, %105 : vector<12x12x128xf32>
      %c1_81 = arith.constant 1 : index
      %c1_82 = arith.constant 1 : index
      %c0_83 = arith.constant 0 : index
      %c0_84 = arith.constant 0 : index
      %c0_85 = arith.constant 0 : index
      %107 = vector.load %arg1[%c1_81, %c1_82, %c0_83, %c0_84, %c0_85] : memref<2x2x14x14x128xf32, #tpu.memory_space<vmem>>, vector<1x1x12x12x128xf32>
      %108 = vector.shape_cast %107 : vector<1x1x12x12x128xf32> to vector<12x12x128xf32>
      %109 = arith.index_cast %arg11 : i32 to index
      %c6_86 = arith.constant 6 : index
      %110 = memref.load %arg2[%109, %c6_86] : memref<10x26xf32, #tpu.memory_space<smem>>
      %111 = vector.broadcast %110 : f32 to vector<12x12x128xf32>
      %112 = arith.mulf %108, %111 : vector<12x12x128xf32>
      %113 = arith.addf %106, %112 : vector<12x12x128xf32>
      %c1_87 = arith.constant 1 : index
      %c0_88 = arith.constant 0 : index
      %c0_89 = arith.constant 0 : index
      %c1_90 = arith.constant 1 : index
      %c0_91 = arith.constant 0 : index
      %114 = vector.load %arg1[%c1_87, %c0_88, %c0_89, %c1_90, %c0_91] : memref<2x2x14x14x128xf32, #tpu.memory_space<vmem>>, vector<1x1x12x12x128xf32>
      %115 = vector.shape_cast %114 : vector<1x1x12x12x128xf32> to vector<12x12x128xf32>
      %116 = arith.index_cast %arg11 : i32 to index
      %c7_92 = arith.constant 7 : index
      %117 = memref.load %arg2[%116, %c7_92] : memref<10x26xf32, #tpu.memory_space<smem>>
      %118 = vector.broadcast %117 : f32 to vector<12x12x128xf32>
      %119 = arith.mulf %115, %118 : vector<12x12x128xf32>
      %120 = arith.addf %113, %119 : vector<12x12x128xf32>
      %c1_93 = arith.constant 1 : index
      %c1_94 = arith.constant 1 : index
      %c0_95 = arith.constant 0 : index
      %c1_96 = arith.constant 1 : index
      %c0_97 = arith.constant 0 : index
      %121 = vector.load %arg1[%c1_93, %c1_94, %c0_95, %c1_96, %c0_97] : memref<2x2x14x14x128xf32, #tpu.memory_space<vmem>>, vector<1x1x12x12x128xf32>
      %122 = vector.shape_cast %121 : vector<1x1x12x12x128xf32> to vector<12x12x128xf32>
      %123 = arith.index_cast %arg11 : i32 to index
      %c8 = arith.constant 8 : index
      %124 = memref.load %arg2[%123, %c8] : memref<10x26xf32, #tpu.memory_space<smem>>
      %125 = vector.broadcast %124 : f32 to vector<12x12x128xf32>
      %126 = arith.mulf %122, %125 : vector<12x12x128xf32>
      %127 = arith.addf %120, %126 : vector<12x12x128xf32>
      %c1_98 = arith.constant 1 : index
      %c0_99 = arith.constant 0 : index
      %c0_100 = arith.constant 0 : index
      %c2_101 = arith.constant 2 : index
      %c0_102 = arith.constant 0 : index
      %128 = vector.load %arg1[%c1_98, %c0_99, %c0_100, %c2_101, %c0_102] : memref<2x2x14x14x128xf32, #tpu.memory_space<vmem>>, vector<1x1x12x12x128xf32>
      %129 = vector.shape_cast %128 : vector<1x1x12x12x128xf32> to vector<12x12x128xf32>
      %130 = arith.index_cast %arg11 : i32 to index
      %c9 = arith.constant 9 : index
      %131 = memref.load %arg2[%130, %c9] : memref<10x26xf32, #tpu.memory_space<smem>>
      %132 = vector.broadcast %131 : f32 to vector<12x12x128xf32>
      %133 = arith.mulf %129, %132 : vector<12x12x128xf32>
      %134 = arith.addf %127, %133 : vector<12x12x128xf32>
      %c0_103 = arith.constant 0 : index
      %c0_104 = arith.constant 0 : index
      %c1_105 = arith.constant 1 : index
      %c0_106 = arith.constant 0 : index
      %c0_107 = arith.constant 0 : index
      %135 = vector.load %arg1[%c0_103, %c0_104, %c1_105, %c0_106, %c0_107] : memref<2x2x14x14x128xf32, #tpu.memory_space<vmem>>, vector<1x1x12x12x128xf32>
      %136 = vector.shape_cast %135 : vector<1x1x12x12x128xf32> to vector<12x12x128xf32>
      %137 = arith.index_cast %arg11 : i32 to index
      %c10 = arith.constant 10 : index
      %138 = memref.load %arg2[%137, %c10] : memref<10x26xf32, #tpu.memory_space<smem>>
      %139 = vector.broadcast %138 : f32 to vector<12x12x128xf32>
      %140 = arith.mulf %136, %139 : vector<12x12x128xf32>
      %141 = arith.addf %134, %140 : vector<12x12x128xf32>
      %c0_108 = arith.constant 0 : index
      %c1_109 = arith.constant 1 : index
      %c1_110 = arith.constant 1 : index
      %c0_111 = arith.constant 0 : index
      %c0_112 = arith.constant 0 : index
      %142 = vector.load %arg1[%c0_108, %c1_109, %c1_110, %c0_111, %c0_112] : memref<2x2x14x14x128xf32, #tpu.memory_space<vmem>>, vector<1x1x12x12x128xf32>
      %143 = vector.shape_cast %142 : vector<1x1x12x12x128xf32> to vector<12x12x128xf32>
      %144 = arith.index_cast %arg11 : i32 to index
      %c11 = arith.constant 11 : index
      %145 = memref.load %arg2[%144, %c11] : memref<10x26xf32, #tpu.memory_space<smem>>
      %146 = vector.broadcast %145 : f32 to vector<12x12x128xf32>
      %147 = arith.mulf %143, %146 : vector<12x12x128xf32>
      %148 = arith.addf %141, %147 : vector<12x12x128xf32>
      %c0_113 = arith.constant 0 : index
      %c0_114 = arith.constant 0 : index
      %c1_115 = arith.constant 1 : index
      %c1_116 = arith.constant 1 : index
      %c0_117 = arith.constant 0 : index
      %149 = vector.load %arg1[%c0_113, %c0_114, %c1_115, %c1_116, %c0_117] : memref<2x2x14x14x128xf32, #tpu.memory_space<vmem>>, vector<1x1x12x12x128xf32>
      %150 = vector.shape_cast %149 : vector<1x1x12x12x128xf32> to vector<12x12x128xf32>
      %151 = arith.index_cast %arg11 : i32 to index
      %c12 = arith.constant 12 : index
      %152 = memref.load %arg2[%151, %c12] : memref<10x26xf32, #tpu.memory_space<smem>>
      %153 = vector.broadcast %152 : f32 to vector<12x12x128xf32>
      %154 = arith.mulf %150, %153 : vector<12x12x128xf32>
      %155 = arith.addf %148, %154 : vector<12x12x128xf32>
      %c0_118 = arith.constant 0 : index
      %c1_119 = arith.constant 1 : index
      %c1_120 = arith.constant 1 : index
      %c1_121 = arith.constant 1 : index
      %c0_122 = arith.constant 0 : index
      %156 = vector.load %arg1[%c0_118, %c1_119, %c1_120, %c1_121, %c0_122] : memref<2x2x14x14x128xf32, #tpu.memory_space<vmem>>, vector<1x1x12x12x128xf32>
      %157 = vector.shape_cast %156 : vector<1x1x12x12x128xf32> to vector<12x12x128xf32>
      %158 = arith.index_cast %arg11 : i32 to index
      %c13 = arith.constant 13 : index
      %159 = memref.load %arg2[%158, %c13] : memref<10x26xf32, #tpu.memory_space<smem>>
      %160 = vector.broadcast %159 : f32 to vector<12x12x128xf32>
      %161 = arith.mulf %157, %160 : vector<12x12x128xf32>
      %162 = arith.addf %155, %161 : vector<12x12x128xf32>
      %c0_123 = arith.constant 0 : index
      %c0_124 = arith.constant 0 : index
      %c1_125 = arith.constant 1 : index
      %c2_126 = arith.constant 2 : index
      %c0_127 = arith.constant 0 : index
      %163 = vector.load %arg1[%c0_123, %c0_124, %c1_125, %c2_126, %c0_127] : memref<2x2x14x14x128xf32, #tpu.memory_space<vmem>>, vector<1x1x12x12x128xf32>
      %164 = vector.shape_cast %163 : vector<1x1x12x12x128xf32> to vector<12x12x128xf32>
      %165 = arith.index_cast %arg11 : i32 to index
      %c14 = arith.constant 14 : index
      %166 = memref.load %arg2[%165, %c14] : memref<10x26xf32, #tpu.memory_space<smem>>
      %167 = vector.broadcast %166 : f32 to vector<12x12x128xf32>
      %168 = arith.mulf %164, %167 : vector<12x12x128xf32>
      %169 = arith.addf %162, %168 : vector<12x12x128xf32>
      %c1_128 = arith.constant 1 : index
      %c0_129 = arith.constant 0 : index
      %c1_130 = arith.constant 1 : index
      %c0_131 = arith.constant 0 : index
      %c0_132 = arith.constant 0 : index
      %170 = vector.load %arg1[%c1_128, %c0_129, %c1_130, %c0_131, %c0_132] : memref<2x2x14x14x128xf32, #tpu.memory_space<vmem>>, vector<1x1x12x12x128xf32>
      %171 = vector.shape_cast %170 : vector<1x1x12x12x128xf32> to vector<12x12x128xf32>
      %172 = arith.index_cast %arg11 : i32 to index
      %c15 = arith.constant 15 : index
      %173 = memref.load %arg2[%172, %c15] : memref<10x26xf32, #tpu.memory_space<smem>>
      %174 = vector.broadcast %173 : f32 to vector<12x12x128xf32>
      %175 = arith.mulf %171, %174 : vector<12x12x128xf32>
      %176 = arith.addf %169, %175 : vector<12x12x128xf32>
      %c1_133 = arith.constant 1 : index
      %c1_134 = arith.constant 1 : index
      %c1_135 = arith.constant 1 : index
      %c0_136 = arith.constant 0 : index
      %c0_137 = arith.constant 0 : index
      %177 = vector.load %arg1[%c1_133, %c1_134, %c1_135, %c0_136, %c0_137] : memref<2x2x14x14x128xf32, #tpu.memory_space<vmem>>, vector<1x1x12x12x128xf32>
      %178 = vector.shape_cast %177 : vector<1x1x12x12x128xf32> to vector<12x12x128xf32>
      %179 = arith.index_cast %arg11 : i32 to index
      %c16 = arith.constant 16 : index
      %180 = memref.load %arg2[%179, %c16] : memref<10x26xf32, #tpu.memory_space<smem>>
      %181 = vector.broadcast %180 : f32 to vector<12x12x128xf32>
      %182 = arith.mulf %178, %181 : vector<12x12x128xf32>
      %183 = arith.addf %176, %182 : vector<12x12x128xf32>
      %c1_138 = arith.constant 1 : index
      %c0_139 = arith.constant 0 : index
      %c1_140 = arith.constant 1 : index
      %c1_141 = arith.constant 1 : index
      %c0_142 = arith.constant 0 : index
      %184 = vector.load %arg1[%c1_138, %c0_139, %c1_140, %c1_141, %c0_142] : memref<2x2x14x14x128xf32, #tpu.memory_space<vmem>>, vector<1x1x12x12x128xf32>
      %185 = vector.shape_cast %184 : vector<1x1x12x12x128xf32> to vector<12x12x128xf32>
      %186 = arith.index_cast %arg11 : i32 to index
      %c17 = arith.constant 17 : index
      %187 = memref.load %arg2[%186, %c17] : memref<10x26xf32, #tpu.memory_space<smem>>
      %188 = vector.broadcast %187 : f32 to vector<12x12x128xf32>
      %189 = arith.mulf %185, %188 : vector<12x12x128xf32>
      %190 = arith.addf %183, %189 : vector<12x12x128xf32>
      %c1_143 = arith.constant 1 : index
      %c1_144 = arith.constant 1 : index
      %c1_145 = arith.constant 1 : index
      %c1_146 = arith.constant 1 : index
      %c0_147 = arith.constant 0 : index
      %191 = vector.load %arg1[%c1_143, %c1_144, %c1_145, %c1_146, %c0_147] : memref<2x2x14x14x128xf32, #tpu.memory_space<vmem>>, vector<1x1x12x12x128xf32>
      %192 = vector.shape_cast %191 : vector<1x1x12x12x128xf32> to vector<12x12x128xf32>
      %193 = arith.index_cast %arg11 : i32 to index
      %c18 = arith.constant 18 : index
      %194 = memref.load %arg2[%193, %c18] : memref<10x26xf32, #tpu.memory_space<smem>>
      %195 = vector.broadcast %194 : f32 to vector<12x12x128xf32>
      %196 = arith.mulf %192, %195 : vector<12x12x128xf32>
      %197 = arith.addf %190, %196 : vector<12x12x128xf32>
      %c1_148 = arith.constant 1 : index
      %c0_149 = arith.constant 0 : index
      %c1_150 = arith.constant 1 : index
      %c2_151 = arith.constant 2 : index
      %c0_152 = arith.constant 0 : index
      %198 = vector.load %arg1[%c1_148, %c0_149, %c1_150, %c2_151, %c0_152] : memref<2x2x14x14x128xf32, #tpu.memory_space<vmem>>, vector<1x1x12x12x128xf32>
      %199 = vector.shape_cast %198 : vector<1x1x12x12x128xf32> to vector<12x12x128xf32>
      %200 = arith.index_cast %arg11 : i32 to index
      %c19 = arith.constant 19 : index
      %201 = memref.load %arg2[%200, %c19] : memref<10x26xf32, #tpu.memory_space<smem>>
      %202 = vector.broadcast %201 : f32 to vector<12x12x128xf32>
      %203 = arith.mulf %199, %202 : vector<12x12x128xf32>
      %204 = arith.addf %197, %203 : vector<12x12x128xf32>
      %c0_153 = arith.constant 0 : index
      %c0_154 = arith.constant 0 : index
      %c2_155 = arith.constant 2 : index
      %c0_156 = arith.constant 0 : index
      %c0_157 = arith.constant 0 : index
      %205 = vector.load %arg1[%c0_153, %c0_154, %c2_155, %c0_156, %c0_157] : memref<2x2x14x14x128xf32, #tpu.memory_space<vmem>>, vector<1x1x12x12x128xf32>
      %206 = vector.shape_cast %205 : vector<1x1x12x12x128xf32> to vector<12x12x128xf32>
      %207 = arith.index_cast %arg11 : i32 to index
      %c20 = arith.constant 20 : index
      %208 = memref.load %arg2[%207, %c20] : memref<10x26xf32, #tpu.memory_space<smem>>
      %209 = vector.broadcast %208 : f32 to vector<12x12x128xf32>
      %210 = arith.mulf %206, %209 : vector<12x12x128xf32>
      %211 = arith.addf %204, %210 : vector<12x12x128xf32>
      %c0_158 = arith.constant 0 : index
      %c1_159 = arith.constant 1 : index
      %c2_160 = arith.constant 2 : index
      %c0_161 = arith.constant 0 : index
      %c0_162 = arith.constant 0 : index
      %212 = vector.load %arg1[%c0_158, %c1_159, %c2_160, %c0_161, %c0_162] : memref<2x2x14x14x128xf32, #tpu.memory_space<vmem>>, vector<1x1x12x12x128xf32>
      %213 = vector.shape_cast %212 : vector<1x1x12x12x128xf32> to vector<12x12x128xf32>
      %214 = arith.index_cast %arg11 : i32 to index
      %c21 = arith.constant 21 : index
      %215 = memref.load %arg2[%214, %c21] : memref<10x26xf32, #tpu.memory_space<smem>>
      %216 = vector.broadcast %215 : f32 to vector<12x12x128xf32>
      %217 = arith.mulf %213, %216 : vector<12x12x128xf32>
      %218 = arith.addf %211, %217 : vector<12x12x128xf32>
      %c0_163 = arith.constant 0 : index
      %c0_164 = arith.constant 0 : index
      %c2_165 = arith.constant 2 : index
      %c1_166 = arith.constant 1 : index
      %c0_167 = arith.constant 0 : index
      %219 = vector.load %arg1[%c0_163, %c0_164, %c2_165, %c1_166, %c0_167] : memref<2x2x14x14x128xf32, #tpu.memory_space<vmem>>, vector<1x1x12x12x128xf32>
      %220 = vector.shape_cast %219 : vector<1x1x12x12x128xf32> to vector<12x12x128xf32>
      %221 = arith.index_cast %arg11 : i32 to index
      %c22 = arith.constant 22 : index
      %222 = memref.load %arg2[%221, %c22] : memref<10x26xf32, #tpu.memory_space<smem>>
      %223 = vector.broadcast %222 : f32 to vector<12x12x128xf32>
      %224 = arith.mulf %220, %223 : vector<12x12x128xf32>
      %225 = arith.addf %218, %224 : vector<12x12x128xf32>
      %c0_168 = arith.constant 0 : index
      %c1_169 = arith.constant 1 : index
      %c2_170 = arith.constant 2 : index
      %c1_171 = arith.constant 1 : index
      %c0_172 = arith.constant 0 : index
      %226 = vector.load %arg1[%c0_168, %c1_169, %c2_170, %c1_171, %c0_172] : memref<2x2x14x14x128xf32, #tpu.memory_space<vmem>>, vector<1x1x12x12x128xf32>
      %227 = vector.shape_cast %226 : vector<1x1x12x12x128xf32> to vector<12x12x128xf32>
      %228 = arith.index_cast %arg11 : i32 to index
      %c23 = arith.constant 23 : index
      %229 = memref.load %arg2[%228, %c23] : memref<10x26xf32, #tpu.memory_space<smem>>
      %230 = vector.broadcast %229 : f32 to vector<12x12x128xf32>
      %231 = arith.mulf %227, %230 : vector<12x12x128xf32>
      %232 = arith.addf %225, %231 : vector<12x12x128xf32>
      %c0_173 = arith.constant 0 : index
      %c0_174 = arith.constant 0 : index
      %c2_175 = arith.constant 2 : index
      %c2_176 = arith.constant 2 : index
      %c0_177 = arith.constant 0 : index
      %233 = vector.load %arg1[%c0_173, %c0_174, %c2_175, %c2_176, %c0_177] : memref<2x2x14x14x128xf32, #tpu.memory_space<vmem>>, vector<1x1x12x12x128xf32>
      %234 = vector.shape_cast %233 : vector<1x1x12x12x128xf32> to vector<12x12x128xf32>
      %235 = arith.index_cast %arg11 : i32 to index
      %c24 = arith.constant 24 : index
      %236 = memref.load %arg2[%235, %c24] : memref<10x26xf32, #tpu.memory_space<smem>>
      %237 = vector.broadcast %236 : f32 to vector<12x12x128xf32>
      %238 = arith.mulf %234, %237 : vector<12x12x128xf32>
      %239 = arith.addf %232, %238 : vector<12x12x128xf32>
      %c0_178 = arith.constant 0 : index
      %c1_179 = arith.constant 1 : index
      %c0_180 = arith.constant 0 : index
      %c0_181 = arith.constant 0 : index
      %c0_182 = arith.constant 0 : index
      %240 = vector.load %arg1[%c0_178, %c1_179, %c0_180, %c0_181, %c0_182] : memref<2x2x14x14x128xf32, #tpu.memory_space<vmem>>, vector<1x1x12x12x128xf32>
      %241 = vector.shape_cast %240 : vector<1x1x12x12x128xf32> to vector<12x12x128xf32>
      %242 = arith.index_cast %arg11 : i32 to index
      %c0_183 = arith.constant 0 : index
      %243 = memref.load %arg2[%242, %c0_183] : memref<10x26xf32, #tpu.memory_space<smem>>
      %244 = vector.broadcast %243 : f32 to vector<12x12x128xf32>
      %245 = arith.mulf %241, %244 : vector<12x12x128xf32>
      %c0_184 = arith.constant 0 : index
      %c0_185 = arith.constant 0 : index
      %c0_186 = arith.constant 0 : index
      %c1_187 = arith.constant 1 : index
      %c0_188 = arith.constant 0 : index
      %246 = vector.load %arg1[%c0_184, %c0_185, %c0_186, %c1_187, %c0_188] : memref<2x2x14x14x128xf32, #tpu.memory_space<vmem>>, vector<1x1x12x12x128xf32>
      %247 = vector.shape_cast %246 : vector<1x1x12x12x128xf32> to vector<12x12x128xf32>
      %248 = arith.index_cast %arg11 : i32 to index
      %c1_189 = arith.constant 1 : index
      %249 = memref.load %arg2[%248, %c1_189] : memref<10x26xf32, #tpu.memory_space<smem>>
      %250 = vector.broadcast %249 : f32 to vector<12x12x128xf32>
      %251 = arith.mulf %247, %250 : vector<12x12x128xf32>
      %252 = arith.addf %245, %251 : vector<12x12x128xf32>
      %c0_190 = arith.constant 0 : index
      %c1_191 = arith.constant 1 : index
      %c0_192 = arith.constant 0 : index
      %c1_193 = arith.constant 1 : index
      %c0_194 = arith.constant 0 : index
      %253 = vector.load %arg1[%c0_190, %c1_191, %c0_192, %c1_193, %c0_194] : memref<2x2x14x14x128xf32, #tpu.memory_space<vmem>>, vector<1x1x12x12x128xf32>
      %254 = vector.shape_cast %253 : vector<1x1x12x12x128xf32> to vector<12x12x128xf32>
      %255 = arith.index_cast %arg11 : i32 to index
      %c2_195 = arith.constant 2 : index
      %256 = memref.load %arg2[%255, %c2_195] : memref<10x26xf32, #tpu.memory_space<smem>>
      %257 = vector.broadcast %256 : f32 to vector<12x12x128xf32>
      %258 = arith.mulf %254, %257 : vector<12x12x128xf32>
      %259 = arith.addf %252, %258 : vector<12x12x128xf32>
      %c0_196 = arith.constant 0 : index
      %c0_197 = arith.constant 0 : index
      %c0_198 = arith.constant 0 : index
      %c2_199 = arith.constant 2 : index
      %c0_200 = arith.constant 0 : index
      %260 = vector.load %arg1[%c0_196, %c0_197, %c0_198, %c2_199, %c0_200] : memref<2x2x14x14x128xf32, #tpu.memory_space<vmem>>, vector<1x1x12x12x128xf32>
      %261 = vector.shape_cast %260 : vector<1x1x12x12x128xf32> to vector<12x12x128xf32>
      %262 = arith.index_cast %arg11 : i32 to index
      %c3_201 = arith.constant 3 : index
      %263 = memref.load %arg2[%262, %c3_201] : memref<10x26xf32, #tpu.memory_space<smem>>
      %264 = vector.broadcast %263 : f32 to vector<12x12x128xf32>
      %265 = arith.mulf %261, %264 : vector<12x12x128xf32>
      %266 = arith.addf %259, %265 : vector<12x12x128xf32>
      %c0_202 = arith.constant 0 : index
      %c1_203 = arith.constant 1 : index
      %c0_204 = arith.constant 0 : index
      %c2_205 = arith.constant 2 : index
      %c0_206 = arith.constant 0 : index
      %267 = vector.load %arg1[%c0_202, %c1_203, %c0_204, %c2_205, %c0_206] : memref<2x2x14x14x128xf32, #tpu.memory_space<vmem>>, vector<1x1x12x12x128xf32>
      %268 = vector.shape_cast %267 : vector<1x1x12x12x128xf32> to vector<12x12x128xf32>
      %269 = arith.index_cast %arg11 : i32 to index
      %c4_207 = arith.constant 4 : index
      %270 = memref.load %arg2[%269, %c4_207] : memref<10x26xf32, #tpu.memory_space<smem>>
      %271 = vector.broadcast %270 : f32 to vector<12x12x128xf32>
      %272 = arith.mulf %268, %271 : vector<12x12x128xf32>
      %273 = arith.addf %266, %272 : vector<12x12x128xf32>
      %c1_208 = arith.constant 1 : index
      %c1_209 = arith.constant 1 : index
      %c0_210 = arith.constant 0 : index
      %c0_211 = arith.constant 0 : index
      %c0_212 = arith.constant 0 : index
      %274 = vector.load %arg1[%c1_208, %c1_209, %c0_210, %c0_211, %c0_212] : memref<2x2x14x14x128xf32, #tpu.memory_space<vmem>>, vector<1x1x12x12x128xf32>
      %275 = vector.shape_cast %274 : vector<1x1x12x12x128xf32> to vector<12x12x128xf32>
      %276 = arith.index_cast %arg11 : i32 to index
      %c5_213 = arith.constant 5 : index
      %277 = memref.load %arg2[%276, %c5_213] : memref<10x26xf32, #tpu.memory_space<smem>>
      %278 = vector.broadcast %277 : f32 to vector<12x12x128xf32>
      %279 = arith.mulf %275, %278 : vector<12x12x128xf32>
      %280 = arith.addf %273, %279 : vector<12x12x128xf32>
      %c1_214 = arith.constant 1 : index
      %c0_215 = arith.constant 0 : index
      %c0_216 = arith.constant 0 : index
      %c1_217 = arith.constant 1 : index
      %c0_218 = arith.constant 0 : index
      %281 = vector.load %arg1[%c1_214, %c0_215, %c0_216, %c1_217, %c0_218] : memref<2x2x14x14x128xf32, #tpu.memory_space<vmem>>, vector<1x1x12x12x128xf32>
      %282 = vector.shape_cast %281 : vector<1x1x12x12x128xf32> to vector<12x12x128xf32>
      %283 = arith.index_cast %arg11 : i32 to index
      %c6_219 = arith.constant 6 : index
      %284 = memref.load %arg2[%283, %c6_219] : memref<10x26xf32, #tpu.memory_space<smem>>
      %285 = vector.broadcast %284 : f32 to vector<12x12x128xf32>
      %286 = arith.mulf %282, %285 : vector<12x12x128xf32>
      %287 = arith.addf %280, %286 : vector<12x12x128xf32>
      %c1_220 = arith.constant 1 : index
      %c1_221 = arith.constant 1 : index
      %c0_222 = arith.constant 0 : index
      %c1_223 = arith.constant 1 : index
      %c0_224 = arith.constant 0 : index
      %288 = vector.load %arg1[%c1_220, %c1_221, %c0_222, %c1_223, %c0_224] : memref<2x2x14x14x128xf32, #tpu.memory_space<vmem>>, vector<1x1x12x12x128xf32>
      %289 = vector.shape_cast %288 : vector<1x1x12x12x128xf32> to vector<12x12x128xf32>
      %290 = arith.index_cast %arg11 : i32 to index
      %c7_225 = arith.constant 7 : index
      %291 = memref.load %arg2[%290, %c7_225] : memref<10x26xf32, #tpu.memory_space<smem>>
      %292 = vector.broadcast %291 : f32 to vector<12x12x128xf32>
      %293 = arith.mulf %289, %292 : vector<12x12x128xf32>
      %294 = arith.addf %287, %293 : vector<12x12x128xf32>
      %c1_226 = arith.constant 1 : index
      %c0_227 = arith.constant 0 : index
      %c0_228 = arith.constant 0 : index
      %c2_229 = arith.constant 2 : index
      %c0_230 = arith.constant 0 : index
      %295 = vector.load %arg1[%c1_226, %c0_227, %c0_228, %c2_229, %c0_230] : memref<2x2x14x14x128xf32, #tpu.memory_space<vmem>>, vector<1x1x12x12x128xf32>
      %296 = vector.shape_cast %295 : vector<1x1x12x12x128xf32> to vector<12x12x128xf32>
      %297 = arith.index_cast %arg11 : i32 to index
      %c8_231 = arith.constant 8 : index
      %298 = memref.load %arg2[%297, %c8_231] : memref<10x26xf32, #tpu.memory_space<smem>>
      %299 = vector.broadcast %298 : f32 to vector<12x12x128xf32>
      %300 = arith.mulf %296, %299 : vector<12x12x128xf32>
      %301 = arith.addf %294, %300 : vector<12x12x128xf32>
      %c1_232 = arith.constant 1 : index
      %c1_233 = arith.constant 1 : index
      %c0_234 = arith.constant 0 : index
      %c2_235 = arith.constant 2 : index
      %c0_236 = arith.constant 0 : index
      %302 = vector.load %arg1[%c1_232, %c1_233, %c0_234, %c2_235, %c0_236] : memref<2x2x14x14x128xf32, #tpu.memory_space<vmem>>, vector<1x1x12x12x128xf32>
      %303 = vector.shape_cast %302 : vector<1x1x12x12x128xf32> to vector<12x12x128xf32>
      %304 = arith.index_cast %arg11 : i32 to index
      %c9_237 = arith.constant 9 : index
      %305 = memref.load %arg2[%304, %c9_237] : memref<10x26xf32, #tpu.memory_space<smem>>
      %306 = vector.broadcast %305 : f32 to vector<12x12x128xf32>
      %307 = arith.mulf %303, %306 : vector<12x12x128xf32>
      %308 = arith.addf %301, %307 : vector<12x12x128xf32>
      %c0_238 = arith.constant 0 : index
      %c1_239 = arith.constant 1 : index
      %c1_240 = arith.constant 1 : index
      %c0_241 = arith.constant 0 : index
      %c0_242 = arith.constant 0 : index
      %309 = vector.load %arg1[%c0_238, %c1_239, %c1_240, %c0_241, %c0_242] : memref<2x2x14x14x128xf32, #tpu.memory_space<vmem>>, vector<1x1x12x12x128xf32>
      %310 = vector.shape_cast %309 : vector<1x1x12x12x128xf32> to vector<12x12x128xf32>
      %311 = arith.index_cast %arg11 : i32 to index
      %c10_243 = arith.constant 10 : index
      %312 = memref.load %arg2[%311, %c10_243] : memref<10x26xf32, #tpu.memory_space<smem>>
      %313 = vector.broadcast %312 : f32 to vector<12x12x128xf32>
      %314 = arith.mulf %310, %313 : vector<12x12x128xf32>
      %315 = arith.addf %308, %314 : vector<12x12x128xf32>
      %c0_244 = arith.constant 0 : index
      %c0_245 = arith.constant 0 : index
      %c1_246 = arith.constant 1 : index
      %c1_247 = arith.constant 1 : index
      %c0_248 = arith.constant 0 : index
      %316 = vector.load %arg1[%c0_244, %c0_245, %c1_246, %c1_247, %c0_248] : memref<2x2x14x14x128xf32, #tpu.memory_space<vmem>>, vector<1x1x12x12x128xf32>
      %317 = vector.shape_cast %316 : vector<1x1x12x12x128xf32> to vector<12x12x128xf32>
      %318 = arith.index_cast %arg11 : i32 to index
      %c11_249 = arith.constant 11 : index
      %319 = memref.load %arg2[%318, %c11_249] : memref<10x26xf32, #tpu.memory_space<smem>>
      %320 = vector.broadcast %319 : f32 to vector<12x12x128xf32>
      %321 = arith.mulf %317, %320 : vector<12x12x128xf32>
      %322 = arith.addf %315, %321 : vector<12x12x128xf32>
      %c0_250 = arith.constant 0 : index
      %c1_251 = arith.constant 1 : index
      %c1_252 = arith.constant 1 : index
      %c1_253 = arith.constant 1 : index
      %c0_254 = arith.constant 0 : index
      %323 = vector.load %arg1[%c0_250, %c1_251, %c1_252, %c1_253, %c0_254] : memref<2x2x14x14x128xf32, #tpu.memory_space<vmem>>, vector<1x1x12x12x128xf32>
      %324 = vector.shape_cast %323 : vector<1x1x12x12x128xf32> to vector<12x12x128xf32>
      %325 = arith.index_cast %arg11 : i32 to index
      %c12_255 = arith.constant 12 : index
      %326 = memref.load %arg2[%325, %c12_255] : memref<10x26xf32, #tpu.memory_space<smem>>
      %327 = vector.broadcast %326 : f32 to vector<12x12x128xf32>
      %328 = arith.mulf %324, %327 : vector<12x12x128xf32>
      %329 = arith.addf %322, %328 : vector<12x12x128xf32>
      %c0_256 = arith.constant 0 : index
      %c0_257 = arith.constant 0 : index
      %c1_258 = arith.constant 1 : index
      %c2_259 = arith.constant 2 : index
      %c0_260 = arith.constant 0 : index
      %330 = vector.load %arg1[%c0_256, %c0_257, %c1_258, %c2_259, %c0_260] : memref<2x2x14x14x128xf32, #tpu.memory_space<vmem>>, vector<1x1x12x12x128xf32>
      %331 = vector.shape_cast %330 : vector<1x1x12x12x128xf32> to vector<12x12x128xf32>
      %332 = arith.index_cast %arg11 : i32 to index
      %c13_261 = arith.constant 13 : index
      %333 = memref.load %arg2[%332, %c13_261] : memref<10x26xf32, #tpu.memory_space<smem>>
      %334 = vector.broadcast %333 : f32 to vector<12x12x128xf32>
      %335 = arith.mulf %331, %334 : vector<12x12x128xf32>
      %336 = arith.addf %329, %335 : vector<12x12x128xf32>
      %c0_262 = arith.constant 0 : index
      %c1_263 = arith.constant 1 : index
      %c1_264 = arith.constant 1 : index
      %c2_265 = arith.constant 2 : index
      %c0_266 = arith.constant 0 : index
      %337 = vector.load %arg1[%c0_262, %c1_263, %c1_264, %c2_265, %c0_266] : memref<2x2x14x14x128xf32, #tpu.memory_space<vmem>>, vector<1x1x12x12x128xf32>
      %338 = vector.shape_cast %337 : vector<1x1x12x12x128xf32> to vector<12x12x128xf32>
      %339 = arith.index_cast %arg11 : i32 to index
      %c14_267 = arith.constant 14 : index
      %340 = memref.load %arg2[%339, %c14_267] : memref<10x26xf32, #tpu.memory_space<smem>>
      %341 = vector.broadcast %340 : f32 to vector<12x12x128xf32>
      %342 = arith.mulf %338, %341 : vector<12x12x128xf32>
      %343 = arith.addf %336, %342 : vector<12x12x128xf32>
      %c1_268 = arith.constant 1 : index
      %c1_269 = arith.constant 1 : index
      %c1_270 = arith.constant 1 : index
      %c0_271 = arith.constant 0 : index
      %c0_272 = arith.constant 0 : index
      %344 = vector.load %arg1[%c1_268, %c1_269, %c1_270, %c0_271, %c0_272] : memref<2x2x14x14x128xf32, #tpu.memory_space<vmem>>, vector<1x1x12x12x128xf32>
      %345 = vector.shape_cast %344 : vector<1x1x12x12x128xf32> to vector<12x12x128xf32>
      %346 = arith.index_cast %arg11 : i32 to index
      %c15_273 = arith.constant 15 : index
      %347 = memref.load %arg2[%346, %c15_273] : memref<10x26xf32, #tpu.memory_space<smem>>
      %348 = vector.broadcast %347 : f32 to vector<12x12x128xf32>
      %349 = arith.mulf %345, %348 : vector<12x12x128xf32>
      %350 = arith.addf %343, %349 : vector<12x12x128xf32>
      %c1_274 = arith.constant 1 : index
      %c0_275 = arith.constant 0 : index
      %c1_276 = arith.constant 1 : index
      %c1_277 = arith.constant 1 : index
      %c0_278 = arith.constant 0 : index
      %351 = vector.load %arg1[%c1_274, %c0_275, %c1_276, %c1_277, %c0_278] : memref<2x2x14x14x128xf32, #tpu.memory_space<vmem>>, vector<1x1x12x12x128xf32>
      %352 = vector.shape_cast %351 : vector<1x1x12x12x128xf32> to vector<12x12x128xf32>
      %353 = arith.index_cast %arg11 : i32 to index
      %c16_279 = arith.constant 16 : index
      %354 = memref.load %arg2[%353, %c16_279] : memref<10x26xf32, #tpu.memory_space<smem>>
      %355 = vector.broadcast %354 : f32 to vector<12x12x128xf32>
      %356 = arith.mulf %352, %355 : vector<12x12x128xf32>
      %357 = arith.addf %350, %356 : vector<12x12x128xf32>
      %c1_280 = arith.constant 1 : index
      %c1_281 = arith.constant 1 : index
      %c1_282 = arith.constant 1 : index
      %c1_283 = arith.constant 1 : index
      %c0_284 = arith.constant 0 : index
      %358 = vector.load %arg1[%c1_280, %c1_281, %c1_282, %c1_283, %c0_284] : memref<2x2x14x14x128xf32, #tpu.memory_space<vmem>>, vector<1x1x12x12x128xf32>
      %359 = vector.shape_cast %358 : vector<1x1x12x12x128xf32> to vector<12x12x128xf32>
      %360 = arith.index_cast %arg11 : i32 to index
      %c17_285 = arith.constant 17 : index
      %361 = memref.load %arg2[%360, %c17_285] : memref<10x26xf32, #tpu.memory_space<smem>>
      %362 = vector.broadcast %361 : f32 to vector<12x12x128xf32>
      %363 = arith.mulf %359, %362 : vector<12x12x128xf32>
      %364 = arith.addf %357, %363 : vector<12x12x128xf32>
      %c1_286 = arith.constant 1 : index
      %c0_287 = arith.constant 0 : index
      %c1_288 = arith.constant 1 : index
      %c2_289 = arith.constant 2 : index
      %c0_290 = arith.constant 0 : index
      %365 = vector.load %arg1[%c1_286, %c0_287, %c1_288, %c2_289, %c0_290] : memref<2x2x14x14x128xf32, #tpu.memory_space<vmem>>, vector<1x1x12x12x128xf32>
      %366 = vector.shape_cast %365 : vector<1x1x12x12x128xf32> to vector<12x12x128xf32>
      %367 = arith.index_cast %arg11 : i32 to index
      %c18_291 = arith.constant 18 : index
      %368 = memref.load %arg2[%367, %c18_291] : memref<10x26xf32, #tpu.memory_space<smem>>
      %369 = vector.broadcast %368 : f32 to vector<12x12x128xf32>
      %370 = arith.mulf %366, %369 : vector<12x12x128xf32>
      %371 = arith.addf %364, %370 : vector<12x12x128xf32>
      %c1_292 = arith.constant 1 : index
      %c1_293 = arith.constant 1 : index
      %c1_294 = arith.constant 1 : index
      %c2_295 = arith.constant 2 : index
      %c0_296 = arith.constant 0 : index
      %372 = vector.load %arg1[%c1_292, %c1_293, %c1_294, %c2_295, %c0_296] : memref<2x2x14x14x128xf32, #tpu.memory_space<vmem>>, vector<1x1x12x12x128xf32>
      %373 = vector.shape_cast %372 : vector<1x1x12x12x128xf32> to vector<12x12x128xf32>
      %374 = arith.index_cast %arg11 : i32 to index
      %c19_297 = arith.constant 19 : index
      %375 = memref.load %arg2[%374, %c19_297] : memref<10x26xf32, #tpu.memory_space<smem>>
      %376 = vector.broadcast %375 : f32 to vector<12x12x128xf32>
      %377 = arith.mulf %373, %376 : vector<12x12x128xf32>
      %378 = arith.addf %371, %377 : vector<12x12x128xf32>
      %c0_298 = arith.constant 0 : index
      %c1_299 = arith.constant 1 : index
      %c2_300 = arith.constant 2 : index
      %c0_301 = arith.constant 0 : index
      %c0_302 = arith.constant 0 : index
      %379 = vector.load %arg1[%c0_298, %c1_299, %c2_300, %c0_301, %c0_302] : memref<2x2x14x14x128xf32, #tpu.memory_space<vmem>>, vector<1x1x12x12x128xf32>
      %380 = vector.shape_cast %379 : vector<1x1x12x12x128xf32> to vector<12x12x128xf32>
      %381 = arith.index_cast %arg11 : i32 to index
      %c20_303 = arith.constant 20 : index
      %382 = memref.load %arg2[%381, %c20_303] : memref<10x26xf32, #tpu.memory_space<smem>>
      %383 = vector.broadcast %382 : f32 to vector<12x12x128xf32>
      %384 = arith.mulf %380, %383 : vector<12x12x128xf32>
      %385 = arith.addf %378, %384 : vector<12x12x128xf32>
      %c0_304 = arith.constant 0 : index
      %c0_305 = arith.constant 0 : index
      %c2_306 = arith.constant 2 : index
      %c1_307 = arith.constant 1 : index
      %c0_308 = arith.constant 0 : index
      %386 = vector.load %arg1[%c0_304, %c0_305, %c2_306, %c1_307, %c0_308] : memref<2x2x14x14x128xf32, #tpu.memory_space<vmem>>, vector<1x1x12x12x128xf32>
      %387 = vector.shape_cast %386 : vector<1x1x12x12x128xf32> to vector<12x12x128xf32>
      %388 = arith.index_cast %arg11 : i32 to index
      %c21_309 = arith.constant 21 : index
      %389 = memref.load %arg2[%388, %c21_309] : memref<10x26xf32, #tpu.memory_space<smem>>
      %390 = vector.broadcast %389 : f32 to vector<12x12x128xf32>
      %391 = arith.mulf %387, %390 : vector<12x12x128xf32>
      %392 = arith.addf %385, %391 : vector<12x12x128xf32>
      %c0_310 = arith.constant 0 : index
      %c1_311 = arith.constant 1 : index
      %c2_312 = arith.constant 2 : index
      %c1_313 = arith.constant 1 : index
      %c0_314 = arith.constant 0 : index
      %393 = vector.load %arg1[%c0_310, %c1_311, %c2_312, %c1_313, %c0_314] : memref<2x2x14x14x128xf32, #tpu.memory_space<vmem>>, vector<1x1x12x12x128xf32>
      %394 = vector.shape_cast %393 : vector<1x1x12x12x128xf32> to vector<12x12x128xf32>
      %395 = arith.index_cast %arg11 : i32 to index
      %c22_315 = arith.constant 22 : index
      %396 = memref.load %arg2[%395, %c22_315] : memref<10x26xf32, #tpu.memory_space<smem>>
      %397 = vector.broadcast %396 : f32 to vector<12x12x128xf32>
      %398 = arith.mulf %394, %397 : vector<12x12x128xf32>
      %399 = arith.addf %392, %398 : vector<12x12x128xf32>
      %c0_316 = arith.constant 0 : index
      %c0_317 = arith.constant 0 : index
      %c2_318 = arith.constant 2 : index
      %c2_319 = arith.constant 2 : index
      %c0_320 = arith.constant 0 : index
      %400 = vector.load %arg1[%c0_316, %c0_317, %c2_318, %c2_319, %c0_320] : memref<2x2x14x14x128xf32, #tpu.memory_space<vmem>>, vector<1x1x12x12x128xf32>
      %401 = vector.shape_cast %400 : vector<1x1x12x12x128xf32> to vector<12x12x128xf32>
      %402 = arith.index_cast %arg11 : i32 to index
      %c23_321 = arith.constant 23 : index
      %403 = memref.load %arg2[%402, %c23_321] : memref<10x26xf32, #tpu.memory_space<smem>>
      %404 = vector.broadcast %403 : f32 to vector<12x12x128xf32>
      %405 = arith.mulf %401, %404 : vector<12x12x128xf32>
      %406 = arith.addf %399, %405 : vector<12x12x128xf32>
      %c0_322 = arith.constant 0 : index
      %c1_323 = arith.constant 1 : index
      %c2_324 = arith.constant 2 : index
      %c2_325 = arith.constant 2 : index
      %c0_326 = arith.constant 0 : index
      %407 = vector.load %arg1[%c0_322, %c1_323, %c2_324, %c2_325, %c0_326] : memref<2x2x14x14x128xf32, #tpu.memory_space<vmem>>, vector<1x1x12x12x128xf32>
      %408 = vector.shape_cast %407 : vector<1x1x12x12x128xf32> to vector<12x12x128xf32>
      %409 = arith.index_cast %arg11 : i32 to index
      %c24_327 = arith.constant 24 : index
      %410 = memref.load %arg2[%409, %c24_327] : memref<10x26xf32, #tpu.memory_space<smem>>
      %411 = vector.broadcast %410 : f32 to vector<12x12x128xf32>
      %412 = arith.mulf %408, %411 : vector<12x12x128xf32>
      %413 = arith.addf %406, %412 : vector<12x12x128xf32>
      %414 = arith.maximumf %239, %413 : vector<12x12x128xf32>
      %c1_328 = arith.constant 1 : index
      %c0_329 = arith.constant 0 : index
      %c0_330 = arith.constant 0 : index
      %c0_331 = arith.constant 0 : index
      %c0_332 = arith.constant 0 : index
      %415 = vector.load %arg1[%c1_328, %c0_329, %c0_330, %c0_331, %c0_332] : memref<2x2x14x14x128xf32, #tpu.memory_space<vmem>>, vector<1x1x12x12x128xf32>
      %416 = vector.shape_cast %415 : vector<1x1x12x12x128xf32> to vector<12x12x128xf32>
      %417 = arith.index_cast %arg11 : i32 to index
      %c0_333 = arith.constant 0 : index
      %418 = memref.load %arg2[%417, %c0_333] : memref<10x26xf32, #tpu.memory_space<smem>>
      %419 = vector.broadcast %418 : f32 to vector<12x12x128xf32>
      %420 = arith.mulf %416, %419 : vector<12x12x128xf32>
      %c1_334 = arith.constant 1 : index
      %c1_335 = arith.constant 1 : index
      %c0_336 = arith.constant 0 : index
      %c0_337 = arith.constant 0 : index
      %c0_338 = arith.constant 0 : index
      %421 = vector.load %arg1[%c1_334, %c1_335, %c0_336, %c0_337, %c0_338] : memref<2x2x14x14x128xf32, #tpu.memory_space<vmem>>, vector<1x1x12x12x128xf32>
      %422 = vector.shape_cast %421 : vector<1x1x12x12x128xf32> to vector<12x12x128xf32>
      %423 = arith.index_cast %arg11 : i32 to index
      %c1_339 = arith.constant 1 : index
      %424 = memref.load %arg2[%423, %c1_339] : memref<10x26xf32, #tpu.memory_space<smem>>
      %425 = vector.broadcast %424 : f32 to vector<12x12x128xf32>
      %426 = arith.mulf %422, %425 : vector<12x12x128xf32>
      %427 = arith.addf %420, %426 : vector<12x12x128xf32>
      %c1_340 = arith.constant 1 : index
      %c0_341 = arith.constant 0 : index
      %c0_342 = arith.constant 0 : index
      %c1_343 = arith.constant 1 : index
      %c0_344 = arith.constant 0 : index
      %428 = vector.load %arg1[%c1_340, %c0_341, %c0_342, %c1_343, %c0_344] : memref<2x2x14x14x128xf32, #tpu.memory_space<vmem>>, vector<1x1x12x12x128xf32>
      %429 = vector.shape_cast %428 : vector<1x1x12x12x128xf32> to vector<12x12x128xf32>
      %430 = arith.index_cast %arg11 : i32 to index
      %c2_345 = arith.constant 2 : index
      %431 = memref.load %arg2[%430, %c2_345] : memref<10x26xf32, #tpu.memory_space<smem>>
      %432 = vector.broadcast %431 : f32 to vector<12x12x128xf32>
      %433 = arith.mulf %429, %432 : vector<12x12x128xf32>
      %434 = arith.addf %427, %433 : vector<12x12x128xf32>
      %c1_346 = arith.constant 1 : index
      %c1_347 = arith.constant 1 : index
      %c0_348 = arith.constant 0 : index
      %c1_349 = arith.constant 1 : index
      %c0_350 = arith.constant 0 : index
      %435 = vector.load %arg1[%c1_346, %c1_347, %c0_348, %c1_349, %c0_350] : memref<2x2x14x14x128xf32, #tpu.memory_space<vmem>>, vector<1x1x12x12x128xf32>
      %436 = vector.shape_cast %435 : vector<1x1x12x12x128xf32> to vector<12x12x128xf32>
      %437 = arith.index_cast %arg11 : i32 to index
      %c3_351 = arith.constant 3 : index
      %438 = memref.load %arg2[%437, %c3_351] : memref<10x26xf32, #tpu.memory_space<smem>>
      %439 = vector.broadcast %438 : f32 to vector<12x12x128xf32>
      %440 = arith.mulf %436, %439 : vector<12x12x128xf32>
      %441 = arith.addf %434, %440 : vector<12x12x128xf32>
      %c1_352 = arith.constant 1 : index
      %c0_353 = arith.constant 0 : index
      %c0_354 = arith.constant 0 : index
      %c2_355 = arith.constant 2 : index
      %c0_356 = arith.constant 0 : index
      %442 = vector.load %arg1[%c1_352, %c0_353, %c0_354, %c2_355, %c0_356] : memref<2x2x14x14x128xf32, #tpu.memory_space<vmem>>, vector<1x1x12x12x128xf32>
      %443 = vector.shape_cast %442 : vector<1x1x12x12x128xf32> to vector<12x12x128xf32>
      %444 = arith.index_cast %arg11 : i32 to index
      %c4_357 = arith.constant 4 : index
      %445 = memref.load %arg2[%444, %c4_357] : memref<10x26xf32, #tpu.memory_space<smem>>
      %446 = vector.broadcast %445 : f32 to vector<12x12x128xf32>
      %447 = arith.mulf %443, %446 : vector<12x12x128xf32>
      %448 = arith.addf %441, %447 : vector<12x12x128xf32>
      %c0_358 = arith.constant 0 : index
      %c0_359 = arith.constant 0 : index
      %c1_360 = arith.constant 1 : index
      %c0_361 = arith.constant 0 : index
      %c0_362 = arith.constant 0 : index
      %449 = vector.load %arg1[%c0_358, %c0_359, %c1_360, %c0_361, %c0_362] : memref<2x2x14x14x128xf32, #tpu.memory_space<vmem>>, vector<1x1x12x12x128xf32>
      %450 = vector.shape_cast %449 : vector<1x1x12x12x128xf32> to vector<12x12x128xf32>
      %451 = arith.index_cast %arg11 : i32 to index
      %c5_363 = arith.constant 5 : index
      %452 = memref.load %arg2[%451, %c5_363] : memref<10x26xf32, #tpu.memory_space<smem>>
      %453 = vector.broadcast %452 : f32 to vector<12x12x128xf32>
      %454 = arith.mulf %450, %453 : vector<12x12x128xf32>
      %455 = arith.addf %448, %454 : vector<12x12x128xf32>
      %c0_364 = arith.constant 0 : index
      %c1_365 = arith.constant 1 : index
      %c1_366 = arith.constant 1 : index
      %c0_367 = arith.constant 0 : index
      %c0_368 = arith.constant 0 : index
      %456 = vector.load %arg1[%c0_364, %c1_365, %c1_366, %c0_367, %c0_368] : memref<2x2x14x14x128xf32, #tpu.memory_space<vmem>>, vector<1x1x12x12x128xf32>
      %457 = vector.shape_cast %456 : vector<1x1x12x12x128xf32> to vector<12x12x128xf32>
      %458 = arith.index_cast %arg11 : i32 to index
      %c6_369 = arith.constant 6 : index
      %459 = memref.load %arg2[%458, %c6_369] : memref<10x26xf32, #tpu.memory_space<smem>>
      %460 = vector.broadcast %459 : f32 to vector<12x12x128xf32>
      %461 = arith.mulf %457, %460 : vector<12x12x128xf32>
      %462 = arith.addf %455, %461 : vector<12x12x128xf32>
      %c0_370 = arith.constant 0 : index
      %c0_371 = arith.constant 0 : index
      %c1_372 = arith.constant 1 : index
      %c1_373 = arith.constant 1 : index
      %c0_374 = arith.constant 0 : index
      %463 = vector.load %arg1[%c0_370, %c0_371, %c1_372, %c1_373, %c0_374] : memref<2x2x14x14x128xf32, #tpu.memory_space<vmem>>, vector<1x1x12x12x128xf32>
      %464 = vector.shape_cast %463 : vector<1x1x12x12x128xf32> to vector<12x12x128xf32>
      %465 = arith.index_cast %arg11 : i32 to index
      %c7_375 = arith.constant 7 : index
      %466 = memref.load %arg2[%465, %c7_375] : memref<10x26xf32, #tpu.memory_space<smem>>
      %467 = vector.broadcast %466 : f32 to vector<12x12x128xf32>
      %468 = arith.mulf %464, %467 : vector<12x12x128xf32>
      %469 = arith.addf %462, %468 : vector<12x12x128xf32>
      %c0_376 = arith.constant 0 : index
      %c1_377 = arith.constant 1 : index
      %c1_378 = arith.constant 1 : index
      %c1_379 = arith.constant 1 : index
      %c0_380 = arith.constant 0 : index
      %470 = vector.load %arg1[%c0_376, %c1_377, %c1_378, %c1_379, %c0_380] : memref<2x2x14x14x128xf32, #tpu.memory_space<vmem>>, vector<1x1x12x12x128xf32>
      %471 = vector.shape_cast %470 : vector<1x1x12x12x128xf32> to vector<12x12x128xf32>
      %472 = arith.index_cast %arg11 : i32 to index
      %c8_381 = arith.constant 8 : index
      %473 = memref.load %arg2[%472, %c8_381] : memref<10x26xf32, #tpu.memory_space<smem>>
      %474 = vector.broadcast %473 : f32 to vector<12x12x128xf32>
      %475 = arith.mulf %471, %474 : vector<12x12x128xf32>
      %476 = arith.addf %469, %475 : vector<12x12x128xf32>
      %c0_382 = arith.constant 0 : index
      %c0_383 = arith.constant 0 : index
      %c1_384 = arith.constant 1 : index
      %c2_385 = arith.constant 2 : index
      %c0_386 = arith.constant 0 : index
      %477 = vector.load %arg1[%c0_382, %c0_383, %c1_384, %c2_385, %c0_386] : memref<2x2x14x14x128xf32, #tpu.memory_space<vmem>>, vector<1x1x12x12x128xf32>
      %478 = vector.shape_cast %477 : vector<1x1x12x12x128xf32> to vector<12x12x128xf32>
      %479 = arith.index_cast %arg11 : i32 to index
      %c9_387 = arith.constant 9 : index
      %480 = memref.load %arg2[%479, %c9_387] : memref<10x26xf32, #tpu.memory_space<smem>>
      %481 = vector.broadcast %480 : f32 to vector<12x12x128xf32>
      %482 = arith.mulf %478, %481 : vector<12x12x128xf32>
      %483 = arith.addf %476, %482 : vector<12x12x128xf32>
      %c1_388 = arith.constant 1 : index
      %c0_389 = arith.constant 0 : index
      %c1_390 = arith.constant 1 : index
      %c0_391 = arith.constant 0 : index
      %c0_392 = arith.constant 0 : index
      %484 = vector.load %arg1[%c1_388, %c0_389, %c1_390, %c0_391, %c0_392] : memref<2x2x14x14x128xf32, #tpu.memory_space<vmem>>, vector<1x1x12x12x128xf32>
      %485 = vector.shape_cast %484 : vector<1x1x12x12x128xf32> to vector<12x12x128xf32>
      %486 = arith.index_cast %arg11 : i32 to index
      %c10_393 = arith.constant 10 : index
      %487 = memref.load %arg2[%486, %c10_393] : memref<10x26xf32, #tpu.memory_space<smem>>
      %488 = vector.broadcast %487 : f32 to vector<12x12x128xf32>
      %489 = arith.mulf %485, %488 : vector<12x12x128xf32>
      %490 = arith.addf %483, %489 : vector<12x12x128xf32>
      %c1_394 = arith.constant 1 : index
      %c1_395 = arith.constant 1 : index
      %c1_396 = arith.constant 1 : index
      %c0_397 = arith.constant 0 : index
      %c0_398 = arith.constant 0 : index
      %491 = vector.load %arg1[%c1_394, %c1_395, %c1_396, %c0_397, %c0_398] : memref<2x2x14x14x128xf32, #tpu.memory_space<vmem>>, vector<1x1x12x12x128xf32>
      %492 = vector.shape_cast %491 : vector<1x1x12x12x128xf32> to vector<12x12x128xf32>
      %493 = arith.index_cast %arg11 : i32 to index
      %c11_399 = arith.constant 11 : index
      %494 = memref.load %arg2[%493, %c11_399] : memref<10x26xf32, #tpu.memory_space<smem>>
      %495 = vector.broadcast %494 : f32 to vector<12x12x128xf32>
      %496 = arith.mulf %492, %495 : vector<12x12x128xf32>
      %497 = arith.addf %490, %496 : vector<12x12x128xf32>
      %c1_400 = arith.constant 1 : index
      %c0_401 = arith.constant 0 : index
      %c1_402 = arith.constant 1 : index
      %c1_403 = arith.constant 1 : index
      %c0_404 = arith.constant 0 : index
      %498 = vector.load %arg1[%c1_400, %c0_401, %c1_402, %c1_403, %c0_404] : memref<2x2x14x14x128xf32, #tpu.memory_space<vmem>>, vector<1x1x12x12x128xf32>
      %499 = vector.shape_cast %498 : vector<1x1x12x12x128xf32> to vector<12x12x128xf32>
      %500 = arith.index_cast %arg11 : i32 to index
      %c12_405 = arith.constant 12 : index
      %501 = memref.load %arg2[%500, %c12_405] : memref<10x26xf32, #tpu.memory_space<smem>>
      %502 = vector.broadcast %501 : f32 to vector<12x12x128xf32>
      %503 = arith.mulf %499, %502 : vector<12x12x128xf32>
      %504 = arith.addf %497, %503 : vector<12x12x128xf32>
      %c1_406 = arith.constant 1 : index
      %c1_407 = arith.constant 1 : index
      %c1_408 = arith.constant 1 : index
      %c1_409 = arith.constant 1 : index
      %c0_410 = arith.constant 0 : index
      %505 = vector.load %arg1[%c1_406, %c1_407, %c1_408, %c1_409, %c0_410] : memref<2x2x14x14x128xf32, #tpu.memory_space<vmem>>, vector<1x1x12x12x128xf32>
      %506 = vector.shape_cast %505 : vector<1x1x12x12x128xf32> to vector<12x12x128xf32>
      %507 = arith.index_cast %arg11 : i32 to index
      %c13_411 = arith.constant 13 : index
      %508 = memref.load %arg2[%507, %c13_411] : memref<10x26xf32, #tpu.memory_space<smem>>
      %509 = vector.broadcast %508 : f32 to vector<12x12x128xf32>
      %510 = arith.mulf %506, %509 : vector<12x12x128xf32>
      %511 = arith.addf %504, %510 : vector<12x12x128xf32>
      %c1_412 = arith.constant 1 : index
      %c0_413 = arith.constant 0 : index
      %c1_414 = arith.constant 1 : index
      %c2_415 = arith.constant 2 : index
      %c0_416 = arith.constant 0 : index
      %512 = vector.load %arg1[%c1_412, %c0_413, %c1_414, %c2_415, %c0_416] : memref<2x2x14x14x128xf32, #tpu.memory_space<vmem>>, vector<1x1x12x12x128xf32>
      %513 = vector.shape_cast %512 : vector<1x1x12x12x128xf32> to vector<12x12x128xf32>
      %514 = arith.index_cast %arg11 : i32 to index
      %c14_417 = arith.constant 14 : index
      %515 = memref.load %arg2[%514, %c14_417] : memref<10x26xf32, #tpu.memory_space<smem>>
      %516 = vector.broadcast %515 : f32 to vector<12x12x128xf32>
      %517 = arith.mulf %513, %516 : vector<12x12x128xf32>
      %518 = arith.addf %511, %517 : vector<12x12x128xf32>
      %c0_418 = arith.constant 0 : index
      %c0_419 = arith.constant 0 : index
      %c2_420 = arith.constant 2 : index
      %c0_421 = arith.constant 0 : index
      %c0_422 = arith.constant 0 : index
      %519 = vector.load %arg1[%c0_418, %c0_419, %c2_420, %c0_421, %c0_422] : memref<2x2x14x14x128xf32, #tpu.memory_space<vmem>>, vector<1x1x12x12x128xf32>
      %520 = vector.shape_cast %519 : vector<1x1x12x12x128xf32> to vector<12x12x128xf32>
      %521 = arith.index_cast %arg11 : i32 to index
      %c15_423 = arith.constant 15 : index
      %522 = memref.load %arg2[%521, %c15_423] : memref<10x26xf32, #tpu.memory_space<smem>>
      %523 = vector.broadcast %522 : f32 to vector<12x12x128xf32>
      %524 = arith.mulf %520, %523 : vector<12x12x128xf32>
      %525 = arith.addf %518, %524 : vector<12x12x128xf32>
      %c0_424 = arith.constant 0 : index
      %c1_425 = arith.constant 1 : index
      %c2_426 = arith.constant 2 : index
      %c0_427 = arith.constant 0 : index
      %c0_428 = arith.constant 0 : index
      %526 = vector.load %arg1[%c0_424, %c1_425, %c2_426, %c0_427, %c0_428] : memref<2x2x14x14x128xf32, #tpu.memory_space<vmem>>, vector<1x1x12x12x128xf32>
      %527 = vector.shape_cast %526 : vector<1x1x12x12x128xf32> to vector<12x12x128xf32>
      %528 = arith.index_cast %arg11 : i32 to index
      %c16_429 = arith.constant 16 : index
      %529 = memref.load %arg2[%528, %c16_429] : memref<10x26xf32, #tpu.memory_space<smem>>
      %530 = vector.broadcast %529 : f32 to vector<12x12x128xf32>
      %531 = arith.mulf %527, %530 : vector<12x12x128xf32>
      %532 = arith.addf %525, %531 : vector<12x12x128xf32>
      %c0_430 = arith.constant 0 : index
      %c0_431 = arith.constant 0 : index
      %c2_432 = arith.constant 2 : index
      %c1_433 = arith.constant 1 : index
      %c0_434 = arith.constant 0 : index
      %533 = vector.load %arg1[%c0_430, %c0_431, %c2_432, %c1_433, %c0_434] : memref<2x2x14x14x128xf32, #tpu.memory_space<vmem>>, vector<1x1x12x12x128xf32>
      %534 = vector.shape_cast %533 : vector<1x1x12x12x128xf32> to vector<12x12x128xf32>
      %535 = arith.index_cast %arg11 : i32 to index
      %c17_435 = arith.constant 17 : index
      %536 = memref.load %arg2[%535, %c17_435] : memref<10x26xf32, #tpu.memory_space<smem>>
      %537 = vector.broadcast %536 : f32 to vector<12x12x128xf32>
      %538 = arith.mulf %534, %537 : vector<12x12x128xf32>
      %539 = arith.addf %532, %538 : vector<12x12x128xf32>
      %c0_436 = arith.constant 0 : index
      %c1_437 = arith.constant 1 : index
      %c2_438 = arith.constant 2 : index
      %c1_439 = arith.constant 1 : index
      %c0_440 = arith.constant 0 : index
      %540 = vector.load %arg1[%c0_436, %c1_437, %c2_438, %c1_439, %c0_440] : memref<2x2x14x14x128xf32, #tpu.memory_space<vmem>>, vector<1x1x12x12x128xf32>
      %541 = vector.shape_cast %540 : vector<1x1x12x12x128xf32> to vector<12x12x128xf32>
      %542 = arith.index_cast %arg11 : i32 to index
      %c18_441 = arith.constant 18 : index
      %543 = memref.load %arg2[%542, %c18_441] : memref<10x26xf32, #tpu.memory_space<smem>>
      %544 = vector.broadcast %543 : f32 to vector<12x12x128xf32>
      %545 = arith.mulf %541, %544 : vector<12x12x128xf32>
      %546 = arith.addf %539, %545 : vector<12x12x128xf32>
      %c0_442 = arith.constant 0 : index
      %c0_443 = arith.constant 0 : index
      %c2_444 = arith.constant 2 : index
      %c2_445 = arith.constant 2 : index
      %c0_446 = arith.constant 0 : index
      %547 = vector.load %arg1[%c0_442, %c0_443, %c2_444, %c2_445, %c0_446] : memref<2x2x14x14x128xf32, #tpu.memory_space<vmem>>, vector<1x1x12x12x128xf32>
      %548 = vector.shape_cast %547 : vector<1x1x12x12x128xf32> to vector<12x12x128xf32>
      %549 = arith.index_cast %arg11 : i32 to index
      %c19_447 = arith.constant 19 : index
      %550 = memref.load %arg2[%549, %c19_447] : memref<10x26xf32, #tpu.memory_space<smem>>
      %551 = vector.broadcast %550 : f32 to vector<12x12x128xf32>
      %552 = arith.mulf %548, %551 : vector<12x12x128xf32>
      %553 = arith.addf %546, %552 : vector<12x12x128xf32>
      %c1_448 = arith.constant 1 : index
      %c0_449 = arith.constant 0 : index
      %c2_450 = arith.constant 2 : index
      %c0_451 = arith.constant 0 : index
      %c0_452 = arith.constant 0 : index
      %554 = vector.load %arg1[%c1_448, %c0_449, %c2_450, %c0_451, %c0_452] : memref<2x2x14x14x128xf32, #tpu.memory_space<vmem>>, vector<1x1x12x12x128xf32>
      %555 = vector.shape_cast %554 : vector<1x1x12x12x128xf32> to vector<12x12x128xf32>
      %556 = arith.index_cast %arg11 : i32 to index
      %c20_453 = arith.constant 20 : index
      %557 = memref.load %arg2[%556, %c20_453] : memref<10x26xf32, #tpu.memory_space<smem>>
      %558 = vector.broadcast %557 : f32 to vector<12x12x128xf32>
      %559 = arith.mulf %555, %558 : vector<12x12x128xf32>
      %560 = arith.addf %553, %559 : vector<12x12x128xf32>
      %c1_454 = arith.constant 1 : index
      %c1_455 = arith.constant 1 : index
      %c2_456 = arith.constant 2 : index
      %c0_457 = arith.constant 0 : index
      %c0_458 = arith.constant 0 : index
      %561 = vector.load %arg1[%c1_454, %c1_455, %c2_456, %c0_457, %c0_458] : memref<2x2x14x14x128xf32, #tpu.memory_space<vmem>>, vector<1x1x12x12x128xf32>
      %562 = vector.shape_cast %561 : vector<1x1x12x12x128xf32> to vector<12x12x128xf32>
      %563 = arith.index_cast %arg11 : i32 to index
      %c21_459 = arith.constant 21 : index
      %564 = memref.load %arg2[%563, %c21_459] : memref<10x26xf32, #tpu.memory_space<smem>>
      %565 = vector.broadcast %564 : f32 to vector<12x12x128xf32>
      %566 = arith.mulf %562, %565 : vector<12x12x128xf32>
      %567 = arith.addf %560, %566 : vector<12x12x128xf32>
      %c1_460 = arith.constant 1 : index
      %c0_461 = arith.constant 0 : index
      %c2_462 = arith.constant 2 : index
      %c1_463 = arith.constant 1 : index
      %c0_464 = arith.constant 0 : index
      %568 = vector.load %arg1[%c1_460, %c0_461, %c2_462, %c1_463, %c0_464] : memref<2x2x14x14x128xf32, #tpu.memory_space<vmem>>, vector<1x1x12x12x128xf32>
      %569 = vector.shape_cast %568 : vector<1x1x12x12x128xf32> to vector<12x12x128xf32>
      %570 = arith.index_cast %arg11 : i32 to index
      %c22_465 = arith.constant 22 : index
      %571 = memref.load %arg2[%570, %c22_465] : memref<10x26xf32, #tpu.memory_space<smem>>
      %572 = vector.broadcast %571 : f32 to vector<12x12x128xf32>
      %573 = arith.mulf %569, %572 : vector<12x12x128xf32>
      %574 = arith.addf %567, %573 : vector<12x12x128xf32>
      %c1_466 = arith.constant 1 : index
      %c1_467 = arith.constant 1 : index
      %c2_468 = arith.constant 2 : index
      %c1_469 = arith.constant 1 : index
      %c0_470 = arith.constant 0 : index
      %575 = vector.load %arg1[%c1_466, %c1_467, %c2_468, %c1_469, %c0_470] : memref<2x2x14x14x128xf32, #tpu.memory_space<vmem>>, vector<1x1x12x12x128xf32>
      %576 = vector.shape_cast %575 : vector<1x1x12x12x128xf32> to vector<12x12x128xf32>
      %577 = arith.index_cast %arg11 : i32 to index
      %c23_471 = arith.constant 23 : index
      %578 = memref.load %arg2[%577, %c23_471] : memref<10x26xf32, #tpu.memory_space<smem>>
      %579 = vector.broadcast %578 : f32 to vector<12x12x128xf32>
      %580 = arith.mulf %576, %579 : vector<12x12x128xf32>
      %581 = arith.addf %574, %580 : vector<12x12x128xf32>
      %c1_472 = arith.constant 1 : index
      %c0_473 = arith.constant 0 : index
      %c2_474 = arith.constant 2 : index
      %c2_475 = arith.constant 2 : index
      %c0_476 = arith.constant 0 : index
      %582 = vector.load %arg1[%c1_472, %c0_473, %c2_474, %c2_475, %c0_476] : memref<2x2x14x14x128xf32, #tpu.memory_space<vmem>>, vector<1x1x12x12x128xf32>
      %583 = vector.shape_cast %582 : vector<1x1x12x12x128xf32> to vector<12x12x128xf32>
      %584 = arith.index_cast %arg11 : i32 to index
      %c24_477 = arith.constant 24 : index
      %585 = memref.load %arg2[%584, %c24_477] : memref<10x26xf32, #tpu.memory_space<smem>>
      %586 = vector.broadcast %585 : f32 to vector<12x12x128xf32>
      %587 = arith.mulf %583, %586 : vector<12x12x128xf32>
      %588 = arith.addf %581, %587 : vector<12x12x128xf32>
      %589 = arith.maximumf %414, %588 : vector<12x12x128xf32>
      %c1_478 = arith.constant 1 : index
      %c1_479 = arith.constant 1 : index
      %c0_480 = arith.constant 0 : index
      %c0_481 = arith.constant 0 : index
      %c0_482 = arith.constant 0 : index
      %590 = vector.load %arg1[%c1_478, %c1_479, %c0_480, %c0_481, %c0_482] : memref<2x2x14x14x128xf32, #tpu.memory_space<vmem>>, vector<1x1x12x12x128xf32>
      %591 = vector.shape_cast %590 : vector<1x1x12x12x128xf32> to vector<12x12x128xf32>
      %592 = arith.index_cast %arg11 : i32 to index
      %c0_483 = arith.constant 0 : index
      %593 = memref.load %arg2[%592, %c0_483] : memref<10x26xf32, #tpu.memory_space<smem>>
      %594 = vector.broadcast %593 : f32 to vector<12x12x128xf32>
      %595 = arith.mulf %591, %594 : vector<12x12x128xf32>
      %c1_484 = arith.constant 1 : index
      %c0_485 = arith.constant 0 : index
      %c0_486 = arith.constant 0 : index
      %c1_487 = arith.constant 1 : index
      %c0_488 = arith.constant 0 : index
      %596 = vector.load %arg1[%c1_484, %c0_485, %c0_486, %c1_487, %c0_488] : memref<2x2x14x14x128xf32, #tpu.memory_space<vmem>>, vector<1x1x12x12x128xf32>
      %597 = vector.shape_cast %596 : vector<1x1x12x12x128xf32> to vector<12x12x128xf32>
      %598 = arith.index_cast %arg11 : i32 to index
      %c1_489 = arith.constant 1 : index
      %599 = memref.load %arg2[%598, %c1_489] : memref<10x26xf32, #tpu.memory_space<smem>>
      %600 = vector.broadcast %599 : f32 to vector<12x12x128xf32>
      %601 = arith.mulf %597, %600 : vector<12x12x128xf32>
      %602 = arith.addf %595, %601 : vector<12x12x128xf32>
      %c1_490 = arith.constant 1 : index
      %c1_491 = arith.constant 1 : index
      %c0_492 = arith.constant 0 : index
      %c1_493 = arith.constant 1 : index
      %c0_494 = arith.constant 0 : index
      %603 = vector.load %arg1[%c1_490, %c1_491, %c0_492, %c1_493, %c0_494] : memref<2x2x14x14x128xf32, #tpu.memory_space<vmem>>, vector<1x1x12x12x128xf32>
      %604 = vector.shape_cast %603 : vector<1x1x12x12x128xf32> to vector<12x12x128xf32>
      %605 = arith.index_cast %arg11 : i32 to index
      %c2_495 = arith.constant 2 : index
      %606 = memref.load %arg2[%605, %c2_495] : memref<10x26xf32, #tpu.memory_space<smem>>
      %607 = vector.broadcast %606 : f32 to vector<12x12x128xf32>
      %608 = arith.mulf %604, %607 : vector<12x12x128xf32>
      %609 = arith.addf %602, %608 : vector<12x12x128xf32>
      %c1_496 = arith.constant 1 : index
      %c0_497 = arith.constant 0 : index
      %c0_498 = arith.constant 0 : index
      %c2_499 = arith.constant 2 : index
      %c0_500 = arith.constant 0 : index
      %610 = vector.load %arg1[%c1_496, %c0_497, %c0_498, %c2_499, %c0_500] : memref<2x2x14x14x128xf32, #tpu.memory_space<vmem>>, vector<1x1x12x12x128xf32>
      %611 = vector.shape_cast %610 : vector<1x1x12x12x128xf32> to vector<12x12x128xf32>
      %612 = arith.index_cast %arg11 : i32 to index
      %c3_501 = arith.constant 3 : index
      %613 = memref.load %arg2[%612, %c3_501] : memref<10x26xf32, #tpu.memory_space<smem>>
      %614 = vector.broadcast %613 : f32 to vector<12x12x128xf32>
      %615 = arith.mulf %611, %614 : vector<12x12x128xf32>
      %616 = arith.addf %609, %615 : vector<12x12x128xf32>
      %c1_502 = arith.constant 1 : index
      %c1_503 = arith.constant 1 : index
      %c0_504 = arith.constant 0 : index
      %c2_505 = arith.constant 2 : index
      %c0_506 = arith.constant 0 : index
      %617 = vector.load %arg1[%c1_502, %c1_503, %c0_504, %c2_505, %c0_506] : memref<2x2x14x14x128xf32, #tpu.memory_space<vmem>>, vector<1x1x12x12x128xf32>
      %618 = vector.shape_cast %617 : vector<1x1x12x12x128xf32> to vector<12x12x128xf32>
      %619 = arith.index_cast %arg11 : i32 to index
      %c4_507 = arith.constant 4 : index
      %620 = memref.load %arg2[%619, %c4_507] : memref<10x26xf32, #tpu.memory_space<smem>>
      %621 = vector.broadcast %620 : f32 to vector<12x12x128xf32>
      %622 = arith.mulf %618, %621 : vector<12x12x128xf32>
      %623 = arith.addf %616, %622 : vector<12x12x128xf32>
      %c0_508 = arith.constant 0 : index
      %c1_509 = arith.constant 1 : index
      %c1_510 = arith.constant 1 : index
      %c0_511 = arith.constant 0 : index
      %c0_512 = arith.constant 0 : index
      %624 = vector.load %arg1[%c0_508, %c1_509, %c1_510, %c0_511, %c0_512] : memref<2x2x14x14x128xf32, #tpu.memory_space<vmem>>, vector<1x1x12x12x128xf32>
      %625 = vector.shape_cast %624 : vector<1x1x12x12x128xf32> to vector<12x12x128xf32>
      %626 = arith.index_cast %arg11 : i32 to index
      %c5_513 = arith.constant 5 : index
      %627 = memref.load %arg2[%626, %c5_513] : memref<10x26xf32, #tpu.memory_space<smem>>
      %628 = vector.broadcast %627 : f32 to vector<12x12x128xf32>
      %629 = arith.mulf %625, %628 : vector<12x12x128xf32>
      %630 = arith.addf %623, %629 : vector<12x12x128xf32>
      %c0_514 = arith.constant 0 : index
      %c0_515 = arith.constant 0 : index
      %c1_516 = arith.constant 1 : index
      %c1_517 = arith.constant 1 : index
      %c0_518 = arith.constant 0 : index
      %631 = vector.load %arg1[%c0_514, %c0_515, %c1_516, %c1_517, %c0_518] : memref<2x2x14x14x128xf32, #tpu.memory_space<vmem>>, vector<1x1x12x12x128xf32>
      %632 = vector.shape_cast %631 : vector<1x1x12x12x128xf32> to vector<12x12x128xf32>
      %633 = arith.index_cast %arg11 : i32 to index
      %c6_519 = arith.constant 6 : index
      %634 = memref.load %arg2[%633, %c6_519] : memref<10x26xf32, #tpu.memory_space<smem>>
      %635 = vector.broadcast %634 : f32 to vector<12x12x128xf32>
      %636 = arith.mulf %632, %635 : vector<12x12x128xf32>
      %637 = arith.addf %630, %636 : vector<12x12x128xf32>
      %c0_520 = arith.constant 0 : index
      %c1_521 = arith.constant 1 : index
      %c1_522 = arith.constant 1 : index
      %c1_523 = arith.constant 1 : index
      %c0_524 = arith.constant 0 : index
      %638 = vector.load %arg1[%c0_520, %c1_521, %c1_522, %c1_523, %c0_524] : memref<2x2x14x14x128xf32, #tpu.memory_space<vmem>>, vector<1x1x12x12x128xf32>
      %639 = vector.shape_cast %638 : vector<1x1x12x12x128xf32> to vector<12x12x128xf32>
      %640 = arith.index_cast %arg11 : i32 to index
      %c7_525 = arith.constant 7 : index
      %641 = memref.load %arg2[%640, %c7_525] : memref<10x26xf32, #tpu.memory_space<smem>>
      %642 = vector.broadcast %641 : f32 to vector<12x12x128xf32>
      %643 = arith.mulf %639, %642 : vector<12x12x128xf32>
      %644 = arith.addf %637, %643 : vector<12x12x128xf32>
      %c0_526 = arith.constant 0 : index
      %c0_527 = arith.constant 0 : index
      %c1_528 = arith.constant 1 : index
      %c2_529 = arith.constant 2 : index
      %c0_530 = arith.constant 0 : index
      %645 = vector.load %arg1[%c0_526, %c0_527, %c1_528, %c2_529, %c0_530] : memref<2x2x14x14x128xf32, #tpu.memory_space<vmem>>, vector<1x1x12x12x128xf32>
      %646 = vector.shape_cast %645 : vector<1x1x12x12x128xf32> to vector<12x12x128xf32>
      %647 = arith.index_cast %arg11 : i32 to index
      %c8_531 = arith.constant 8 : index
      %648 = memref.load %arg2[%647, %c8_531] : memref<10x26xf32, #tpu.memory_space<smem>>
      %649 = vector.broadcast %648 : f32 to vector<12x12x128xf32>
      %650 = arith.mulf %646, %649 : vector<12x12x128xf32>
      %651 = arith.addf %644, %650 : vector<12x12x128xf32>
      %c0_532 = arith.constant 0 : index
      %c1_533 = arith.constant 1 : index
      %c1_534 = arith.constant 1 : index
      %c2_535 = arith.constant 2 : index
      %c0_536 = arith.constant 0 : index
      %652 = vector.load %arg1[%c0_532, %c1_533, %c1_534, %c2_535, %c0_536] : memref<2x2x14x14x128xf32, #tpu.memory_space<vmem>>, vector<1x1x12x12x128xf32>
      %653 = vector.shape_cast %652 : vector<1x1x12x12x128xf32> to vector<12x12x128xf32>
      %654 = arith.index_cast %arg11 : i32 to index
      %c9_537 = arith.constant 9 : index
      %655 = memref.load %arg2[%654, %c9_537] : memref<10x26xf32, #tpu.memory_space<smem>>
      %656 = vector.broadcast %655 : f32 to vector<12x12x128xf32>
      %657 = arith.mulf %653, %656 : vector<12x12x128xf32>
      %658 = arith.addf %651, %657 : vector<12x12x128xf32>
      %c1_538 = arith.constant 1 : index
      %c1_539 = arith.constant 1 : index
      %c1_540 = arith.constant 1 : index
      %c0_541 = arith.constant 0 : index
      %c0_542 = arith.constant 0 : index
      %659 = vector.load %arg1[%c1_538, %c1_539, %c1_540, %c0_541, %c0_542] : memref<2x2x14x14x128xf32, #tpu.memory_space<vmem>>, vector<1x1x12x12x128xf32>
      %660 = vector.shape_cast %659 : vector<1x1x12x12x128xf32> to vector<12x12x128xf32>
      %661 = arith.index_cast %arg11 : i32 to index
      %c10_543 = arith.constant 10 : index
      %662 = memref.load %arg2[%661, %c10_543] : memref<10x26xf32, #tpu.memory_space<smem>>
      %663 = vector.broadcast %662 : f32 to vector<12x12x128xf32>
      %664 = arith.mulf %660, %663 : vector<12x12x128xf32>
      %665 = arith.addf %658, %664 : vector<12x12x128xf32>
      %c1_544 = arith.constant 1 : index
      %c0_545 = arith.constant 0 : index
      %c1_546 = arith.constant 1 : index
      %c1_547 = arith.constant 1 : index
      %c0_548 = arith.constant 0 : index
      %666 = vector.load %arg1[%c1_544, %c0_545, %c1_546, %c1_547, %c0_548] : memref<2x2x14x14x128xf32, #tpu.memory_space<vmem>>, vector<1x1x12x12x128xf32>
      %667 = vector.shape_cast %666 : vector<1x1x12x12x128xf32> to vector<12x12x128xf32>
      %668 = arith.index_cast %arg11 : i32 to index
      %c11_549 = arith.constant 11 : index
      %669 = memref.load %arg2[%668, %c11_549] : memref<10x26xf32, #tpu.memory_space<smem>>
      %670 = vector.broadcast %669 : f32 to vector<12x12x128xf32>
      %671 = arith.mulf %667, %670 : vector<12x12x128xf32>
      %672 = arith.addf %665, %671 : vector<12x12x128xf32>
      %c1_550 = arith.constant 1 : index
      %c1_551 = arith.constant 1 : index
      %c1_552 = arith.constant 1 : index
      %c1_553 = arith.constant 1 : index
      %c0_554 = arith.constant 0 : index
      %673 = vector.load %arg1[%c1_550, %c1_551, %c1_552, %c1_553, %c0_554] : memref<2x2x14x14x128xf32, #tpu.memory_space<vmem>>, vector<1x1x12x12x128xf32>
      %674 = vector.shape_cast %673 : vector<1x1x12x12x128xf32> to vector<12x12x128xf32>
      %675 = arith.index_cast %arg11 : i32 to index
      %c12_555 = arith.constant 12 : index
      %676 = memref.load %arg2[%675, %c12_555] : memref<10x26xf32, #tpu.memory_space<smem>>
      %677 = vector.broadcast %676 : f32 to vector<12x12x128xf32>
      %678 = arith.mulf %674, %677 : vector<12x12x128xf32>
      %679 = arith.addf %672, %678 : vector<12x12x128xf32>
      %c1_556 = arith.constant 1 : index
      %c0_557 = arith.constant 0 : index
      %c1_558 = arith.constant 1 : index
      %c2_559 = arith.constant 2 : index
      %c0_560 = arith.constant 0 : index
      %680 = vector.load %arg1[%c1_556, %c0_557, %c1_558, %c2_559, %c0_560] : memref<2x2x14x14x128xf32, #tpu.memory_space<vmem>>, vector<1x1x12x12x128xf32>
      %681 = vector.shape_cast %680 : vector<1x1x12x12x128xf32> to vector<12x12x128xf32>
      %682 = arith.index_cast %arg11 : i32 to index
      %c13_561 = arith.constant 13 : index
      %683 = memref.load %arg2[%682, %c13_561] : memref<10x26xf32, #tpu.memory_space<smem>>
      %684 = vector.broadcast %683 : f32 to vector<12x12x128xf32>
      %685 = arith.mulf %681, %684 : vector<12x12x128xf32>
      %686 = arith.addf %679, %685 : vector<12x12x128xf32>
      %c1_562 = arith.constant 1 : index
      %c1_563 = arith.constant 1 : index
      %c1_564 = arith.constant 1 : index
      %c2_565 = arith.constant 2 : index
      %c0_566 = arith.constant 0 : index
      %687 = vector.load %arg1[%c1_562, %c1_563, %c1_564, %c2_565, %c0_566] : memref<2x2x14x14x128xf32, #tpu.memory_space<vmem>>, vector<1x1x12x12x128xf32>
      %688 = vector.shape_cast %687 : vector<1x1x12x12x128xf32> to vector<12x12x128xf32>
      %689 = arith.index_cast %arg11 : i32 to index
      %c14_567 = arith.constant 14 : index
      %690 = memref.load %arg2[%689, %c14_567] : memref<10x26xf32, #tpu.memory_space<smem>>
      %691 = vector.broadcast %690 : f32 to vector<12x12x128xf32>
      %692 = arith.mulf %688, %691 : vector<12x12x128xf32>
      %693 = arith.addf %686, %692 : vector<12x12x128xf32>
      %c0_568 = arith.constant 0 : index
      %c1_569 = arith.constant 1 : index
      %c2_570 = arith.constant 2 : index
      %c0_571 = arith.constant 0 : index
      %c0_572 = arith.constant 0 : index
      %694 = vector.load %arg1[%c0_568, %c1_569, %c2_570, %c0_571, %c0_572] : memref<2x2x14x14x128xf32, #tpu.memory_space<vmem>>, vector<1x1x12x12x128xf32>
      %695 = vector.shape_cast %694 : vector<1x1x12x12x128xf32> to vector<12x12x128xf32>
      %696 = arith.index_cast %arg11 : i32 to index
      %c15_573 = arith.constant 15 : index
      %697 = memref.load %arg2[%696, %c15_573] : memref<10x26xf32, #tpu.memory_space<smem>>
      %698 = vector.broadcast %697 : f32 to vector<12x12x128xf32>
      %699 = arith.mulf %695, %698 : vector<12x12x128xf32>
      %700 = arith.addf %693, %699 : vector<12x12x128xf32>
      %c0_574 = arith.constant 0 : index
      %c0_575 = arith.constant 0 : index
      %c2_576 = arith.constant 2 : index
      %c1_577 = arith.constant 1 : index
      %c0_578 = arith.constant 0 : index
      %701 = vector.load %arg1[%c0_574, %c0_575, %c2_576, %c1_577, %c0_578] : memref<2x2x14x14x128xf32, #tpu.memory_space<vmem>>, vector<1x1x12x12x128xf32>
      %702 = vector.shape_cast %701 : vector<1x1x12x12x128xf32> to vector<12x12x128xf32>
      %703 = arith.index_cast %arg11 : i32 to index
      %c16_579 = arith.constant 16 : index
      %704 = memref.load %arg2[%703, %c16_579] : memref<10x26xf32, #tpu.memory_space<smem>>
      %705 = vector.broadcast %704 : f32 to vector<12x12x128xf32>
      %706 = arith.mulf %702, %705 : vector<12x12x128xf32>
      %707 = arith.addf %700, %706 : vector<12x12x128xf32>
      %c0_580 = arith.constant 0 : index
      %c1_581 = arith.constant 1 : index
      %c2_582 = arith.constant 2 : index
      %c1_583 = arith.constant 1 : index
      %c0_584 = arith.constant 0 : index
      %708 = vector.load %arg1[%c0_580, %c1_581, %c2_582, %c1_583, %c0_584] : memref<2x2x14x14x128xf32, #tpu.memory_space<vmem>>, vector<1x1x12x12x128xf32>
      %709 = vector.shape_cast %708 : vector<1x1x12x12x128xf32> to vector<12x12x128xf32>
      %710 = arith.index_cast %arg11 : i32 to index
      %c17_585 = arith.constant 17 : index
      %711 = memref.load %arg2[%710, %c17_585] : memref<10x26xf32, #tpu.memory_space<smem>>
      %712 = vector.broadcast %711 : f32 to vector<12x12x128xf32>
      %713 = arith.mulf %709, %712 : vector<12x12x128xf32>
      %714 = arith.addf %707, %713 : vector<12x12x128xf32>
      %c0_586 = arith.constant 0 : index
      %c0_587 = arith.constant 0 : index
      %c2_588 = arith.constant 2 : index
      %c2_589 = arith.constant 2 : index
      %c0_590 = arith.constant 0 : index
      %715 = vector.load %arg1[%c0_586, %c0_587, %c2_588, %c2_589, %c0_590] : memref<2x2x14x14x128xf32, #tpu.memory_space<vmem>>, vector<1x1x12x12x128xf32>
      %716 = vector.shape_cast %715 : vector<1x1x12x12x128xf32> to vector<12x12x128xf32>
      %717 = arith.index_cast %arg11 : i32 to index
      %c18_591 = arith.constant 18 : index
      %718 = memref.load %arg2[%717, %c18_591] : memref<10x26xf32, #tpu.memory_space<smem>>
      %719 = vector.broadcast %718 : f32 to vector<12x12x128xf32>
      %720 = arith.mulf %716, %719 : vector<12x12x128xf32>
      %721 = arith.addf %714, %720 : vector<12x12x128xf32>
      %c0_592 = arith.constant 0 : index
      %c1_593 = arith.constant 1 : index
      %c2_594 = arith.constant 2 : index
      %c2_595 = arith.constant 2 : index
      %c0_596 = arith.constant 0 : index
      %722 = vector.load %arg1[%c0_592, %c1_593, %c2_594, %c2_595, %c0_596] : memref<2x2x14x14x128xf32, #tpu.memory_space<vmem>>, vector<1x1x12x12x128xf32>
      %723 = vector.shape_cast %722 : vector<1x1x12x12x128xf32> to vector<12x12x128xf32>
      %724 = arith.index_cast %arg11 : i32 to index
      %c19_597 = arith.constant 19 : index
      %725 = memref.load %arg2[%724, %c19_597] : memref<10x26xf32, #tpu.memory_space<smem>>
      %726 = vector.broadcast %725 : f32 to vector<12x12x128xf32>
      %727 = arith.mulf %723, %726 : vector<12x12x128xf32>
      %728 = arith.addf %721, %727 : vector<12x12x128xf32>
      %c1_598 = arith.constant 1 : index
      %c1_599 = arith.constant 1 : index
      %c2_600 = arith.constant 2 : index
      %c0_601 = arith.constant 0 : index
      %c0_602 = arith.constant 0 : index
      %729 = vector.load %arg1[%c1_598, %c1_599, %c2_600, %c0_601, %c0_602] : memref<2x2x14x14x128xf32, #tpu.memory_space<vmem>>, vector<1x1x12x12x128xf32>
      %730 = vector.shape_cast %729 : vector<1x1x12x12x128xf32> to vector<12x12x128xf32>
      %731 = arith.index_cast %arg11 : i32 to index
      %c20_603 = arith.constant 20 : index
      %732 = memref.load %arg2[%731, %c20_603] : memref<10x26xf32, #tpu.memory_space<smem>>
      %733 = vector.broadcast %732 : f32 to vector<12x12x128xf32>
      %734 = arith.mulf %730, %733 : vector<12x12x128xf32>
      %735 = arith.addf %728, %734 : vector<12x12x128xf32>
      %c1_604 = arith.constant 1 : index
      %c0_605 = arith.constant 0 : index
      %c2_606 = arith.constant 2 : index
      %c1_607 = arith.constant 1 : index
      %c0_608 = arith.constant 0 : index
      %736 = vector.load %arg1[%c1_604, %c0_605, %c2_606, %c1_607, %c0_608] : memref<2x2x14x14x128xf32, #tpu.memory_space<vmem>>, vector<1x1x12x12x128xf32>
      %737 = vector.shape_cast %736 : vector<1x1x12x12x128xf32> to vector<12x12x128xf32>
      %738 = arith.index_cast %arg11 : i32 to index
      %c21_609 = arith.constant 21 : index
      %739 = memref.load %arg2[%738, %c21_609] : memref<10x26xf32, #tpu.memory_space<smem>>
      %740 = vector.broadcast %739 : f32 to vector<12x12x128xf32>
      %741 = arith.mulf %737, %740 : vector<12x12x128xf32>
      %742 = arith.addf %735, %741 : vector<12x12x128xf32>
      %c1_610 = arith.constant 1 : index
      %c1_611 = arith.constant 1 : index
      %c2_612 = arith.constant 2 : index
      %c1_613 = arith.constant 1 : index
      %c0_614 = arith.constant 0 : index
      %743 = vector.load %arg1[%c1_610, %c1_611, %c2_612, %c1_613, %c0_614] : memref<2x2x14x14x128xf32, #tpu.memory_space<vmem>>, vector<1x1x12x12x128xf32>
      %744 = vector.shape_cast %743 : vector<1x1x12x12x128xf32> to vector<12x12x128xf32>
      %745 = arith.index_cast %arg11 : i32 to index
      %c22_615 = arith.constant 22 : index
      %746 = memref.load %arg2[%745, %c22_615] : memref<10x26xf32, #tpu.memory_space<smem>>
      %747 = vector.broadcast %746 : f32 to vector<12x12x128xf32>
      %748 = arith.mulf %744, %747 : vector<12x12x128xf32>
      %749 = arith.addf %742, %748 : vector<12x12x128xf32>
      %c1_616 = arith.constant 1 : index
      %c0_617 = arith.constant 0 : index
      %c2_618 = arith.constant 2 : index
      %c2_619 = arith.constant 2 : index
      %c0_620 = arith.constant 0 : index
      %750 = vector.load %arg1[%c1_616, %c0_617, %c2_618, %c2_619, %c0_620] : memref<2x2x14x14x128xf32, #tpu.memory_space<vmem>>, vector<1x1x12x12x128xf32>
      %751 = vector.shape_cast %750 : vector<1x1x12x12x128xf32> to vector<12x12x128xf32>
      %752 = arith.index_cast %arg11 : i32 to index
      %c23_621 = arith.constant 23 : index
      %753 = memref.load %arg2[%752, %c23_621] : memref<10x26xf32, #tpu.memory_space<smem>>
      %754 = vector.broadcast %753 : f32 to vector<12x12x128xf32>
      %755 = arith.mulf %751, %754 : vector<12x12x128xf32>
      %756 = arith.addf %749, %755 : vector<12x12x128xf32>
      %c1_622 = arith.constant 1 : index
      %c1_623 = arith.constant 1 : index
      %c2_624 = arith.constant 2 : index
      %c2_625 = arith.constant 2 : index
      %c0_626 = arith.constant 0 : index
      %757 = vector.load %arg1[%c1_622, %c1_623, %c2_624, %c2_625, %c0_626] : memref<2x2x14x14x128xf32, #tpu.memory_space<vmem>>, vector<1x1x12x12x128xf32>
      %758 = vector.shape_cast %757 : vector<1x1x12x12x128xf32> to vector<12x12x128xf32>
      %759 = arith.index_cast %arg11 : i32 to index
      %c24_627 = arith.constant 24 : index
      %760 = memref.load %arg2[%759, %c24_627] : memref<10x26xf32, #tpu.memory_space<smem>>
      %761 = vector.broadcast %760 : f32 to vector<12x12x128xf32>
      %762 = arith.mulf %758, %761 : vector<12x12x128xf32>
      %763 = arith.addf %756, %762 : vector<12x12x128xf32>
      %764 = arith.maximumf %589, %763 : vector<12x12x128xf32>
      %765 = arith.index_cast %arg11 : i32 to index
      %c25 = arith.constant 25 : index
      %766 = memref.load %arg2[%765, %c25] : memref<10x26xf32, #tpu.memory_space<smem>>
      %767 = vector.broadcast %766 : f32 to vector<12x12x128xf32>
      %768 = arith.addf %764, %767 : vector<12x12x128xf32>
      %cst_628 = arith.constant 0.000000e+00 : f32
      %769 = vector.broadcast %cst_628 : f32 to vector<12x12x128xf32>
      %770 = arith.maximumf %768, %769 : vector<12x12x128xf32>
      %cst_629 = arith.constant 0.000000e+00 : f32
      %771 = vector.broadcast %cst_629 : f32 to vector<12x4x128xf32>
      %772 = tpu.concatenate %770, %771 in 1 : vector<12x12x128xf32>, vector<12x4x128xf32> -> vector<12x16x128xf32>
      %773 = arith.truncf %772 : vector<12x16x128xf32> to vector<12x16x128xbf16>
      %774 = arith.index_cast %arg11 : i32 to index
      %c0_630 = arith.constant 0 : index
      %c0_631 = arith.constant 0 : index
      %c0_632 = arith.constant 0 : index
      %775 = vector.load %arg10[%774, %c0_630, %c0_631, %c0_632] : memref<10x12x16x128xbf16, #tpu.memory_space<vmem>>, vector<1x12x16x128xbf16>
      %776 = vector.shape_cast %775 : vector<1x12x16x128xbf16> to vector<12x16x128xbf16>
      %777 = vector.shape_cast %773 : vector<12x16x128xbf16> to vector<1x12x16x128xbf16>
      tpu.vector_store %arg10[%774, %c0_630, %c0_631, %c0_632], %777 {strides = array<i32>} : memref<10x12x16x128xbf16, #tpu.memory_space<vmem>>, vector<1x12x16x128xbf16>,
    }
    %c10_i32_0 = arith.constant 10 : i32
    %c0 = arith.constant 0 : index
    %c0_1 = arith.constant 0 : index
    %1 = vector.load %arg3[%c0, %c0_1] : memref<160x800xbf16, #tpu.memory_space<vmem>>, vector<160x800xbf16>
    %c0_2 = arith.constant 0 : index
    %c0_3 = arith.constant 0 : index
    %c0_4 = arith.constant 0 : index
    %c0_5 = arith.constant 0 : index
    %2 = vector.load %arg10[%c0_2, %c0_3, %c0_4, %c0_5] : memref<10x12x16x128xbf16, #tpu.memory_space<vmem>>, vector<10x5x16x128xbf16>
    %3 = vector.shape_cast %2 : vector<10x5x16x128xbf16> to vector<800x128xbf16>
    %c0_6 = arith.constant 0 : index
    %c1 = arith.constant 1 : index
    %c0_7 = arith.constant 0 : index
    %c0_8 = arith.constant 0 : index
    %4 = vector.load %arg10[%c0_6, %c1, %c0_7, %c0_8] : memref<10x12x16x128xbf16, #tpu.memory_space<vmem>>, vector<10x5x16x128xbf16>
    %5 = vector.shape_cast %4 : vector<10x5x16x128xbf16> to vector<800x128xbf16>
    %c0_9 = arith.constant 0 : index
    %c2 = arith.constant 2 : index
    %c0_10 = arith.constant 0 : index
    %c0_11 = arith.constant 0 : index
    %6 = vector.load %arg10[%c0_9, %c2, %c0_10, %c0_11] : memref<10x12x16x128xbf16, #tpu.memory_space<vmem>>, vector<10x5x16x128xbf16>
    %7 = vector.shape_cast %6 : vector<10x5x16x128xbf16> to vector<800x128xbf16>
    %c0_12 = arith.constant 0 : index
    %c3 = arith.constant 3 : index
    %c0_13 = arith.constant 0 : index
    %c0_14 = arith.constant 0 : index
    %8 = vector.load %arg10[%c0_12, %c3, %c0_13, %c0_14] : memref<10x12x16x128xbf16, #tpu.memory_space<vmem>>, vector<10x5x16x128xbf16>
    %9 = vector.shape_cast %8 : vector<10x5x16x128xbf16> to vector<800x128xbf16>
    %c0_15 = arith.constant 0 : index
    %c4 = arith.constant 4 : index
    %c0_16 = arith.constant 0 : index
    %c0_17 = arith.constant 0 : index
    %10 = vector.load %arg10[%c0_15, %c4, %c0_16, %c0_17] : memref<10x12x16x128xbf16, #tpu.memory_space<vmem>>, vector<10x5x16x128xbf16>
    %11 = vector.shape_cast %10 : vector<10x5x16x128xbf16> to vector<800x128xbf16>
    %c0_18 = arith.constant 0 : index
    %c5 = arith.constant 5 : index
    %c0_19 = arith.constant 0 : index
    %c0_20 = arith.constant 0 : index
    %12 = vector.load %arg10[%c0_18, %c5, %c0_19, %c0_20] : memref<10x12x16x128xbf16, #tpu.memory_space<vmem>>, vector<10x5x16x128xbf16>
    %13 = vector.shape_cast %12 : vector<10x5x16x128xbf16> to vector<800x128xbf16>
    %c0_21 = arith.constant 0 : index
    %c6 = arith.constant 6 : index
    %c0_22 = arith.constant 0 : index
    %c0_23 = arith.constant 0 : index
    %14 = vector.load %arg10[%c0_21, %c6, %c0_22, %c0_23] : memref<10x12x16x128xbf16, #tpu.memory_space<vmem>>, vector<10x5x16x128xbf16>
    %15 = vector.shape_cast %14 : vector<10x5x16x128xbf16> to vector<800x128xbf16>
    %c0_24 = arith.constant 0 : index
    %c7 = arith.constant 7 : index
    %c0_25 = arith.constant 0 : index
    %c0_26 = arith.constant 0 : index
    %16 = vector.load %arg10[%c0_24, %c7, %c0_25, %c0_26] : memref<10x12x16x128xbf16, #tpu.memory_space<vmem>>, vector<10x5x16x128xbf16>
    %17 = vector.shape_cast %16 : vector<10x5x16x128xbf16> to vector<800x128xbf16>
    %18 = tpu.concatenate %3, %5, %7, %9, %11, %13, %15, %17 in 1 : vector<800x128xbf16>, vector<800x128xbf16>, vector<800x128xbf16>, vector<800x128xbf16>, vector<800x128xbf16>, vector<800x128xbf16>, vector<800x128xbf16>, vector<800x128xbf16> -> vector<800x1024xbf16>
    %cst = arith.constant dense<0.000000e+00> : vector<160x1024xf32>
    %19 = tpu.matmul %1, %18, %cst {dimension_numbers = #tpu.dot_dimension_numbers<[1], [0], [0], [1], [0, 0, 1, 1], [], []>} : vector<160x800xbf16>, vector<800x1024xbf16>, vector<160x1024xf32> -> vector<160x1024xf32>
    %20 = vector.extract_strided_slice %19 {offsets = [0, 0], sizes = [80, 1024], strides = [1, 1]} : vector<160x1024xf32> to vector<80x1024xf32>
    %21 = vector.extract_strided_slice %19 {offsets = [80, 0], sizes = [80, 1024], strides = [1, 1]} : vector<160x1024xf32> to vector<80x1024xf32>
    %22 = arith.maximumf %20, %21 : vector<80x1024xf32>
    %23 = vector.extract_strided_slice %22 {offsets = [0, 0], sizes = [80, 128], strides = [1, 1]} : vector<80x1024xf32> to vector<80x128xf32>
    %24 = vector.extract_strided_slice %22 {offsets = [0, 128], sizes = [80, 128], strides = [1, 1]} : vector<80x1024xf32> to vector<80x128xf32>
    %25 = arith.maximumf %23, %24 : vector<80x128xf32>
    %26 = vector.extract_strided_slice %22 {offsets = [0, 256], sizes = [80, 128], strides = [1, 1]} : vector<80x1024xf32> to vector<80x128xf32>
    %27 = vector.extract_strided_slice %22 {offsets = [0, 384], sizes = [80, 128], strides = [1, 1]} : vector<80x1024xf32> to vector<80x128xf32>
    %28 = arith.maximumf %26, %27 : vector<80x128xf32>
    %29 = vector.extract_strided_slice %22 {offsets = [0, 512], sizes = [80, 128], strides = [1, 1]} : vector<80x1024xf32> to vector<80x128xf32>
    %30 = vector.extract_strided_slice %22 {offsets = [0, 640], sizes = [80, 128], strides = [1, 1]} : vector<80x1024xf32> to vector<80x128xf32>
    %31 = arith.maximumf %29, %30 : vector<80x128xf32>
    %32 = vector.extract_strided_slice %22 {offsets = [0, 768], sizes = [80, 128], strides = [1, 1]} : vector<80x1024xf32> to vector<80x128xf32>
    %33 = vector.extract_strided_slice %22 {offsets = [0, 896], sizes = [80, 128], strides = [1, 1]} : vector<80x1024xf32> to vector<80x128xf32>
    %34 = arith.maximumf %32, %33 : vector<80x128xf32>
    %35 = tpu.concatenate %25, %28, %31, %34 in 0 : vector<80x128xf32>, vector<80x128xf32>, vector<80x128xf32>, vector<80x128xf32> -> vector<320x128xf32>
    %c0_27 = arith.constant 0 : index
    %c0_28 = arith.constant 0 : index
    %36 = vector.load %arg4[%c0_27, %c0_28] : memref<320x1xf32, #tpu.memory_space<vmem>>, vector<320x1xf32>
    %37 = vector.broadcast %36 : vector<320x1xf32> to vector<320x128xf32>
    %38 = arith.addf %35, %37 : vector<320x128xf32>
    %cst_29 = arith.constant 0.000000e+00 : f32
    %39 = vector.broadcast %cst_29 : f32 to vector<320x128xf32>
    %40 = arith.maximumf %38, %39 : vector<320x128xf32>
    %c0_30 = arith.constant 0 : index
    %c0_31 = arith.constant 0 : index
    %41 = vector.load %arg5[%c0_30, %c0_31] : memref<50x320xbf16, #tpu.memory_space<vmem>>, vector<50x320xbf16>
    %42 = arith.truncf %40 : vector<320x128xf32> to vector<320x128xbf16>
    %cst_32 = arith.constant dense<0.000000e+00> : vector<50x128xf32>
    %43 = tpu.matmul %41, %42, %cst_32 {dimension_numbers = #tpu.dot_dimension_numbers<[1], [0], [0], [1], [0, 0, 1, 1], [], []>} : vector<50x320xbf16>, vector<320x128xbf16>, vector<50x128xf32> -> vector<50x128xf32>
    %c0_33 = arith.constant 0 : index
    %c0_34 = arith.constant 0 : index
    %44 = vector.load %arg6[%c0_33, %c0_34] : memref<50x1xf32, #tpu.memory_space<vmem>>, vector<50x1xf32>
    %45 = vector.broadcast %44 : vector<50x1xf32> to vector<50x128xf32>
    %46 = arith.addf %43, %45 : vector<50x128xf32>
    %cst_35 = arith.constant 0.000000e+00 : f32
    %47 = vector.broadcast %cst_35 : f32 to vector<50x128xf32>
    %48 = arith.maximumf %46, %47 : vector<50x128xf32>
    %c0_36 = arith.constant 0 : index
    %c0_37 = arith.constant 0 : index
    %49 = vector.load %arg7[%c0_36, %c0_37] : memref<10x50xbf16, #tpu.memory_space<vmem>>, vector<10x50xbf16>
    %50 = arith.truncf %48 : vector<50x128xf32> to vector<50x128xbf16>
    %cst_38 = arith.constant dense<0.000000e+00> : vector<10x128xf32>
    %51 = tpu.matmul %49, %50, %cst_38 {dimension_numbers = #tpu.dot_dimension_numbers<[1], [0], [0], [1], [0, 0, 1, 1], [], []>} : vector<10x50xbf16>, vector<50x128xbf16>, vector<10x128xf32> -> vector<10x128xf32>
    %c0_39 = arith.constant 0 : index
    %c0_40 = arith.constant 0 : index
    %52 = vector.load %arg8[%c0_39, %c0_40] : memref<10x1xf32, #tpu.memory_space<vmem>>, vector<10x1xf32>
    %53 = vector.broadcast %52 : vector<10x1xf32> to vector<10x128xf32>
    %54 = arith.addf %51, %53 : vector<10x128xf32>
    %cst_41 = arith.constant dense<0xFF800000> : vector<128xf32>
    %55 = vector.multi_reduction <maximumf>, %54, %cst_41 [0] : vector<10x128xf32> to vector<128xf32>
    %56 = vector.shape_cast %55 : vector<128xf32> to vector<1x128xf32>
    %57 = vector.broadcast %56 : vector<1x128xf32> to vector<10x128xf32>
    %58 = arith.subf %54, %57 : vector<10x128xf32>
    %59 = math.exp %58 : vector<10x128xf32>
    %cst_42 = arith.constant dense<0.000000e+00> : vector<128xf32>
    %60 = vector.multi_reduction <add>, %59, %cst_42 [0] : vector<10x128xf32> to vector<128xf32>
    %61 = vector.shape_cast %60 : vector<128xf32> to vector<1x128xf32>
    %62 = math.log %61 : vector<1x128xf32>
    %63 = vector.broadcast %62 : vector<1x128xf32> to vector<10x128xf32>
    %64 = arith.subf %58, %63 : vector<10x128xf32>
    %c0_43 = arith.constant 0 : index
    %c0_44 = arith.constant 0 : index
    %65 = vector.load %arg9[%c0_43, %c0_44] : memref<10x128xf32, #tpu.memory_space<vmem>>, vector<10x128xf32>
    tpu.vector_store %arg9[%c0_43, %c0_44], %64 {strides = array<i32>} : memref<10x128xf32, #tpu.memory_space<vmem>>, vector<10x128xf32>,
    return
  }
  func.func @transform_0(%arg0: i32) -> (i32, i32, i32, i32, i32) {
    %c0_i32 = arith.constant 0 : i32
    %c0_i32_0 = arith.constant 0 : i32
    %c0_i32_1 = arith.constant 0 : i32
    %c0_i32_2 = arith.constant 0 : i32
    %c0_i32_3 = arith.constant 0 : i32
    return %c0_i32, %c0_i32_0, %c0_i32_1, %c0_i32_2, %arg0 : i32, i32, i32, i32, i32
  }
  func.func @transform_1(%arg0: i32) -> (i32, i32) {
    %c0_i32 = arith.constant 0 : i32
    %c0_i32_0 = arith.constant 0 : i32
    %c0_i32_1 = arith.constant 0 : i32
    return %c0_i32, %c0_i32_0 : i32, i32
  }
  func.func @transform_2(%arg0: i32) -> (i32, i32) {
    %c0_i32 = arith.constant 0 : i32
    %c0_i32_0 = arith.constant 0 : i32
    %c0_i32_1 = arith.constant 0 : i32
    return %c0_i32, %c0_i32_0 : i32, i32
  }
  func.func @transform_3(%arg0: i32) -> (i32, i32) {
    %c0_i32 = arith.constant 0 : i32
    %c0_i32_0 = arith.constant 0 : i32
    %c0_i32_1 = arith.constant 0 : i32
    return %c0_i32, %c0_i32_0 : i32, i32
  }
  func.func @transform_4(%arg0: i32) -> (i32, i32) {
    %c0_i32 = arith.constant 0 : i32
    %c0_i32_0 = arith.constant 0 : i32
    %c0_i32_1 = arith.constant 0 : i32
    return %c0_i32, %c0_i32_0 : i32, i32
  }
  func.func @transform_5(%arg0: i32) -> (i32, i32) {
    %c0_i32 = arith.constant 0 : i32
    %c0_i32_0 = arith.constant 0 : i32
    %c0_i32_1 = arith.constant 0 : i32
    return %c0_i32, %c0_i32_0 : i32, i32
  }
  func.func @transform_6(%arg0: i32) -> (i32, i32) {
    %c0_i32 = arith.constant 0 : i32
    %c0_i32_0 = arith.constant 0 : i32
    %c0_i32_1 = arith.constant 0 : i32
    return %c0_i32, %c0_i32_0 : i32, i32
  }
  func.func @transform_7(%arg0: i32) -> (i32, i32) {
    %c0_i32 = arith.constant 0 : i32
    %c0_i32_0 = arith.constant 0 : i32
    %c0_i32_1 = arith.constant 0 : i32
    return %c0_i32, %c0_i32_0 : i32, i32
  }
  func.func @transform_8(%arg0: i32) -> (i32, i32) {
    %c0_i32 = arith.constant 0 : i32
    %c0_i32_0 = arith.constant 0 : i32
    return %c0_i32, %arg0 : i32, i32
  }
}

</mosaic_0001>

<llo_original>
// kernel: net_forward.1
$region0: #{net_forward.1}
  #allocation0 [shape = 'u32[]', space=smem, size = 0x4, offset = 0x4, fixed_abs, tag = 'smem constant byte address 0x4 - core index']
  #allocation1 [shape = 'u32[144,128]{1,0:T(1,128)}', space=vmem, size = 0x12000, scoped, tag = 'internal scratch']
  #allocation2 [shape = 'bf16[10,12,16,128]{3,2,1,0:T(16,128)(2,1)}', space=vmem, size = 0x78000, scoped, tag = 'scratch operand']
  %s0 = inlined_call_operand.vmem [shape: f32[2,2,14,14,128], index: 0, kind: input, shape index: {}]
  %s1 = inlined_call_operand.vmem [shape: f32[10,26], index: 1, kind: input, shape index: {}]
  %s2 = inlined_call_operand.vmem [shape: bf16[160,800], index: 2, kind: input, shape index: {}]
  %s3 = inlined_call_operand.vmem [shape: f32[320,1], index: 3, kind: input, shape index: {}]
  %s4 = inlined_call_operand.vmem [shape: bf16[50,320], index: 4, kind: input, shape index: {}]
  %s5 = inlined_call_operand.vmem [shape: f32[50,1], index: 5, kind: input, shape index: {}]
  %s6 = inlined_call_operand.vmem [shape: bf16[10,50], index: 6, kind: input, shape index: {}]
  %s7 = inlined_call_operand.vmem [shape: f32[10,1], index: 7, kind: input, shape index: {}]
  %s8 = inlined_call_operand.vmem [shape: f32[10,128], index: 8, kind: output, shape index: {}]
  %s9 = sld [smem:[#allocation0]]
  $region53: #{net_forward.1} parent=0
    _
  %s11 = ssub.s32 1, %s9
  %s12 = scalar_select 0, %s11, %s9
  $region1: #{net_forward.1} parent=0
    #allocation3 [shape = 'u8[8192]{0}', space=smem, size = 0x2000, scoped, tag = 'input window, operand 1, single buffered']
    #allocation4 [shape = 's32[1]{0}', space=sflag, size = 0x4, scoped, tag = 'scoped memory for net_forward.1']
    %13 = vsyncpa [#allocation4], 0
    // Predicated region
    $region2: #{net_forward.1} parent=1 // pred_check
      _
    $region3: #{net_forward.1} parent=1 // pred_check_branch
      %15 = sbr.rel (0) target = $region5
    $region4: #{net_forward.1} parent=1 // pred_region
      _
    $region5: #{net_forward.1} parent=1 // pred_fallthru
      _
    // Predicated region
    $region6: #{net_forward.1} parent=1 // pred_check
      _
    $region7: #{net_forward.1} parent=1 // pred_check_branch
      %17 = sbr.rel (0) target = $region9
    $region8: #{net_forward.1} parent=1 // pred_region
      %s19 = ssub.s32 256, 256
      %20 = vsyncadd [#allocation4], %s19
      %s21 = sshll.u32 %s1, 4
      %s22 = int_to_ptr.vmem [resolvable:$true] %s21
      %27 = dma.vmem_to_smem %s22, 256, [#allocation3], [#allocation4], 128, 128, 8
    $region9: #{net_forward.1} parent=1 // pred_fallthru
      _
    // Predicated region
    $region10: #{net_forward.1} parent=1 // pred_check
      _
    $region11: #{net_forward.1} parent=1 // pred_check_branch
      %29 = sbr.rel (0) target = $region13
    $region12: #{net_forward.1} parent=1 // pred_region
      _
    $region13: #{net_forward.1} parent=1 // pred_fallthru
      _
    // Predicated region
    $region14: #{net_forward.1} parent=1 // pred_check
      _
    $region15: #{net_forward.1} parent=1 // pred_check_branch
      %31 = sbr.rel (0) target = $region17
    $region16: #{net_forward.1} parent=1 // pred_region
      _
    $region17: #{net_forward.1} parent=1 // pred_fallthru
      _
    // Predicated region
    $region18: #{net_forward.1} parent=1 // pred_check
      _
    $region19: #{net_forward.1} parent=1 // pred_check_branch
      %33 = sbr.rel (0) target = $region21
    $region20: #{net_forward.1} parent=1 // pred_region
      _
    $region21: #{net_forward.1} parent=1 // pred_fallthru
      _
    // Predicated region
    $region22: #{net_forward.1} parent=1 // pred_check
      _
    $region23: #{net_forward.1} parent=1 // pred_check_branch
      %35 = sbr.rel (0) target = $region25
    $region24: #{net_forward.1} parent=1 // pred_region
      _
    $region25: #{net_forward.1} parent=1 // pred_fallthru
      _
    // Predicated region
    $region26: #{net_forward.1} parent=1 // pred_check
      _
    $region27: #{net_forward.1} parent=1 // pred_check_branch
      %37 = sbr.rel (0) target = $region29
    $region28: #{net_forward.1} parent=1 // pred_region
      _
    $region29: #{net_forward.1} parent=1 // pred_fallthru
      _
    // Predicated region
    $region30: #{net_forward.1} parent=1 // pred_check
      _
    $region31: #{net_forward.1} parent=1 // pred_check_branch
      %39 = sbr.rel (0) target = $region33
    $region32: #{net_forward.1} parent=1 // pred_region
      _
    $region33: #{net_forward.1} parent=1 // pred_fallthru
      _
    // Predicated region
    $region34: #{net_forward.1} parent=1 // pred_check
      _
    $region35: #{net_forward.1} parent=1 // pred_check_branch
      %41 = sbr.rel (0) target = $region37
    $region36: #{net_forward.1} parent=1 // pred_region
      %42 = dma.done [#allocation4], 256
    $region37: #{net_forward.1} parent=1 // pred_fallthru
      _
    %43 = sfence
    loop: start=0, step=1, limit=10
    $region38: #{net_forward.1} parent=1 // loop_pre_header
      _
    $region39: #{net_forward.1} parent=1 // loop_header
      %s46 = sphi 0, %s50
      %p47 = scmp.ge.s32.totalorder %s46, 10
    $region40: #{net_forward.1} parent=1 // loop_header_branch
      %49 = sbr.rel (%p47) target = $region44
    $region41: #{net_forward.1} parent=1 // loop_body
      %v51 = vld [vmem:[%s0] sm:$0xff]
      %v52 = vld [vmem:[%s0 + $0x8] sm:$0xf]
      %v53 = vld [vmem:[%s0 + $0x10] sm:$0xff]
      %v54 = vld [vmem:[%s0 + $0x18] sm:$0xf]
      %v55 = vld [vmem:[%s0 + $0x20] sm:$0xff]
      %v56 = vld [vmem:[%s0 + $0x28] sm:$0xf]
      %v57 = vld [vmem:[%s0 + $0x30] sm:$0xff]
      %v58 = vld [vmem:[%s0 + $0x38] sm:$0xf]
      %v59 = vld [vmem:[%s0 + $0x40] sm:$0xff]
      %v60 = vld [vmem:[%s0 + $0x48] sm:$0xf]
      %v61 = vld [vmem:[%s0 + $0x50] sm:$0xff]
      %v62 = vld [vmem:[%s0 + $0x58] sm:$0xf]
      %v63 = vld [vmem:[%s0 + $0x60] sm:$0xff]
      %v64 = vld [vmem:[%s0 + $0x68] sm:$0xf]
      %v65 = vld [vmem:[%s0 + $0x70] sm:$0xff]
      %v66 = vld [vmem:[%s0 + $0x78] sm:$0xf]
      %v67 = vld [vmem:[%s0 + $0x80] sm:$0xff]
      %v68 = vld [vmem:[%s0 + $0x88] sm:$0xf]
      %v69 = vld [vmem:[%s0 + $0x90] sm:$0xff]
      %v70 = vld [vmem:[%s0 + $0x98] sm:$0xf]
      %v71 = vld [vmem:[%s0 + $0xa0] sm:$0xff]
      %v72 = vld [vmem:[%s0 + $0xa8] sm:$0xf]
      %v73 = vld [vmem:[%s0 + $0xb0] sm:$0xff]
      %v74 = vld [vmem:[%s0 + $0xb8] sm:$0xf]
      %s75 = smul.u32 %s46, 128
      %s76 = sld [smem:[#allocation3 + %s75]]
      %v77 = vstv %s76
      %v78 = vmul.f32 %v51, %v77
      %v79 = vmul.f32 %v52, %v77
      %v80 = vmul.f32 %v53, %v77
      %v81 = vmul.f32 %v54, %v77
      %v82 = vmul.f32 %v55, %v77
      %v83 = vmul.f32 %v56, %v77
      %v84 = vmul.f32 %v57, %v77
      %v85 = vmul.f32 %v58, %v77
      %v86 = vmul.f32 %v59, %v77
      %v87 = vmul.f32 %v60, %v77
      %v88 = vmul.f32 %v61, %v77
      %v89 = vmul.f32 %v62, %v77
      %v90 = vmul.f32 %v63, %v77
      %v91 = vmul.f32 %v64, %v77
      %v92 = vmul.f32 %v65, %v77
      %v93 = vmul.f32 %v66, %v77
      %v94 = vmul.f32 %v67, %v77
      %v95 = vmul.f32 %v68, %v77
      %v96 = vmul.f32 %v69, %v77
      %v97 = vmul.f32 %v70, %v77
      %v98 = vmul.f32 %v71, %v77
      %v99 = vmul.f32 %v72, %v77
      %v100 = vmul.f32 %v73, %v77
      %v101 = vmul.f32 %v74, %v77
      %s102 = scalar_lea.vmem %s0, 224
      %v103 = vld [vmem:[%s102] sm:$0xff]
      %v104 = vld [vmem:[%s102 + $0x8] sm:$0xf]
      %v105 = vld [vmem:[%s102 + $0x10] sm:$0xff]
      %v106 = vld [vmem:[%s102 + $0x18] sm:$0xf]
      %v107 = vld [vmem:[%s102 + $0x20] sm:$0xff]
      %v108 = vld [vmem:[%s102 + $0x28] sm:$0xf]
      %v109 = vld [vmem:[%s102 + $0x30] sm:$0xff]
      %v110 = vld [vmem:[%s102 + $0x38] sm:$0xf]
      %v111 = vld [vmem:[%s102 + $0x40] sm:$0xff]
      %v112 = vld [vmem:[%s102 + $0x48] sm:$0xf]
      %v113 = vld [vmem:[%s102 + $0x50] sm:$0xff]
      %v114 = vld [vmem:[%s102 + $0x58] sm:$0xf]
      %v115 = vld [vmem:[%s102 + $0x60] sm:$0xff]
      %v116 = vld [vmem:[%s102 + $0x68] sm:$0xf]
      %v117 = vld [vmem:[%s102 + $0x70] sm:$0xff]
      %v118 = vld [vmem:[%s102 + $0x78] sm:$0xf]
      %v119 = vld [vmem:[%s102 + $0x80] sm:$0xff]
      %v120 = vld [vmem:[%s102 + $0x88] sm:$0xf]
      %v121 = vld [vmem:[%s102 + $0x90] sm:$0xff]
      %v122 = vld [vmem:[%s102 + $0x98] sm:$0xf]
      %v123 = vld [vmem:[%s102 + $0xa0] sm:$0xff]
      %v124 = vld [vmem:[%s102 + $0xa8] sm:$0xf]
      %v125 = vld [vmem:[%s102 + $0xb0] sm:$0xff]
      %v126 = vld [vmem:[%s102 + $0xb8] sm:$0xf]
      %s127 = sadd.s32 %s75, 1
      %s128 = sld [smem:[#allocation3 + %s127]]
      %v129 = vstv %s128
      %v130 = vmul.f32 %v103, %v129
      %v131 = vmul.f32 %v104, %v129
      %v132 = vmul.f32 %v105, %v129
      %v133 = vmul.f32 %v106, %v129
      %v134 = vmul.f32 %v107, %v129
      %v135 = vmul.f32 %v108, %v129
      %v136 = vmul.f32 %v109, %v129
      %v137 = vmul.f32 %v110, %v129
      %v138 = vmul.f32 %v111, %v129
      %v139 = vmul.f32 %v112, %v129
      %v140 = vmul.f32 %v113, %v129
      %v141 = vmul.f32 %v114, %v129
      %v142 = vmul.f32 %v115, %v129
      %v143 = vmul.f32 %v116, %v129
      %v144 = vmul.f32 %v117, %v129
      %v145 = vmul.f32 %v118, %v129
      %v146 = vmul.f32 %v119, %v129
      %v147 = vmul.f32 %v120, %v129
      %v148 = vmul.f32 %v121, %v129
      %v149 = vmul.f32 %v122, %v129
      %v150 = vmul.f32 %v123, %v129
      %v151 = vmul.f32 %v124, %v129
      %v152 = vmul.f32 %v125, %v129
      %v153 = vmul.f32 %v126, %v129
      %v154 = vadd.f32 %v78, %v130
      %v155 = vadd.f32 %v79, %v131
      %v156 = vadd.f32 %v80, %v132
      %v157 = vadd.f32 %v81, %v133
      %v158 = vadd.f32 %v82, %v134
      %v159 = vadd.f32 %v83, %v135
      %v160 = vadd.f32 %v84, %v136
      %v161 = vadd.f32 %v85, %v137
      %v162 = vadd.f32 %v86, %v138
      %v163 = vadd.f32 %v87, %v139
      %v164 = vadd.f32 %v88, %v140
      %v165 = vadd.f32 %v89, %v141
      %v166 = vadd.f32 %v90, %v142
      %v167 = vadd.f32 %v91, %v143
      %v168 = vadd.f32 %v92, %v144
      %v169 = vadd.f32 %v93, %v145
      %v170 = vadd.f32 %v94, %v146
      %v171 = vadd.f32 %v95, %v147
      %v172 = vadd.f32 %v96, %v148
      %v173 = vadd.f32 %v97, %v149
      %v174 = vadd.f32 %v98, %v150
      %v175 = vadd.f32 %v99, %v151
      %v176 = vadd.f32 %v100, %v152
      %v177 = vadd.f32 %v101, %v153
      %v178 = vld [vmem:[%s0 + $0x1] sm:$0xff]
      %v179 = vld [vmem:[%s0 + $0x9] sm:$0xf]
      %v180 = vld [vmem:[%s0 + $0x11] sm:$0xff]
      %v181 = vld [vmem:[%s0 + $0x19] sm:$0xf]
      %v182 = vld [vmem:[%s0 + $0x21] sm:$0xff]
      %v183 = vld [vmem:[%s0 + $0x29] sm:$0xf]
      %v184 = vld [vmem:[%s0 + $0x31] sm:$0xff]
      %v185 = vld [vmem:[%s0 + $0x39] sm:$0xf]
      %v186 = vld [vmem:[%s0 + $0x41] sm:$0xff]
      %v187 = vld [vmem:[%s0 + $0x49] sm:$0xf]
      %v188 = vld [vmem:[%s0 + $0x51] sm:$0xff]
      %v189 = vld [vmem:[%s0 + $0x59] sm:$0xf]
      %v190 = vld [vmem:[%s0 + $0x61] sm:$0xff]
      %v191 = vld [vmem:[%s0 + $0x69] sm:$0xf]
      %v192 = vld [vmem:[%s0 + $0x71] sm:$0xff]
      %v193 = vld [vmem:[%s0 + $0x79] sm:$0xf]
      %v194 = vld [vmem:[%s0 + $0x81] sm:$0xff]
      %v195 = vld [vmem:[%s0 + $0x89] sm:$0xf]
      %v196 = vld [vmem:[%s0 + $0x91] sm:$0xff]
      %v197 = vld [vmem:[%s0 + $0x99] sm:$0xf]
      %v198 = vld [vmem:[%s0 + $0xa1] sm:$0xff]
      %v199 = vld [vmem:[%s0 + $0xa9] sm:$0xf]
      %v200 = vld [vmem:[%s0 + $0xb1] sm:$0xff]
      %v201 = vld [vmem:[%s0 + $0xb9] sm:$0xf]
      %s202 = sadd.s32 %s75, 2
      %s203 = sld [smem:[#allocation3 + %s202]]
      %v204 = vstv %s203
      %v205 = vmul.f32 %v178, %v204
      %v206 = vmul.f32 %v179, %v204
      %v207 = vmul.f32 %v180, %v204
      %v208 = vmul.f32 %v181, %v204
      %v209 = vmul.f32 %v182, %v204
      %v210 = vmul.f32 %v183, %v204
      %v211 = vmul.f32 %v184, %v204
      %v212 = vmul.f32 %v185, %v204
      %v213 = vmul.f32 %v186, %v204
      %v214 = vmul.f32 %v187, %v204
      %v215 = vmul.f32 %v188, %v204
      %v216 = vmul.f32 %v189, %v204
      %v217 = vmul.f32 %v190, %v204
      %v218 = vmul.f32 %v191, %v204
      %v219 = vmul.f32 %v192, %v204
      %v220 = vmul.f32 %v193, %v204
      %v221 = vmul.f32 %v194, %v204
      %v222 = vmul.f32 %v195, %v204
      %v223 = vmul.f32 %v196, %v204
      %v224 = vmul.f32 %v197, %v204
      %v225 = vmul.f32 %v198, %v204
      %v226 = vmul.f32 %v199, %v204
      %v227 = vmul.f32 %v200, %v204
      %v228 = vmul.f32 %v201, %v204
      %v229 = vadd.f32 %v154, %v205
      %v230 = vadd.f32 %v155, %v206
      %v231 = vadd.f32 %v156, %v207
      %v232 = vadd.f32 %v157, %v208
      %v233 = vadd.f32 %v158, %v209
      %v234 = vadd.f32 %v159, %v210
      %v235 = vadd.f32 %v160, %v211
      %v236 = vadd.f32 %v161, %v212
      %v237 = vadd.f32 %v162, %v213
      %v238 = vadd.f32 %v163, %v214
      %v239 = vadd.f32 %v164, %v215
      %v240 = vadd.f32 %v165, %v216
      %v241 = vadd.f32 %v166, %v217
      %v242 = vadd.f32 %v167, %v218
      %v243 = vadd.f32 %v168, %v219
      %v244 = vadd.f32 %v169, %v220
      %v245 = vadd.f32 %v170, %v221
      %v246 = vadd.f32 %v171, %v222
      %v247 = vadd.f32 %v172, %v223
      %v248 = vadd.f32 %v173, %v224
      %v249 = vadd.f32 %v174, %v225
      %v250 = vadd.f32 %v175, %v226
      %v251 = vadd.f32 %v176, %v227
      %v252 = vadd.f32 %v177, %v228
      %v253 = vld [vmem:[%s102 + $0x1] sm:$0xff]
      %v254 = vld [vmem:[%s102 + $0x9] sm:$0xf]
      %v255 = vld [vmem:[%s102 + $0x11] sm:$0xff]
      %v256 = vld [vmem:[%s102 + $0x19] sm:$0xf]
      %v257 = vld [vmem:[%s102 + $0x21] sm:$0xff]
      %v258 = vld [vmem:[%s102 + $0x29] sm:$0xf]
      %v259 = vld [vmem:[%s102 + $0x31] sm:$0xff]
      %v260 = vld [vmem:[%s102 + $0x39] sm:$0xf]
      %v261 = vld [vmem:[%s102 + $0x41] sm:$0xff]
      %v262 = vld [vmem:[%s102 + $0x49] sm:$0xf]
      %v263 = vld [vmem:[%s102 + $0x51] sm:$0xff]
      %v264 = vld [vmem:[%s102 + $0x59] sm:$0xf]
      %v265 = vld [vmem:[%s102 + $0x61] sm:$0xff]
      %v266 = vld [vmem:[%s102 + $0x69] sm:$0xf]
      %v267 = vld [vmem:[%s102 + $0x71] sm:$0xff]
      %v268 = vld [vmem:[%s102 + $0x79] sm:$0xf]
      %v269 = vld [vmem:[%s102 + $0x81] sm:$0xff]
      %v270 = vld [vmem:[%s102 + $0x89] sm:$0xf]
      %v271 = vld [vmem:[%s102 + $0x91] sm:$0xff]
      %v272 = vld [vmem:[%s102 + $0x99] sm:$0xf]
      %v273 = vld [vmem:[%s102 + $0xa1] sm:$0xff]
      %v274 = vld [vmem:[%s102 + $0xa9] sm:$0xf]
      %v275 = vld [vmem:[%s102 + $0xb1] sm:$0xff]
      %v276 = vld [vmem:[%s102 + $0xb9] sm:$0xf]
      %s277 = sadd.s32 %s75, 3
      %s278 = sld [smem:[#allocation3 + %s277]]
      %v279 = vstv %s278
      %v280 = vmul.f32 %v253, %v279
      %v281 = vmul.f32 %v254, %v279
      %v282 = vmul.f32 %v255, %v279
      %v283 = vmul.f32 %v256, %v279
      %v284 = vmul.f32 %v257, %v279
      %v285 = vmul.f32 %v258, %v279
      %v286 = vmul.f32 %v259, %v279
      %v287 = vmul.f32 %v260, %v279
      %v288 = vmul.f32 %v261, %v279
      %v289 = vmul.f32 %v262, %v279
      %v290 = vmul.f32 %v263, %v279
      %v291 = vmul.f32 %v264, %v279
      %v292 = vmul.f32 %v265, %v279
      %v293 = vmul.f32 %v266, %v279
      %v294 = vmul.f32 %v267, %v279
      %v295 = vmul.f32 %v268, %v279
      %v296 = vmul.f32 %v269, %v279
      %v297 = vmul.f32 %v270, %v279
      %v298 = vmul.f32 %v271, %v279
      %v299 = vmul.f32 %v272, %v279
      %v300 = vmul.f32 %v273, %v279
      %v301 = vmul.f32 %v274, %v279
      %v302 = vmul.f32 %v275, %v279
      %v303 = vmul.f32 %v276, %v279
      %v304 = vadd.f32 %v229, %v280
      %v305 = vadd.f32 %v230, %v281
      %v306 = vadd.f32 %v231, %v282
      %v307 = vadd.f32 %v232, %v283
      %v308 = vadd.f32 %v233, %v284
      %v309 = vadd.f32 %v234, %v285
      %v310 = vadd.f32 %v235, %v286
      %v311 = vadd.f32 %v236, %v287
      %v312 = vadd.f32 %v237, %v288
      %v313 = vadd.f32 %v238, %v289
      %v314 = vadd.f32 %v239, %v290
      %v315 = vadd.f32 %v240, %v291
      %v316 = vadd.f32 %v241, %v292
      %v317 = vadd.f32 %v242, %v293
      %v318 = vadd.f32 %v243, %v294
      %v319 = vadd.f32 %v244, %v295
      %v320 = vadd.f32 %v245, %v296
      %v321 = vadd.f32 %v246, %v297
      %v322 = vadd.f32 %v247, %v298
      %v323 = vadd.f32 %v248, %v299
      %v324 = vadd.f32 %v249, %v300
      %v325 = vadd.f32 %v250, %v301
      %v326 = vadd.f32 %v251, %v302
      %v327 = vadd.f32 %v252, %v303
      %v328 = vld [vmem:[%s0 + $0x2] sm:$0xff]
      %v329 = vld [vmem:[%s0 + $0xa] sm:$0xf]
      %v330 = vld [vmem:[%s0 + $0x12] sm:$0xff]
      %v331 = vld [vmem:[%s0 + $0x1a] sm:$0xf]
      %v332 = vld [vmem:[%s0 + $0x22] sm:$0xff]
      %v333 = vld [vmem:[%s0 + $0x2a] sm:$0xf]
      %v334 = vld [vmem:[%s0 + $0x32] sm:$0xff]
      %v335 = vld [vmem:[%s0 + $0x3a] sm:$0xf]
      %v336 = vld [vmem:[%s0 + $0x42] sm:$0xff]
      %v337 = vld [vmem:[%s0 + $0x4a] sm:$0xf]
      %v338 = vld [vmem:[%s0 + $0x52] sm:$0xff]
      %v339 = vld [vmem:[%s0 + $0x5a] sm:$0xf]
      %v340 = vld [vmem:[%s0 + $0x62] sm:$0xff]
      %v341 = vld [vmem:[%s0 + $0x6a] sm:$0xf]
      %v342 = vld [vmem:[%s0 + $0x72] sm:$0xff]
      %v343 = vld [vmem:[%s0 + $0x7a] sm:$0xf]
      %v344 = vld [vmem:[%s0 + $0x82] sm:$0xff]
      %v345 = vld [vmem:[%s0 + $0x8a] sm:$0xf]
      %v346 = vld [vmem:[%s0 + $0x92] sm:$0xff]
      %v347 = vld [vmem:[%s0 + $0x9a] sm:$0xf]
      %v348 = vld [vmem:[%s0 + $0xa2] sm:$0xff]
      %v349 = vld [vmem:[%s0 + $0xaa] sm:$0xf]
      %v350 = vld [vmem:[%s0 + $0xb2] sm:$0xff]
      %v351 = vld [vmem:[%s0 + $0xba] sm:$0xf]
      %s352 = sadd.s32 %s75, 4
      %s353 = sld [smem:[#allocation3 + %s352]]
      %v354 = vstv %s353
      %v355 = vmul.f32 %v328, %v354
      %v356 = vmul.f32 %v329, %v354
      %v357 = vmul.f32 %v330, %v354
      %v358 = vmul.f32 %v331, %v354
      %v359 = vmul.f32 %v332, %v354
      %v360 = vmul.f32 %v333, %v354
      %v361 = vmul.f32 %v334, %v354
      %v362 = vmul.f32 %v335, %v354
      %v363 = vmul.f32 %v336, %v354
      %v364 = vmul.f32 %v337, %v354
      %v365 = vmul.f32 %v338, %v354
      %v366 = vmul.f32 %v339, %v354
      %v367 = vmul.f32 %v340, %v354
      %v368 = vmul.f32 %v341, %v354
      %v369 = vmul.f32 %v342, %v354
      %v370 = vmul.f32 %v343, %v354
      %v371 = vmul.f32 %v344, %v354
      %v372 = vmul.f32 %v345, %v354
      %v373 = vmul.f32 %v346, %v354
      %v374 = vmul.f32 %v347, %v354
      %v375 = vmul.f32 %v348, %v354
      %v376 = vmul.f32 %v349, %v354
      %v377 = vmul.f32 %v350, %v354
      %v378 = vmul.f32 %v351, %v354
      %v379 = vadd.f32 %v304, %v355
      %v380 = vadd.f32 %v305, %v356
      %v381 = vadd.f32 %v306, %v357
      %v382 = vadd.f32 %v307, %v358
      %v383 = vadd.f32 %v308, %v359
      %v384 = vadd.f32 %v309, %v360
      %v385 = vadd.f32 %v310, %v361
      %v386 = vadd.f32 %v311, %v362
      %v387 = vadd.f32 %v312, %v363
      %v388 = vadd.f32 %v313, %v364
      %v389 = vadd.f32 %v314, %v365
      %v390 = vadd.f32 %v315, %v366
      %v391 = vadd.f32 %v316, %v367
      %v392 = vadd.f32 %v317, %v368
      %v393 = vadd.f32 %v318, %v369
      %v394 = vadd.f32 %v319, %v370
      %v395 = vadd.f32 %v320, %v371
      %v396 = vadd.f32 %v321, %v372
      %v397 = vadd.f32 %v322, %v373
      %v398 = vadd.f32 %v323, %v374
      %v399 = vadd.f32 %v324, %v375
      %v400 = vadd.f32 %v325, %v376
      %v401 = vadd.f32 %v326, %v377
      %v402 = vadd.f32 %v327, %v378
      %s403 = scalar_lea.vmem %s0, 448
      %v404 = vld [vmem:[%s403] sm:$0xff]
      %v405 = vld [vmem:[%s403 + $0x8] sm:$0xf]
      %v406 = vld [vmem:[%s403 + $0x10] sm:$0xff]
      %v407 = vld [vmem:[%s403 + $0x18] sm:$0xf]
      %v408 = vld [vmem:[%s403 + $0x20] sm:$0xff]
      %v409 = vld [vmem:[%s403 + $0x28] sm:$0xf]
      %v410 = vld [vmem:[%s403 + $0x30] sm:$0xff]
      %v411 = vld [vmem:[%s403 + $0x38] sm:$0xf]
      %v412 = vld [vmem:[%s403 + $0x40] sm:$0xff]
      %v413 = vld [vmem:[%s403 + $0x48] sm:$0xf]
      %v414 = vld [vmem:[%s403 + $0x50] sm:$0xff]
      %v415 = vld [vmem:[%s403 + $0x58] sm:$0xf]
      %v416 = vld [vmem:[%s403 + $0x60] sm:$0xff]
      %v417 = vld [vmem:[%s403 + $0x68] sm:$0xf]
      %v418 = vld [vmem:[%s403 + $0x70] sm:$0xff]
      %v419 = vld [vmem:[%s403 + $0x78] sm:$0xf]
      %v420 = vld [vmem:[%s403 + $0x80] sm:$0xff]
      %v421 = vld [vmem:[%s403 + $0x88] sm:$0xf]
      %v422 = vld [vmem:[%s403 + $0x90] sm:$0xff]
      %v423 = vld [vmem:[%s403 + $0x98] sm:$0xf]
      %v424 = vld [vmem:[%s403 + $0xa0] sm:$0xff]
      %v425 = vld [vmem:[%s403 + $0xa8] sm:$0xf]
      %v426 = vld [vmem:[%s403 + $0xb0] sm:$0xff]
      %v427 = vld [vmem:[%s403 + $0xb8] sm:$0xf]
      %s428 = sadd.s32 %s75, 5
      %s429 = sld [smem:[#allocation3 + %s428]]
      %v430 = vstv %s429
      %v431 = vmul.f32 %v404, %v430
      %v432 = vmul.f32 %v405, %v430
      %v433 = vmul.f32 %v406, %v430
      %v434 = vmul.f32 %v407, %v430
      %v435 = vmul.f32 %v408, %v430
      %v436 = vmul.f32 %v409, %v430
      %v437 = vmul.f32 %v410, %v430
      %v438 = vmul.f32 %v411, %v430
      %v439 = vmul.f32 %v412, %v430
      %v440 = vmul.f32 %v413, %v430
      %v441 = vmul.f32 %v414, %v430
      %v442 = vmul.f32 %v415, %v430
      %v443 = vmul.f32 %v416, %v430
      %v444 = vmul.f32 %v417, %v430
      %v445 = vmul.f32 %v418, %v430
      %v446 = vmul.f32 %v419, %v430
      %v447 = vmul.f32 %v420, %v430
      %v448 = vmul.f32 %v421, %v430
      %v449 = vmul.f32 %v422, %v430
      %v450 = vmul.f32 %v423, %v430
      %v451 = vmul.f32 %v424, %v430
      %v452 = vmul.f32 %v425, %v430
      %v453 = vmul.f32 %v426, %v430
      %v454 = vmul.f32 %v427, %v430
      %v455 = vadd.f32 %v379, %v431
      %v456 = vadd.f32 %v380, %v432
      %v457 = vadd.f32 %v381, %v433
      %v458 = vadd.f32 %v382, %v434
      %v459 = vadd.f32 %v383, %v435
      %v460 = vadd.f32 %v384, %v436
      %v461 = vadd.f32 %v385, %v437
      %v462 = vadd.f32 %v386, %v438
      %v463 = vadd.f32 %v387, %v439
      %v464 = vadd.f32 %v388, %v440
      %v465 = vadd.f32 %v389, %v441
      %v466 = vadd.f32 %v390, %v442
      %v467 = vadd.f32 %v391, %v443
      %v468 = vadd.f32 %v392, %v444
      %v469 = vadd.f32 %v393, %v445
      %v470 = vadd.f32 %v394, %v446
      %v471 = vadd.f32 %v395, %v447
      %v472 = vadd.f32 %v396, %v448
      %v473 = vadd.f32 %v397, %v449
      %v474 = vadd.f32 %v398, %v450
      %v475 = vadd.f32 %v399, %v451
      %v476 = vadd.f32 %v400, %v452
      %v477 = vadd.f32 %v401, %v453
      %v478 = vadd.f32 %v402, %v454
      %s479 = scalar_lea.vmem %s0, 672
      %v480 = vld [vmem:[%s479] sm:$0xff]
      %v481 = vld [vmem:[%s479 + $0x8] sm:$0xf]
      %v482 = vld [vmem:[%s479 + $0x10] sm:$0xff]
      %v483 = vld [vmem:[%s479 + $0x18] sm:$0xf]
      %v484 = vld [vmem:[%s479 + $0x20] sm:$0xff]
      %v485 = vld [vmem:[%s479 + $0x28] sm:$0xf]
      %v486 = vld [vmem:[%s479 + $0x30] sm:$0xff]
      %v487 = vld [vmem:[%s479 + $0x38] sm:$0xf]
      %v488 = vld [vmem:[%s479 + $0x40] sm:$0xff]
      %v489 = vld [vmem:[%s479 + $0x48] sm:$0xf]
      %v490 = vld [vmem:[%s479 + $0x50] sm:$0xff]
      %v491 = vld [vmem:[%s479 + $0x58] sm:$0xf]
      %v492 = vld [vmem:[%s479 + $0x60] sm:$0xff]
      %v493 = vld [vmem:[%s479 + $0x68] sm:$0xf]
      %v494 = vld [vmem:[%s479 + $0x70] sm:$0xff]
      %v495 = vld [vmem:[%s479 + $0x78] sm:$0xf]
      %v496 = vld [vmem:[%s479 + $0x80] sm:$0xff]
      %v497 = vld [vmem:[%s479 + $0x88] sm:$0xf]
      %v498 = vld [vmem:[%s479 + $0x90] sm:$0xff]
      %v499 = vld [vmem:[%s479 + $0x98] sm:$0xf]
      %v500 = vld [vmem:[%s479 + $0xa0] sm:$0xff]
      %v501 = vld [vmem:[%s479 + $0xa8] sm:$0xf]
      %v502 = vld [vmem:[%s479 + $0xb0] sm:$0xff]
      %v503 = vld [vmem:[%s479 + $0xb8] sm:$0xf]
      %s504 = sadd.s32 %s75, 6
      %s505 = sld [smem:[#allocation3 + %s504]]
      %v506 = vstv %s505
      %v507 = vmul.f32 %v480, %v506
      %v508 = vmul.f32 %v481, %v506
      %v509 = vmul.f32 %v482, %v506
      %v510 = vmul.f32 %v483, %v506
      %v511 = vmul.f32 %v484, %v506
      %v512 = vmul.f32 %v485, %v506
      %v513 = vmul.f32 %v486, %v506
      %v514 = vmul.f32 %v487, %v506
      %v515 = vmul.f32 %v488, %v506
      %v516 = vmul.f32 %v489, %v506
      %v517 = vmul.f32 %v490, %v506
      %v518 = vmul.f32 %v491, %v506
      %v519 = vmul.f32 %v492, %v506
      %v520 = vmul.f32 %v493, %v506
      %v521 = vmul.f32 %v494, %v506
      %v522 = vmul.f32 %v495, %v506
      %v523 = vmul.f32 %v496, %v506
      %v524 = vmul.f32 %v497, %v506
      %v525 = vmul.f32 %v498, %v506
      %v526 = vmul.f32 %v499, %v506
      %v527 = vmul.f32 %v500, %v506
      %v528 = vmul.f32 %v501, %v506
      %v529 = vmul.f32 %v502, %v506
      %v530 = vmul.f32 %v503, %v506
      %v531 = vadd.f32 %v455, %v507
      %v532 = vadd.f32 %v456, %v508
      %v533 = vadd.f32 %v457, %v509
      %v534 = vadd.f32 %v458, %v510
      %v535 = vadd.f32 %v459, %v511
      %v536 = vadd.f32 %v460, %v512
      %v537 = vadd.f32 %v461, %v513
      %v538 = vadd.f32 %v462, %v514
      %v539 = vadd.f32 %v463, %v515
      %v540 = vadd.f32 %v464, %v516
      %v541 = vadd.f32 %v465, %v517
      %v542 = vadd.f32 %v466, %v518
      %v543 = vadd.f32 %v467, %v519
      %v544 = vadd.f32 %v468, %v520
      %v545 = vadd.f32 %v469, %v521
      %v546 = vadd.f32 %v470, %v522
      %v547 = vadd.f32 %v471, %v523
      %v548 = vadd.f32 %v472, %v524
      %v549 = vadd.f32 %v473, %v525
      %v550 = vadd.f32 %v474, %v526
      %v551 = vadd.f32 %v475, %v527
      %v552 = vadd.f32 %v476, %v528
      %v553 = vadd.f32 %v477, %v529
      %v554 = vadd.f32 %v478, %v530
      %v555 = vld [vmem:[%s403 + $0x1] sm:$0xff]
      %v556 = vld [vmem:[%s403 + $0x9] sm:$0xf]
      %v557 = vld [vmem:[%s403 + $0x11] sm:$0xff]
      %v558 = vld [vmem:[%s403 + $0x19] sm:$0xf]
      %v559 = vld [vmem:[%s403 + $0x21] sm:$0xff]
      %v560 = vld [vmem:[%s403 + $0x29] sm:$0xf]
      %v561 = vld [vmem:[%s403 + $0x31] sm:$0xff]
      %v562 = vld [vmem:[%s403 + $0x39] sm:$0xf]
      %v563 = vld [vmem:[%s403 + $0x41] sm:$0xff]
      %v564 = vld [vmem:[%s403 + $0x49] sm:$0xf]
      %v565 = vld [vmem:[%s403 + $0x51] sm:$0xff]
      %v566 = vld [vmem:[%s403 + $0x59] sm:$0xf]
      %v567 = vld [vmem:[%s403 + $0x61] sm:$0xff]
      %v568 = vld [vmem:[%s403 + $0x69] sm:$0xf]
      %v569 = vld [vmem:[%s403 + $0x71] sm:$0xff]
      %v570 = vld [vmem:[%s403 + $0x79] sm:$0xf]
      %v571 = vld [vmem:[%s403 + $0x81] sm:$0xff]
      %v572 = vld [vmem:[%s403 + $0x89] sm:$0xf]
      %v573 = vld [vmem:[%s403 + $0x91] sm:$0xff]
      %v574 = vld [vmem:[%s403 + $0x99] sm:$0xf]
      %v575 = vld [vmem:[%s403 + $0xa1] sm:$0xff]
      %v576 = vld [vmem:[%s403 + $0xa9] sm:$0xf]
      %v577 = vld [vmem:[%s403 + $0xb1] sm:$0xff]
      %v578 = vld [vmem:[%s403 + $0xb9] sm:$0xf]
      %s579 = sadd.s32 %s75, 7
      %s580 = sld [smem:[#allocation3 + %s579]]
      %v581 = vstv %s580
      %v582 = vmul.f32 %v555, %v581
      %v583 = vmul.f32 %v556, %v581
      %v584 = vmul.f32 %v557, %v581
      %v585 = vmul.f32 %v558, %v581
      %v586 = vmul.f32 %v559, %v581
      %v587 = vmul.f32 %v560, %v581
      %v588 = vmul.f32 %v561, %v581
      %v589 = vmul.f32 %v562, %v581
      %v590 = vmul.f32 %v563, %v581
      %v591 = vmul.f32 %v564, %v581
      %v592 = vmul.f32 %v565, %v581
      %v593 = vmul.f32 %v566, %v581
      %v594 = vmul.f32 %v567, %v581
      %v595 = vmul.f32 %v568, %v581
      %v596 = vmul.f32 %v569, %v581
      %v597 = vmul.f32 %v570, %v581
      %v598 = vmul.f32 %v571, %v581
      %v599 = vmul.f32 %v572, %v581
      %v600 = vmul.f32 %v573, %v581
      %v601 = vmul.f32 %v574, %v581
      %v602 = vmul.f32 %v575, %v581
      %v603 = vmul.f32 %v576, %v581
      %v604 = vmul.f32 %v577, %v581
      %v605 = vmul.f32 %v578, %v581
      %v606 = vadd.f32 %v531, %v582
      %v607 = vadd.f32 %v532, %v583
      %v608 = vadd.f32 %v533, %v584
      %v609 = vadd.f32 %v534, %v585
      %v610 = vadd.f32 %v535, %v586
      %v611 = vadd.f32 %v536, %v587
      %v612 = vadd.f32 %v537, %v588
      %v613 = vadd.f32 %v538, %v589
      %v614 = vadd.f32 %v539, %v590
      %v615 = vadd.f32 %v540, %v591
      %v616 = vadd.f32 %v541, %v592
      %v617 = vadd.f32 %v542, %v593
      %v618 = vadd.f32 %v543, %v594
      %v619 = vadd.f32 %v544, %v595
      %v620 = vadd.f32 %v545, %v596
      %v621 = vadd.f32 %v546, %v597
      %v622 = vadd.f32 %v547, %v598
      %v623 = vadd.f32 %v548, %v599
      %v624 = vadd.f32 %v549, %v600
      %v625 = vadd.f32 %v550, %v601
      %v626 = vadd.f32 %v551, %v602
      %v627 = vadd.f32 %v552, %v603
      %v628 = vadd.f32 %v553, %v604
      %v629 = vadd.f32 %v554, %v605
      %v630 = vld [vmem:[%s479 + $0x1] sm:$0xff]
      %v631 = vld [vmem:[%s479 + $0x9] sm:$0xf]
      %v632 = vld [vmem:[%s479 + $0x11] sm:$0xff]
      %v633 = vld [vmem:[%s479 + $0x19] sm:$0xf]
      %v634 = vld [vmem:[%s479 + $0x21] sm:$0xff]
      %v635 = vld [vmem:[%s479 + $0x29] sm:$0xf]
      %v636 = vld [vmem:[%s479 + $0x31] sm:$0xff]
      %v637 = vld [vmem:[%s479 + $0x39] sm:$0xf]
      %v638 = vld [vmem:[%s479 + $0x41] sm:$0xff]
      %v639 = vld [vmem:[%s479 + $0x49] sm:$0xf]
      %v640 = vld [vmem:[%s479 + $0x51] sm:$0xff]
      %v641 = vld [vmem:[%s479 + $0x59] sm:$0xf]
      %v642 = vld [vmem:[%s479 + $0x61] sm:$0xff]
      %v643 = vld [vmem:[%s479 + $0x69] sm:$0xf]
      %v644 = vld [vmem:[%s479 + $0x71] sm:$0xff]
      %v645 = vld [vmem:[%s479 + $0x79] sm:$0xf]
      %v646 = vld [vmem:[%s479 + $0x81] sm:$0xff]
      %v647 = vld [vmem:[%s479 + $0x89] sm:$0xf]
      %v648 = vld [vmem:[%s479 + $0x91] sm:$0xff]
      %v649 = vld [vmem:[%s479 + $0x99] sm:$0xf]
      %v650 = vld [vmem:[%s479 + $0xa1] sm:$0xff]
      %v651 = vld [vmem:[%s479 + $0xa9] sm:$0xf]
      %v652 = vld [vmem:[%s479 + $0xb1] sm:$0xff]
      %v653 = vld [vmem:[%s479 + $0xb9] sm:$0xf]
      %s654 = sadd.s32 %s75, 8
      %s655 = sld [smem:[#allocation3 + %s654]]
      %v656 = vstv %s655
      %v657 = vmul.f32 %v630, %v656
      %v658 = vmul.f32 %v631, %v656
      %v659 = vmul.f32 %v632, %v656
      %v660 = vmul.f32 %v633, %v656
      %v661 = vmul.f32 %v634, %v656
      %v662 = vmul.f32 %v635, %v656
      %v663 = vmul.f32 %v636, %v656
      %v664 = vmul.f32 %v637, %v656
      %v665 = vmul.f32 %v638, %v656
      %v666 = vmul.f32 %v639, %v656
      %v667 = vmul.f32 %v640, %v656
      %v668 = vmul.f32 %v641, %v656
      %v669 = vmul.f32 %v642, %v656
      %v670 = vmul.f32 %v643, %v656
      %v671 = vmul.f32 %v644, %v656
      %v672 = vmul.f32 %v645, %v656
      %v673 = vmul.f32 %v646, %v656
      %v674 = vmul.f32 %v647, %v656
      %v675 = vmul.f32 %v648, %v656
      %v676 = vmul.f32 %v649, %v656
      %v677 = vmul.f32 %v650, %v656
      %v678 = vmul.f32 %v651, %v656
      %v679 = vmul.f32 %v652, %v656
      %v680 = vmul.f32 %v653, %v656
      %v681 = vadd.f32 %v606, %v657
      %v682 = vadd.f32 %v607, %v658
      %v683 = vadd.f32 %v608, %v659
      %v684 = vadd.f32 %v609, %v660
      %v685 = vadd.f32 %v610, %v661
      %v686 = vadd.f32 %v611, %v662
      %v687 = vadd.f32 %v612, %v663
      %v688 = vadd.f32 %v613, %v664
      %v689 = vadd.f32 %v614, %v665
      %v690 = vadd.f32 %v615, %v666
      %v691 = vadd.f32 %v616, %v667
      %v692 = vadd.f32 %v617, %v668
      %v693 = vadd.f32 %v618, %v669
      %v694 = vadd.f32 %v619, %v670
      %v695 = vadd.f32 %v620, %v671
      %v696 = vadd.f32 %v621, %v672
      %v697 = vadd.f32 %v622, %v673
      %v698 = vadd.f32 %v623, %v674
      %v699 = vadd.f32 %v624, %v675
      %v700 = vadd.f32 %v625, %v676
      %v701 = vadd.f32 %v626, %v677
      %v702 = vadd.f32 %v627, %v678
      %v703 = vadd.f32 %v628, %v679
      %v704 = vadd.f32 %v629, %v680
      %v705 = vld [vmem:[%s403 + $0x2] sm:$0xff]
      %v706 = vld [vmem:[%s403 + $0xa] sm:$0xf]
      %v707 = vld [vmem:[%s403 + $0x12] sm:$0xff]
      %v708 = vld [vmem:[%s403 + $0x1a] sm:$0xf]
      %v709 = vld [vmem:[%s403 + $0x22] sm:$0xff]
      %v710 = vld [vmem:[%s403 + $0x2a] sm:$0xf]
      %v711 = vld [vmem:[%s403 + $0x32] sm:$0xff]
      %v712 = vld [vmem:[%s403 + $0x3a] sm:$0xf]
      %v713 = vld [vmem:[%s403 + $0x42] sm:$0xff]
      %v714 = vld [vmem:[%s403 + $0x4a] sm:$0xf]
      %v715 = vld [vmem:[%s403 + $0x52] sm:$0xff]
      %v716 = vld [vmem:[%s403 + $0x5a] sm:$0xf]
      %v717 = vld [vmem:[%s403 + $0x62] sm:$0xff]
      %v718 = vld [vmem:[%s403 + $0x6a] sm:$0xf]
      %v719 = vld [vmem:[%s403 + $0x72] sm:$0xff]
      %v720 = vld [vmem:[%s403 + $0x7a] sm:$0xf]
      %v721 = vld [vmem:[%s403 + $0x82] sm:$0xff]
      %v722 = vld [vmem:[%s403 + $0x8a] sm:$0xf]
      %v723 = vld [vmem:[%s403 + $0x92] sm:$0xff]
      %v724 = vld [vmem:[%s403 + $0x9a] sm:$0xf]
      %v725 = vld [vmem:[%s403 + $0xa2] sm:$0xff]
      %v726 = vld [vmem:[%s403 + $0xaa] sm:$0xf]
      %v727 = vld [vmem:[%s403 + $0xb2] sm:$0xff]
      %v728 = vld [vmem:[%s403 + $0xba] sm:$0xf]
      %s729 = sadd.s32 %s75, 9
      %s730 = sld [smem:[#allocation3 + %s729]]
      %v731 = vstv %s730
      %v732 = vmul.f32 %v705, %v731
      %v733 = vmul.f32 %v706, %v731
      %v734 = vmul.f32 %v707, %v731
      %v735 = vmul.f32 %v708, %v731
      %v736 = vmul.f32 %v709, %v731
      %v737 = vmul.f32 %v710, %v731
      %v738 = vmul.f32 %v711, %v731
      %v739 = vmul.f32 %v712, %v731
      %v740 = vmul.f32 %v713, %v731
      %v741 = vmul.f32 %v714, %v731
      %v742 = vmul.f32 %v715, %v731
      %v743 = vmul.f32 %v716, %v731
      %v744 = vmul.f32 %v717, %v731
      %v745 = vmul.f32 %v718, %v731
      %v746 = vmul.f32 %v719, %v731
      %v747 = vmul.f32 %v720, %v731
      %v748 = vmul.f32 %v721, %v731
      %v749 = vmul.f32 %v722, %v731
      %v750 = vmul.f32 %v723, %v731
      %v751 = vmul.f32 %v724, %v731
      %v752 = vmul.f32 %v725, %v731
      %v753 = vmul.f32 %v726, %v731
      %v754 = vmul.f32 %v727, %v731
      %v755 = vmul.f32 %v728, %v731
      %v756 = vadd.f32 %v681, %v732
      %v757 = vadd.f32 %v682, %v733
      %v758 = vadd.f32 %v683, %v734
      %v759 = vadd.f32 %v684, %v735
      %v760 = vadd.f32 %v685, %v736
      %v761 = vadd.f32 %v686, %v737
      %v762 = vadd.f32 %v687, %v738
      %v763 = vadd.f32 %v688, %v739
      %v764 = vadd.f32 %v689, %v740
      %v765 = vadd.f32 %v690, %v741
      %v766 = vadd.f32 %v691, %v742
      %v767 = vadd.f32 %v692, %v743
      %v768 = vadd.f32 %v693, %v744
      %v769 = vadd.f32 %v694, %v745
      %v770 = vadd.f32 %v695, %v746
      %v771 = vadd.f32 %v696, %v747
      %v772 = vadd.f32 %v697, %v748
      %v773 = vadd.f32 %v698, %v749
      %v774 = vadd.f32 %v699, %v750
      %v775 = vadd.f32 %v700, %v751
      %v776 = vadd.f32 %v701, %v752
      %v777 = vadd.f32 %v702, %v753
      %v778 = vadd.f32 %v703, %v754
      %v779 = vadd.f32 %v704, %v755
      %s780 = scalar_lea.vmem %s0, 16
      %v781 = vld [vmem:[%s780] sm:$0xff]
      %v782 = vld [vmem:[%s780 + $0x8] sm:$0xf]
      %v783 = vld [vmem:[%s780 + $0x10] sm:$0xff]
      %v784 = vld [vmem:[%s780 + $0x18] sm:$0xf]
      %v785 = vld [vmem:[%s780 + $0x20] sm:$0xff]
      %v786 = vld [vmem:[%s780 + $0x28] sm:$0xf]
      %v787 = vld [vmem:[%s780 + $0x30] sm:$0xff]
      %v788 = vld [vmem:[%s780 + $0x38] sm:$0xf]
      %v789 = vld [vmem:[%s780 + $0x40] sm:$0xff]
      %v790 = vld [vmem:[%s780 + $0x48] sm:$0xf]
      %v791 = vld [vmem:[%s780 + $0x50] sm:$0xff]
      %v792 = vld [vmem:[%s780 + $0x58] sm:$0xf]
      %v793 = vld [vmem:[%s780 + $0x60] sm:$0xff]
      %v794 = vld [vmem:[%s780 + $0x68] sm:$0xf]
      %v795 = vld [vmem:[%s780 + $0x70] sm:$0xff]
      %v796 = vld [vmem:[%s780 + $0x78] sm:$0xf]
      %v797 = vld [vmem:[%s780 + $0x80] sm:$0xff]
      %v798 = vld [vmem:[%s780 + $0x88] sm:$0xf]
      %v799 = vld [vmem:[%s780 + $0x90] sm:$0xff]
      %v800 = vld [vmem:[%s780 + $0x98] sm:$0xf]
      %v801 = vld [vmem:[%s780 + $0xa0] sm:$0xff]
      %v802 = vld [vmem:[%s780 + $0xa8] sm:$0xf]
      %v803 = vld [vmem:[%s780 + $0xb0] sm:$0xff]
      %v804 = vld [vmem:[%s780 + $0xb8] sm:$0xf]
      %s805 = sadd.s32 %s75, 10
      %s806 = sld [smem:[#allocation3 + %s805]]
      %v807 = vstv %s806
      %v808 = vmul.f32 %v781, %v807
      %v809 = vmul.f32 %v782, %v807
      %v810 = vmul.f32 %v783, %v807
      %v811 = vmul.f32 %v784, %v807
      %v812 = vmul.f32 %v785, %v807
      %v813 = vmul.f32 %v786, %v807
      %v814 = vmul.f32 %v787, %v807
      %v815 = vmul.f32 %v788, %v807
      %v816 = vmul.f32 %v789, %v807
      %v817 = vmul.f32 %v790, %v807
      %v818 = vmul.f32 %v791, %v807
      %v819 = vmul.f32 %v792, %v807
      %v820 = vmul.f32 %v793, %v807
      %v821 = vmul.f32 %v794, %v807
      %v822 = vmul.f32 %v795, %v807
      %v823 = vmul.f32 %v796, %v807
      %v824 = vmul.f32 %v797, %v807
      %v825 = vmul.f32 %v798, %v807
      %v826 = vmul.f32 %v799, %v807
      %v827 = vmul.f32 %v800, %v807
      %v828 = vmul.f32 %v801, %v807
      %v829 = vmul.f32 %v802, %v807
      %v830 = vmul.f32 %v803, %v807
      %v831 = vmul.f32 %v804, %v807
      %v832 = vadd.f32 %v756, %v808
      %v833 = vadd.f32 %v757, %v809
      %v834 = vadd.f32 %v758, %v810
      %v835 = vadd.f32 %v759, %v811
      %v836 = vadd.f32 %v760, %v812
      %v837 = vadd.f32 %v761, %v813
      %v838 = vadd.f32 %v762, %v814
      %v839 = vadd.f32 %v763, %v815
      %v840 = vadd.f32 %v764, %v816
      %v841 = vadd.f32 %v765, %v817
      %v842 = vadd.f32 %v766, %v818
      %v843 = vadd.f32 %v767, %v819
      %v844 = vadd.f32 %v768, %v820
      %v845 = vadd.f32 %v769, %v821
      %v846 = vadd.f32 %v770, %v822
      %v847 = vadd.f32 %v771, %v823
      %v848 = vadd.f32 %v772, %v824
      %v849 = vadd.f32 %v773, %v825
      %v850 = vadd.f32 %v774, %v826
      %v851 = vadd.f32 %v775, %v827
      %v852 = vadd.f32 %v776, %v828
      %v853 = vadd.f32 %v777, %v829
      %v854 = vadd.f32 %v778, %v830
      %v855 = vadd.f32 %v779, %v831
      %s856 = scalar_lea.vmem %s0, 240
      %v857 = vld [vmem:[%s856] sm:$0xff]
      %v858 = vld [vmem:[%s856 + $0x8] sm:$0xf]
      %v859 = vld [vmem:[%s856 + $0x10] sm:$0xff]
      %v860 = vld [vmem:[%s856 + $0x18] sm:$0xf]
      %v861 = vld [vmem:[%s856 + $0x20] sm:$0xff]
      %v862 = vld [vmem:[%s856 + $0x28] sm:$0xf]
      %v863 = vld [vmem:[%s856 + $0x30] sm:$0xff]
      %v864 = vld [vmem:[%s856 + $0x38] sm:$0xf]
      %v865 = vld [vmem:[%s856 + $0x40] sm:$0xff]
      %v866 = vld [vmem:[%s856 + $0x48] sm:$0xf]
      %v867 = vld [vmem:[%s856 + $0x50] sm:$0xff]
      %v868 = vld [vmem:[%s856 + $0x58] sm:$0xf]
      %v869 = vld [vmem:[%s856 + $0x60] sm:$0xff]
      %v870 = vld [vmem:[%s856 + $0x68] sm:$0xf]
      %v871 = vld [vmem:[%s856 + $0x70] sm:$0xff]
      %v872 = vld [vmem:[%s856 + $0x78] sm:$0xf]
      %v873 = vld [vmem:[%s856 + $0x80] sm:$0xff]
      %v874 = vld [vmem:[%s856 + $0x88] sm:$0xf]
      %v875 = vld [vmem:[%s856 + $0x90] sm:$0xff]
      %v876 = vld [vmem:[%s856 + $0x98] sm:$0xf]
      %v877 = vld [vmem:[%s856 + $0xa0] sm:$0xff]
      %v878 = vld [vmem:[%s856 + $0xa8] sm:$0xf]
      %v879 = vld [vmem:[%s856 + $0xb0] sm:$0xff]
      %v880 = vld [vmem:[%s856 + $0xb8] sm:$0xf]
      %s881 = sadd.s32 %s75, 11
      %s882 = sld [smem:[#allocation3 + %s881]]
      %v883 = vstv %s882
      %v884 = vmul.f32 %v857, %v883
      %v885 = vmul.f32 %v858, %v883
      %v886 = vmul.f32 %v859, %v883
      %v887 = vmul.f32 %v860, %v883
      %v888 = vmul.f32 %v861, %v883
      %v889 = vmul.f32 %v862, %v883
      %v890 = vmul.f32 %v863, %v883
      %v891 = vmul.f32 %v864, %v883
      %v892 = vmul.f32 %v865, %v883
      %v893 = vmul.f32 %v866, %v883
      %v894 = vmul.f32 %v867, %v883
      %v895 = vmul.f32 %v868, %v883
      %v896 = vmul.f32 %v869, %v883
      %v897 = vmul.f32 %v870, %v883
      %v898 = vmul.f32 %v871, %v883
      %v899 = vmul.f32 %v872, %v883
      %v900 = vmul.f32 %v873, %v883
      %v901 = vmul.f32 %v874, %v883
      %v902 = vmul.f32 %v875, %v883
      %v903 = vmul.f32 %v876, %v883
      %v904 = vmul.f32 %v877, %v883
      %v905 = vmul.f32 %v878, %v883
      %v906 = vmul.f32 %v879, %v883
      %v907 = vmul.f32 %v880, %v883
      %v908 = vadd.f32 %v832, %v884
      %v909 = vadd.f32 %v833, %v885
      %v910 = vadd.f32 %v834, %v886
      %v911 = vadd.f32 %v835, %v887
      %v912 = vadd.f32 %v836, %v888
      %v913 = vadd.f32 %v837, %v889
      %v914 = vadd.f32 %v838, %v890
      %v915 = vadd.f32 %v839, %v891
      %v916 = vadd.f32 %v840, %v892
      %v917 = vadd.f32 %v841, %v893
      %v918 = vadd.f32 %v842, %v894
      %v919 = vadd.f32 %v843, %v895
      %v920 = vadd.f32 %v844, %v896
      %v921 = vadd.f32 %v845, %v897
      %v922 = vadd.f32 %v846, %v898
      %v923 = vadd.f32 %v847, %v899
      %v924 = vadd.f32 %v848, %v900
      %v925 = vadd.f32 %v849, %v901
      %v926 = vadd.f32 %v850, %v902
      %v927 = vadd.f32 %v851, %v903
      %v928 = vadd.f32 %v852, %v904
      %v929 = vadd.f32 %v853, %v905
      %v930 = vadd.f32 %v854, %v906
      %v931 = vadd.f32 %v855, %v907
      %v932 = vld [vmem:[%s780 + $0x1] sm:$0xff]
      %v933 = vld [vmem:[%s780 + $0x9] sm:$0xf]
      %v934 = vld [vmem:[%s780 + $0x11] sm:$0xff]
      %v935 = vld [vmem:[%s780 + $0x19] sm:$0xf]
      %v936 = vld [vmem:[%s780 + $0x21] sm:$0xff]
      %v937 = vld [vmem:[%s780 + $0x29] sm:$0xf]
      %v938 = vld [vmem:[%s780 + $0x31] sm:$0xff]
      %v939 = vld [vmem:[%s780 + $0x39] sm:$0xf]
      %v940 = vld [vmem:[%s780 + $0x41] sm:$0xff]
      %v941 = vld [vmem:[%s780 + $0x49] sm:$0xf]
      %v942 = vld [vmem:[%s780 + $0x51] sm:$0xff]
      %v943 = vld [vmem:[%s780 + $0x59] sm:$0xf]
      %v944 = vld [vmem:[%s780 + $0x61] sm:$0xff]
      %v945 = vld [vmem:[%s780 + $0x69] sm:$0xf]
      %v946 = vld [vmem:[%s780 + $0x71] sm:$0xff]
      %v947 = vld [vmem:[%s780 + $0x79] sm:$0xf]
      %v948 = vld [vmem:[%s780 + $0x81] sm:$0xff]
      %v949 = vld [vmem:[%s780 + $0x89] sm:$0xf]
      %v950 = vld [vmem:[%s780 + $0x91] sm:$0xff]
      %v951 = vld [vmem:[%s780 + $0x99] sm:$0xf]
      %v952 = vld [vmem:[%s780 + $0xa1] sm:$0xff]
      %v953 = vld [vmem:[%s780 + $0xa9] sm:$0xf]
      %v954 = vld [vmem:[%s780 + $0xb1] sm:$0xff]
      %v955 = vld [vmem:[%s780 + $0xb9] sm:$0xf]
      %s956 = sadd.s32 %s75, 12
      %s957 = sld [smem:[#allocation3 + %s956]]
      %v958 = vstv %s957
      %v959 = vmul.f32 %v932, %v958
      %v960 = vmul.f32 %v933, %v958
      %v961 = vmul.f32 %v934, %v958
      %v962 = vmul.f32 %v935, %v958
      %v963 = vmul.f32 %v936, %v958
      %v964 = vmul.f32 %v937, %v958
      %v965 = vmul.f32 %v938, %v958
      %v966 = vmul.f32 %v939, %v958
      %v967 = vmul.f32 %v940, %v958
      %v968 = vmul.f32 %v941, %v958
      %v969 = vmul.f32 %v942, %v958
      %v970 = vmul.f32 %v943, %v958
      %v971 = vmul.f32 %v944, %v958
      %v972 = vmul.f32 %v945, %v958
      %v973 = vmul.f32 %v946, %v958
      %v974 = vmul.f32 %v947, %v958
      %v975 = vmul.f32 %v948, %v958
      %v976 = vmul.f32 %v949, %v958
      %v977 = vmul.f32 %v950, %v958
      %v978 = vmul.f32 %v951, %v958
      %v979 = vmul.f32 %v952, %v958
      %v980 = vmul.f32 %v953, %v958
      %v981 = vmul.f32 %v954, %v958
      %v982 = vmul.f32 %v955, %v958
      %v983 = vadd.f32 %v908, %v959
      %v984 = vadd.f32 %v909, %v960
      %v985 = vadd.f32 %v910, %v961
      %v986 = vadd.f32 %v911, %v962
      %v987 = vadd.f32 %v912, %v963
      %v988 = vadd.f32 %v913, %v964
      %v989 = vadd.f32 %v914, %v965
      %v990 = vadd.f32 %v915, %v966
      %v991 = vadd.f32 %v916, %v967
      %v992 = vadd.f32 %v917, %v968
      %v993 = vadd.f32 %v918, %v969
      %v994 = vadd.f32 %v919, %v970
      %v995 = vadd.f32 %v920, %v971
      %v996 = vadd.f32 %v921, %v972
      %v997 = vadd.f32 %v922, %v973
      %v998 = vadd.f32 %v923, %v974
      %v999 = vadd.f32 %v924, %v975
      %v1000 = vadd.f32 %v925, %v976
      %v1001 = vadd.f32 %v926, %v977
      %v1002 = vadd.f32 %v927, %v978
      %v1003 = vadd.f32 %v928, %v979
      %v1004 = vadd.f32 %v929, %v980
      %v1005 = vadd.f32 %v930, %v981
      %v1006 = vadd.f32 %v931, %v982
      %v1007 = vld [vmem:[%s856 + $0x1] sm:$0xff]
      %v1008 = vld [vmem:[%s856 + $0x9] sm:$0xf]
      %v1009 = vld [vmem:[%s856 + $0x11] sm:$0xff]
      %v1010 = vld [vmem:[%s856 + $0x19] sm:$0xf]
      %v1011 = vld [vmem:[%s856 + $0x21] sm:$0xff]
      %v1012 = vld [vmem:[%s856 + $0x29] sm:$0xf]
      %v1013 = vld [vmem:[%s856 + $0x31] sm:$0xff]
      %v1014 = vld [vmem:[%s856 + $0x39] sm:$0xf]
      %v1015 = vld [vmem:[%s856 + $0x41] sm:$0xff]
      %v1016 = vld [vmem:[%s856 + $0x49] sm:$0xf]
      %v1017 = vld [vmem:[%s856 + $0x51] sm:$0xff]
      %v1018 = vld [vmem:[%s856 + $0x59] sm:$0xf]
      %v1019 = vld [vmem:[%s856 + $0x61] sm:$0xff]
      %v1020 = vld [vmem:[%s856 + $0x69] sm:$0xf]
      %v1021 = vld [vmem:[%s856 + $0x71] sm:$0xff]
      %v1022 = vld [vmem:[%s856 + $0x79] sm:$0xf]
      %v1023 = vld [vmem:[%s856 + $0x81] sm:$0xff]
      %v1024 = vld [vmem:[%s856 + $0x89] sm:$0xf]
      %v1025 = vld [vmem:[%s856 + $0x91] sm:$0xff]
      %v1026 = vld [vmem:[%s856 + $0x99] sm:$0xf]
      %v1027 = vld [vmem:[%s856 + $0xa1] sm:$0xff]
      %v1028 = vld [vmem:[%s856 + $0xa9] sm:$0xf]
      %v1029 = vld [vmem:[%s856 + $0xb1] sm:$0xff]
      %v1030 = vld [vmem:[%s856 + $0xb9] sm:$0xf]
      %s1031 = sadd.s32 %s75, 13
      %s1032 = sld [smem:[#allocation3 + %s1031]]
      %v1033 = vstv %s1032
      %v1034 = vmul.f32 %v1007, %v1033
      %v1035 = vmul.f32 %v1008, %v1033
      %v1036 = vmul.f32 %v1009, %v1033
      %v1037 = vmul.f32 %v1010, %v1033
      %v1038 = vmul.f32 %v1011, %v1033
      %v1039 = vmul.f32 %v1012, %v1033
      %v1040 = vmul.f32 %v1013, %v1033
      %v1041 = vmul.f32 %v1014, %v1033
      %v1042 = vmul.f32 %v1015, %v1033
      %v1043 = vmul.f32 %v1016, %v1033
      %v1044 = vmul.f32 %v1017, %v1033
      %v1045 = vmul.f32 %v1018, %v1033
      %v1046 = vmul.f32 %v1019, %v1033
      %v1047 = vmul.f32 %v1020, %v1033
      %v1048 = vmul.f32 %v1021, %v1033
      %v1049 = vmul.f32 %v1022, %v1033
      %v1050 = vmul.f32 %v1023, %v1033
      %v1051 = vmul.f32 %v1024, %v1033
      %v1052 = vmul.f32 %v1025, %v1033
      %v1053 = vmul.f32 %v1026, %v1033
      %v1054 = vmul.f32 %v1027, %v1033
      %v1055 = vmul.f32 %v1028, %v1033
      %v1056 = vmul.f32 %v1029, %v1033
      %v1057 = vmul.f32 %v1030, %v1033
      %v1058 = vadd.f32 %v983, %v1034
      %v1059 = vadd.f32 %v984, %v1035
      %v1060 = vadd.f32 %v985, %v1036
      %v1061 = vadd.f32 %v986, %v1037
      %v1062 = vadd.f32 %v987, %v1038
      %v1063 = vadd.f32 %v988, %v1039
      %v1064 = vadd.f32 %v989, %v1040
      %v1065 = vadd.f32 %v990, %v1041
      %v1066 = vadd.f32 %v991, %v1042
      %v1067 = vadd.f32 %v992, %v1043
      %v1068 = vadd.f32 %v993, %v1044
      %v1069 = vadd.f32 %v994, %v1045
      %v1070 = vadd.f32 %v995, %v1046
      %v1071 = vadd.f32 %v996, %v1047
      %v1072 = vadd.f32 %v997, %v1048
      %v1073 = vadd.f32 %v998, %v1049
      %v1074 = vadd.f32 %v999, %v1050
      %v1075 = vadd.f32 %v1000, %v1051
      %v1076 = vadd.f32 %v1001, %v1052
      %v1077 = vadd.f32 %v1002, %v1053
      %v1078 = vadd.f32 %v1003, %v1054
      %v1079 = vadd.f32 %v1004, %v1055
      %v1080 = vadd.f32 %v1005, %v1056
      %v1081 = vadd.f32 %v1006, %v1057
      %v1082 = vld [vmem:[%s780 + $0x2] sm:$0xff]
      %v1083 = vld [vmem:[%s780 + $0xa] sm:$0xf]
      %v1084 = vld [vmem:[%s780 + $0x12] sm:$0xff]
      %v1085 = vld [vmem:[%s780 + $0x1a] sm:$0xf]
      %v1086 = vld [vmem:[%s780 + $0x22] sm:$0xff]
      %v1087 = vld [vmem:[%s780 + $0x2a] sm:$0xf]
      %v1088 = vld [vmem:[%s780 + $0x32] sm:$0xff]
      %v1089 = vld [vmem:[%s780 + $0x3a] sm:$0xf]
      %v1090 = vld [vmem:[%s780 + $0x42] sm:$0xff]
      %v1091 = vld [vmem:[%s780 + $0x4a] sm:$0xf]
      %v1092 = vld [vmem:[%s780 + $0x52] sm:$0xff]
      %v1093 = vld [vmem:[%s780 + $0x5a] sm:$0xf]
      %v1094 = vld [vmem:[%s780 + $0x62] sm:$0xff]
      %v1095 = vld [vmem:[%s780 + $0x6a] sm:$0xf]
      %v1096 = vld [vmem:[%s780 + $0x72] sm:$0xff]
      %v1097 = vld [vmem:[%s780 + $0x7a] sm:$0xf]
      %v1098 = vld [vmem:[%s780 + $0x82] sm:$0xff]
      %v1099 = vld [vmem:[%s780 + $0x8a] sm:$0xf]
      %v1100 = vld [vmem:[%s780 + $0x92] sm:$0xff]
      %v1101 = vld [vmem:[%s780 + $0x9a] sm:$0xf]
      %v1102 = vld [vmem:[%s780 + $0xa2] sm:$0xff]
      %v1103 = vld [vmem:[%s780 + $0xaa] sm:$0xf]
      %v1104 = vld [vmem:[%s780 + $0xb2] sm:$0xff]
      %v1105 = vld [vmem:[%s780 + $0xba] sm:$0xf]
      %s1106 = sadd.s32 %s75, 14
      %s1107 = sld [smem:[#allocation3 + %s1106]]
      %v1108 = vstv %s1107
      %v1109 = vmul.f32 %v1082, %v1108
      %v1110 = vmul.f32 %v1083, %v1108
      %v1111 = vmul.f32 %v1084, %v1108
      %v1112 = vmul.f32 %v1085, %v1108
      %v1113 = vmul.f32 %v1086, %v1108
      %v1114 = vmul.f32 %v1087, %v1108
      %v1115 = vmul.f32 %v1088, %v1108
      %v1116 = vmul.f32 %v1089, %v1108
      %v1117 = vmul.f32 %v1090, %v1108
      %v1118 = vmul.f32 %v1091, %v1108
      %v1119 = vmul.f32 %v1092, %v1108
      %v1120 = vmul.f32 %v1093, %v1108
      %v1121 = vmul.f32 %v1094, %v1108
      %v1122 = vmul.f32 %v1095, %v1108
      %v1123 = vmul.f32 %v1096, %v1108
      %v1124 = vmul.f32 %v1097, %v1108
      %v1125 = vmul.f32 %v1098, %v1108
      %v1126 = vmul.f32 %v1099, %v1108
      %v1127 = vmul.f32 %v1100, %v1108
      %v1128 = vmul.f32 %v1101, %v1108
      %v1129 = vmul.f32 %v1102, %v1108
      %v1130 = vmul.f32 %v1103, %v1108
      %v1131 = vmul.f32 %v1104, %v1108
      %v1132 = vmul.f32 %v1105, %v1108
      %v1133 = vadd.f32 %v1058, %v1109
      %v1134 = vadd.f32 %v1059, %v1110
      %v1135 = vadd.f32 %v1060, %v1111
      %v1136 = vadd.f32 %v1061, %v1112
      %v1137 = vadd.f32 %v1062, %v1113
      %v1138 = vadd.f32 %v1063, %v1114
      %v1139 = vadd.f32 %v1064, %v1115
      %v1140 = vadd.f32 %v1065, %v1116
      %v1141 = vadd.f32 %v1066, %v1117
      %v1142 = vadd.f32 %v1067, %v1118
      %v1143 = vadd.f32 %v1068, %v1119
      %v1144 = vadd.f32 %v1069, %v1120
      %v1145 = vadd.f32 %v1070, %v1121
      %v1146 = vadd.f32 %v1071, %v1122
      %v1147 = vadd.f32 %v1072, %v1123
      %v1148 = vadd.f32 %v1073, %v1124
      %v1149 = vadd.f32 %v1074, %v1125
      %v1150 = vadd.f32 %v1075, %v1126
      %v1151 = vadd.f32 %v1076, %v1127
      %v1152 = vadd.f32 %v1077, %v1128
      %v1153 = vadd.f32 %v1078, %v1129
      %v1154 = vadd.f32 %v1079, %v1130
      %v1155 = vadd.f32 %v1080, %v1131
      %v1156 = vadd.f32 %v1081, %v1132
      %s1157 = scalar_lea.vmem %s0, 464
      %v1158 = vld [vmem:[%s1157] sm:$0xff]
      %v1159 = vld [vmem:[%s1157 + $0x8] sm:$0xf]
      %v1160 = vld [vmem:[%s1157 + $0x10] sm:$0xff]
      %v1161 = vld [vmem:[%s1157 + $0x18] sm:$0xf]
      %v1162 = vld [vmem:[%s1157 + $0x20] sm:$0xff]
      %v1163 = vld [vmem:[%s1157 + $0x28] sm:$0xf]
      %v1164 = vld [vmem:[%s1157 + $0x30] sm:$0xff]
      %v1165 = vld [vmem:[%s1157 + $0x38] sm:$0xf]
      %v1166 = vld [vmem:[%s1157 + $0x40] sm:$0xff]
      %v1167 = vld [vmem:[%s1157 + $0x48] sm:$0xf]
      %v1168 = vld [vmem:[%s1157 + $0x50] sm:$0xff]
      %v1169 = vld [vmem:[%s1157 + $0x58] sm:$0xf]
      %v1170 = vld [vmem:[%s1157 + $0x60] sm:$0xff]
      %v1171 = vld [vmem:[%s1157 + $0x68] sm:$0xf]
      %v1172 = vld [vmem:[%s1157 + $0x70] sm:$0xff]
      %v1173 = vld [vmem:[%s1157 + $0x78] sm:$0xf]
      %v1174 = vld [vmem:[%s1157 + $0x80] sm:$0xff]
      %v1175 = vld [vmem:[%s1157 + $0x88] sm:$0xf]
      %v1176 = vld [vmem:[%s1157 + $0x90] sm:$0xff]
      %v1177 = vld [vmem:[%s1157 + $0x98] sm:$0xf]
      %v1178 = vld [vmem:[%s1157 + $0xa0] sm:$0xff]
      %v1179 = vld [vmem:[%s1157 + $0xa8] sm:$0xf]
      %v1180 = vld [vmem:[%s1157 + $0xb0] sm:$0xff]
      %v1181 = vld [vmem:[%s1157 + $0xb8] sm:$0xf]
      %s1182 = sadd.s32 %s75, 15
      %s1183 = sld [smem:[#allocation3 + %s1182]]
      %v1184 = vstv %s1183
      %v1185 = vmul.f32 %v1158, %v1184
      %v1186 = vmul.f32 %v1159, %v1184
      %v1187 = vmul.f32 %v1160, %v1184
      %v1188 = vmul.f32 %v1161, %v1184
      %v1189 = vmul.f32 %v1162, %v1184
      %v1190 = vmul.f32 %v1163, %v1184
      %v1191 = vmul.f32 %v1164, %v1184
      %v1192 = vmul.f32 %v1165, %v1184
      %v1193 = vmul.f32 %v1166, %v1184
      %v1194 = vmul.f32 %v1167, %v1184
      %v1195 = vmul.f32 %v1168, %v1184
      %v1196 = vmul.f32 %v1169, %v1184
      %v1197 = vmul.f32 %v1170, %v1184
      %v1198 = vmul.f32 %v1171, %v1184
      %v1199 = vmul.f32 %v1172, %v1184
      %v1200 = vmul.f32 %v1173, %v1184
      %v1201 = vmul.f32 %v1174, %v1184
      %v1202 = vmul.f32 %v1175, %v1184
      %v1203 = vmul.f32 %v1176, %v1184
      %v1204 = vmul.f32 %v1177, %v1184
      %v1205 = vmul.f32 %v1178, %v1184
      %v1206 = vmul.f32 %v1179, %v1184
      %v1207 = vmul.f32 %v1180, %v1184
      %v1208 = vmul.f32 %v1181, %v1184
      %v1209 = vadd.f32 %v1133, %v1185
      %v1210 = vadd.f32 %v1134, %v1186
      %v1211 = vadd.f32 %v1135, %v1187
      %v1212 = vadd.f32 %v1136, %v1188
      %v1213 = vadd.f32 %v1137, %v1189
      %v1214 = vadd.f32 %v1138, %v1190
      %v1215 = vadd.f32 %v1139, %v1191
      %v1216 = vadd.f32 %v1140, %v1192
      %v1217 = vadd.f32 %v1141, %v1193
      %v1218 = vadd.f32 %v1142, %v1194
      %v1219 = vadd.f32 %v1143, %v1195
      %v1220 = vadd.f32 %v1144, %v1196
      %v1221 = vadd.f32 %v1145, %v1197
      %v1222 = vadd.f32 %v1146, %v1198
      %v1223 = vadd.f32 %v1147, %v1199
      %v1224 = vadd.f32 %v1148, %v1200
      %v1225 = vadd.f32 %v1149, %v1201
      %v1226 = vadd.f32 %v1150, %v1202
      %v1227 = vadd.f32 %v1151, %v1203
      %v1228 = vadd.f32 %v1152, %v1204
      %v1229 = vadd.f32 %v1153, %v1205
      %v1230 = vadd.f32 %v1154, %v1206
      %v1231 = vadd.f32 %v1155, %v1207
      %v1232 = vadd.f32 %v1156, %v1208
      %s1233 = scalar_lea.vmem %s0, 688
      %v1234 = vld [vmem:[%s1233] sm:$0xff]
      %v1235 = vld [vmem:[%s1233 + $0x8] sm:$0xf]
      %v1236 = vld [vmem:[%s1233 + $0x10] sm:$0xff]
      %v1237 = vld [vmem:[%s1233 + $0x18] sm:$0xf]
      %v1238 = vld [vmem:[%s1233 + $0x20] sm:$0xff]
      %v1239 = vld [vmem:[%s1233 + $0x28] sm:$0xf]
      %v1240 = vld [vmem:[%s1233 + $0x30] sm:$0xff]
      %v1241 = vld [vmem:[%s1233 + $0x38] sm:$0xf]
      %v1242 = vld [vmem:[%s1233 + $0x40] sm:$0xff]
      %v1243 = vld [vmem:[%s1233 + $0x48] sm:$0xf]
      %v1244 = vld [vmem:[%s1233 + $0x50] sm:$0xff]
      %v1245 = vld [vmem:[%s1233 + $0x58] sm:$0xf]
      %v1246 = vld [vmem:[%s1233 + $0x60] sm:$0xff]
      %v1247 = vld [vmem:[%s1233 + $0x68] sm:$0xf]
      %v1248 = vld [vmem:[%s1233 + $0x70] sm:$0xff]
      %v1249 = vld [vmem:[%s1233 + $0x78] sm:$0xf]
      %v1250 = vld [vmem:[%s1233 + $0x80] sm:$0xff]
      %v1251 = vld [vmem:[%s1233 + $0x88] sm:$0xf]
      %v1252 = vld [vmem:[%s1233 + $0x90] sm:$0xff]
      %v1253 = vld [vmem:[%s1233 + $0x98] sm:$0xf]
      %v1254 = vld [vmem:[%s1233 + $0xa0] sm:$0xff]
      %v1255 = vld [vmem:[%s1233 + $0xa8] sm:$0xf]
      %v1256 = vld [vmem:[%s1233 + $0xb0] sm:$0xff]
      %v1257 = vld [vmem:[%s1233 + $0xb8] sm:$0xf]
      %s1258 = sadd.s32 %s75, 16
      %s1259 = sld [smem:[#allocation3 + %s1258]]
      %v1260 = vstv %s1259
      %v1261 = vmul.f32 %v1234, %v1260
      %v1262 = vmul.f32 %v1235, %v1260
      %v1263 = vmul.f32 %v1236, %v1260
      %v1264 = vmul.f32 %v1237, %v1260
      %v1265 = vmul.f32 %v1238, %v1260
      %v1266 = vmul.f32 %v1239, %v1260
      %v1267 = vmul.f32 %v1240, %v1260
      %v1268 = vmul.f32 %v1241, %v1260
      %v1269 = vmul.f32 %v1242, %v1260
      %v1270 = vmul.f32 %v1243, %v1260
      %v1271 = vmul.f32 %v1244, %v1260
      %v1272 = vmul.f32 %v1245, %v1260
      %v1273 = vmul.f32 %v1246, %v1260
      %v1274 = vmul.f32 %v1247, %v1260
      %v1275 = vmul.f32 %v1248, %v1260
      %v1276 = vmul.f32 %v1249, %v1260
      %v1277 = vmul.f32 %v1250, %v1260
      %v1278 = vmul.f32 %v1251, %v1260
      %v1279 = vmul.f32 %v1252, %v1260
      %v1280 = vmul.f32 %v1253, %v1260
      %v1281 = vmul.f32 %v1254, %v1260
      %v1282 = vmul.f32 %v1255, %v1260
      %v1283 = vmul.f32 %v1256, %v1260
      %v1284 = vmul.f32 %v1257, %v1260
      %v1285 = vadd.f32 %v1209, %v1261
      %v1286 = vadd.f32 %v1210, %v1262
      %v1287 = vadd.f32 %v1211, %v1263
      %v1288 = vadd.f32 %v1212, %v1264
      %v1289 = vadd.f32 %v1213, %v1265
      %v1290 = vadd.f32 %v1214, %v1266
      %v1291 = vadd.f32 %v1215, %v1267
      %v1292 = vadd.f32 %v1216, %v1268
      %v1293 = vadd.f32 %v1217, %v1269
      %v1294 = vadd.f32 %v1218, %v1270
      %v1295 = vadd.f32 %v1219, %v1271
      %v1296 = vadd.f32 %v1220, %v1272
      %v1297 = vadd.f32 %v1221, %v1273
      %v1298 = vadd.f32 %v1222, %v1274
      %v1299 = vadd.f32 %v1223, %v1275
      %v1300 = vadd.f32 %v1224, %v1276
      %v1301 = vadd.f32 %v1225, %v1277
      %v1302 = vadd.f32 %v1226, %v1278
      %v1303 = vadd.f32 %v1227, %v1279
      %v1304 = vadd.f32 %v1228, %v1280
      %v1305 = vadd.f32 %v1229, %v1281
      %v1306 = vadd.f32 %v1230, %v1282
      %v1307 = vadd.f32 %v1231, %v1283
      %v1308 = vadd.f32 %v1232, %v1284
      %v1309 = vld [vmem:[%s1157 + $0x1] sm:$0xff]
      %v1310 = vld [vmem:[%s1157 + $0x9] sm:$0xf]
      %v1311 = vld [vmem:[%s1157 + $0x11] sm:$0xff]
      %v1312 = vld [vmem:[%s1157 + $0x19] sm:$0xf]
      %v1313 = vld [vmem:[%s1157 + $0x21] sm:$0xff]
      %v1314 = vld [vmem:[%s1157 + $0x29] sm:$0xf]
      %v1315 = vld [vmem:[%s1157 + $0x31] sm:$0xff]
      %v1316 = vld [vmem:[%s1157 + $0x39] sm:$0xf]
      %v1317 = vld [vmem:[%s1157 + $0x41] sm:$0xff]
      %v1318 = vld [vmem:[%s1157 + $0x49] sm:$0xf]
      %v1319 = vld [vmem:[%s1157 + $0x51] sm:$0xff]
      %v1320 = vld [vmem:[%s1157 + $0x59] sm:$0xf]
      %v1321 = vld [vmem:[%s1157 + $0x61] sm:$0xff]
      %v1322 = vld [vmem:[%s1157 + $0x69] sm:$0xf]
      %v1323 = vld [vmem:[%s1157 + $0x71] sm:$0xff]
      %v1324 = vld [vmem:[%s1157 + $0x79] sm:$0xf]
      %v1325 = vld [vmem:[%s1157 + $0x81] sm:$0xff]
      %v1326 = vld [vmem:[%s1157 + $0x89] sm:$0xf]
      %v1327 = vld [vmem:[%s1157 + $0x91] sm:$0xff]
      %v1328 = vld [vmem:[%s1157 + $0x99] sm:$0xf]
      %v1329 = vld [vmem:[%s1157 + $0xa1] sm:$0xff]
      %v1330 = vld [vmem:[%s1157 + $0xa9] sm:$0xf]
      %v1331 = vld [vmem:[%s1157 + $0xb1] sm:$0xff]
      %v1332 = vld [vmem:[%s1157 + $0xb9] sm:$0xf]
      %s1333 = sadd.s32 %s75, 17
      %s1334 = sld [smem:[#allocation3 + %s1333]]
      %v1335 = vstv %s1334
      %v1336 = vmul.f32 %v1309, %v1335
      %v1337 = vmul.f32 %v1310, %v1335
      %v1338 = vmul.f32 %v1311, %v1335
      %v1339 = vmul.f32 %v1312, %v1335
      %v1340 = vmul.f32 %v1313, %v1335
      %v1341 = vmul.f32 %v1314, %v1335
      %v1342 = vmul.f32 %v1315, %v1335
      %v1343 = vmul.f32 %v1316, %v1335
      %v1344 = vmul.f32 %v1317, %v1335
      %v1345 = vmul.f32 %v1318, %v1335
      %v1346 = vmul.f32 %v1319, %v1335
      %v1347 = vmul.f32 %v1320, %v1335
      %v1348 = vmul.f32 %v1321, %v1335
      %v1349 = vmul.f32 %v1322, %v1335
      %v1350 = vmul.f32 %v1323, %v1335
      %v1351 = vmul.f32 %v1324, %v1335
      %v1352 = vmul.f32 %v1325, %v1335
      %v1353 = vmul.f32 %v1326, %v1335
      %v1354 = vmul.f32 %v1327, %v1335
      %v1355 = vmul.f32 %v1328, %v1335
      %v1356 = vmul.f32 %v1329, %v1335
      %v1357 = vmul.f32 %v1330, %v1335
      %v1358 = vmul.f32 %v1331, %v1335
      %v1359 = vmul.f32 %v1332, %v1335
      %v1360 = vadd.f32 %v1285, %v1336
      %v1361 = vadd.f32 %v1286, %v1337
      %v1362 = vadd.f32 %v1287, %v1338
      %v1363 = vadd.f32 %v1288, %v1339
      %v1364 = vadd.f32 %v1289, %v1340
      %v1365 = vadd.f32 %v1290, %v1341
      %v1366 = vadd.f32 %v1291, %v1342
      %v1367 = vadd.f32 %v1292, %v1343
      %v1368 = vadd.f32 %v1293, %v1344
      %v1369 = vadd.f32 %v1294, %v1345
      %v1370 = vadd.f32 %v1295, %v1346
      %v1371 = vadd.f32 %v1296, %v1347
      %v1372 = vadd.f32 %v1297, %v1348
      %v1373 = vadd.f32 %v1298, %v1349
      %v1374 = vadd.f32 %v1299, %v1350
      %v1375 = vadd.f32 %v1300, %v1351
      %v1376 = vadd.f32 %v1301, %v1352
      %v1377 = vadd.f32 %v1302, %v1353
      %v1378 = vadd.f32 %v1303, %v1354
      %v1379 = vadd.f32 %v1304, %v1355
      %v1380 = vadd.f32 %v1305, %v1356
      %v1381 = vadd.f32 %v1306, %v1357
      %v1382 = vadd.f32 %v1307, %v1358
      %v1383 = vadd.f32 %v1308, %v1359
      %v1384 = vld [vmem:[%s1233 + $0x1] sm:$0xff]
      %v1385 = vld [vmem:[%s1233 + $0x9] sm:$0xf]
      %v1386 = vld [vmem:[%s1233 + $0x11] sm:$0xff]
      %v1387 = vld [vmem:[%s1233 + $0x19] sm:$0xf]
      %v1388 = vld [vmem:[%s1233 + $0x21] sm:$0xff]
      %v1389 = vld [vmem:[%s1233 + $0x29] sm:$0xf]
      %v1390 = vld [vmem:[%s1233 + $0x31] sm:$0xff]
      %v1391 = vld [vmem:[%s1233 + $0x39] sm:$0xf]
      %v1392 = vld [vmem:[%s1233 + $0x41] sm:$0xff]
      %v1393 = vld [vmem:[%s1233 + $0x49] sm:$0xf]
      %v1394 = vld [vmem:[%s1233 + $0x51] sm:$0xff]
      %v1395 = vld [vmem:[%s1233 + $0x59] sm:$0xf]
      %v1396 = vld [vmem:[%s1233 + $0x61] sm:$0xff]
      %v1397 = vld [vmem:[%s1233 + $0x69] sm:$0xf]
      %v1398 = vld [vmem:[%s1233 + $0x71] sm:$0xff]
      %v1399 = vld [vmem:[%s1233 + $0x79] sm:$0xf]
      %v1400 = vld [vmem:[%s1233 + $0x81] sm:$0xff]
      %v1401 = vld [vmem:[%s1233 + $0x89] sm:$0xf]
      %v1402 = vld [vmem:[%s1233 + $0x91] sm:$0xff]
      %v1403 = vld [vmem:[%s1233 + $0x99] sm:$0xf]
      %v1404 = vld [vmem:[%s1233 + $0xa1] sm:$0xff]
      %v1405 = vld [vmem:[%s1233 + $0xa9] sm:$0xf]
      %v1406 = vld [vmem:[%s1233 + $0xb1] sm:$0xff]
      %v1407 = vld [vmem:[%s1233 + $0xb9] sm:$0xf]
      %s1408 = sadd.s32 %s75, 18
      %s1409 = sld [smem:[#allocation3 + %s1408]]
      %v1410 = vstv %s1409
      %v1411 = vmul.f32 %v1384, %v1410
      %v1412 = vmul.f32 %v1385, %v1410
      %v1413 = vmul.f32 %v1386, %v1410
      %v1414 = vmul.f32 %v1387, %v1410
      %v1415 = vmul.f32 %v1388, %v1410
      %v1416 = vmul.f32 %v1389, %v1410
      %v1417 = vmul.f32 %v1390, %v1410
      %v1418 = vmul.f32 %v1391, %v1410
      %v1419 = vmul.f32 %v1392, %v1410
      %v1420 = vmul.f32 %v1393, %v1410
      %v1421 = vmul.f32 %v1394, %v1410
      %v1422 = vmul.f32 %v1395, %v1410
      %v1423 = vmul.f32 %v1396, %v1410
      %v1424 = vmul.f32 %v1397, %v1410
      %v1425 = vmul.f32 %v1398, %v1410
      %v1426 = vmul.f32 %v1399, %v1410
      %v1427 = vmul.f32 %v1400, %v1410
      %v1428 = vmul.f32 %v1401, %v1410
      %v1429 = vmul.f32 %v1402, %v1410
      %v1430 = vmul.f32 %v1403, %v1410
      %v1431 = vmul.f32 %v1404, %v1410
      %v1432 = vmul.f32 %v1405, %v1410
      %v1433 = vmul.f32 %v1406, %v1410
      %v1434 = vmul.f32 %v1407, %v1410
      %v1435 = vadd.f32 %v1360, %v1411
      %v1436 = vadd.f32 %v1361, %v1412
      %v1437 = vadd.f32 %v1362, %v1413
      %v1438 = vadd.f32 %v1363, %v1414
      %v1439 = vadd.f32 %v1364, %v1415
      %v1440 = vadd.f32 %v1365, %v1416
      %v1441 = vadd.f32 %v1366, %v1417
      %v1442 = vadd.f32 %v1367, %v1418
      %v1443 = vadd.f32 %v1368, %v1419
      %v1444 = vadd.f32 %v1369, %v1420
      %v1445 = vadd.f32 %v1370, %v1421
      %v1446 = vadd.f32 %v1371, %v1422
      %v1447 = vadd.f32 %v1372, %v1423
      %v1448 = vadd.f32 %v1373, %v1424
      %v1449 = vadd.f32 %v1374, %v1425
      %v1450 = vadd.f32 %v1375, %v1426
      %v1451 = vadd.f32 %v1376, %v1427
      %v1452 = vadd.f32 %v1377, %v1428
      %v1453 = vadd.f32 %v1378, %v1429
      %v1454 = vadd.f32 %v1379, %v1430
      %v1455 = vadd.f32 %v1380, %v1431
      %v1456 = vadd.f32 %v1381, %v1432
      %v1457 = vadd.f32 %v1382, %v1433
      %v1458 = vadd.f32 %v1383, %v1434
      %v1459 = vld [vmem:[%s1157 + $0x2] sm:$0xff]
      %v1460 = vld [vmem:[%s1157 + $0xa] sm:$0xf]
      %v1461 = vld [vmem:[%s1157 + $0x12] sm:$0xff]
      %v1462 = vld [vmem:[%s1157 + $0x1a] sm:$0xf]
      %v1463 = vld [vmem:[%s1157 + $0x22] sm:$0xff]
      %v1464 = vld [vmem:[%s1157 + $0x2a] sm:$0xf]
      %v1465 = vld [vmem:[%s1157 + $0x32] sm:$0xff]
      %v1466 = vld [vmem:[%s1157 + $0x3a] sm:$0xf]
      %v1467 = vld [vmem:[%s1157 + $0x42] sm:$0xff]
      %v1468 = vld [vmem:[%s1157 + $0x4a] sm:$0xf]
      %v1469 = vld [vmem:[%s1157 + $0x52] sm:$0xff]
      %v1470 = vld [vmem:[%s1157 + $0x5a] sm:$0xf]
      %v1471 = vld [vmem:[%s1157 + $0x62] sm:$0xff]
      %v1472 = vld [vmem:[%s1157 + $0x6a] sm:$0xf]
      %v1473 = vld [vmem:[%s1157 + $0x72] sm:$0xff]
      %v1474 = vld [vmem:[%s1157 + $0x7a] sm:$0xf]
      %v1475 = vld [vmem:[%s1157 + $0x82] sm:$0xff]
      %v1476 = vld [vmem:[%s1157 + $0x8a] sm:$0xf]
      %v1477 = vld [vmem:[%s1157 + $0x92] sm:$0xff]
      %v1478 = vld [vmem:[%s1157 + $0x9a] sm:$0xf]
      %v1479 = vld [vmem:[%s1157 + $0xa2] sm:$0xff]
      %v1480 = vld [vmem:[%s1157 + $0xaa] sm:$0xf]
      %v1481 = vld [vmem:[%s1157 + $0xb2] sm:$0xff]
      %v1482 = vld [vmem:[%s1157 + $0xba] sm:$0xf]
      %s1483 = sadd.s32 %s75, 19
      %s1484 = sld [smem:[#allocation3 + %s1483]]
      %v1485 = vstv %s1484
      %v1486 = vmul.f32 %v1459, %v1485
      %v1487 = vmul.f32 %v1460, %v1485
      %v1488 = vmul.f32 %v1461, %v1485
      %v1489 = vmul.f32 %v1462, %v1485
      %v1490 = vmul.f32 %v1463, %v1485
      %v1491 = vmul.f32 %v1464, %v1485
      %v1492 = vmul.f32 %v1465, %v1485
      %v1493 = vmul.f32 %v1466, %v1485
      %v1494 = vmul.f32 %v1467, %v1485
      %v1495 = vmul.f32 %v1468, %v1485
      %v1496 = vmul.f32 %v1469, %v1485
      %v1497 = vmul.f32 %v1470, %v1485
      %v1498 = vmul.f32 %v1471, %v1485
      %v1499 = vmul.f32 %v1472, %v1485
      %v1500 = vmul.f32 %v1473, %v1485
      %v1501 = vmul.f32 %v1474, %v1485
      %v1502 = vmul.f32 %v1475, %v1485
      %v1503 = vmul.f32 %v1476, %v1485
      %v1504 = vmul.f32 %v1477, %v1485
      %v1505 = vmul.f32 %v1478, %v1485
      %v1506 = vmul.f32 %v1479, %v1485
      %v1507 = vmul.f32 %v1480, %v1485
      %v1508 = vmul.f32 %v1481, %v1485
      %v1509 = vmul.f32 %v1482, %v1485
      %v1510 = vadd.f32 %v1435, %v1486
      %v1511 = vadd.f32 %v1436, %v1487
      %v1512 = vadd.f32 %v1437, %v1488
      %v1513 = vadd.f32 %v1438, %v1489
      %v1514 = vadd.f32 %v1439, %v1490
      %v1515 = vadd.f32 %v1440, %v1491
      %v1516 = vadd.f32 %v1441, %v1492
      %v1517 = vadd.f32 %v1442, %v1493
      %v1518 = vadd.f32 %v1443, %v1494
      %v1519 = vadd.f32 %v1444, %v1495
      %v1520 = vadd.f32 %v1445, %v1496
      %v1521 = vadd.f32 %v1446, %v1497
      %v1522 = vadd.f32 %v1447, %v1498
      %v1523 = vadd.f32 %v1448, %v1499
      %v1524 = vadd.f32 %v1449, %v1500
      %v1525 = vadd.f32 %v1450, %v1501
      %v1526 = vadd.f32 %v1451, %v1502
      %v1527 = vadd.f32 %v1452, %v1503
      %v1528 = vadd.f32 %v1453, %v1504
      %v1529 = vadd.f32 %v1454, %v1505
      %v1530 = vadd.f32 %v1455, %v1506
      %v1531 = vadd.f32 %v1456, %v1507
      %v1532 = vadd.f32 %v1457, %v1508
      %v1533 = vadd.f32 %v1458, %v1509
      %s1534 = scalar_lea.vmem %s0, 32
      %v1535 = vld [vmem:[%s1534] sm:$0xff]
      %v1536 = vld [vmem:[%s1534 + $0x8] sm:$0xf]
      %v1537 = vld [vmem:[%s1534 + $0x10] sm:$0xff]
      %v1538 = vld [vmem:[%s1534 + $0x18] sm:$0xf]
      %v1539 = vld [vmem:[%s1534 + $0x20] sm:$0xff]
      %v1540 = vld [vmem:[%s1534 + $0x28] sm:$0xf]
      %v1541 = vld [vmem:[%s1534 + $0x30] sm:$0xff]
      %v1542 = vld [vmem:[%s1534 + $0x38] sm:$0xf]
      %v1543 = vld [vmem:[%s1534 + $0x40] sm:$0xff]
      %v1544 = vld [vmem:[%s1534 + $0x48] sm:$0xf]
      %v1545 = vld [vmem:[%s1534 + $0x50] sm:$0xff]
      %v1546 = vld [vmem:[%s1534 + $0x58] sm:$0xf]
      %v1547 = vld [vmem:[%s1534 + $0x60] sm:$0xff]
      %v1548 = vld [vmem:[%s1534 + $0x68] sm:$0xf]
      %v1549 = vld [vmem:[%s1534 + $0x70] sm:$0xff]
      %v1550 = vld [vmem:[%s1534 + $0x78] sm:$0xf]
      %v1551 = vld [vmem:[%s1534 + $0x80] sm:$0xff]
      %v1552 = vld [vmem:[%s1534 + $0x88] sm:$0xf]
      %v1553 = vld [vmem:[%s1534 + $0x90] sm:$0xff]
      %v1554 = vld [vmem:[%s1534 + $0x98] sm:$0xf]
      %v1555 = vld [vmem:[%s1534 + $0xa0] sm:$0xff]
      %v1556 = vld [vmem:[%s1534 + $0xa8] sm:$0xf]
      %v1557 = vld [vmem:[%s1534 + $0xb0] sm:$0xff]
      %v1558 = vld [vmem:[%s1534 + $0xb8] sm:$0xf]
      %s1559 = sadd.s32 %s75, 20
      %s1560 = sld [smem:[#allocation3 + %s1559]]
      %v1561 = vstv %s1560
      %v1562 = vmul.f32 %v1535, %v1561
      %v1563 = vmul.f32 %v1536, %v1561
      %v1564 = vmul.f32 %v1537, %v1561
      %v1565 = vmul.f32 %v1538, %v1561
      %v1566 = vmul.f32 %v1539, %v1561
      %v1567 = vmul.f32 %v1540, %v1561
      %v1568 = vmul.f32 %v1541, %v1561
      %v1569 = vmul.f32 %v1542, %v1561
      %v1570 = vmul.f32 %v1543, %v1561
      %v1571 = vmul.f32 %v1544, %v1561
      %v1572 = vmul.f32 %v1545, %v1561
      %v1573 = vmul.f32 %v1546, %v1561
      %v1574 = vmul.f32 %v1547, %v1561
      %v1575 = vmul.f32 %v1548, %v1561
      %v1576 = vmul.f32 %v1549, %v1561
      %v1577 = vmul.f32 %v1550, %v1561
      %v1578 = vmul.f32 %v1551, %v1561
      %v1579 = vmul.f32 %v1552, %v1561
      %v1580 = vmul.f32 %v1553, %v1561
      %v1581 = vmul.f32 %v1554, %v1561
      %v1582 = vmul.f32 %v1555, %v1561
      %v1583 = vmul.f32 %v1556, %v1561
      %v1584 = vmul.f32 %v1557, %v1561
      %v1585 = vmul.f32 %v1558, %v1561
      %v1586 = vadd.f32 %v1510, %v1562
      %v1587 = vadd.f32 %v1511, %v1563
      %v1588 = vadd.f32 %v1512, %v1564
      %v1589 = vadd.f32 %v1513, %v1565
      %v1590 = vadd.f32 %v1514, %v1566
      %v1591 = vadd.f32 %v1515, %v1567
      %v1592 = vadd.f32 %v1516, %v1568
      %v1593 = vadd.f32 %v1517, %v1569
      %v1594 = vadd.f32 %v1518, %v1570
      %v1595 = vadd.f32 %v1519, %v1571
      %v1596 = vadd.f32 %v1520, %v1572
      %v1597 = vadd.f32 %v1521, %v1573
      %v1598 = vadd.f32 %v1522, %v1574
      %v1599 = vadd.f32 %v1523, %v1575
      %v1600 = vadd.f32 %v1524, %v1576
      %v1601 = vadd.f32 %v1525, %v1577
      %v1602 = vadd.f32 %v1526, %v1578
      %v1603 = vadd.f32 %v1527, %v1579
      %v1604 = vadd.f32 %v1528, %v1580
      %v1605 = vadd.f32 %v1529, %v1581
      %v1606 = vadd.f32 %v1530, %v1582
      %v1607 = vadd.f32 %v1531, %v1583
      %v1608 = vadd.f32 %v1532, %v1584
      %v1609 = vadd.f32 %v1533, %v1585
      %s1610 = scalar_lea.vmem %s0, 256
      %v1611 = vld [vmem:[%s1610] sm:$0xff]
      %v1612 = vld [vmem:[%s1610 + $0x8] sm:$0xf]
      %v1613 = vld [vmem:[%s1610 + $0x10] sm:$0xff]
      %v1614 = vld [vmem:[%s1610 + $0x18] sm:$0xf]
      %v1615 = vld [vmem:[%s1610 + $0x20] sm:$0xff]
      %v1616 = vld [vmem:[%s1610 + $0x28] sm:$0xf]
      %v1617 = vld [vmem:[%s1610 + $0x30] sm:$0xff]
      %v1618 = vld [vmem:[%s1610 + $0x38] sm:$0xf]
      %v1619 = vld [vmem:[%s1610 + $0x40] sm:$0xff]
      %v1620 = vld [vmem:[%s1610 + $0x48] sm:$0xf]
      %v1621 = vld [vmem:[%s1610 + $0x50] sm:$0xff]
      %v1622 = vld [vmem:[%s1610 + $0x58] sm:$0xf]
      %v1623 = vld [vmem:[%s1610 + $0x60] sm:$0xff]
      %v1624 = vld [vmem:[%s1610 + $0x68] sm:$0xf]
      %v1625 = vld [vmem:[%s1610 + $0x70] sm:$0xff]
      %v1626 = vld [vmem:[%s1610 + $0x78] sm:$0xf]
      %v1627 = vld [vmem:[%s1610 + $0x80] sm:$0xff]
      %v1628 = vld [vmem:[%s1610 + $0x88] sm:$0xf]
      %v1629 = vld [vmem:[%s1610 + $0x90] sm:$0xff]
      %v1630 = vld [vmem:[%s1610 + $0x98] sm:$0xf]
      %v1631 = vld [vmem:[%s1610 + $0xa0] sm:$0xff]
      %v1632 = vld [vmem:[%s1610 + $0xa8] sm:$0xf]
      %v1633 = vld [vmem:[%s1610 + $0xb0] sm:$0xff]
      %v1634 = vld [vmem:[%s1610 + $0xb8] sm:$0xf]
      %s1635 = sadd.s32 %s75, 21
      %s1636 = sld [smem:[#allocation3 + %s1635]]
      %v1637 = vstv %s1636
      %v1638 = vmul.f32 %v1611, %v1637
      %v1639 = vmul.f32 %v1612, %v1637
      %v1640 = vmul.f32 %v1613, %v1637
      %v1641 = vmul.f32 %v1614, %v1637
      %v1642 = vmul.f32 %v1615, %v1637
      %v1643 = vmul.f32 %v1616, %v1637
      %v1644 = vmul.f32 %v1617, %v1637
      %v1645 = vmul.f32 %v1618, %v1637
      %v1646 = vmul.f32 %v1619, %v1637
      %v1647 = vmul.f32 %v1620, %v1637
      %v1648 = vmul.f32 %v1621, %v1637
      %v1649 = vmul.f32 %v1622, %v1637
      %v1650 = vmul.f32 %v1623, %v1637
      %v1651 = vmul.f32 %v1624, %v1637
      %v1652 = vmul.f32 %v1625, %v1637
      %v1653 = vmul.f32 %v1626, %v1637
      %v1654 = vmul.f32 %v1627, %v1637
      %v1655 = vmul.f32 %v1628, %v1637
      %v1656 = vmul.f32 %v1629, %v1637
      %v1657 = vmul.f32 %v1630, %v1637
      %v1658 = vmul.f32 %v1631, %v1637
      %v1659 = vmul.f32 %v1632, %v1637
      %v1660 = vmul.f32 %v1633, %v1637
      %v1661 = vmul.f32 %v1634, %v1637
      %v1662 = vadd.f32 %v1586, %v1638
      %v1663 = vadd.f32 %v1587, %v1639
      %v1664 = vadd.f32 %v1588, %v1640
      %v1665 = vadd.f32 %v1589, %v1641
      %v1666 = vadd.f32 %v1590, %v1642
      %v1667 = vadd.f32 %v1591, %v1643
      %v1668 = vadd.f32 %v1592, %v1644
      %v1669 = vadd.f32 %v1593, %v1645
      %v1670 = vadd.f32 %v1594, %v1646
      %v1671 = vadd.f32 %v1595, %v1647
      %v1672 = vadd.f32 %v1596, %v1648
      %v1673 = vadd.f32 %v1597, %v1649
      %v1674 = vadd.f32 %v1598, %v1650
      %v1675 = vadd.f32 %v1599, %v1651
      %v1676 = vadd.f32 %v1600, %v1652
      %v1677 = vadd.f32 %v1601, %v1653
      %v1678 = vadd.f32 %v1602, %v1654
      %v1679 = vadd.f32 %v1603, %v1655
      %v1680 = vadd.f32 %v1604, %v1656
      %v1681 = vadd.f32 %v1605, %v1657
      %v1682 = vadd.f32 %v1606, %v1658
      %v1683 = vadd.f32 %v1607, %v1659
      %v1684 = vadd.f32 %v1608, %v1660
      %v1685 = vadd.f32 %v1609, %v1661
      %v1686 = vld [vmem:[%s1534 + $0x1] sm:$0xff]
      %v1687 = vld [vmem:[%s1534 + $0x9] sm:$0xf]
      %v1688 = vld [vmem:[%s1534 + $0x11] sm:$0xff]
      %v1689 = vld [vmem:[%s1534 + $0x19] sm:$0xf]
      %v1690 = vld [vmem:[%s1534 + $0x21] sm:$0xff]
      %v1691 = vld [vmem:[%s1534 + $0x29] sm:$0xf]
      %v1692 = vld [vmem:[%s1534 + $0x31] sm:$0xff]
      %v1693 = vld [vmem:[%s1534 + $0x39] sm:$0xf]
      %v1694 = vld [vmem:[%s1534 + $0x41] sm:$0xff]
      %v1695 = vld [vmem:[%s1534 + $0x49] sm:$0xf]
      %v1696 = vld [vmem:[%s1534 + $0x51] sm:$0xff]
      %v1697 = vld [vmem:[%s1534 + $0x59] sm:$0xf]
      %v1698 = vld [vmem:[%s1534 + $0x61] sm:$0xff]
      %v1699 = vld [vmem:[%s1534 + $0x69] sm:$0xf]
      %v1700 = vld [vmem:[%s1534 + $0x71] sm:$0xff]
      %v1701 = vld [vmem:[%s1534 + $0x79] sm:$0xf]
      %v1702 = vld [vmem:[%s1534 + $0x81] sm:$0xff]
      %v1703 = vld [vmem:[%s1534 + $0x89] sm:$0xf]
      %v1704 = vld [vmem:[%s1534 + $0x91] sm:$0xff]
      %v1705 = vld [vmem:[%s1534 + $0x99] sm:$0xf]
      %v1706 = vld [vmem:[%s1534 + $0xa1] sm:$0xff]
      %v1707 = vld [vmem:[%s1534 + $0xa9] sm:$0xf]
      %v1708 = vld [vmem:[%s1534 + $0xb1] sm:$0xff]
      %v1709 = vld [vmem:[%s1534 + $0xb9] sm:$0xf]
      %s1710 = sadd.s32 %s75, 22
      %s1711 = sld [smem:[#allocation3 + %s1710]]
      %v1712 = vstv %s1711
      %v1713 = vmul.f32 %v1686, %v1712
      %v1714 = vmul.f32 %v1687, %v1712
      %v1715 = vmul.f32 %v1688, %v1712
      %v1716 = vmul.f32 %v1689, %v1712
      %v1717 = vmul.f32 %v1690, %v1712
      %v1718 = vmul.f32 %v1691, %v1712
      %v1719 = vmul.f32 %v1692, %v1712
      %v1720 = vmul.f32 %v1693, %v1712
      %v1721 = vmul.f32 %v1694, %v1712
      %v1722 = vmul.f32 %v1695, %v1712
      %v1723 = vmul.f32 %v1696, %v1712
      %v1724 = vmul.f32 %v1697, %v1712
      %v1725 = vmul.f32 %v1698, %v1712
      %v1726 = vmul.f32 %v1699, %v1712
      %v1727 = vmul.f32 %v1700, %v1712
      %v1728 = vmul.f32 %v1701, %v1712
      %v1729 = vmul.f32 %v1702, %v1712
      %v1730 = vmul.f32 %v1703, %v1712
      %v1731 = vmul.f32 %v1704, %v1712
      %v1732 = vmul.f32 %v1705, %v1712
      %v1733 = vmul.f32 %v1706, %v1712
      %v1734 = vmul.f32 %v1707, %v1712
      %v1735 = vmul.f32 %v1708, %v1712
      %v1736 = vmul.f32 %v1709, %v1712
      %v1737 = vadd.f32 %v1662, %v1713
      %v1738 = vadd.f32 %v1663, %v1714
      %v1739 = vadd.f32 %v1664, %v1715
      %v1740 = vadd.f32 %v1665, %v1716
      %v1741 = vadd.f32 %v1666, %v1717
      %v1742 = vadd.f32 %v1667, %v1718
      %v1743 = vadd.f32 %v1668, %v1719
      %v1744 = vadd.f32 %v1669, %v1720
      %v1745 = vadd.f32 %v1670, %v1721
      %v1746 = vadd.f32 %v1671, %v1722
      %v1747 = vadd.f32 %v1672, %v1723
      %v1748 = vadd.f32 %v1673, %v1724
      %v1749 = vadd.f32 %v1674, %v1725
      %v1750 = vadd.f32 %v1675, %v1726
      %v1751 = vadd.f32 %v1676, %v1727
      %v1752 = vadd.f32 %v1677, %v1728
      %v1753 = vadd.f32 %v1678, %v1729
      %v1754 = vadd.f32 %v1679, %v1730
      %v1755 = vadd.f32 %v1680, %v1731
      %v1756 = vadd.f32 %v1681, %v1732
      %v1757 = vadd.f32 %v1682, %v1733
      %v1758 = vadd.f32 %v1683, %v1734
      %v1759 = vadd.f32 %v1684, %v1735
      %v1760 = vadd.f32 %v1685, %v1736
      %v1761 = vld [vmem:[%s1610 + $0x1] sm:$0xff]
      %v1762 = vld [vmem:[%s1610 + $0x9] sm:$0xf]
      %v1763 = vld [vmem:[%s1610 + $0x11] sm:$0xff]
      %v1764 = vld [vmem:[%s1610 + $0x19] sm:$0xf]
      %v1765 = vld [vmem:[%s1610 + $0x21] sm:$0xff]
      %v1766 = vld [vmem:[%s1610 + $0x29] sm:$0xf]
      %v1767 = vld [vmem:[%s1610 + $0x31] sm:$0xff]
      %v1768 = vld [vmem:[%s1610 + $0x39] sm:$0xf]
      %v1769 = vld [vmem:[%s1610 + $0x41] sm:$0xff]
      %v1770 = vld [vmem:[%s1610 + $0x49] sm:$0xf]
      %v1771 = vld [vmem:[%s1610 + $0x51] sm:$0xff]
      %v1772 = vld [vmem:[%s1610 + $0x59] sm:$0xf]
      %v1773 = vld [vmem:[%s1610 + $0x61] sm:$0xff]
      %v1774 = vld [vmem:[%s1610 + $0x69] sm:$0xf]
      %v1775 = vld [vmem:[%s1610 + $0x71] sm:$0xff]
      %v1776 = vld [vmem:[%s1610 + $0x79] sm:$0xf]
      %v1777 = vld [vmem:[%s1610 + $0x81] sm:$0xff]
      %v1778 = vld [vmem:[%s1610 + $0x89] sm:$0xf]
      %v1779 = vld [vmem:[%s1610 + $0x91] sm:$0xff]
      %v1780 = vld [vmem:[%s1610 + $0x99] sm:$0xf]
      %v1781 = vld [vmem:[%s1610 + $0xa1] sm:$0xff]
      %v1782 = vld [vmem:[%s1610 + $0xa9] sm:$0xf]
      %v1783 = vld [vmem:[%s1610 + $0xb1] sm:$0xff]
      %v1784 = vld [vmem:[%s1610 + $0xb9] sm:$0xf]
      %s1785 = sadd.s32 %s75, 23
      %s1786 = sld [smem:[#allocation3 + %s1785]]
      %v1787 = vstv %s1786
      %v1788 = vmul.f32 %v1761, %v1787
      %v1789 = vmul.f32 %v1762, %v1787
      %v1790 = vmul.f32 %v1763, %v1787
      %v1791 = vmul.f32 %v1764, %v1787
      %v1792 = vmul.f32 %v1765, %v1787
      %v1793 = vmul.f32 %v1766, %v1787
      %v1794 = vmul.f32 %v1767, %v1787
      %v1795 = vmul.f32 %v1768, %v1787
      %v1796 = vmul.f32 %v1769, %v1787
      %v1797 = vmul.f32 %v1770, %v1787
      %v1798 = vmul.f32 %v1771, %v1787
      %v1799 = vmul.f32 %v1772, %v1787
      %v1800 = vmul.f32 %v1773, %v1787
      %v1801 = vmul.f32 %v1774, %v1787
      %v1802 = vmul.f32 %v1775, %v1787
      %v1803 = vmul.f32 %v1776, %v1787
      %v1804 = vmul.f32 %v1777, %v1787
      %v1805 = vmul.f32 %v1778, %v1787
      %v1806 = vmul.f32 %v1779, %v1787
      %v1807 = vmul.f32 %v1780, %v1787
      %v1808 = vmul.f32 %v1781, %v1787
      %v1809 = vmul.f32 %v1782, %v1787
      %v1810 = vmul.f32 %v1783, %v1787
      %v1811 = vmul.f32 %v1784, %v1787
      %v1812 = vadd.f32 %v1737, %v1788
      %v1813 = vadd.f32 %v1738, %v1789
      %v1814 = vadd.f32 %v1739, %v1790
      %v1815 = vadd.f32 %v1740, %v1791
      %v1816 = vadd.f32 %v1741, %v1792
      %v1817 = vadd.f32 %v1742, %v1793
      %v1818 = vadd.f32 %v1743, %v1794
      %v1819 = vadd.f32 %v1744, %v1795
      %v1820 = vadd.f32 %v1745, %v1796
      %v1821 = vadd.f32 %v1746, %v1797
      %v1822 = vadd.f32 %v1747, %v1798
      %v1823 = vadd.f32 %v1748, %v1799
      %v1824 = vadd.f32 %v1749, %v1800
      %v1825 = vadd.f32 %v1750, %v1801
      %v1826 = vadd.f32 %v1751, %v1802
      %v1827 = vadd.f32 %v1752, %v1803
      %v1828 = vadd.f32 %v1753, %v1804
      %v1829 = vadd.f32 %v1754, %v1805
      %v1830 = vadd.f32 %v1755, %v1806
      %v1831 = vadd.f32 %v1756, %v1807
      %v1832 = vadd.f32 %v1757, %v1808
      %v1833 = vadd.f32 %v1758, %v1809
      %v1834 = vadd.f32 %v1759, %v1810
      %v1835 = vadd.f32 %v1760, %v1811
      %v1836 = vld [vmem:[%s1534 + $0x2] sm:$0xff]
      %v1837 = vld [vmem:[%s1534 + $0xa] sm:$0xf]
      %v1838 = vld [vmem:[%s1534 + $0x12] sm:$0xff]
      %v1839 = vld [vmem:[%s1534 + $0x1a] sm:$0xf]
      %v1840 = vld [vmem:[%s1534 + $0x22] sm:$0xff]
      %v1841 = vld [vmem:[%s1534 + $0x2a] sm:$0xf]
      %v1842 = vld [vmem:[%s1534 + $0x32] sm:$0xff]
      %v1843 = vld [vmem:[%s1534 + $0x3a] sm:$0xf]
      %v1844 = vld [vmem:[%s1534 + $0x42] sm:$0xff]
      %v1845 = vld [vmem:[%s1534 + $0x4a] sm:$0xf]
      %v1846 = vld [vmem:[%s1534 + $0x52] sm:$0xff]
      %v1847 = vld [vmem:[%s1534 + $0x5a] sm:$0xf]
      %v1848 = vld [vmem:[%s1534 + $0x62] sm:$0xff]
      %v1849 = vld [vmem:[%s1534 + $0x6a] sm:$0xf]
      %v1850 = vld [vmem:[%s1534 + $0x72] sm:$0xff]
      %v1851 = vld [vmem:[%s1534 + $0x7a] sm:$0xf]
      %v1852 = vld [vmem:[%s1534 + $0x82] sm:$0xff]
      %v1853 = vld [vmem:[%s1534 + $0x8a] sm:$0xf]
      %v1854 = vld [vmem:[%s1534 + $0x92] sm:$0xff]
      %v1855 = vld [vmem:[%s1534 + $0x9a] sm:$0xf]
      %v1856 = vld [vmem:[%s1534 + $0xa2] sm:$0xff]
      %v1857 = vld [vmem:[%s1534 + $0xaa] sm:$0xf]
      %v1858 = vld [vmem:[%s1534 + $0xb2] sm:$0xff]
      %v1859 = vld [vmem:[%s1534 + $0xba] sm:$0xf]
      %s1860 = sadd.s32 %s75, 24
      %s1861 = sld [smem:[#allocation3 + %s1860]]
      %v1862 = vstv %s1861
      %v1863 = vmul.f32 %v1836, %v1862
      %v1864 = vmul.f32 %v1837, %v1862
      %v1865 = vmul.f32 %v1838, %v1862
      %v1866 = vmul.f32 %v1839, %v1862
      %v1867 = vmul.f32 %v1840, %v1862
      %v1868 = vmul.f32 %v1841, %v1862
      %v1869 = vmul.f32 %v1842, %v1862
      %v1870 = vmul.f32 %v1843, %v1862
      %v1871 = vmul.f32 %v1844, %v1862
      %v1872 = vmul.f32 %v1845, %v1862
      %v1873 = vmul.f32 %v1846, %v1862
      %v1874 = vmul.f32 %v1847, %v1862
      %v1875 = vmul.f32 %v1848, %v1862
      %v1876 = vmul.f32 %v1849, %v1862
      %v1877 = vmul.f32 %v1850, %v1862
      %v1878 = vmul.f32 %v1851, %v1862
      %v1879 = vmul.f32 %v1852, %v1862
      %v1880 = vmul.f32 %v1853, %v1862
      %v1881 = vmul.f32 %v1854, %v1862
      %v1882 = vmul.f32 %v1855, %v1862
      %v1883 = vmul.f32 %v1856, %v1862
      %v1884 = vmul.f32 %v1857, %v1862
      %v1885 = vmul.f32 %v1858, %v1862
      %v1886 = vmul.f32 %v1859, %v1862
      %v1887 = vadd.f32 %v1812, %v1863
      %v1888 = vadd.f32 %v1813, %v1864
      %v1889 = vadd.f32 %v1814, %v1865
      %v1890 = vadd.f32 %v1815, %v1866
      %v1891 = vadd.f32 %v1816, %v1867
      %v1892 = vadd.f32 %v1817, %v1868
      %v1893 = vadd.f32 %v1818, %v1869
      %v1894 = vadd.f32 %v1819, %v1870
      %v1895 = vadd.f32 %v1820, %v1871
      %v1896 = vadd.f32 %v1821, %v1872
      %v1897 = vadd.f32 %v1822, %v1873
      %v1898 = vadd.f32 %v1823, %v1874
      %v1899 = vadd.f32 %v1824, %v1875
      %v1900 = vadd.f32 %v1825, %v1876
      %v1901 = vadd.f32 %v1826, %v1877
      %v1902 = vadd.f32 %v1827, %v1878
      %v1903 = vadd.f32 %v1828, %v1879
      %v1904 = vadd.f32 %v1829, %v1880
      %v1905 = vadd.f32 %v1830, %v1881
      %v1906 = vadd.f32 %v1831, %v1882
      %v1907 = vadd.f32 %v1832, %v1883
      %v1908 = vadd.f32 %v1833, %v1884
      %v1909 = vadd.f32 %v1834, %v1885
      %v1910 = vadd.f32 %v1835, %v1886
      %v1911 = vmul.f32 %v103, %v77
      %v1912 = vmul.f32 %v104, %v77
      %v1913 = vmul.f32 %v105, %v77
      %v1914 = vmul.f32 %v106, %v77
      %v1915 = vmul.f32 %v107, %v77
      %v1916 = vmul.f32 %v108, %v77
      %v1917 = vmul.f32 %v109, %v77
      %v1918 = vmul.f32 %v110, %v77
      %v1919 = vmul.f32 %v111, %v77
      %v1920 = vmul.f32 %v112, %v77
      %v1921 = vmul.f32 %v113, %v77
      %v1922 = vmul.f32 %v114, %v77
      %v1923 = vmul.f32 %v115, %v77
      %v1924 = vmul.f32 %v116, %v77
      %v1925 = vmul.f32 %v117, %v77
      %v1926 = vmul.f32 %v118, %v77
      %v1927 = vmul.f32 %v119, %v77
      %v1928 = vmul.f32 %v120, %v77
      %v1929 = vmul.f32 %v121, %v77
      %v1930 = vmul.f32 %v122, %v77
      %v1931 = vmul.f32 %v123, %v77
      %v1932 = vmul.f32 %v124, %v77
      %v1933 = vmul.f32 %v125, %v77
      %v1934 = vmul.f32 %v126, %v77
      %v1935 = vmul.f32 %v178, %v129
      %v1936 = vmul.f32 %v179, %v129
      %v1937 = vmul.f32 %v180, %v129
      %v1938 = vmul.f32 %v181, %v129
      %v1939 = vmul.f32 %v182, %v129
      %v1940 = vmul.f32 %v183, %v129
      %v1941 = vmul.f32 %v184, %v129
      %v1942 = vmul.f32 %v185, %v129
      %v1943 = vmul.f32 %v186, %v129
      %v1944 = vmul.f32 %v187, %v129
      %v1945 = vmul.f32 %v188, %v129
      %v1946 = vmul.f32 %v189, %v129
      %v1947 = vmul.f32 %v190, %v129
      %v1948 = vmul.f32 %v191, %v129
      %v1949 = vmul.f32 %v192, %v129
      %v1950 = vmul.f32 %v193, %v129
      %v1951 = vmul.f32 %v194, %v129
      %v1952 = vmul.f32 %v195, %v129
      %v1953 = vmul.f32 %v196, %v129
      %v1954 = vmul.f32 %v197, %v129
      %v1955 = vmul.f32 %v198, %v129
      %v1956 = vmul.f32 %v199, %v129
      %v1957 = vmul.f32 %v200, %v129
      %v1958 = vmul.f32 %v201, %v129
      %v1959 = vadd.f32 %v1911, %v1935
      %v1960 = vadd.f32 %v1912, %v1936
      %v1961 = vadd.f32 %v1913, %v1937
      %v1962 = vadd.f32 %v1914, %v1938
      %v1963 = vadd.f32 %v1915, %v1939
      %v1964 = vadd.f32 %v1916, %v1940
      %v1965 = vadd.f32 %v1917, %v1941
      %v1966 = vadd.f32 %v1918, %v1942
      %v1967 = vadd.f32 %v1919, %v1943
      %v1968 = vadd.f32 %v1920, %v1944
      %v1969 = vadd.f32 %v1921, %v1945
      %v1970 = vadd.f32 %v1922, %v1946
      %v1971 = vadd.f32 %v1923, %v1947
      %v1972 = vadd.f32 %v1924, %v1948
      %v1973 = vadd.f32 %v1925, %v1949
      %v1974 = vadd.f32 %v1926, %v1950
      %v1975 = vadd.f32 %v1927, %v1951
      %v1976 = vadd.f32 %v1928, %v1952
      %v1977 = vadd.f32 %v1929, %v1953
      %v1978 = vadd.f32 %v1930, %v1954
      %v1979 = vadd.f32 %v1931, %v1955
      %v1980 = vadd.f32 %v1932, %v1956
      %v1981 = vadd.f32 %v1933, %v1957
      %v1982 = vadd.f32 %v1934, %v1958
      %v1983 = vmul.f32 %v253, %v204
      %v1984 = vmul.f32 %v254, %v204
      %v1985 = vmul.f32 %v255, %v204
      %v1986 = vmul.f32 %v256, %v204
      %v1987 = vmul.f32 %v257, %v204
      %v1988 = vmul.f32 %v258, %v204
      %v1989 = vmul.f32 %v259, %v204
      %v1990 = vmul.f32 %v260, %v204
      %v1991 = vmul.f32 %v261, %v204
      %v1992 = vmul.f32 %v262, %v204
      %v1993 = vmul.f32 %v263, %v204
      %v1994 = vmul.f32 %v264, %v204
      %v1995 = vmul.f32 %v265, %v204
      %v1996 = vmul.f32 %v266, %v204
      %v1997 = vmul.f32 %v267, %v204
      %v1998 = vmul.f32 %v268, %v204
      %v1999 = vmul.f32 %v269, %v204
      %v2000 = vmul.f32 %v270, %v204
      %v2001 = vmul.f32 %v271, %v204
      %v2002 = vmul.f32 %v272, %v204
      %v2003 = vmul.f32 %v273, %v204
      %v2004 = vmul.f32 %v274, %v204
      %v2005 = vmul.f32 %v275, %v204
      %v2006 = vmul.f32 %v276, %v204
      %v2007 = vadd.f32 %v1959, %v1983
      %v2008 = vadd.f32 %v1960, %v1984
      %v2009 = vadd.f32 %v1961, %v1985
      %v2010 = vadd.f32 %v1962, %v1986
      %v2011 = vadd.f32 %v1963, %v1987
      %v2012 = vadd.f32 %v1964, %v1988
      %v2013 = vadd.f32 %v1965, %v1989
      %v2014 = vadd.f32 %v1966, %v1990
      %v2015 = vadd.f32 %v1967, %v1991
      %v2016 = vadd.f32 %v1968, %v1992
      %v2017 = vadd.f32 %v1969, %v1993
      %v2018 = vadd.f32 %v1970, %v1994
      %v2019 = vadd.f32 %v1971, %v1995
      %v2020 = vadd.f32 %v1972, %v1996
      %v2021 = vadd.f32 %v1973, %v1997
      %v2022 = vadd.f32 %v1974, %v1998
      %v2023 = vadd.f32 %v1975, %v1999
      %v2024 = vadd.f32 %v1976, %v2000
      %v2025 = vadd.f32 %v1977, %v2001
      %v2026 = vadd.f32 %v1978, %v2002
      %v2027 = vadd.f32 %v1979, %v2003
      %v2028 = vadd.f32 %v1980, %v2004
      %v2029 = vadd.f32 %v1981, %v2005
      %v2030 = vadd.f32 %v1982, %v2006
      %v2031 = vmul.f32 %v328, %v279
      %v2032 = vmul.f32 %v329, %v279
      %v2033 = vmul.f32 %v330, %v279
      %v2034 = vmul.f32 %v331, %v279
      %v2035 = vmul.f32 %v332, %v279
      %v2036 = vmul.f32 %v333, %v279
      %v2037 = vmul.f32 %v334, %v279
      %v2038 = vmul.f32 %v335, %v279
      %v2039 = vmul.f32 %v336, %v279
      %v2040 = vmul.f32 %v337, %v279
      %v2041 = vmul.f32 %v338, %v279
      %v2042 = vmul.f32 %v339, %v279
      %v2043 = vmul.f32 %v340, %v279
      %v2044 = vmul.f32 %v341, %v279
      %v2045 = vmul.f32 %v342, %v279
      %v2046 = vmul.f32 %v343, %v279
      %v2047 = vmul.f32 %v344, %v279
      %v2048 = vmul.f32 %v345, %v279
      %v2049 = vmul.f32 %v346, %v279
      %v2050 = vmul.f32 %v347, %v279
      %v2051 = vmul.f32 %v348, %v279
      %v2052 = vmul.f32 %v349, %v279
      %v2053 = vmul.f32 %v350, %v279
      %v2054 = vmul.f32 %v351, %v279
      %v2055 = vadd.f32 %v2007, %v2031
      %v2056 = vadd.f32 %v2008, %v2032
      %v2057 = vadd.f32 %v2009, %v2033
      %v2058 = vadd.f32 %v2010, %v2034
      %v2059 = vadd.f32 %v2011, %v2035
      %v2060 = vadd.f32 %v2012, %v2036
      %v2061 = vadd.f32 %v2013, %v2037
      %v2062 = vadd.f32 %v2014, %v2038
      %v2063 = vadd.f32 %v2015, %v2039
      %v2064 = vadd.f32 %v2016, %v2040
      %v2065 = vadd.f32 %v2017, %v2041
      %v2066 = vadd.f32 %v2018, %v2042
      %v2067 = vadd.f32 %v2019, %v2043
      %v2068 = vadd.f32 %v2020, %v2044
      %v2069 = vadd.f32 %v2021, %v2045
      %v2070 = vadd.f32 %v2022, %v2046
      %v2071 = vadd.f32 %v2023, %v2047
      %v2072 = vadd.f32 %v2024, %v2048
      %v2073 = vadd.f32 %v2025, %v2049
      %v2074 = vadd.f32 %v2026, %v2050
      %v2075 = vadd.f32 %v2027, %v2051
      %v2076 = vadd.f32 %v2028, %v2052
      %v2077 = vadd.f32 %v2029, %v2053
      %v2078 = vadd.f32 %v2030, %v2054
      %v2079 = vld [vmem:[%s102 + $0x2] sm:$0xff]
      %v2080 = vld [vmem:[%s102 + $0xa] sm:$0xf]
      %v2081 = vld [vmem:[%s102 + $0x12] sm:$0xff]
      %v2082 = vld [vmem:[%s102 + $0x1a] sm:$0xf]
      %v2083 = vld [vmem:[%s102 + $0x22] sm:$0xff]
      %v2084 = vld [vmem:[%s102 + $0x2a] sm:$0xf]
      %v2085 = vld [vmem:[%s102 + $0x32] sm:$0xff]
      %v2086 = vld [vmem:[%s102 + $0x3a] sm:$0xf]
      %v2087 = vld [vmem:[%s102 + $0x42] sm:$0xff]
      %v2088 = vld [vmem:[%s102 + $0x4a] sm:$0xf]
      %v2089 = vld [vmem:[%s102 + $0x52] sm:$0xff]
      %v2090 = vld [vmem:[%s102 + $0x5a] sm:$0xf]
      %v2091 = vld [vmem:[%s102 + $0x62] sm:$0xff]
      %v2092 = vld [vmem:[%s102 + $0x6a] sm:$0xf]
      %v2093 = vld [vmem:[%s102 + $0x72] sm:$0xff]
      %v2094 = vld [vmem:[%s102 + $0x7a] sm:$0xf]
      %v2095 = vld [vmem:[%s102 + $0x82] sm:$0xff]
      %v2096 = vld [vmem:[%s102 + $0x8a] sm:$0xf]
      %v2097 = vld [vmem:[%s102 + $0x92] sm:$0xff]
      %v2098 = vld [vmem:[%s102 + $0x9a] sm:$0xf]
      %v2099 = vld [vmem:[%s102 + $0xa2] sm:$0xff]
      %v2100 = vld [vmem:[%s102 + $0xaa] sm:$0xf]
      %v2101 = vld [vmem:[%s102 + $0xb2] sm:$0xff]
      %v2102 = vld [vmem:[%s102 + $0xba] sm:$0xf]
      %v2103 = vmul.f32 %v2079, %v354
      %v2104 = vmul.f32 %v2080, %v354
      %v2105 = vmul.f32 %v2081, %v354
      %v2106 = vmul.f32 %v2082, %v354
      %v2107 = vmul.f32 %v2083, %v354
      %v2108 = vmul.f32 %v2084, %v354
      %v2109 = vmul.f32 %v2085, %v354
      %v2110 = vmul.f32 %v2086, %v354
      %v2111 = vmul.f32 %v2087, %v354
      %v2112 = vmul.f32 %v2088, %v354
      %v2113 = vmul.f32 %v2089, %v354
      %v2114 = vmul.f32 %v2090, %v354
      %v2115 = vmul.f32 %v2091, %v354
      %v2116 = vmul.f32 %v2092, %v354
      %v2117 = vmul.f32 %v2093, %v354
      %v2118 = vmul.f32 %v2094, %v354
      %v2119 = vmul.f32 %v2095, %v354
      %v2120 = vmul.f32 %v2096, %v354
      %v2121 = vmul.f32 %v2097, %v354
      %v2122 = vmul.f32 %v2098, %v354
      %v2123 = vmul.f32 %v2099, %v354
      %v2124 = vmul.f32 %v2100, %v354
      %v2125 = vmul.f32 %v2101, %v354
      %v2126 = vmul.f32 %v2102, %v354
      %v2127 = vadd.f32 %v2055, %v2103
      %v2128 = vadd.f32 %v2056, %v2104
      %v2129 = vadd.f32 %v2057, %v2105
      %v2130 = vadd.f32 %v2058, %v2106
      %v2131 = vadd.f32 %v2059, %v2107
      %v2132 = vadd.f32 %v2060, %v2108
      %v2133 = vadd.f32 %v2061, %v2109
      %v2134 = vadd.f32 %v2062, %v2110
      %v2135 = vadd.f32 %v2063, %v2111
      %v2136 = vadd.f32 %v2064, %v2112
      %v2137 = vadd.f32 %v2065, %v2113
      %v2138 = vadd.f32 %v2066, %v2114
      %v2139 = vadd.f32 %v2067, %v2115
      %v2140 = vadd.f32 %v2068, %v2116
      %v2141 = vadd.f32 %v2069, %v2117
      %v2142 = vadd.f32 %v2070, %v2118
      %v2143 = vadd.f32 %v2071, %v2119
      %v2144 = vadd.f32 %v2072, %v2120
      %v2145 = vadd.f32 %v2073, %v2121
      %v2146 = vadd.f32 %v2074, %v2122
      %v2147 = vadd.f32 %v2075, %v2123
      %v2148 = vadd.f32 %v2076, %v2124
      %v2149 = vadd.f32 %v2077, %v2125
      %v2150 = vadd.f32 %v2078, %v2126
      %v2151 = vmul.f32 %v480, %v430
      %v2152 = vmul.f32 %v481, %v430
      %v2153 = vmul.f32 %v482, %v430
      %v2154 = vmul.f32 %v483, %v430
      %v2155 = vmul.f32 %v484, %v430
      %v2156 = vmul.f32 %v485, %v430
      %v2157 = vmul.f32 %v486, %v430
      %v2158 = vmul.f32 %v487, %v430
      %v2159 = vmul.f32 %v488, %v430
      %v2160 = vmul.f32 %v489, %v430
      %v2161 = vmul.f32 %v490, %v430
      %v2162 = vmul.f32 %v491, %v430
      %v2163 = vmul.f32 %v492, %v430
      %v2164 = vmul.f32 %v493, %v430
      %v2165 = vmul.f32 %v494, %v430
      %v2166 = vmul.f32 %v495, %v430
      %v2167 = vmul.f32 %v496, %v430
      %v2168 = vmul.f32 %v497, %v430
      %v2169 = vmul.f32 %v498, %v430
      %v2170 = vmul.f32 %v499, %v430
      %v2171 = vmul.f32 %v500, %v430
      %v2172 = vmul.f32 %v501, %v430
      %v2173 = vmul.f32 %v502, %v430
      %v2174 = vmul.f32 %v503, %v430
      %v2175 = vadd.f32 %v2127, %v2151
      %v2176 = vadd.f32 %v2128, %v2152
      %v2177 = vadd.f32 %v2129, %v2153
      %v2178 = vadd.f32 %v2130, %v2154
      %v2179 = vadd.f32 %v2131, %v2155
      %v2180 = vadd.f32 %v2132, %v2156
      %v2181 = vadd.f32 %v2133, %v2157
      %v2182 = vadd.f32 %v2134, %v2158
      %v2183 = vadd.f32 %v2135, %v2159
      %v2184 = vadd.f32 %v2136, %v2160
      %v2185 = vadd.f32 %v2137, %v2161
      %v2186 = vadd.f32 %v2138, %v2162
      %v2187 = vadd.f32 %v2139, %v2163
      %v2188 = vadd.f32 %v2140, %v2164
      %v2189 = vadd.f32 %v2141, %v2165
      %v2190 = vadd.f32 %v2142, %v2166
      %v2191 = vadd.f32 %v2143, %v2167
      %v2192 = vadd.f32 %v2144, %v2168
      %v2193 = vadd.f32 %v2145, %v2169
      %v2194 = vadd.f32 %v2146, %v2170
      %v2195 = vadd.f32 %v2147, %v2171
      %v2196 = vadd.f32 %v2148, %v2172
      %v2197 = vadd.f32 %v2149, %v2173
      %v2198 = vadd.f32 %v2150, %v2174
      %v2199 = vmul.f32 %v555, %v506
      %v2200 = vmul.f32 %v556, %v506
      %v2201 = vmul.f32 %v557, %v506
      %v2202 = vmul.f32 %v558, %v506
      %v2203 = vmul.f32 %v559, %v506
      %v2204 = vmul.f32 %v560, %v506
      %v2205 = vmul.f32 %v561, %v506
      %v2206 = vmul.f32 %v562, %v506
      %v2207 = vmul.f32 %v563, %v506
      %v2208 = vmul.f32 %v564, %v506
      %v2209 = vmul.f32 %v565, %v506
      %v2210 = vmul.f32 %v566, %v506
      %v2211 = vmul.f32 %v567, %v506
      %v2212 = vmul.f32 %v568, %v506
      %v2213 = vmul.f32 %v569, %v506
      %v2214 = vmul.f32 %v570, %v506
      %v2215 = vmul.f32 %v571, %v506
      %v2216 = vmul.f32 %v572, %v506
      %v2217 = vmul.f32 %v573, %v506
      %v2218 = vmul.f32 %v574, %v506
      %v2219 = vmul.f32 %v575, %v506
      %v2220 = vmul.f32 %v576, %v506
      %v2221 = vmul.f32 %v577, %v506
      %v2222 = vmul.f32 %v578, %v506
      %v2223 = vadd.f32 %v2175, %v2199
      %v2224 = vadd.f32 %v2176, %v2200
      %v2225 = vadd.f32 %v2177, %v2201
      %v2226 = vadd.f32 %v2178, %v2202
      %v2227 = vadd.f32 %v2179, %v2203
      %v2228 = vadd.f32 %v2180, %v2204
      %v2229 = vadd.f32 %v2181, %v2205
      %v2230 = vadd.f32 %v2182, %v2206
      %v2231 = vadd.f32 %v2183, %v2207
      %v2232 = vadd.f32 %v2184, %v2208
      %v2233 = vadd.f32 %v2185, %v2209
      %v2234 = vadd.f32 %v2186, %v2210
      %v2235 = vadd.f32 %v2187, %v2211
      %v2236 = vadd.f32 %v2188, %v2212
      %v2237 = vadd.f32 %v2189, %v2213
      %v2238 = vadd.f32 %v2190, %v2214
      %v2239 = vadd.f32 %v2191, %v2215
      %v2240 = vadd.f32 %v2192, %v2216
      %v2241 = vadd.f32 %v2193, %v2217
      %v2242 = vadd.f32 %v2194, %v2218
      %v2243 = vadd.f32 %v2195, %v2219
      %v2244 = vadd.f32 %v2196, %v2220
      %v2245 = vadd.f32 %v2197, %v2221
      %v2246 = vadd.f32 %v2198, %v2222
      %v2247 = vmul.f32 %v630, %v581
      %v2248 = vmul.f32 %v631, %v581
      %v2249 = vmul.f32 %v632, %v581
      %v2250 = vmul.f32 %v633, %v581
      %v2251 = vmul.f32 %v634, %v581
      %v2252 = vmul.f32 %v635, %v581
      %v2253 = vmul.f32 %v636, %v581
      %v2254 = vmul.f32 %v637, %v581
      %v2255 = vmul.f32 %v638, %v581
      %v2256 = vmul.f32 %v639, %v581
      %v2257 = vmul.f32 %v640, %v581
      %v2258 = vmul.f32 %v641, %v581
      %v2259 = vmul.f32 %v642, %v581
      %v2260 = vmul.f32 %v643, %v581
      %v2261 = vmul.f32 %v644, %v581
      %v2262 = vmul.f32 %v645, %v581
      %v2263 = vmul.f32 %v646, %v581
      %v2264 = vmul.f32 %v647, %v581
      %v2265 = vmul.f32 %v648, %v581
      %v2266 = vmul.f32 %v649, %v581
      %v2267 = vmul.f32 %v650, %v581
      %v2268 = vmul.f32 %v651, %v581
      %v2269 = vmul.f32 %v652, %v581
      %v2270 = vmul.f32 %v653, %v581
      %v2271 = vadd.f32 %v2223, %v2247
      %v2272 = vadd.f32 %v2224, %v2248
      %v2273 = vadd.f32 %v2225, %v2249
      %v2274 = vadd.f32 %v2226, %v2250
      %v2275 = vadd.f32 %v2227, %v2251
      %v2276 = vadd.f32 %v2228, %v2252
      %v2277 = vadd.f32 %v2229, %v2253
      %v2278 = vadd.f32 %v2230, %v2254
      %v2279 = vadd.f32 %v2231, %v2255
      %v2280 = vadd.f32 %v2232, %v2256
      %v2281 = vadd.f32 %v2233, %v2257
      %v2282 = vadd.f32 %v2234, %v2258
      %v2283 = vadd.f32 %v2235, %v2259
      %v2284 = vadd.f32 %v2236, %v2260
      %v2285 = vadd.f32 %v2237, %v2261
      %v2286 = vadd.f32 %v2238, %v2262
      %v2287 = vadd.f32 %v2239, %v2263
      %v2288 = vadd.f32 %v2240, %v2264
      %v2289 = vadd.f32 %v2241, %v2265
      %v2290 = vadd.f32 %v2242, %v2266
      %v2291 = vadd.f32 %v2243, %v2267
      %v2292 = vadd.f32 %v2244, %v2268
      %v2293 = vadd.f32 %v2245, %v2269
      %v2294 = vadd.f32 %v2246, %v2270
      %v2295 = vmul.f32 %v705, %v656
      %v2296 = vmul.f32 %v706, %v656
      %v2297 = vmul.f32 %v707, %v656
      %v2298 = vmul.f32 %v708, %v656
      %v2299 = vmul.f32 %v709, %v656
      %v2300 = vmul.f32 %v710, %v656
      %v2301 = vmul.f32 %v711, %v656
      %v2302 = vmul.f32 %v712, %v656
      %v2303 = vmul.f32 %v713, %v656
      %v2304 = vmul.f32 %v714, %v656
      %v2305 = vmul.f32 %v715, %v656
      %v2306 = vmul.f32 %v716, %v656
      %v2307 = vmul.f32 %v717, %v656
      %v2308 = vmul.f32 %v718, %v656
      %v2309 = vmul.f32 %v719, %v656
      %v2310 = vmul.f32 %v720, %v656
      %v2311 = vmul.f32 %v721, %v656
      %v2312 = vmul.f32 %v722, %v656
      %v2313 = vmul.f32 %v723, %v656
      %v2314 = vmul.f32 %v724, %v656
      %v2315 = vmul.f32 %v725, %v656
      %v2316 = vmul.f32 %v726, %v656
      %v2317 = vmul.f32 %v727, %v656
      %v2318 = vmul.f32 %v728, %v656
      %v2319 = vadd.f32 %v2271, %v2295
      %v2320 = vadd.f32 %v2272, %v2296
      %v2321 = vadd.f32 %v2273, %v2297
      %v2322 = vadd.f32 %v2274, %v2298
      %v2323 = vadd.f32 %v2275, %v2299
      %v2324 = vadd.f32 %v2276, %v2300
      %v2325 = vadd.f32 %v2277, %v2301
      %v2326 = vadd.f32 %v2278, %v2302
      %v2327 = vadd.f32 %v2279, %v2303
      %v2328 = vadd.f32 %v2280, %v2304
      %v2329 = vadd.f32 %v2281, %v2305
      %v2330 = vadd.f32 %v2282, %v2306
      %v2331 = vadd.f32 %v2283, %v2307
      %v2332 = vadd.f32 %v2284, %v2308
      %v2333 = vadd.f32 %v2285, %v2309
      %v2334 = vadd.f32 %v2286, %v2310
      %v2335 = vadd.f32 %v2287, %v2311
      %v2336 = vadd.f32 %v2288, %v2312
      %v2337 = vadd.f32 %v2289, %v2313
      %v2338 = vadd.f32 %v2290, %v2314
      %v2339 = vadd.f32 %v2291, %v2315
      %v2340 = vadd.f32 %v2292, %v2316
      %v2341 = vadd.f32 %v2293, %v2317
      %v2342 = vadd.f32 %v2294, %v2318
      %v2343 = vld [vmem:[%s479 + $0x2] sm:$0xff]
      %v2344 = vld [vmem:[%s479 + $0xa] sm:$0xf]
      %v2345 = vld [vmem:[%s479 + $0x12] sm:$0xff]
      %v2346 = vld [vmem:[%s479 + $0x1a] sm:$0xf]
      %v2347 = vld [vmem:[%s479 + $0x22] sm:$0xff]
      %v2348 = vld [vmem:[%s479 + $0x2a] sm:$0xf]
      %v2349 = vld [vmem:[%s479 + $0x32] sm:$0xff]
      %v2350 = vld [vmem:[%s479 + $0x3a] sm:$0xf]
      %v2351 = vld [vmem:[%s479 + $0x42] sm:$0xff]
      %v2352 = vld [vmem:[%s479 + $0x4a] sm:$0xf]
      %v2353 = vld [vmem:[%s479 + $0x52] sm:$0xff]
      %v2354 = vld [vmem:[%s479 + $0x5a] sm:$0xf]
      %v2355 = vld [vmem:[%s479 + $0x62] sm:$0xff]
      %v2356 = vld [vmem:[%s479 + $0x6a] sm:$0xf]
      %v2357 = vld [vmem:[%s479 + $0x72] sm:$0xff]
      %v2358 = vld [vmem:[%s479 + $0x7a] sm:$0xf]
      %v2359 = vld [vmem:[%s479 + $0x82] sm:$0xff]
      %v2360 = vld [vmem:[%s479 + $0x8a] sm:$0xf]
      %v2361 = vld [vmem:[%s479 + $0x92] sm:$0xff]
      %v2362 = vld [vmem:[%s479 + $0x9a] sm:$0xf]
      %v2363 = vld [vmem:[%s479 + $0xa2] sm:$0xff]
      %v2364 = vld [vmem:[%s479 + $0xaa] sm:$0xf]
      %v2365 = vld [vmem:[%s479 + $0xb2] sm:$0xff]
      %v2366 = vld [vmem:[%s479 + $0xba] sm:$0xf]
      %v2367 = vmul.f32 %v2343, %v731
      %v2368 = vmul.f32 %v2344, %v731
      %v2369 = vmul.f32 %v2345, %v731
      %v2370 = vmul.f32 %v2346, %v731
      %v2371 = vmul.f32 %v2347, %v731
      %v2372 = vmul.f32 %v2348, %v731
      %v2373 = vmul.f32 %v2349, %v731
      %v2374 = vmul.f32 %v2350, %v731
      %v2375 = vmul.f32 %v2351, %v731
      %v2376 = vmul.f32 %v2352, %v731
      %v2377 = vmul.f32 %v2353, %v731
      %v2378 = vmul.f32 %v2354, %v731
      %v2379 = vmul.f32 %v2355, %v731
      %v2380 = vmul.f32 %v2356, %v731
      %v2381 = vmul.f32 %v2357, %v731
      %v2382 = vmul.f32 %v2358, %v731
      %v2383 = vmul.f32 %v2359, %v731
      %v2384 = vmul.f32 %v2360, %v731
      %v2385 = vmul.f32 %v2361, %v731
      %v2386 = vmul.f32 %v2362, %v731
      %v2387 = vmul.f32 %v2363, %v731
      %v2388 = vmul.f32 %v2364, %v731
      %v2389 = vmul.f32 %v2365, %v731
      %v2390 = vmul.f32 %v2366, %v731
      %v2391 = vadd.f32 %v2319, %v2367
      %v2392 = vadd.f32 %v2320, %v2368
      %v2393 = vadd.f32 %v2321, %v2369
      %v2394 = vadd.f32 %v2322, %v2370
      %v2395 = vadd.f32 %v2323, %v2371
      %v2396 = vadd.f32 %v2324, %v2372
      %v2397 = vadd.f32 %v2325, %v2373
      %v2398 = vadd.f32 %v2326, %v2374
      %v2399 = vadd.f32 %v2327, %v2375
      %v2400 = vadd.f32 %v2328, %v2376
      %v2401 = vadd.f32 %v2329, %v2377
      %v2402 = vadd.f32 %v2330, %v2378
      %v2403 = vadd.f32 %v2331, %v2379
      %v2404 = vadd.f32 %v2332, %v2380
      %v2405 = vadd.f32 %v2333, %v2381
      %v2406 = vadd.f32 %v2334, %v2382
      %v2407 = vadd.f32 %v2335, %v2383
      %v2408 = vadd.f32 %v2336, %v2384
      %v2409 = vadd.f32 %v2337, %v2385
      %v2410 = vadd.f32 %v2338, %v2386
      %v2411 = vadd.f32 %v2339, %v2387
      %v2412 = vadd.f32 %v2340, %v2388
      %v2413 = vadd.f32 %v2341, %v2389
      %v2414 = vadd.f32 %v2342, %v2390
      %v2415 = vmul.f32 %v857, %v807
      %v2416 = vmul.f32 %v858, %v807
      %v2417 = vmul.f32 %v859, %v807
      %v2418 = vmul.f32 %v860, %v807
      %v2419 = vmul.f32 %v861, %v807
      %v2420 = vmul.f32 %v862, %v807
      %v2421 = vmul.f32 %v863, %v807
      %v2422 = vmul.f32 %v864, %v807
      %v2423 = vmul.f32 %v865, %v807
      %v2424 = vmul.f32 %v866, %v807
      %v2425 = vmul.f32 %v867, %v807
      %v2426 = vmul.f32 %v868, %v807
      %v2427 = vmul.f32 %v869, %v807
      %v2428 = vmul.f32 %v870, %v807
      %v2429 = vmul.f32 %v871, %v807
      %v2430 = vmul.f32 %v872, %v807
      %v2431 = vmul.f32 %v873, %v807
      %v2432 = vmul.f32 %v874, %v807
      %v2433 = vmul.f32 %v875, %v807
      %v2434 = vmul.f32 %v876, %v807
      %v2435 = vmul.f32 %v877, %v807
      %v2436 = vmul.f32 %v878, %v807
      %v2437 = vmul.f32 %v879, %v807
      %v2438 = vmul.f32 %v880, %v807
      %v2439 = vadd.f32 %v2391, %v2415
      %v2440 = vadd.f32 %v2392, %v2416
      %v2441 = vadd.f32 %v2393, %v2417
      %v2442 = vadd.f32 %v2394, %v2418
      %v2443 = vadd.f32 %v2395, %v2419
      %v2444 = vadd.f32 %v2396, %v2420
      %v2445 = vadd.f32 %v2397, %v2421
      %v2446 = vadd.f32 %v2398, %v2422
      %v2447 = vadd.f32 %v2399, %v2423
      %v2448 = vadd.f32 %v2400, %v2424
      %v2449 = vadd.f32 %v2401, %v2425
      %v2450 = vadd.f32 %v2402, %v2426
      %v2451 = vadd.f32 %v2403, %v2427
      %v2452 = vadd.f32 %v2404, %v2428
      %v2453 = vadd.f32 %v2405, %v2429
      %v2454 = vadd.f32 %v2406, %v2430
      %v2455 = vadd.f32 %v2407, %v2431
      %v2456 = vadd.f32 %v2408, %v2432
      %v2457 = vadd.f32 %v2409, %v2433
      %v2458 = vadd.f32 %v2410, %v2434
      %v2459 = vadd.f32 %v2411, %v2435
      %v2460 = vadd.f32 %v2412, %v2436
      %v2461 = vadd.f32 %v2413, %v2437
      %v2462 = vadd.f32 %v2414, %v2438
      %v2463 = vmul.f32 %v932, %v883
      %v2464 = vmul.f32 %v933, %v883
      %v2465 = vmul.f32 %v934, %v883
      %v2466 = vmul.f32 %v935, %v883
      %v2467 = vmul.f32 %v936, %v883
      %v2468 = vmul.f32 %v937, %v883
      %v2469 = vmul.f32 %v938, %v883
      %v2470 = vmul.f32 %v939, %v883
      %v2471 = vmul.f32 %v940, %v883
      %v2472 = vmul.f32 %v941, %v883
      %v2473 = vmul.f32 %v942, %v883
      %v2474 = vmul.f32 %v943, %v883
      %v2475 = vmul.f32 %v944, %v883
      %v2476 = vmul.f32 %v945, %v883
      %v2477 = vmul.f32 %v946, %v883
      %v2478 = vmul.f32 %v947, %v883
      %v2479 = vmul.f32 %v948, %v883
      %v2480 = vmul.f32 %v949, %v883
      %v2481 = vmul.f32 %v950, %v883
      %v2482 = vmul.f32 %v951, %v883
      %v2483 = vmul.f32 %v952, %v883
      %v2484 = vmul.f32 %v953, %v883
      %v2485 = vmul.f32 %v954, %v883
      %v2486 = vmul.f32 %v955, %v883
      %v2487 = vadd.f32 %v2439, %v2463
      %v2488 = vadd.f32 %v2440, %v2464
      %v2489 = vadd.f32 %v2441, %v2465
      %v2490 = vadd.f32 %v2442, %v2466
      %v2491 = vadd.f32 %v2443, %v2467
      %v2492 = vadd.f32 %v2444, %v2468
      %v2493 = vadd.f32 %v2445, %v2469
      %v2494 = vadd.f32 %v2446, %v2470
      %v2495 = vadd.f32 %v2447, %v2471
      %v2496 = vadd.f32 %v2448, %v2472
      %v2497 = vadd.f32 %v2449, %v2473
      %v2498 = vadd.f32 %v2450, %v2474
      %v2499 = vadd.f32 %v2451, %v2475
      %v2500 = vadd.f32 %v2452, %v2476
      %v2501 = vadd.f32 %v2453, %v2477
      %v2502 = vadd.f32 %v2454, %v2478
      %v2503 = vadd.f32 %v2455, %v2479
      %v2504 = vadd.f32 %v2456, %v2480
      %v2505 = vadd.f32 %v2457, %v2481
      %v2506 = vadd.f32 %v2458, %v2482
      %v2507 = vadd.f32 %v2459, %v2483
      %v2508 = vadd.f32 %v2460, %v2484
      %v2509 = vadd.f32 %v2461, %v2485
      %v2510 = vadd.f32 %v2462, %v2486
      %v2511 = vmul.f32 %v1007, %v958
      %v2512 = vmul.f32 %v1008, %v958
      %v2513 = vmul.f32 %v1009, %v958
      %v2514 = vmul.f32 %v1010, %v958
      %v2515 = vmul.f32 %v1011, %v958
      %v2516 = vmul.f32 %v1012, %v958
      %v2517 = vmul.f32 %v1013, %v958
      %v2518 = vmul.f32 %v1014, %v958
      %v2519 = vmul.f32 %v1015, %v958
      %v2520 = vmul.f32 %v1016, %v958
      %v2521 = vmul.f32 %v1017, %v958
      %v2522 = vmul.f32 %v1018, %v958
      %v2523 = vmul.f32 %v1019, %v958
      %v2524 = vmul.f32 %v1020, %v958
      %v2525 = vmul.f32 %v1021, %v958
      %v2526 = vmul.f32 %v1022, %v958
      %v2527 = vmul.f32 %v1023, %v958
      %v2528 = vmul.f32 %v1024, %v958
      %v2529 = vmul.f32 %v1025, %v958
      %v2530 = vmul.f32 %v1026, %v958
      %v2531 = vmul.f32 %v1027, %v958
      %v2532 = vmul.f32 %v1028, %v958
      %v2533 = vmul.f32 %v1029, %v958
      %v2534 = vmul.f32 %v1030, %v958
      %v2535 = vadd.f32 %v2487, %v2511
      %v2536 = vadd.f32 %v2488, %v2512
      %v2537 = vadd.f32 %v2489, %v2513
      %v2538 = vadd.f32 %v2490, %v2514
      %v2539 = vadd.f32 %v2491, %v2515
      %v2540 = vadd.f32 %v2492, %v2516
      %v2541 = vadd.f32 %v2493, %v2517
      %v2542 = vadd.f32 %v2494, %v2518
      %v2543 = vadd.f32 %v2495, %v2519
      %v2544 = vadd.f32 %v2496, %v2520
      %v2545 = vadd.f32 %v2497, %v2521
      %v2546 = vadd.f32 %v2498, %v2522
      %v2547 = vadd.f32 %v2499, %v2523
      %v2548 = vadd.f32 %v2500, %v2524
      %v2549 = vadd.f32 %v2501, %v2525
      %v2550 = vadd.f32 %v2502, %v2526
      %v2551 = vadd.f32 %v2503, %v2527
      %v2552 = vadd.f32 %v2504, %v2528
      %v2553 = vadd.f32 %v2505, %v2529
      %v2554 = vadd.f32 %v2506, %v2530
      %v2555 = vadd.f32 %v2507, %v2531
      %v2556 = vadd.f32 %v2508, %v2532
      %v2557 = vadd.f32 %v2509, %v2533
      %v2558 = vadd.f32 %v2510, %v2534
      %v2559 = vmul.f32 %v1082, %v1033
      %v2560 = vmul.f32 %v1083, %v1033
      %v2561 = vmul.f32 %v1084, %v1033
      %v2562 = vmul.f32 %v1085, %v1033
      %v2563 = vmul.f32 %v1086, %v1033
      %v2564 = vmul.f32 %v1087, %v1033
      %v2565 = vmul.f32 %v1088, %v1033
      %v2566 = vmul.f32 %v1089, %v1033
      %v2567 = vmul.f32 %v1090, %v1033
      %v2568 = vmul.f32 %v1091, %v1033
      %v2569 = vmul.f32 %v1092, %v1033
      %v2570 = vmul.f32 %v1093, %v1033
      %v2571 = vmul.f32 %v1094, %v1033
      %v2572 = vmul.f32 %v1095, %v1033
      %v2573 = vmul.f32 %v1096, %v1033
      %v2574 = vmul.f32 %v1097, %v1033
      %v2575 = vmul.f32 %v1098, %v1033
      %v2576 = vmul.f32 %v1099, %v1033
      %v2577 = vmul.f32 %v1100, %v1033
      %v2578 = vmul.f32 %v1101, %v1033
      %v2579 = vmul.f32 %v1102, %v1033
      %v2580 = vmul.f32 %v1103, %v1033
      %v2581 = vmul.f32 %v1104, %v1033
      %v2582 = vmul.f32 %v1105, %v1033
      %v2583 = vadd.f32 %v2535, %v2559
      %v2584 = vadd.f32 %v2536, %v2560
      %v2585 = vadd.f32 %v2537, %v2561
      %v2586 = vadd.f32 %v2538, %v2562
      %v2587 = vadd.f32 %v2539, %v2563
      %v2588 = vadd.f32 %v2540, %v2564
      %v2589 = vadd.f32 %v2541, %v2565
      %v2590 = vadd.f32 %v2542, %v2566
      %v2591 = vadd.f32 %v2543, %v2567
      %v2592 = vadd.f32 %v2544, %v2568
      %v2593 = vadd.f32 %v2545, %v2569
      %v2594 = vadd.f32 %v2546, %v2570
      %v2595 = vadd.f32 %v2547, %v2571
      %v2596 = vadd.f32 %v2548, %v2572
      %v2597 = vadd.f32 %v2549, %v2573
      %v2598 = vadd.f32 %v2550, %v2574
      %v2599 = vadd.f32 %v2551, %v2575
      %v2600 = vadd.f32 %v2552, %v2576
      %v2601 = vadd.f32 %v2553, %v2577
      %v2602 = vadd.f32 %v2554, %v2578
      %v2603 = vadd.f32 %v2555, %v2579
      %v2604 = vadd.f32 %v2556, %v2580
      %v2605 = vadd.f32 %v2557, %v2581
      %v2606 = vadd.f32 %v2558, %v2582
      %v2607 = vld [vmem:[%s856 + $0x2] sm:$0xff]
      %v2608 = vld [vmem:[%s856 + $0xa] sm:$0xf]
      %v2609 = vld [vmem:[%s856 + $0x12] sm:$0xff]
      %v2610 = vld [vmem:[%s856 + $0x1a] sm:$0xf]
      %v2611 = vld [vmem:[%s856 + $0x22] sm:$0xff]
      %v2612 = vld [vmem:[%s856 + $0x2a] sm:$0xf]
      %v2613 = vld [vmem:[%s856 + $0x32] sm:$0xff]
      %v2614 = vld [vmem:[%s856 + $0x3a] sm:$0xf]
      %v2615 = vld [vmem:[%s856 + $0x42] sm:$0xff]
      %v2616 = vld [vmem:[%s856 + $0x4a] sm:$0xf]
      %v2617 = vld [vmem:[%s856 + $0x52] sm:$0xff]
      %v2618 = vld [vmem:[%s856 + $0x5a] sm:$0xf]
      %v2619 = vld [vmem:[%s856 + $0x62] sm:$0xff]
      %v2620 = vld [vmem:[%s856 + $0x6a] sm:$0xf]
      %v2621 = vld [vmem:[%s856 + $0x72] sm:$0xff]
      %v2622 = vld [vmem:[%s856 + $0x7a] sm:$0xf]
      %v2623 = vld [vmem:[%s856 + $0x82] sm:$0xff]
      %v2624 = vld [vmem:[%s856 + $0x8a] sm:$0xf]
      %v2625 = vld [vmem:[%s856 + $0x92] sm:$0xff]
      %v2626 = vld [vmem:[%s856 + $0x9a] sm:$0xf]
      %v2627 = vld [vmem:[%s856 + $0xa2] sm:$0xff]
      %v2628 = vld [vmem:[%s856 + $0xaa] sm:$0xf]
      %v2629 = vld [vmem:[%s856 + $0xb2] sm:$0xff]
      %v2630 = vld [vmem:[%s856 + $0xba] sm:$0xf]
      %v2631 = vmul.f32 %v2607, %v1108
      %v2632 = vmul.f32 %v2608, %v1108
      %v2633 = vmul.f32 %v2609, %v1108
      %v2634 = vmul.f32 %v2610, %v1108
      %v2635 = vmul.f32 %v2611, %v1108
      %v2636 = vmul.f32 %v2612, %v1108
      %v2637 = vmul.f32 %v2613, %v1108
      %v2638 = vmul.f32 %v2614, %v1108
      %v2639 = vmul.f32 %v2615, %v1108
      %v2640 = vmul.f32 %v2616, %v1108
      %v2641 = vmul.f32 %v2617, %v1108
      %v2642 = vmul.f32 %v2618, %v1108
      %v2643 = vmul.f32 %v2619, %v1108
      %v2644 = vmul.f32 %v2620, %v1108
      %v2645 = vmul.f32 %v2621, %v1108
      %v2646 = vmul.f32 %v2622, %v1108
      %v2647 = vmul.f32 %v2623, %v1108
      %v2648 = vmul.f32 %v2624, %v1108
      %v2649 = vmul.f32 %v2625, %v1108
      %v2650 = vmul.f32 %v2626, %v1108
      %v2651 = vmul.f32 %v2627, %v1108
      %v2652 = vmul.f32 %v2628, %v1108
      %v2653 = vmul.f32 %v2629, %v1108
      %v2654 = vmul.f32 %v2630, %v1108
      %v2655 = vadd.f32 %v2583, %v2631
      %v2656 = vadd.f32 %v2584, %v2632
      %v2657 = vadd.f32 %v2585, %v2633
      %v2658 = vadd.f32 %v2586, %v2634
      %v2659 = vadd.f32 %v2587, %v2635
      %v2660 = vadd.f32 %v2588, %v2636
      %v2661 = vadd.f32 %v2589, %v2637
      %v2662 = vadd.f32 %v2590, %v2638
      %v2663 = vadd.f32 %v2591, %v2639
      %v2664 = vadd.f32 %v2592, %v2640
      %v2665 = vadd.f32 %v2593, %v2641
      %v2666 = vadd.f32 %v2594, %v2642
      %v2667 = vadd.f32 %v2595, %v2643
      %v2668 = vadd.f32 %v2596, %v2644
      %v2669 = vadd.f32 %v2597, %v2645
      %v2670 = vadd.f32 %v2598, %v2646
      %v2671 = vadd.f32 %v2599, %v2647
      %v2672 = vadd.f32 %v2600, %v2648
      %v2673 = vadd.f32 %v2601, %v2649
      %v2674 = vadd.f32 %v2602, %v2650
      %v2675 = vadd.f32 %v2603, %v2651
      %v2676 = vadd.f32 %v2604, %v2652
      %v2677 = vadd.f32 %v2605, %v2653
      %v2678 = vadd.f32 %v2606, %v2654
      %v2679 = vmul.f32 %v1234, %v1184
      %v2680 = vmul.f32 %v1235, %v1184
      %v2681 = vmul.f32 %v1236, %v1184
      %v2682 = vmul.f32 %v1237, %v1184
      %v2683 = vmul.f32 %v1238, %v1184
      %v2684 = vmul.f32 %v1239, %v1184
      %v2685 = vmul.f32 %v1240, %v1184
      %v2686 = vmul.f32 %v1241, %v1184
      %v2687 = vmul.f32 %v1242, %v1184
      %v2688 = vmul.f32 %v1243, %v1184
      %v2689 = vmul.f32 %v1244, %v1184
      %v2690 = vmul.f32 %v1245, %v1184
      %v2691 = vmul.f32 %v1246, %v1184
      %v2692 = vmul.f32 %v1247, %v1184
      %v2693 = vmul.f32 %v1248, %v1184
      %v2694 = vmul.f32 %v1249, %v1184
      %v2695 = vmul.f32 %v1250, %v1184
      %v2696 = vmul.f32 %v1251, %v1184
      %v2697 = vmul.f32 %v1252, %v1184
      %v2698 = vmul.f32 %v1253, %v1184
      %v2699 = vmul.f32 %v1254, %v1184
      %v2700 = vmul.f32 %v1255, %v1184
      %v2701 = vmul.f32 %v1256, %v1184
      %v2702 = vmul.f32 %v1257, %v1184
      %v2703 = vadd.f32 %v2655, %v2679
      %v2704 = vadd.f32 %v2656, %v2680
      %v2705 = vadd.f32 %v2657, %v2681
      %v2706 = vadd.f32 %v2658, %v2682
      %v2707 = vadd.f32 %v2659, %v2683
      %v2708 = vadd.f32 %v2660, %v2684
      %v2709 = vadd.f32 %v2661, %v2685
      %v2710 = vadd.f32 %v2662, %v2686
      %v2711 = vadd.f32 %v2663, %v2687
      %v2712 = vadd.f32 %v2664, %v2688
      %v2713 = vadd.f32 %v2665, %v2689
      %v2714 = vadd.f32 %v2666, %v2690
      %v2715 = vadd.f32 %v2667, %v2691
      %v2716 = vadd.f32 %v2668, %v2692
      %v2717 = vadd.f32 %v2669, %v2693
      %v2718 = vadd.f32 %v2670, %v2694
      %v2719 = vadd.f32 %v2671, %v2695
      %v2720 = vadd.f32 %v2672, %v2696
      %v2721 = vadd.f32 %v2673, %v2697
      %v2722 = vadd.f32 %v2674, %v2698
      %v2723 = vadd.f32 %v2675, %v2699
      %v2724 = vadd.f32 %v2676, %v2700
      %v2725 = vadd.f32 %v2677, %v2701
      %v2726 = vadd.f32 %v2678, %v2702
      %v2727 = vmul.f32 %v1309, %v1260
      %v2728 = vmul.f32 %v1310, %v1260
      %v2729 = vmul.f32 %v1311, %v1260
      %v2730 = vmul.f32 %v1312, %v1260
      %v2731 = vmul.f32 %v1313, %v1260
      %v2732 = vmul.f32 %v1314, %v1260
      %v2733 = vmul.f32 %v1315, %v1260
      %v2734 = vmul.f32 %v1316, %v1260
      %v2735 = vmul.f32 %v1317, %v1260
      %v2736 = vmul.f32 %v1318, %v1260
      %v2737 = vmul.f32 %v1319, %v1260
      %v2738 = vmul.f32 %v1320, %v1260
      %v2739 = vmul.f32 %v1321, %v1260
      %v2740 = vmul.f32 %v1322, %v1260
      %v2741 = vmul.f32 %v1323, %v1260
      %v2742 = vmul.f32 %v1324, %v1260
      %v2743 = vmul.f32 %v1325, %v1260
      %v2744 = vmul.f32 %v1326, %v1260
      %v2745 = vmul.f32 %v1327, %v1260
      %v2746 = vmul.f32 %v1328, %v1260
      %v2747 = vmul.f32 %v1329, %v1260
      %v2748 = vmul.f32 %v1330, %v1260
      %v2749 = vmul.f32 %v1331, %v1260
      %v2750 = vmul.f32 %v1332, %v1260
      %v2751 = vadd.f32 %v2703, %v2727
      %v2752 = vadd.f32 %v2704, %v2728
      %v2753 = vadd.f32 %v2705, %v2729
      %v2754 = vadd.f32 %v2706, %v2730
      %v2755 = vadd.f32 %v2707, %v2731
      %v2756 = vadd.f32 %v2708, %v2732
      %v2757 = vadd.f32 %v2709, %v2733
      %v2758 = vadd.f32 %v2710, %v2734
      %v2759 = vadd.f32 %v2711, %v2735
      %v2760 = vadd.f32 %v2712, %v2736
      %v2761 = vadd.f32 %v2713, %v2737
      %v2762 = vadd.f32 %v2714, %v2738
      %v2763 = vadd.f32 %v2715, %v2739
      %v2764 = vadd.f32 %v2716, %v2740
      %v2765 = vadd.f32 %v2717, %v2741
      %v2766 = vadd.f32 %v2718, %v2742
      %v2767 = vadd.f32 %v2719, %v2743
      %v2768 = vadd.f32 %v2720, %v2744
      %v2769 = vadd.f32 %v2721, %v2745
      %v2770 = vadd.f32 %v2722, %v2746
      %v2771 = vadd.f32 %v2723, %v2747
      %v2772 = vadd.f32 %v2724, %v2748
      %v2773 = vadd.f32 %v2725, %v2749
      %v2774 = vadd.f32 %v2726, %v2750
      %v2775 = vmul.f32 %v1384, %v1335
      %v2776 = vmul.f32 %v1385, %v1335
      %v2777 = vmul.f32 %v1386, %v1335
      %v2778 = vmul.f32 %v1387, %v1335
      %v2779 = vmul.f32 %v1388, %v1335
      %v2780 = vmul.f32 %v1389, %v1335
      %v2781 = vmul.f32 %v1390, %v1335
      %v2782 = vmul.f32 %v1391, %v1335
      %v2783 = vmul.f32 %v1392, %v1335
      %v2784 = vmul.f32 %v1393, %v1335
      %v2785 = vmul.f32 %v1394, %v1335
      %v2786 = vmul.f32 %v1395, %v1335
      %v2787 = vmul.f32 %v1396, %v1335
      %v2788 = vmul.f32 %v1397, %v1335
      %v2789 = vmul.f32 %v1398, %v1335
      %v2790 = vmul.f32 %v1399, %v1335
      %v2791 = vmul.f32 %v1400, %v1335
      %v2792 = vmul.f32 %v1401, %v1335
      %v2793 = vmul.f32 %v1402, %v1335
      %v2794 = vmul.f32 %v1403, %v1335
      %v2795 = vmul.f32 %v1404, %v1335
      %v2796 = vmul.f32 %v1405, %v1335
      %v2797 = vmul.f32 %v1406, %v1335
      %v2798 = vmul.f32 %v1407, %v1335
      %v2799 = vadd.f32 %v2751, %v2775
      %v2800 = vadd.f32 %v2752, %v2776
      %v2801 = vadd.f32 %v2753, %v2777
      %v2802 = vadd.f32 %v2754, %v2778
      %v2803 = vadd.f32 %v2755, %v2779
      %v2804 = vadd.f32 %v2756, %v2780
      %v2805 = vadd.f32 %v2757, %v2781
      %v2806 = vadd.f32 %v2758, %v2782
      %v2807 = vadd.f32 %v2759, %v2783
      %v2808 = vadd.f32 %v2760, %v2784
      %v2809 = vadd.f32 %v2761, %v2785
      %v2810 = vadd.f32 %v2762, %v2786
      %v2811 = vadd.f32 %v2763, %v2787
      %v2812 = vadd.f32 %v2764, %v2788
      %v2813 = vadd.f32 %v2765, %v2789
      %v2814 = vadd.f32 %v2766, %v2790
      %v2815 = vadd.f32 %v2767, %v2791
      %v2816 = vadd.f32 %v2768, %v2792
      %v2817 = vadd.f32 %v2769, %v2793
      %v2818 = vadd.f32 %v2770, %v2794
      %v2819 = vadd.f32 %v2771, %v2795
      %v2820 = vadd.f32 %v2772, %v2796
      %v2821 = vadd.f32 %v2773, %v2797
      %v2822 = vadd.f32 %v2774, %v2798
      %v2823 = vmul.f32 %v1459, %v1410
      %v2824 = vmul.f32 %v1460, %v1410
      %v2825 = vmul.f32 %v1461, %v1410
      %v2826 = vmul.f32 %v1462, %v1410
      %v2827 = vmul.f32 %v1463, %v1410
      %v2828 = vmul.f32 %v1464, %v1410
      %v2829 = vmul.f32 %v1465, %v1410
      %v2830 = vmul.f32 %v1466, %v1410
      %v2831 = vmul.f32 %v1467, %v1410
      %v2832 = vmul.f32 %v1468, %v1410
      %v2833 = vmul.f32 %v1469, %v1410
      %v2834 = vmul.f32 %v1470, %v1410
      %v2835 = vmul.f32 %v1471, %v1410
      %v2836 = vmul.f32 %v1472, %v1410
      %v2837 = vmul.f32 %v1473, %v1410
      %v2838 = vmul.f32 %v1474, %v1410
      %v2839 = vmul.f32 %v1475, %v1410
      %v2840 = vmul.f32 %v1476, %v1410
      %v2841 = vmul.f32 %v1477, %v1410
      %v2842 = vmul.f32 %v1478, %v1410
      %v2843 = vmul.f32 %v1479, %v1410
      %v2844 = vmul.f32 %v1480, %v1410
      %v2845 = vmul.f32 %v1481, %v1410
      %v2846 = vmul.f32 %v1482, %v1410
      %v2847 = vadd.f32 %v2799, %v2823
      %v2848 = vadd.f32 %v2800, %v2824
      %v2849 = vadd.f32 %v2801, %v2825
      %v2850 = vadd.f32 %v2802, %v2826
      %v2851 = vadd.f32 %v2803, %v2827
      %v2852 = vadd.f32 %v2804, %v2828
      %v2853 = vadd.f32 %v2805, %v2829
      %v2854 = vadd.f32 %v2806, %v2830
      %v2855 = vadd.f32 %v2807, %v2831
      %v2856 = vadd.f32 %v2808, %v2832
      %v2857 = vadd.f32 %v2809, %v2833
      %v2858 = vadd.f32 %v2810, %v2834
      %v2859 = vadd.f32 %v2811, %v2835
      %v2860 = vadd.f32 %v2812, %v2836
      %v2861 = vadd.f32 %v2813, %v2837
      %v2862 = vadd.f32 %v2814, %v2838
      %v2863 = vadd.f32 %v2815, %v2839
      %v2864 = vadd.f32 %v2816, %v2840
      %v2865 = vadd.f32 %v2817, %v2841
      %v2866 = vadd.f32 %v2818, %v2842
      %v2867 = vadd.f32 %v2819, %v2843
      %v2868 = vadd.f32 %v2820, %v2844
      %v2869 = vadd.f32 %v2821, %v2845
      %v2870 = vadd.f32 %v2822, %v2846
      %v2871 = vld [vmem:[%s1233 + $0x2] sm:$0xff]
      %v2872 = vld [vmem:[%s1233 + $0xa] sm:$0xf]
      %v2873 = vld [vmem:[%s1233 + $0x12] sm:$0xff]
      %v2874 = vld [vmem:[%s1233 + $0x1a] sm:$0xf]
      %v2875 = vld [vmem:[%s1233 + $0x22] sm:$0xff]
      %v2876 = vld [vmem:[%s1233 + $0x2a] sm:$0xf]
      %v2877 = vld [vmem:[%s1233 + $0x32] sm:$0xff]
      %v2878 = vld [vmem:[%s1233 + $0x3a] sm:$0xf]
      %v2879 = vld [vmem:[%s1233 + $0x42] sm:$0xff]
      %v2880 = vld [vmem:[%s1233 + $0x4a] sm:$0xf]
      %v2881 = vld [vmem:[%s1233 + $0x52] sm:$0xff]
      %v2882 = vld [vmem:[%s1233 + $0x5a] sm:$0xf]
      %v2883 = vld [vmem:[%s1233 + $0x62] sm:$0xff]
      %v2884 = vld [vmem:[%s1233 + $0x6a] sm:$0xf]
      %v2885 = vld [vmem:[%s1233 + $0x72] sm:$0xff]
      %v2886 = vld [vmem:[%s1233 + $0x7a] sm:$0xf]
      %v2887 = vld [vmem:[%s1233 + $0x82] sm:$0xff]
      %v2888 = vld [vmem:[%s1233 + $0x8a] sm:$0xf]
      %v2889 = vld [vmem:[%s1233 + $0x92] sm:$0xff]
      %v2890 = vld [vmem:[%s1233 + $0x9a] sm:$0xf]
      %v2891 = vld [vmem:[%s1233 + $0xa2] sm:$0xff]
      %v2892 = vld [vmem:[%s1233 + $0xaa] sm:$0xf]
      %v2893 = vld [vmem:[%s1233 + $0xb2] sm:$0xff]
      %v2894 = vld [vmem:[%s1233 + $0xba] sm:$0xf]
      %v2895 = vmul.f32 %v2871, %v1485
      %v2896 = vmul.f32 %v2872, %v1485
      %v2897 = vmul.f32 %v2873, %v1485
      %v2898 = vmul.f32 %v2874, %v1485
      %v2899 = vmul.f32 %v2875, %v1485
      %v2900 = vmul.f32 %v2876, %v1485
      %v2901 = vmul.f32 %v2877, %v1485
      %v2902 = vmul.f32 %v2878, %v1485
      %v2903 = vmul.f32 %v2879, %v1485
      %v2904 = vmul.f32 %v2880, %v1485
      %v2905 = vmul.f32 %v2881, %v1485
      %v2906 = vmul.f32 %v2882, %v1485
      %v2907 = vmul.f32 %v2883, %v1485
      %v2908 = vmul.f32 %v2884, %v1485
      %v2909 = vmul.f32 %v2885, %v1485
      %v2910 = vmul.f32 %v2886, %v1485
      %v2911 = vmul.f32 %v2887, %v1485
      %v2912 = vmul.f32 %v2888, %v1485
      %v2913 = vmul.f32 %v2889, %v1485
      %v2914 = vmul.f32 %v2890, %v1485
      %v2915 = vmul.f32 %v2891, %v1485
      %v2916 = vmul.f32 %v2892, %v1485
      %v2917 = vmul.f32 %v2893, %v1485
      %v2918 = vmul.f32 %v2894, %v1485
      %v2919 = vadd.f32 %v2847, %v2895
      %v2920 = vadd.f32 %v2848, %v2896
      %v2921 = vadd.f32 %v2849, %v2897
      %v2922 = vadd.f32 %v2850, %v2898
      %v2923 = vadd.f32 %v2851, %v2899
      %v2924 = vadd.f32 %v2852, %v2900
      %v2925 = vadd.f32 %v2853, %v2901
      %v2926 = vadd.f32 %v2854, %v2902
      %v2927 = vadd.f32 %v2855, %v2903
      %v2928 = vadd.f32 %v2856, %v2904
      %v2929 = vadd.f32 %v2857, %v2905
      %v2930 = vadd.f32 %v2858, %v2906
      %v2931 = vadd.f32 %v2859, %v2907
      %v2932 = vadd.f32 %v2860, %v2908
      %v2933 = vadd.f32 %v2861, %v2909
      %v2934 = vadd.f32 %v2862, %v2910
      %v2935 = vadd.f32 %v2863, %v2911
      %v2936 = vadd.f32 %v2864, %v2912
      %v2937 = vadd.f32 %v2865, %v2913
      %v2938 = vadd.f32 %v2866, %v2914
      %v2939 = vadd.f32 %v2867, %v2915
      %v2940 = vadd.f32 %v2868, %v2916
      %v2941 = vadd.f32 %v2869, %v2917
      %v2942 = vadd.f32 %v2870, %v2918
      %v2943 = vmul.f32 %v1611, %v1561
      %v2944 = vmul.f32 %v1612, %v1561
      %v2945 = vmul.f32 %v1613, %v1561
      %v2946 = vmul.f32 %v1614, %v1561
      %v2947 = vmul.f32 %v1615, %v1561
      %v2948 = vmul.f32 %v1616, %v1561
      %v2949 = vmul.f32 %v1617, %v1561
      %v2950 = vmul.f32 %v1618, %v1561
      %v2951 = vmul.f32 %v1619, %v1561
      %v2952 = vmul.f32 %v1620, %v1561
      %v2953 = vmul.f32 %v1621, %v1561
      %v2954 = vmul.f32 %v1622, %v1561
      %v2955 = vmul.f32 %v1623, %v1561
      %v2956 = vmul.f32 %v1624, %v1561
      %v2957 = vmul.f32 %v1625, %v1561
      %v2958 = vmul.f32 %v1626, %v1561
      %v2959 = vmul.f32 %v1627, %v1561
      %v2960 = vmul.f32 %v1628, %v1561
      %v2961 = vmul.f32 %v1629, %v1561
      %v2962 = vmul.f32 %v1630, %v1561
      %v2963 = vmul.f32 %v1631, %v1561
      %v2964 = vmul.f32 %v1632, %v1561
      %v2965 = vmul.f32 %v1633, %v1561
      %v2966 = vmul.f32 %v1634, %v1561
      %v2967 = vadd.f32 %v2919, %v2943
      %v2968 = vadd.f32 %v2920, %v2944
      %v2969 = vadd.f32 %v2921, %v2945
      %v2970 = vadd.f32 %v2922, %v2946
      %v2971 = vadd.f32 %v2923, %v2947
      %v2972 = vadd.f32 %v2924, %v2948
      %v2973 = vadd.f32 %v2925, %v2949
      %v2974 = vadd.f32 %v2926, %v2950
      %v2975 = vadd.f32 %v2927, %v2951
      %v2976 = vadd.f32 %v2928, %v2952
      %v2977 = vadd.f32 %v2929, %v2953
      %v2978 = vadd.f32 %v2930, %v2954
      %v2979 = vadd.f32 %v2931, %v2955
      %v2980 = vadd.f32 %v2932, %v2956
      %v2981 = vadd.f32 %v2933, %v2957
      %v2982 = vadd.f32 %v2934, %v2958
      %v2983 = vadd.f32 %v2935, %v2959
      %v2984 = vadd.f32 %v2936, %v2960
      %v2985 = vadd.f32 %v2937, %v2961
      %v2986 = vadd.f32 %v2938, %v2962
      %v2987 = vadd.f32 %v2939, %v2963
      %v2988 = vadd.f32 %v2940, %v2964
      %v2989 = vadd.f32 %v2941, %v2965
      %v2990 = vadd.f32 %v2942, %v2966
      %v2991 = vmul.f32 %v1686, %v1637
      %v2992 = vmul.f32 %v1687, %v1637
      %v2993 = vmul.f32 %v1688, %v1637
      %v2994 = vmul.f32 %v1689, %v1637
      %v2995 = vmul.f32 %v1690, %v1637
      %v2996 = vmul.f32 %v1691, %v1637
      %v2997 = vmul.f32 %v1692, %v1637
      %v2998 = vmul.f32 %v1693, %v1637
      %v2999 = vmul.f32 %v1694, %v1637
      %v3000 = vmul.f32 %v1695, %v1637
      %v3001 = vmul.f32 %v1696, %v1637
      %v3002 = vmul.f32 %v1697, %v1637
      %v3003 = vmul.f32 %v1698, %v1637
      %v3004 = vmul.f32 %v1699, %v1637
      %v3005 = vmul.f32 %v1700, %v1637
      %v3006 = vmul.f32 %v1701, %v1637
      %v3007 = vmul.f32 %v1702, %v1637
      %v3008 = vmul.f32 %v1703, %v1637
      %v3009 = vmul.f32 %v1704, %v1637
      %v3010 = vmul.f32 %v1705, %v1637
      %v3011 = vmul.f32 %v1706, %v1637
      %v3012 = vmul.f32 %v1707, %v1637
      %v3013 = vmul.f32 %v1708, %v1637
      %v3014 = vmul.f32 %v1709, %v1637
      %v3015 = vadd.f32 %v2967, %v2991
      %v3016 = vadd.f32 %v2968, %v2992
      %v3017 = vadd.f32 %v2969, %v2993
      %v3018 = vadd.f32 %v2970, %v2994
      %v3019 = vadd.f32 %v2971, %v2995
      %v3020 = vadd.f32 %v2972, %v2996
      %v3021 = vadd.f32 %v2973, %v2997
      %v3022 = vadd.f32 %v2974, %v2998
      %v3023 = vadd.f32 %v2975, %v2999
      %v3024 = vadd.f32 %v2976, %v3000
      %v3025 = vadd.f32 %v2977, %v3001
      %v3026 = vadd.f32 %v2978, %v3002
      %v3027 = vadd.f32 %v2979, %v3003
      %v3028 = vadd.f32 %v2980, %v3004
      %v3029 = vadd.f32 %v2981, %v3005
      %v3030 = vadd.f32 %v2982, %v3006
      %v3031 = vadd.f32 %v2983, %v3007
      %v3032 = vadd.f32 %v2984, %v3008
      %v3033 = vadd.f32 %v2985, %v3009
      %v3034 = vadd.f32 %v2986, %v3010
      %v3035 = vadd.f32 %v2987, %v3011
      %v3036 = vadd.f32 %v2988, %v3012
      %v3037 = vadd.f32 %v2989, %v3013
      %v3038 = vadd.f32 %v2990, %v3014
      %v3039 = vmul.f32 %v1761, %v1712
      %v3040 = vmul.f32 %v1762, %v1712
      %v3041 = vmul.f32 %v1763, %v1712
      %v3042 = vmul.f32 %v1764, %v1712
      %v3043 = vmul.f32 %v1765, %v1712
      %v3044 = vmul.f32 %v1766, %v1712
      %v3045 = vmul.f32 %v1767, %v1712
      %v3046 = vmul.f32 %v1768, %v1712
      %v3047 = vmul.f32 %v1769, %v1712
      %v3048 = vmul.f32 %v1770, %v1712
      %v3049 = vmul.f32 %v1771, %v1712
      %v3050 = vmul.f32 %v1772, %v1712
      %v3051 = vmul.f32 %v1773, %v1712
      %v3052 = vmul.f32 %v1774, %v1712
      %v3053 = vmul.f32 %v1775, %v1712
      %v3054 = vmul.f32 %v1776, %v1712
      %v3055 = vmul.f32 %v1777, %v1712
      %v3056 = vmul.f32 %v1778, %v1712
      %v3057 = vmul.f32 %v1779, %v1712
      %v3058 = vmul.f32 %v1780, %v1712
      %v3059 = vmul.f32 %v1781, %v1712
      %v3060 = vmul.f32 %v1782, %v1712
      %v3061 = vmul.f32 %v1783, %v1712
      %v3062 = vmul.f32 %v1784, %v1712
      %v3063 = vadd.f32 %v3015, %v3039
      %v3064 = vadd.f32 %v3016, %v3040
      %v3065 = vadd.f32 %v3017, %v3041
      %v3066 = vadd.f32 %v3018, %v3042
      %v3067 = vadd.f32 %v3019, %v3043
      %v3068 = vadd.f32 %v3020, %v3044
      %v3069 = vadd.f32 %v3021, %v3045
      %v3070 = vadd.f32 %v3022, %v3046
      %v3071 = vadd.f32 %v3023, %v3047
      %v3072 = vadd.f32 %v3024, %v3048
      %v3073 = vadd.f32 %v3025, %v3049
      %v3074 = vadd.f32 %v3026, %v3050
      %v3075 = vadd.f32 %v3027, %v3051
      %v3076 = vadd.f32 %v3028, %v3052
      %v3077 = vadd.f32 %v3029, %v3053
      %v3078 = vadd.f32 %v3030, %v3054
      %v3079 = vadd.f32 %v3031, %v3055
      %v3080 = vadd.f32 %v3032, %v3056
      %v3081 = vadd.f32 %v3033, %v3057
      %v3082 = vadd.f32 %v3034, %v3058
      %v3083 = vadd.f32 %v3035, %v3059
      %v3084 = vadd.f32 %v3036, %v3060
      %v3085 = vadd.f32 %v3037, %v3061
      %v3086 = vadd.f32 %v3038, %v3062
      %v3087 = vmul.f32 %v1836, %v1787
      %v3088 = vmul.f32 %v1837, %v1787
      %v3089 = vmul.f32 %v1838, %v1787
      %v3090 = vmul.f32 %v1839, %v1787
      %v3091 = vmul.f32 %v1840, %v1787
      %v3092 = vmul.f32 %v1841, %v1787
      %v3093 = vmul.f32 %v1842, %v1787
      %v3094 = vmul.f32 %v1843, %v1787
      %v3095 = vmul.f32 %v1844, %v1787
      %v3096 = vmul.f32 %v1845, %v1787
      %v3097 = vmul.f32 %v1846, %v1787
      %v3098 = vmul.f32 %v1847, %v1787
      %v3099 = vmul.f32 %v1848, %v1787
      %v3100 = vmul.f32 %v1849, %v1787
      %v3101 = vmul.f32 %v1850, %v1787
      %v3102 = vmul.f32 %v1851, %v1787
      %v3103 = vmul.f32 %v1852, %v1787
      %v3104 = vmul.f32 %v1853, %v1787
      %v3105 = vmul.f32 %v1854, %v1787
      %v3106 = vmul.f32 %v1855, %v1787
      %v3107 = vmul.f32 %v1856, %v1787
      %v3108 = vmul.f32 %v1857, %v1787
      %v3109 = vmul.f32 %v1858, %v1787
      %v3110 = vmul.f32 %v1859, %v1787
      %v3111 = vadd.f32 %v3063, %v3087
      %v3112 = vadd.f32 %v3064, %v3088
      %v3113 = vadd.f32 %v3065, %v3089
      %v3114 = vadd.f32 %v3066, %v3090
      %v3115 = vadd.f32 %v3067, %v3091
      %v3116 = vadd.f32 %v3068, %v3092
      %v3117 = vadd.f32 %v3069, %v3093
      %v3118 = vadd.f32 %v3070, %v3094
      %v3119 = vadd.f32 %v3071, %v3095
      %v3120 = vadd.f32 %v3072, %v3096
      %v3121 = vadd.f32 %v3073, %v3097
      %v3122 = vadd.f32 %v3074, %v3098
      %v3123 = vadd.f32 %v3075, %v3099
      %v3124 = vadd.f32 %v3076, %v3100
      %v3125 = vadd.f32 %v3077, %v3101
      %v3126 = vadd.f32 %v3078, %v3102
      %v3127 = vadd.f32 %v3079, %v3103
      %v3128 = vadd.f32 %v3080, %v3104
      %v3129 = vadd.f32 %v3081, %v3105
      %v3130 = vadd.f32 %v3082, %v3106
      %v3131 = vadd.f32 %v3083, %v3107
      %v3132 = vadd.f32 %v3084, %v3108
      %v3133 = vadd.f32 %v3085, %v3109
      %v3134 = vadd.f32 %v3086, %v3110
      %v3135 = vld [vmem:[%s1610 + $0x2] sm:$0xff]
      %v3136 = vld [vmem:[%s1610 + $0xa] sm:$0xf]
      %v3137 = vld [vmem:[%s1610 + $0x12] sm:$0xff]
      %v3138 = vld [vmem:[%s1610 + $0x1a] sm:$0xf]
      %v3139 = vld [vmem:[%s1610 + $0x22] sm:$0xff]
      %v3140 = vld [vmem:[%s1610 + $0x2a] sm:$0xf]
      %v3141 = vld [vmem:[%s1610 + $0x32] sm:$0xff]
      %v3142 = vld [vmem:[%s1610 + $0x3a] sm:$0xf]
      %v3143 = vld [vmem:[%s1610 + $0x42] sm:$0xff]
      %v3144 = vld [vmem:[%s1610 + $0x4a] sm:$0xf]
      %v3145 = vld [vmem:[%s1610 + $0x52] sm:$0xff]
      %v3146 = vld [vmem:[%s1610 + $0x5a] sm:$0xf]
      %v3147 = vld [vmem:[%s1610 + $0x62] sm:$0xff]
      %v3148 = vld [vmem:[%s1610 + $0x6a] sm:$0xf]
      %v3149 = vld [vmem:[%s1610 + $0x72] sm:$0xff]
      %v3150 = vld [vmem:[%s1610 + $0x7a] sm:$0xf]
      %v3151 = vld [vmem:[%s1610 + $0x82] sm:$0xff]
      %v3152 = vld [vmem:[%s1610 + $0x8a] sm:$0xf]
      %v3153 = vld [vmem:[%s1610 + $0x92] sm:$0xff]
      %v3154 = vld [vmem:[%s1610 + $0x9a] sm:$0xf]
      %v3155 = vld [vmem:[%s1610 + $0xa2] sm:$0xff]
      %v3156 = vld [vmem:[%s1610 + $0xaa] sm:$0xf]
      %v3157 = vld [vmem:[%s1610 + $0xb2] sm:$0xff]
      %v3158 = vld [vmem:[%s1610 + $0xba] sm:$0xf]
      %v3159 = vmul.f32 %v3135, %v1862
      %v3160 = vmul.f32 %v3136, %v1862
      %v3161 = vmul.f32 %v3137, %v1862
      %v3162 = vmul.f32 %v3138, %v1862
      %v3163 = vmul.f32 %v3139, %v1862
      %v3164 = vmul.f32 %v3140, %v1862
      %v3165 = vmul.f32 %v3141, %v1862
      %v3166 = vmul.f32 %v3142, %v1862
      %v3167 = vmul.f32 %v3143, %v1862
      %v3168 = vmul.f32 %v3144, %v1862
      %v3169 = vmul.f32 %v3145, %v1862
      %v3170 = vmul.f32 %v3146, %v1862
      %v3171 = vmul.f32 %v3147, %v1862
      %v3172 = vmul.f32 %v3148, %v1862
      %v3173 = vmul.f32 %v3149, %v1862
      %v3174 = vmul.f32 %v3150, %v1862
      %v3175 = vmul.f32 %v3151, %v1862
      %v3176 = vmul.f32 %v3152, %v1862
      %v3177 = vmul.f32 %v3153, %v1862
      %v3178 = vmul.f32 %v3154, %v1862
      %v3179 = vmul.f32 %v3155, %v1862
      %v3180 = vmul.f32 %v3156, %v1862
      %v3181 = vmul.f32 %v3157, %v1862
      %v3182 = vmul.f32 %v3158, %v1862
      %v3183 = vadd.f32 %v3111, %v3159
      %v3184 = vadd.f32 %v3112, %v3160
      %v3185 = vadd.f32 %v3113, %v3161
      %v3186 = vadd.f32 %v3114, %v3162
      %v3187 = vadd.f32 %v3115, %v3163
      %v3188 = vadd.f32 %v3116, %v3164
      %v3189 = vadd.f32 %v3117, %v3165
      %v3190 = vadd.f32 %v3118, %v3166
      %v3191 = vadd.f32 %v3119, %v3167
      %v3192 = vadd.f32 %v3120, %v3168
      %v3193 = vadd.f32 %v3121, %v3169
      %v3194 = vadd.f32 %v3122, %v3170
      %v3195 = vadd.f32 %v3123, %v3171
      %v3196 = vadd.f32 %v3124, %v3172
      %v3197 = vadd.f32 %v3125, %v3173
      %v3198 = vadd.f32 %v3126, %v3174
      %v3199 = vadd.f32 %v3127, %v3175
      %v3200 = vadd.f32 %v3128, %v3176
      %v3201 = vadd.f32 %v3129, %v3177
      %v3202 = vadd.f32 %v3130, %v3178
      %v3203 = vadd.f32 %v3131, %v3179
      %v3204 = vadd.f32 %v3132, %v3180
      %v3205 = vadd.f32 %v3133, %v3181
      %v3206 = vadd.f32 %v3134, %v3182
      %v3207 = vmax.f32 %v1887, %v3183
      %v3208 = vmax.f32 %v1888, %v3184
      %v3209 = vmax.f32 %v1889, %v3185
      %v3210 = vmax.f32 %v1890, %v3186
      %v3211 = vmax.f32 %v1891, %v3187
      %v3212 = vmax.f32 %v1892, %v3188
      %v3213 = vmax.f32 %v1893, %v3189
      %v3214 = vmax.f32 %v1894, %v3190
      %v3215 = vmax.f32 %v1895, %v3191
      %v3216 = vmax.f32 %v1896, %v3192
      %v3217 = vmax.f32 %v1897, %v3193
      %v3218 = vmax.f32 %v1898, %v3194
      %v3219 = vmax.f32 %v1899, %v3195
      %v3220 = vmax.f32 %v1900, %v3196
      %v3221 = vmax.f32 %v1901, %v3197
      %v3222 = vmax.f32 %v1902, %v3198
      %v3223 = vmax.f32 %v1903, %v3199
      %v3224 = vmax.f32 %v1904, %v3200
      %v3225 = vmax.f32 %v1905, %v3201
      %v3226 = vmax.f32 %v1906, %v3202
      %v3227 = vmax.f32 %v1907, %v3203
      %v3228 = vmax.f32 %v1908, %v3204
      %v3229 = vmax.f32 %v1909, %v3205
      %v3230 = vmax.f32 %v1910, %v3206
      %v3231 = vmul.f32 %v404, %v77
      %v3232 = vmul.f32 %v405, %v77
      %v3233 = vmul.f32 %v406, %v77
      %v3234 = vmul.f32 %v407, %v77
      %v3235 = vmul.f32 %v408, %v77
      %v3236 = vmul.f32 %v409, %v77
      %v3237 = vmul.f32 %v410, %v77
      %v3238 = vmul.f32 %v411, %v77
      %v3239 = vmul.f32 %v412, %v77
      %v3240 = vmul.f32 %v413, %v77
      %v3241 = vmul.f32 %v414, %v77
      %v3242 = vmul.f32 %v415, %v77
      %v3243 = vmul.f32 %v416, %v77
      %v3244 = vmul.f32 %v417, %v77
      %v3245 = vmul.f32 %v418, %v77
      %v3246 = vmul.f32 %v419, %v77
      %v3247 = vmul.f32 %v420, %v77
      %v3248 = vmul.f32 %v421, %v77
      %v3249 = vmul.f32 %v422, %v77
      %v3250 = vmul.f32 %v423, %v77
      %v3251 = vmul.f32 %v424, %v77
      %v3252 = vmul.f32 %v425, %v77
      %v3253 = vmul.f32 %v426, %v77
      %v3254 = vmul.f32 %v427, %v77
      %v3255 = vmul.f32 %v480, %v129
      %v3256 = vmul.f32 %v481, %v129
      %v3257 = vmul.f32 %v482, %v129
      %v3258 = vmul.f32 %v483, %v129
      %v3259 = vmul.f32 %v484, %v129
      %v3260 = vmul.f32 %v485, %v129
      %v3261 = vmul.f32 %v486, %v129
      %v3262 = vmul.f32 %v487, %v129
      %v3263 = vmul.f32 %v488, %v129
      %v3264 = vmul.f32 %v489, %v129
      %v3265 = vmul.f32 %v490, %v129
      %v3266 = vmul.f32 %v491, %v129
      %v3267 = vmul.f32 %v492, %v129
      %v3268 = vmul.f32 %v493, %v129
      %v3269 = vmul.f32 %v494, %v129
      %v3270 = vmul.f32 %v495, %v129
      %v3271 = vmul.f32 %v496, %v129
      %v3272 = vmul.f32 %v497, %v129
      %v3273 = vmul.f32 %v498, %v129
      %v3274 = vmul.f32 %v499, %v129
      %v3275 = vmul.f32 %v500, %v129
      %v3276 = vmul.f32 %v501, %v129
      %v3277 = vmul.f32 %v502, %v129
      %v3278 = vmul.f32 %v503, %v129
      %v3279 = vadd.f32 %v3231, %v3255
      %v3280 = vadd.f32 %v3232, %v3256
      %v3281 = vadd.f32 %v3233, %v3257
      %v3282 = vadd.f32 %v3234, %v3258
      %v3283 = vadd.f32 %v3235, %v3259
      %v3284 = vadd.f32 %v3236, %v3260
      %v3285 = vadd.f32 %v3237, %v3261
      %v3286 = vadd.f32 %v3238, %v3262
      %v3287 = vadd.f32 %v3239, %v3263
      %v3288 = vadd.f32 %v3240, %v3264
      %v3289 = vadd.f32 %v3241, %v3265
      %v3290 = vadd.f32 %v3242, %v3266
      %v3291 = vadd.f32 %v3243, %v3267
      %v3292 = vadd.f32 %v3244, %v3268
      %v3293 = vadd.f32 %v3245, %v3269
      %v3294 = vadd.f32 %v3246, %v3270
      %v3295 = vadd.f32 %v3247, %v3271
      %v3296 = vadd.f32 %v3248, %v3272
      %v3297 = vadd.f32 %v3249, %v3273
      %v3298 = vadd.f32 %v3250, %v3274
      %v3299 = vadd.f32 %v3251, %v3275
      %v3300 = vadd.f32 %v3252, %v3276
      %v3301 = vadd.f32 %v3253, %v3277
      %v3302 = vadd.f32 %v3254, %v3278
      %v3303 = vmul.f32 %v555, %v204
      %v3304 = vmul.f32 %v556, %v204
      %v3305 = vmul.f32 %v557, %v204
      %v3306 = vmul.f32 %v558, %v204
      %v3307 = vmul.f32 %v559, %v204
      %v3308 = vmul.f32 %v560, %v204
      %v3309 = vmul.f32 %v561, %v204
      %v3310 = vmul.f32 %v562, %v204
      %v3311 = vmul.f32 %v563, %v204
      %v3312 = vmul.f32 %v564, %v204
      %v3313 = vmul.f32 %v565, %v204
      %v3314 = vmul.f32 %v566, %v204
      %v3315 = vmul.f32 %v567, %v204
      %v3316 = vmul.f32 %v568, %v204
      %v3317 = vmul.f32 %v569, %v204
      %v3318 = vmul.f32 %v570, %v204
      %v3319 = vmul.f32 %v571, %v204
      %v3320 = vmul.f32 %v572, %v204
      %v3321 = vmul.f32 %v573, %v204
      %v3322 = vmul.f32 %v574, %v204
      %v3323 = vmul.f32 %v575, %v204
      %v3324 = vmul.f32 %v576, %v204
      %v3325 = vmul.f32 %v577, %v204
      %v3326 = vmul.f32 %v578, %v204
      %v3327 = vadd.f32 %v3279, %v3303
      %v3328 = vadd.f32 %v3280, %v3304
      %v3329 = vadd.f32 %v3281, %v3305
      %v3330 = vadd.f32 %v3282, %v3306
      %v3331 = vadd.f32 %v3283, %v3307
      %v3332 = vadd.f32 %v3284, %v3308
      %v3333 = vadd.f32 %v3285, %v3309
      %v3334 = vadd.f32 %v3286, %v3310
      %v3335 = vadd.f32 %v3287, %v3311
      %v3336 = vadd.f32 %v3288, %v3312
      %v3337 = vadd.f32 %v3289, %v3313
      %v3338 = vadd.f32 %v3290, %v3314
      %v3339 = vadd.f32 %v3291, %v3315
      %v3340 = vadd.f32 %v3292, %v3316
      %v3341 = vadd.f32 %v3293, %v3317
      %v3342 = vadd.f32 %v3294, %v3318
      %v3343 = vadd.f32 %v3295, %v3319
      %v3344 = vadd.f32 %v3296, %v3320
      %v3345 = vadd.f32 %v3297, %v3321
      %v3346 = vadd.f32 %v3298, %v3322
      %v3347 = vadd.f32 %v3299, %v3323
      %v3348 = vadd.f32 %v3300, %v3324
      %v3349 = vadd.f32 %v3301, %v3325
      %v3350 = vadd.f32 %v3302, %v3326
      %v3351 = vmul.f32 %v630, %v279
      %v3352 = vmul.f32 %v631, %v279
      %v3353 = vmul.f32 %v632, %v279
      %v3354 = vmul.f32 %v633, %v279
      %v3355 = vmul.f32 %v634, %v279
      %v3356 = vmul.f32 %v635, %v279
      %v3357 = vmul.f32 %v636, %v279
      %v3358 = vmul.f32 %v637, %v279
      %v3359 = vmul.f32 %v638, %v279
      %v3360 = vmul.f32 %v639, %v279
      %v3361 = vmul.f32 %v640, %v279
      %v3362 = vmul.f32 %v641, %v279
      %v3363 = vmul.f32 %v642, %v279
      %v3364 = vmul.f32 %v643, %v279
      %v3365 = vmul.f32 %v644, %v279
      %v3366 = vmul.f32 %v645, %v279
      %v3367 = vmul.f32 %v646, %v279
      %v3368 = vmul.f32 %v647, %v279
      %v3369 = vmul.f32 %v648, %v279
      %v3370 = vmul.f32 %v649, %v279
      %v3371 = vmul.f32 %v650, %v279
      %v3372 = vmul.f32 %v651, %v279
      %v3373 = vmul.f32 %v652, %v279
      %v3374 = vmul.f32 %v653, %v279
      %v3375 = vadd.f32 %v3327, %v3351
      %v3376 = vadd.f32 %v3328, %v3352
      %v3377 = vadd.f32 %v3329, %v3353
      %v3378 = vadd.f32 %v3330, %v3354
      %v3379 = vadd.f32 %v3331, %v3355
      %v3380 = vadd.f32 %v3332, %v3356
      %v3381 = vadd.f32 %v3333, %v3357
      %v3382 = vadd.f32 %v3334, %v3358
      %v3383 = vadd.f32 %v3335, %v3359
      %v3384 = vadd.f32 %v3336, %v3360
      %v3385 = vadd.f32 %v3337, %v3361
      %v3386 = vadd.f32 %v3338, %v3362
      %v3387 = vadd.f32 %v3339, %v3363
      %v3388 = vadd.f32 %v3340, %v3364
      %v3389 = vadd.f32 %v3341, %v3365
      %v3390 = vadd.f32 %v3342, %v3366
      %v3391 = vadd.f32 %v3343, %v3367
      %v3392 = vadd.f32 %v3344, %v3368
      %v3393 = vadd.f32 %v3345, %v3369
      %v3394 = vadd.f32 %v3346, %v3370
      %v3395 = vadd.f32 %v3347, %v3371
      %v3396 = vadd.f32 %v3348, %v3372
      %v3397 = vadd.f32 %v3349, %v3373
      %v3398 = vadd.f32 %v3350, %v3374
      %v3399 = vmul.f32 %v705, %v354
      %v3400 = vmul.f32 %v706, %v354
      %v3401 = vmul.f32 %v707, %v354
      %v3402 = vmul.f32 %v708, %v354
      %v3403 = vmul.f32 %v709, %v354
      %v3404 = vmul.f32 %v710, %v354
      %v3405 = vmul.f32 %v711, %v354
      %v3406 = vmul.f32 %v712, %v354
      %v3407 = vmul.f32 %v713, %v354
      %v3408 = vmul.f32 %v714, %v354
      %v3409 = vmul.f32 %v715, %v354
      %v3410 = vmul.f32 %v716, %v354
      %v3411 = vmul.f32 %v717, %v354
      %v3412 = vmul.f32 %v718, %v354
      %v3413 = vmul.f32 %v719, %v354
      %v3414 = vmul.f32 %v720, %v354
      %v3415 = vmul.f32 %v721, %v354
      %v3416 = vmul.f32 %v722, %v354
      %v3417 = vmul.f32 %v723, %v354
      %v3418 = vmul.f32 %v724, %v354
      %v3419 = vmul.f32 %v725, %v354
      %v3420 = vmul.f32 %v726, %v354
      %v3421 = vmul.f32 %v727, %v354
      %v3422 = vmul.f32 %v728, %v354
      %v3423 = vadd.f32 %v3375, %v3399
      %v3424 = vadd.f32 %v3376, %v3400
      %v3425 = vadd.f32 %v3377, %v3401
      %v3426 = vadd.f32 %v3378, %v3402
      %v3427 = vadd.f32 %v3379, %v3403
      %v3428 = vadd.f32 %v3380, %v3404
      %v3429 = vadd.f32 %v3381, %v3405
      %v3430 = vadd.f32 %v3382, %v3406
      %v3431 = vadd.f32 %v3383, %v3407
      %v3432 = vadd.f32 %v3384, %v3408
      %v3433 = vadd.f32 %v3385, %v3409
      %v3434 = vadd.f32 %v3386, %v3410
      %v3435 = vadd.f32 %v3387, %v3411
      %v3436 = vadd.f32 %v3388, %v3412
      %v3437 = vadd.f32 %v3389, %v3413
      %v3438 = vadd.f32 %v3390, %v3414
      %v3439 = vadd.f32 %v3391, %v3415
      %v3440 = vadd.f32 %v3392, %v3416
      %v3441 = vadd.f32 %v3393, %v3417
      %v3442 = vadd.f32 %v3394, %v3418
      %v3443 = vadd.f32 %v3395, %v3419
      %v3444 = vadd.f32 %v3396, %v3420
      %v3445 = vadd.f32 %v3397, %v3421
      %v3446 = vadd.f32 %v3398, %v3422
      %v3447 = vmul.f32 %v781, %v430
      %v3448 = vmul.f32 %v782, %v430
      %v3449 = vmul.f32 %v783, %v430
      %v3450 = vmul.f32 %v784, %v430
      %v3451 = vmul.f32 %v785, %v430
      %v3452 = vmul.f32 %v786, %v430
      %v3453 = vmul.f32 %v787, %v430
      %v3454 = vmul.f32 %v788, %v430
      %v3455 = vmul.f32 %v789, %v430
      %v3456 = vmul.f32 %v790, %v430
      %v3457 = vmul.f32 %v791, %v430
      %v3458 = vmul.f32 %v792, %v430
      %v3459 = vmul.f32 %v793, %v430
      %v3460 = vmul.f32 %v794, %v430
      %v3461 = vmul.f32 %v795, %v430
      %v3462 = vmul.f32 %v796, %v430
      %v3463 = vmul.f32 %v797, %v430
      %v3464 = vmul.f32 %v798, %v430
      %v3465 = vmul.f32 %v799, %v430
      %v3466 = vmul.f32 %v800, %v430
      %v3467 = vmul.f32 %v801, %v430
      %v3468 = vmul.f32 %v802, %v430
      %v3469 = vmul.f32 %v803, %v430
      %v3470 = vmul.f32 %v804, %v430
      %v3471 = vadd.f32 %v3423, %v3447
      %v3472 = vadd.f32 %v3424, %v3448
      %v3473 = vadd.f32 %v3425, %v3449
      %v3474 = vadd.f32 %v3426, %v3450
      %v3475 = vadd.f32 %v3427, %v3451
      %v3476 = vadd.f32 %v3428, %v3452
      %v3477 = vadd.f32 %v3429, %v3453
      %v3478 = vadd.f32 %v3430, %v3454
      %v3479 = vadd.f32 %v3431, %v3455
      %v3480 = vadd.f32 %v3432, %v3456
      %v3481 = vadd.f32 %v3433, %v3457
      %v3482 = vadd.f32 %v3434, %v3458
      %v3483 = vadd.f32 %v3435, %v3459
      %v3484 = vadd.f32 %v3436, %v3460
      %v3485 = vadd.f32 %v3437, %v3461
      %v3486 = vadd.f32 %v3438, %v3462
      %v3487 = vadd.f32 %v3439, %v3463
      %v3488 = vadd.f32 %v3440, %v3464
      %v3489 = vadd.f32 %v3441, %v3465
      %v3490 = vadd.f32 %v3442, %v3466
      %v3491 = vadd.f32 %v3443, %v3467
      %v3492 = vadd.f32 %v3444, %v3468
      %v3493 = vadd.f32 %v3445, %v3469
      %v3494 = vadd.f32 %v3446, %v3470
      %v3495 = vmul.f32 %v857, %v506
      %v3496 = vmul.f32 %v858, %v506
      %v3497 = vmul.f32 %v859, %v506
      %v3498 = vmul.f32 %v860, %v506
      %v3499 = vmul.f32 %v861, %v506
      %v3500 = vmul.f32 %v862, %v506
      %v3501 = vmul.f32 %v863, %v506
      %v3502 = vmul.f32 %v864, %v506
      %v3503 = vmul.f32 %v865, %v506
      %v3504 = vmul.f32 %v866, %v506
      %v3505 = vmul.f32 %v867, %v506
      %v3506 = vmul.f32 %v868, %v506
      %v3507 = vmul.f32 %v869, %v506
      %v3508 = vmul.f32 %v870, %v506
      %v3509 = vmul.f32 %v871, %v506
      %v3510 = vmul.f32 %v872, %v506
      %v3511 = vmul.f32 %v873, %v506
      %v3512 = vmul.f32 %v874, %v506
      %v3513 = vmul.f32 %v875, %v506
      %v3514 = vmul.f32 %v876, %v506
      %v3515 = vmul.f32 %v877, %v506
      %v3516 = vmul.f32 %v878, %v506
      %v3517 = vmul.f32 %v879, %v506
      %v3518 = vmul.f32 %v880, %v506
      %v3519 = vadd.f32 %v3471, %v3495
      %v3520 = vadd.f32 %v3472, %v3496
      %v3521 = vadd.f32 %v3473, %v3497
      %v3522 = vadd.f32 %v3474, %v3498
      %v3523 = vadd.f32 %v3475, %v3499
      %v3524 = vadd.f32 %v3476, %v3500
      %v3525 = vadd.f32 %v3477, %v3501
      %v3526 = vadd.f32 %v3478, %v3502
      %v3527 = vadd.f32 %v3479, %v3503
      %v3528 = vadd.f32 %v3480, %v3504
      %v3529 = vadd.f32 %v3481, %v3505
      %v3530 = vadd.f32 %v3482, %v3506
      %v3531 = vadd.f32 %v3483, %v3507
      %v3532 = vadd.f32 %v3484, %v3508
      %v3533 = vadd.f32 %v3485, %v3509
      %v3534 = vadd.f32 %v3486, %v3510
      %v3535 = vadd.f32 %v3487, %v3511
      %v3536 = vadd.f32 %v3488, %v3512
      %v3537 = vadd.f32 %v3489, %v3513
      %v3538 = vadd.f32 %v3490, %v3514
      %v3539 = vadd.f32 %v3491, %v3515
      %v3540 = vadd.f32 %v3492, %v3516
      %v3541 = vadd.f32 %v3493, %v3517
      %v3542 = vadd.f32 %v3494, %v3518
      %v3543 = vmul.f32 %v932, %v581
      %v3544 = vmul.f32 %v933, %v581
      %v3545 = vmul.f32 %v934, %v581
      %v3546 = vmul.f32 %v935, %v581
      %v3547 = vmul.f32 %v936, %v581
      %v3548 = vmul.f32 %v937, %v581
      %v3549 = vmul.f32 %v938, %v581
      %v3550 = vmul.f32 %v939, %v581
      %v3551 = vmul.f32 %v940, %v581
      %v3552 = vmul.f32 %v941, %v581
      %v3553 = vmul.f32 %v942, %v581
      %v3554 = vmul.f32 %v943, %v581
      %v3555 = vmul.f32 %v944, %v581
      %v3556 = vmul.f32 %v945, %v581
      %v3557 = vmul.f32 %v946, %v581
      %v3558 = vmul.f32 %v947, %v581
      %v3559 = vmul.f32 %v948, %v581
      %v3560 = vmul.f32 %v949, %v581
      %v3561 = vmul.f32 %v950, %v581
      %v3562 = vmul.f32 %v951, %v581
      %v3563 = vmul.f32 %v952, %v581
      %v3564 = vmul.f32 %v953, %v581
      %v3565 = vmul.f32 %v954, %v581
      %v3566 = vmul.f32 %v955, %v581
      %v3567 = vadd.f32 %v3519, %v3543
      %v3568 = vadd.f32 %v3520, %v3544
      %v3569 = vadd.f32 %v3521, %v3545
      %v3570 = vadd.f32 %v3522, %v3546
      %v3571 = vadd.f32 %v3523, %v3547
      %v3572 = vadd.f32 %v3524, %v3548
      %v3573 = vadd.f32 %v3525, %v3549
      %v3574 = vadd.f32 %v3526, %v3550
      %v3575 = vadd.f32 %v3527, %v3551
      %v3576 = vadd.f32 %v3528, %v3552
      %v3577 = vadd.f32 %v3529, %v3553
      %v3578 = vadd.f32 %v3530, %v3554
      %v3579 = vadd.f32 %v3531, %v3555
      %v3580 = vadd.f32 %v3532, %v3556
      %v3581 = vadd.f32 %v3533, %v3557
      %v3582 = vadd.f32 %v3534, %v3558
      %v3583 = vadd.f32 %v3535, %v3559
      %v3584 = vadd.f32 %v3536, %v3560
      %v3585 = vadd.f32 %v3537, %v3561
      %v3586 = vadd.f32 %v3538, %v3562
      %v3587 = vadd.f32 %v3539, %v3563
      %v3588 = vadd.f32 %v3540, %v3564
      %v3589 = vadd.f32 %v3541, %v3565
      %v3590 = vadd.f32 %v3542, %v3566
      %v3591 = vmul.f32 %v1007, %v656
      %v3592 = vmul.f32 %v1008, %v656
      %v3593 = vmul.f32 %v1009, %v656
      %v3594 = vmul.f32 %v1010, %v656
      %v3595 = vmul.f32 %v1011, %v656
      %v3596 = vmul.f32 %v1012, %v656
      %v3597 = vmul.f32 %v1013, %v656
      %v3598 = vmul.f32 %v1014, %v656
      %v3599 = vmul.f32 %v1015, %v656
      %v3600 = vmul.f32 %v1016, %v656
      %v3601 = vmul.f32 %v1017, %v656
      %v3602 = vmul.f32 %v1018, %v656
      %v3603 = vmul.f32 %v1019, %v656
      %v3604 = vmul.f32 %v1020, %v656
      %v3605 = vmul.f32 %v1021, %v656
      %v3606 = vmul.f32 %v1022, %v656
      %v3607 = vmul.f32 %v1023, %v656
      %v3608 = vmul.f32 %v1024, %v656
      %v3609 = vmul.f32 %v1025, %v656
      %v3610 = vmul.f32 %v1026, %v656
      %v3611 = vmul.f32 %v1027, %v656
      %v3612 = vmul.f32 %v1028, %v656
      %v3613 = vmul.f32 %v1029, %v656
      %v3614 = vmul.f32 %v1030, %v656
      %v3615 = vadd.f32 %v3567, %v3591
      %v3616 = vadd.f32 %v3568, %v3592
      %v3617 = vadd.f32 %v3569, %v3593
      %v3618 = vadd.f32 %v3570, %v3594
      %v3619 = vadd.f32 %v3571, %v3595
      %v3620 = vadd.f32 %v3572, %v3596
      %v3621 = vadd.f32 %v3573, %v3597
      %v3622 = vadd.f32 %v3574, %v3598
      %v3623 = vadd.f32 %v3575, %v3599
      %v3624 = vadd.f32 %v3576, %v3600
      %v3625 = vadd.f32 %v3577, %v3601
      %v3626 = vadd.f32 %v3578, %v3602
      %v3627 = vadd.f32 %v3579, %v3603
      %v3628 = vadd.f32 %v3580, %v3604
      %v3629 = vadd.f32 %v3581, %v3605
      %v3630 = vadd.f32 %v3582, %v3606
      %v3631 = vadd.f32 %v3583, %v3607
      %v3632 = vadd.f32 %v3584, %v3608
      %v3633 = vadd.f32 %v3585, %v3609
      %v3634 = vadd.f32 %v3586, %v3610
      %v3635 = vadd.f32 %v3587, %v3611
      %v3636 = vadd.f32 %v3588, %v3612
      %v3637 = vadd.f32 %v3589, %v3613
      %v3638 = vadd.f32 %v3590, %v3614
      %v3639 = vmul.f32 %v1082, %v731
      %v3640 = vmul.f32 %v1083, %v731
      %v3641 = vmul.f32 %v1084, %v731
      %v3642 = vmul.f32 %v1085, %v731
      %v3643 = vmul.f32 %v1086, %v731
      %v3644 = vmul.f32 %v1087, %v731
      %v3645 = vmul.f32 %v1088, %v731
      %v3646 = vmul.f32 %v1089, %v731
      %v3647 = vmul.f32 %v1090, %v731
      %v3648 = vmul.f32 %v1091, %v731
      %v3649 = vmul.f32 %v1092, %v731
      %v3650 = vmul.f32 %v1093, %v731
      %v3651 = vmul.f32 %v1094, %v731
      %v3652 = vmul.f32 %v1095, %v731
      %v3653 = vmul.f32 %v1096, %v731
      %v3654 = vmul.f32 %v1097, %v731
      %v3655 = vmul.f32 %v1098, %v731
      %v3656 = vmul.f32 %v1099, %v731
      %v3657 = vmul.f32 %v1100, %v731
      %v3658 = vmul.f32 %v1101, %v731
      %v3659 = vmul.f32 %v1102, %v731
      %v3660 = vmul.f32 %v1103, %v731
      %v3661 = vmul.f32 %v1104, %v731
      %v3662 = vmul.f32 %v1105, %v731
      %v3663 = vadd.f32 %v3615, %v3639
      %v3664 = vadd.f32 %v3616, %v3640
      %v3665 = vadd.f32 %v3617, %v3641
      %v3666 = vadd.f32 %v3618, %v3642
      %v3667 = vadd.f32 %v3619, %v3643
      %v3668 = vadd.f32 %v3620, %v3644
      %v3669 = vadd.f32 %v3621, %v3645
      %v3670 = vadd.f32 %v3622, %v3646
      %v3671 = vadd.f32 %v3623, %v3647
      %v3672 = vadd.f32 %v3624, %v3648
      %v3673 = vadd.f32 %v3625, %v3649
      %v3674 = vadd.f32 %v3626, %v3650
      %v3675 = vadd.f32 %v3627, %v3651
      %v3676 = vadd.f32 %v3628, %v3652
      %v3677 = vadd.f32 %v3629, %v3653
      %v3678 = vadd.f32 %v3630, %v3654
      %v3679 = vadd.f32 %v3631, %v3655
      %v3680 = vadd.f32 %v3632, %v3656
      %v3681 = vadd.f32 %v3633, %v3657
      %v3682 = vadd.f32 %v3634, %v3658
      %v3683 = vadd.f32 %v3635, %v3659
      %v3684 = vadd.f32 %v3636, %v3660
      %v3685 = vadd.f32 %v3637, %v3661
      %v3686 = vadd.f32 %v3638, %v3662
      %v3687 = vmul.f32 %v1158, %v807
      %v3688 = vmul.f32 %v1159, %v807
      %v3689 = vmul.f32 %v1160, %v807
      %v3690 = vmul.f32 %v1161, %v807
      %v3691 = vmul.f32 %v1162, %v807
      %v3692 = vmul.f32 %v1163, %v807
      %v3693 = vmul.f32 %v1164, %v807
      %v3694 = vmul.f32 %v1165, %v807
      %v3695 = vmul.f32 %v1166, %v807
      %v3696 = vmul.f32 %v1167, %v807
      %v3697 = vmul.f32 %v1168, %v807
      %v3698 = vmul.f32 %v1169, %v807
      %v3699 = vmul.f32 %v1170, %v807
      %v3700 = vmul.f32 %v1171, %v807
      %v3701 = vmul.f32 %v1172, %v807
      %v3702 = vmul.f32 %v1173, %v807
      %v3703 = vmul.f32 %v1174, %v807
      %v3704 = vmul.f32 %v1175, %v807
      %v3705 = vmul.f32 %v1176, %v807
      %v3706 = vmul.f32 %v1177, %v807
      %v3707 = vmul.f32 %v1178, %v807
      %v3708 = vmul.f32 %v1179, %v807
      %v3709 = vmul.f32 %v1180, %v807
      %v3710 = vmul.f32 %v1181, %v807
      %v3711 = vadd.f32 %v3663, %v3687
      %v3712 = vadd.f32 %v3664, %v3688
      %v3713 = vadd.f32 %v3665, %v3689
      %v3714 = vadd.f32 %v3666, %v3690
      %v3715 = vadd.f32 %v3667, %v3691
      %v3716 = vadd.f32 %v3668, %v3692
      %v3717 = vadd.f32 %v3669, %v3693
      %v3718 = vadd.f32 %v3670, %v3694
      %v3719 = vadd.f32 %v3671, %v3695
      %v3720 = vadd.f32 %v3672, %v3696
      %v3721 = vadd.f32 %v3673, %v3697
      %v3722 = vadd.f32 %v3674, %v3698
      %v3723 = vadd.f32 %v3675, %v3699
      %v3724 = vadd.f32 %v3676, %v3700
      %v3725 = vadd.f32 %v3677, %v3701
      %v3726 = vadd.f32 %v3678, %v3702
      %v3727 = vadd.f32 %v3679, %v3703
      %v3728 = vadd.f32 %v3680, %v3704
      %v3729 = vadd.f32 %v3681, %v3705
      %v3730 = vadd.f32 %v3682, %v3706
      %v3731 = vadd.f32 %v3683, %v3707
      %v3732 = vadd.f32 %v3684, %v3708
      %v3733 = vadd.f32 %v3685, %v3709
      %v3734 = vadd.f32 %v3686, %v3710
      %v3735 = vmul.f32 %v1234, %v883
      %v3736 = vmul.f32 %v1235, %v883
      %v3737 = vmul.f32 %v1236, %v883
      %v3738 = vmul.f32 %v1237, %v883
      %v3739 = vmul.f32 %v1238, %v883
      %v3740 = vmul.f32 %v1239, %v883
      %v3741 = vmul.f32 %v1240, %v883
      %v3742 = vmul.f32 %v1241, %v883
      %v3743 = vmul.f32 %v1242, %v883
      %v3744 = vmul.f32 %v1243, %v883
      %v3745 = vmul.f32 %v1244, %v883
      %v3746 = vmul.f32 %v1245, %v883
      %v3747 = vmul.f32 %v1246, %v883
      %v3748 = vmul.f32 %v1247, %v883
      %v3749 = vmul.f32 %v1248, %v883
      %v3750 = vmul.f32 %v1249, %v883
      %v3751 = vmul.f32 %v1250, %v883
      %v3752 = vmul.f32 %v1251, %v883
      %v3753 = vmul.f32 %v1252, %v883
      %v3754 = vmul.f32 %v1253, %v883
      %v3755 = vmul.f32 %v1254, %v883
      %v3756 = vmul.f32 %v1255, %v883
      %v3757 = vmul.f32 %v1256, %v883
      %v3758 = vmul.f32 %v1257, %v883
      %v3759 = vadd.f32 %v3711, %v3735
      %v3760 = vadd.f32 %v3712, %v3736
      %v3761 = vadd.f32 %v3713, %v3737
      %v3762 = vadd.f32 %v3714, %v3738
      %v3763 = vadd.f32 %v3715, %v3739
      %v3764 = vadd.f32 %v3716, %v3740
      %v3765 = vadd.f32 %v3717, %v3741
      %v3766 = vadd.f32 %v3718, %v3742
      %v3767 = vadd.f32 %v3719, %v3743
      %v3768 = vadd.f32 %v3720, %v3744
      %v3769 = vadd.f32 %v3721, %v3745
      %v3770 = vadd.f32 %v3722, %v3746
      %v3771 = vadd.f32 %v3723, %v3747
      %v3772 = vadd.f32 %v3724, %v3748
      %v3773 = vadd.f32 %v3725, %v3749
      %v3774 = vadd.f32 %v3726, %v3750
      %v3775 = vadd.f32 %v3727, %v3751
      %v3776 = vadd.f32 %v3728, %v3752
      %v3777 = vadd.f32 %v3729, %v3753
      %v3778 = vadd.f32 %v3730, %v3754
      %v3779 = vadd.f32 %v3731, %v3755
      %v3780 = vadd.f32 %v3732, %v3756
      %v3781 = vadd.f32 %v3733, %v3757
      %v3782 = vadd.f32 %v3734, %v3758
      %v3783 = vmul.f32 %v1309, %v958
      %v3784 = vmul.f32 %v1310, %v958
      %v3785 = vmul.f32 %v1311, %v958
      %v3786 = vmul.f32 %v1312, %v958
      %v3787 = vmul.f32 %v1313, %v958
      %v3788 = vmul.f32 %v1314, %v958
      %v3789 = vmul.f32 %v1315, %v958
      %v3790 = vmul.f32 %v1316, %v958
      %v3791 = vmul.f32 %v1317, %v958
      %v3792 = vmul.f32 %v1318, %v958
      %v3793 = vmul.f32 %v1319, %v958
      %v3794 = vmul.f32 %v1320, %v958
      %v3795 = vmul.f32 %v1321, %v958
      %v3796 = vmul.f32 %v1322, %v958
      %v3797 = vmul.f32 %v1323, %v958
      %v3798 = vmul.f32 %v1324, %v958
      %v3799 = vmul.f32 %v1325, %v958
      %v3800 = vmul.f32 %v1326, %v958
      %v3801 = vmul.f32 %v1327, %v958
      %v3802 = vmul.f32 %v1328, %v958
      %v3803 = vmul.f32 %v1329, %v958
      %v3804 = vmul.f32 %v1330, %v958
      %v3805 = vmul.f32 %v1331, %v958
      %v3806 = vmul.f32 %v1332, %v958
      %v3807 = vadd.f32 %v3759, %v3783
      %v3808 = vadd.f32 %v3760, %v3784
      %v3809 = vadd.f32 %v3761, %v3785
      %v3810 = vadd.f32 %v3762, %v3786
      %v3811 = vadd.f32 %v3763, %v3787
      %v3812 = vadd.f32 %v3764, %v3788
      %v3813 = vadd.f32 %v3765, %v3789
      %v3814 = vadd.f32 %v3766, %v3790
      %v3815 = vadd.f32 %v3767, %v3791
      %v3816 = vadd.f32 %v3768, %v3792
      %v3817 = vadd.f32 %v3769, %v3793
      %v3818 = vadd.f32 %v3770, %v3794
      %v3819 = vadd.f32 %v3771, %v3795
      %v3820 = vadd.f32 %v3772, %v3796
      %v3821 = vadd.f32 %v3773, %v3797
      %v3822 = vadd.f32 %v3774, %v3798
      %v3823 = vadd.f32 %v3775, %v3799
      %v3824 = vadd.f32 %v3776, %v3800
      %v3825 = vadd.f32 %v3777, %v3801
      %v3826 = vadd.f32 %v3778, %v3802
      %v3827 = vadd.f32 %v3779, %v3803
      %v3828 = vadd.f32 %v3780, %v3804
      %v3829 = vadd.f32 %v3781, %v3805
      %v3830 = vadd.f32 %v3782, %v3806
      %v3831 = vmul.f32 %v1384, %v1033
      %v3832 = vmul.f32 %v1385, %v1033
      %v3833 = vmul.f32 %v1386, %v1033
      %v3834 = vmul.f32 %v1387, %v1033
      %v3835 = vmul.f32 %v1388, %v1033
      %v3836 = vmul.f32 %v1389, %v1033
      %v3837 = vmul.f32 %v1390, %v1033
      %v3838 = vmul.f32 %v1391, %v1033
      %v3839 = vmul.f32 %v1392, %v1033
      %v3840 = vmul.f32 %v1393, %v1033
      %v3841 = vmul.f32 %v1394, %v1033
      %v3842 = vmul.f32 %v1395, %v1033
      %v3843 = vmul.f32 %v1396, %v1033
      %v3844 = vmul.f32 %v1397, %v1033
      %v3845 = vmul.f32 %v1398, %v1033
      %v3846 = vmul.f32 %v1399, %v1033
      %v3847 = vmul.f32 %v1400, %v1033
      %v3848 = vmul.f32 %v1401, %v1033
      %v3849 = vmul.f32 %v1402, %v1033
      %v3850 = vmul.f32 %v1403, %v1033
      %v3851 = vmul.f32 %v1404, %v1033
      %v3852 = vmul.f32 %v1405, %v1033
      %v3853 = vmul.f32 %v1406, %v1033
      %v3854 = vmul.f32 %v1407, %v1033
      %v3855 = vadd.f32 %v3807, %v3831
      %v3856 = vadd.f32 %v3808, %v3832
      %v3857 = vadd.f32 %v3809, %v3833
      %v3858 = vadd.f32 %v3810, %v3834
      %v3859 = vadd.f32 %v3811, %v3835
      %v3860 = vadd.f32 %v3812, %v3836
      %v3861 = vadd.f32 %v3813, %v3837
      %v3862 = vadd.f32 %v3814, %v3838
      %v3863 = vadd.f32 %v3815, %v3839
      %v3864 = vadd.f32 %v3816, %v3840
      %v3865 = vadd.f32 %v3817, %v3841
      %v3866 = vadd.f32 %v3818, %v3842
      %v3867 = vadd.f32 %v3819, %v3843
      %v3868 = vadd.f32 %v3820, %v3844
      %v3869 = vadd.f32 %v3821, %v3845
      %v3870 = vadd.f32 %v3822, %v3846
      %v3871 = vadd.f32 %v3823, %v3847
      %v3872 = vadd.f32 %v3824, %v3848
      %v3873 = vadd.f32 %v3825, %v3849
      %v3874 = vadd.f32 %v3826, %v3850
      %v3875 = vadd.f32 %v3827, %v3851
      %v3876 = vadd.f32 %v3828, %v3852
      %v3877 = vadd.f32 %v3829, %v3853
      %v3878 = vadd.f32 %v3830, %v3854
      %v3879 = vmul.f32 %v1459, %v1108
      %v3880 = vmul.f32 %v1460, %v1108
      %v3881 = vmul.f32 %v1461, %v1108
      %v3882 = vmul.f32 %v1462, %v1108
      %v3883 = vmul.f32 %v1463, %v1108
      %v3884 = vmul.f32 %v1464, %v1108
      %v3885 = vmul.f32 %v1465, %v1108
      %v3886 = vmul.f32 %v1466, %v1108
      %v3887 = vmul.f32 %v1467, %v1108
      %v3888 = vmul.f32 %v1468, %v1108
      %v3889 = vmul.f32 %v1469, %v1108
      %v3890 = vmul.f32 %v1470, %v1108
      %v3891 = vmul.f32 %v1471, %v1108
      %v3892 = vmul.f32 %v1472, %v1108
      %v3893 = vmul.f32 %v1473, %v1108
      %v3894 = vmul.f32 %v1474, %v1108
      %v3895 = vmul.f32 %v1475, %v1108
      %v3896 = vmul.f32 %v1476, %v1108
      %v3897 = vmul.f32 %v1477, %v1108
      %v3898 = vmul.f32 %v1478, %v1108
      %v3899 = vmul.f32 %v1479, %v1108
      %v3900 = vmul.f32 %v1480, %v1108
      %v3901 = vmul.f32 %v1481, %v1108
      %v3902 = vmul.f32 %v1482, %v1108
      %v3903 = vadd.f32 %v3855, %v3879
      %v3904 = vadd.f32 %v3856, %v3880
      %v3905 = vadd.f32 %v3857, %v3881
      %v3906 = vadd.f32 %v3858, %v3882
      %v3907 = vadd.f32 %v3859, %v3883
      %v3908 = vadd.f32 %v3860, %v3884
      %v3909 = vadd.f32 %v3861, %v3885
      %v3910 = vadd.f32 %v3862, %v3886
      %v3911 = vadd.f32 %v3863, %v3887
      %v3912 = vadd.f32 %v3864, %v3888
      %v3913 = vadd.f32 %v3865, %v3889
      %v3914 = vadd.f32 %v3866, %v3890
      %v3915 = vadd.f32 %v3867, %v3891
      %v3916 = vadd.f32 %v3868, %v3892
      %v3917 = vadd.f32 %v3869, %v3893
      %v3918 = vadd.f32 %v3870, %v3894
      %v3919 = vadd.f32 %v3871, %v3895
      %v3920 = vadd.f32 %v3872, %v3896
      %v3921 = vadd.f32 %v3873, %v3897
      %v3922 = vadd.f32 %v3874, %v3898
      %v3923 = vadd.f32 %v3875, %v3899
      %v3924 = vadd.f32 %v3876, %v3900
      %v3925 = vadd.f32 %v3877, %v3901
      %v3926 = vadd.f32 %v3878, %v3902
      %v3927 = vmul.f32 %v1535, %v1184
      %v3928 = vmul.f32 %v1536, %v1184
      %v3929 = vmul.f32 %v1537, %v1184
      %v3930 = vmul.f32 %v1538, %v1184
      %v3931 = vmul.f32 %v1539, %v1184
      %v3932 = vmul.f32 %v1540, %v1184
      %v3933 = vmul.f32 %v1541, %v1184
      %v3934 = vmul.f32 %v1542, %v1184
      %v3935 = vmul.f32 %v1543, %v1184
      %v3936 = vmul.f32 %v1544, %v1184
      %v3937 = vmul.f32 %v1545, %v1184
      %v3938 = vmul.f32 %v1546, %v1184
      %v3939 = vmul.f32 %v1547, %v1184
      %v3940 = vmul.f32 %v1548, %v1184
      %v3941 = vmul.f32 %v1549, %v1184
      %v3942 = vmul.f32 %v1550, %v1184
      %v3943 = vmul.f32 %v1551, %v1184
      %v3944 = vmul.f32 %v1552, %v1184
      %v3945 = vmul.f32 %v1553, %v1184
      %v3946 = vmul.f32 %v1554, %v1184
      %v3947 = vmul.f32 %v1555, %v1184
      %v3948 = vmul.f32 %v1556, %v1184
      %v3949 = vmul.f32 %v1557, %v1184
      %v3950 = vmul.f32 %v1558, %v1184
      %v3951 = vadd.f32 %v3903, %v3927
      %v3952 = vadd.f32 %v3904, %v3928
      %v3953 = vadd.f32 %v3905, %v3929
      %v3954 = vadd.f32 %v3906, %v3930
      %v3955 = vadd.f32 %v3907, %v3931
      %v3956 = vadd.f32 %v3908, %v3932
      %v3957 = vadd.f32 %v3909, %v3933
      %v3958 = vadd.f32 %v3910, %v3934
      %v3959 = vadd.f32 %v3911, %v3935
      %v3960 = vadd.f32 %v3912, %v3936
      %v3961 = vadd.f32 %v3913, %v3937
      %v3962 = vadd.f32 %v3914, %v3938
      %v3963 = vadd.f32 %v3915, %v3939
      %v3964 = vadd.f32 %v3916, %v3940
      %v3965 = vadd.f32 %v3917, %v3941
      %v3966 = vadd.f32 %v3918, %v3942
      %v3967 = vadd.f32 %v3919, %v3943
      %v3968 = vadd.f32 %v3920, %v3944
      %v3969 = vadd.f32 %v3921, %v3945
      %v3970 = vadd.f32 %v3922, %v3946
      %v3971 = vadd.f32 %v3923, %v3947
      %v3972 = vadd.f32 %v3924, %v3948
      %v3973 = vadd.f32 %v3925, %v3949
      %v3974 = vadd.f32 %v3926, %v3950
      %v3975 = vmul.f32 %v1611, %v1260
      %v3976 = vmul.f32 %v1612, %v1260
      %v3977 = vmul.f32 %v1613, %v1260
      %v3978 = vmul.f32 %v1614, %v1260
      %v3979 = vmul.f32 %v1615, %v1260
      %v3980 = vmul.f32 %v1616, %v1260
      %v3981 = vmul.f32 %v1617, %v1260
      %v3982 = vmul.f32 %v1618, %v1260
      %v3983 = vmul.f32 %v1619, %v1260
      %v3984 = vmul.f32 %v1620, %v1260
      %v3985 = vmul.f32 %v1621, %v1260
      %v3986 = vmul.f32 %v1622, %v1260
      %v3987 = vmul.f32 %v1623, %v1260
      %v3988 = vmul.f32 %v1624, %v1260
      %v3989 = vmul.f32 %v1625, %v1260
      %v3990 = vmul.f32 %v1626, %v1260
      %v3991 = vmul.f32 %v1627, %v1260
      %v3992 = vmul.f32 %v1628, %v1260
      %v3993 = vmul.f32 %v1629, %v1260
      %v3994 = vmul.f32 %v1630, %v1260
      %v3995 = vmul.f32 %v1631, %v1260
      %v3996 = vmul.f32 %v1632, %v1260
      %v3997 = vmul.f32 %v1633, %v1260
      %v3998 = vmul.f32 %v1634, %v1260
      %v3999 = vadd.f32 %v3951, %v3975
      %v4000 = vadd.f32 %v3952, %v3976
      %v4001 = vadd.f32 %v3953, %v3977
      %v4002 = vadd.f32 %v3954, %v3978
      %v4003 = vadd.f32 %v3955, %v3979
      %v4004 = vadd.f32 %v3956, %v3980
      %v4005 = vadd.f32 %v3957, %v3981
      %v4006 = vadd.f32 %v3958, %v3982
      %v4007 = vadd.f32 %v3959, %v3983
      %v4008 = vadd.f32 %v3960, %v3984
      %v4009 = vadd.f32 %v3961, %v3985
      %v4010 = vadd.f32 %v3962, %v3986
      %v4011 = vadd.f32 %v3963, %v3987
      %v4012 = vadd.f32 %v3964, %v3988
      %v4013 = vadd.f32 %v3965, %v3989
      %v4014 = vadd.f32 %v3966, %v3990
      %v4015 = vadd.f32 %v3967, %v3991
      %v4016 = vadd.f32 %v3968, %v3992
      %v4017 = vadd.f32 %v3969, %v3993
      %v4018 = vadd.f32 %v3970, %v3994
      %v4019 = vadd.f32 %v3971, %v3995
      %v4020 = vadd.f32 %v3972, %v3996
      %v4021 = vadd.f32 %v3973, %v3997
      %v4022 = vadd.f32 %v3974, %v3998
      %v4023 = vmul.f32 %v1686, %v1335
      %v4024 = vmul.f32 %v1687, %v1335
      %v4025 = vmul.f32 %v1688, %v1335
      %v4026 = vmul.f32 %v1689, %v1335
      %v4027 = vmul.f32 %v1690, %v1335
      %v4028 = vmul.f32 %v1691, %v1335
      %v4029 = vmul.f32 %v1692, %v1335
      %v4030 = vmul.f32 %v1693, %v1335
      %v4031 = vmul.f32 %v1694, %v1335
      %v4032 = vmul.f32 %v1695, %v1335
      %v4033 = vmul.f32 %v1696, %v1335
      %v4034 = vmul.f32 %v1697, %v1335
      %v4035 = vmul.f32 %v1698, %v1335
      %v4036 = vmul.f32 %v1699, %v1335
      %v4037 = vmul.f32 %v1700, %v1335
      %v4038 = vmul.f32 %v1701, %v1335
      %v4039 = vmul.f32 %v1702, %v1335
      %v4040 = vmul.f32 %v1703, %v1335
      %v4041 = vmul.f32 %v1704, %v1335
      %v4042 = vmul.f32 %v1705, %v1335
      %v4043 = vmul.f32 %v1706, %v1335
      %v4044 = vmul.f32 %v1707, %v1335
      %v4045 = vmul.f32 %v1708, %v1335
      %v4046 = vmul.f32 %v1709, %v1335
      %v4047 = vadd.f32 %v3999, %v4023
      %v4048 = vadd.f32 %v4000, %v4024
      %v4049 = vadd.f32 %v4001, %v4025
      %v4050 = vadd.f32 %v4002, %v4026
      %v4051 = vadd.f32 %v4003, %v4027
      %v4052 = vadd.f32 %v4004, %v4028
      %v4053 = vadd.f32 %v4005, %v4029
      %v4054 = vadd.f32 %v4006, %v4030
      %v4055 = vadd.f32 %v4007, %v4031
      %v4056 = vadd.f32 %v4008, %v4032
      %v4057 = vadd.f32 %v4009, %v4033
      %v4058 = vadd.f32 %v4010, %v4034
      %v4059 = vadd.f32 %v4011, %v4035
      %v4060 = vadd.f32 %v4012, %v4036
      %v4061 = vadd.f32 %v4013, %v4037
      %v4062 = vadd.f32 %v4014, %v4038
      %v4063 = vadd.f32 %v4015, %v4039
      %v4064 = vadd.f32 %v4016, %v4040
      %v4065 = vadd.f32 %v4017, %v4041
      %v4066 = vadd.f32 %v4018, %v4042
      %v4067 = vadd.f32 %v4019, %v4043
      %v4068 = vadd.f32 %v4020, %v4044
      %v4069 = vadd.f32 %v4021, %v4045
      %v4070 = vadd.f32 %v4022, %v4046
      %v4071 = vmul.f32 %v1761, %v1410
      %v4072 = vmul.f32 %v1762, %v1410
      %v4073 = vmul.f32 %v1763, %v1410
      %v4074 = vmul.f32 %v1764, %v1410
      %v4075 = vmul.f32 %v1765, %v1410
      %v4076 = vmul.f32 %v1766, %v1410
      %v4077 = vmul.f32 %v1767, %v1410
      %v4078 = vmul.f32 %v1768, %v1410
      %v4079 = vmul.f32 %v1769, %v1410
      %v4080 = vmul.f32 %v1770, %v1410
      %v4081 = vmul.f32 %v1771, %v1410
      %v4082 = vmul.f32 %v1772, %v1410
      %v4083 = vmul.f32 %v1773, %v1410
      %v4084 = vmul.f32 %v1774, %v1410
      %v4085 = vmul.f32 %v1775, %v1410
      %v4086 = vmul.f32 %v1776, %v1410
      %v4087 = vmul.f32 %v1777, %v1410
      %v4088 = vmul.f32 %v1778, %v1410
      %v4089 = vmul.f32 %v1779, %v1410
      %v4090 = vmul.f32 %v1780, %v1410
      %v4091 = vmul.f32 %v1781, %v1410
      %v4092 = vmul.f32 %v1782, %v1410
      %v4093 = vmul.f32 %v1783, %v1410
      %v4094 = vmul.f32 %v1784, %v1410
      %v4095 = vadd.f32 %v4047, %v4071
      %v4096 = vadd.f32 %v4048, %v4072
      %v4097 = vadd.f32 %v4049, %v4073
      %v4098 = vadd.f32 %v4050, %v4074
      %v4099 = vadd.f32 %v4051, %v4075
      %v4100 = vadd.f32 %v4052, %v4076
      %v4101 = vadd.f32 %v4053, %v4077
      %v4102 = vadd.f32 %v4054, %v4078
      %v4103 = vadd.f32 %v4055, %v4079
      %v4104 = vadd.f32 %v4056, %v4080
      %v4105 = vadd.f32 %v4057, %v4081
      %v4106 = vadd.f32 %v4058, %v4082
      %v4107 = vadd.f32 %v4059, %v4083
      %v4108 = vadd.f32 %v4060, %v4084
      %v4109 = vadd.f32 %v4061, %v4085
      %v4110 = vadd.f32 %v4062, %v4086
      %v4111 = vadd.f32 %v4063, %v4087
      %v4112 = vadd.f32 %v4064, %v4088
      %v4113 = vadd.f32 %v4065, %v4089
      %v4114 = vadd.f32 %v4066, %v4090
      %v4115 = vadd.f32 %v4067, %v4091
      %v4116 = vadd.f32 %v4068, %v4092
      %v4117 = vadd.f32 %v4069, %v4093
      %v4118 = vadd.f32 %v4070, %v4094
      %v4119 = vmul.f32 %v1836, %v1485
      %v4120 = vmul.f32 %v1837, %v1485
      %v4121 = vmul.f32 %v1838, %v1485
      %v4122 = vmul.f32 %v1839, %v1485
      %v4123 = vmul.f32 %v1840, %v1485
      %v4124 = vmul.f32 %v1841, %v1485
      %v4125 = vmul.f32 %v1842, %v1485
      %v4126 = vmul.f32 %v1843, %v1485
      %v4127 = vmul.f32 %v1844, %v1485
      %v4128 = vmul.f32 %v1845, %v1485
      %v4129 = vmul.f32 %v1846, %v1485
      %v4130 = vmul.f32 %v1847, %v1485
      %v4131 = vmul.f32 %v1848, %v1485
      %v4132 = vmul.f32 %v1849, %v1485
      %v4133 = vmul.f32 %v1850, %v1485
      %v4134 = vmul.f32 %v1851, %v1485
      %v4135 = vmul.f32 %v1852, %v1485
      %v4136 = vmul.f32 %v1853, %v1485
      %v4137 = vmul.f32 %v1854, %v1485
      %v4138 = vmul.f32 %v1855, %v1485
      %v4139 = vmul.f32 %v1856, %v1485
      %v4140 = vmul.f32 %v1857, %v1485
      %v4141 = vmul.f32 %v1858, %v1485
      %v4142 = vmul.f32 %v1859, %v1485
      %v4143 = vadd.f32 %v4095, %v4119
      %v4144 = vadd.f32 %v4096, %v4120
      %v4145 = vadd.f32 %v4097, %v4121
      %v4146 = vadd.f32 %v4098, %v4122
      %v4147 = vadd.f32 %v4099, %v4123
      %v4148 = vadd.f32 %v4100, %v4124
      %v4149 = vadd.f32 %v4101, %v4125
      %v4150 = vadd.f32 %v4102, %v4126
      %v4151 = vadd.f32 %v4103, %v4127
      %v4152 = vadd.f32 %v4104, %v4128
      %v4153 = vadd.f32 %v4105, %v4129
      %v4154 = vadd.f32 %v4106, %v4130
      %v4155 = vadd.f32 %v4107, %v4131
      %v4156 = vadd.f32 %v4108, %v4132
      %v4157 = vadd.f32 %v4109, %v4133
      %v4158 = vadd.f32 %v4110, %v4134
      %v4159 = vadd.f32 %v4111, %v4135
      %v4160 = vadd.f32 %v4112, %v4136
      %v4161 = vadd.f32 %v4113, %v4137
      %v4162 = vadd.f32 %v4114, %v4138
      %v4163 = vadd.f32 %v4115, %v4139
      %v4164 = vadd.f32 %v4116, %v4140
      %v4165 = vadd.f32 %v4117, %v4141
      %v4166 = vadd.f32 %v4118, %v4142
      %s4167 = scalar_lea.vmem %s0, 480
      %v4168 = vld [vmem:[%s4167] sm:$0xff]
      %v4169 = vld [vmem:[%s4167 + $0x8] sm:$0xf]
      %v4170 = vld [vmem:[%s4167 + $0x10] sm:$0xff]
      %v4171 = vld [vmem:[%s4167 + $0x18] sm:$0xf]
      %v4172 = vld [vmem:[%s4167 + $0x20] sm:$0xff]
      %v4173 = vld [vmem:[%s4167 + $0x28] sm:$0xf]
      %v4174 = vld [vmem:[%s4167 + $0x30] sm:$0xff]
      %v4175 = vld [vmem:[%s4167 + $0x38] sm:$0xf]
      %v4176 = vld [vmem:[%s4167 + $0x40] sm:$0xff]
      %v4177 = vld [vmem:[%s4167 + $0x48] sm:$0xf]
      %v4178 = vld [vmem:[%s4167 + $0x50] sm:$0xff]
      %v4179 = vld [vmem:[%s4167 + $0x58] sm:$0xf]
      %v4180 = vld [vmem:[%s4167 + $0x60] sm:$0xff]
      %v4181 = vld [vmem:[%s4167 + $0x68] sm:$0xf]
      %v4182 = vld [vmem:[%s4167 + $0x70] sm:$0xff]
      %v4183 = vld [vmem:[%s4167 + $0x78] sm:$0xf]
      %v4184 = vld [vmem:[%s4167 + $0x80] sm:$0xff]
      %v4185 = vld [vmem:[%s4167 + $0x88] sm:$0xf]
      %v4186 = vld [vmem:[%s4167 + $0x90] sm:$0xff]
      %v4187 = vld [vmem:[%s4167 + $0x98] sm:$0xf]
      %v4188 = vld [vmem:[%s4167 + $0xa0] sm:$0xff]
      %v4189 = vld [vmem:[%s4167 + $0xa8] sm:$0xf]
      %v4190 = vld [vmem:[%s4167 + $0xb0] sm:$0xff]
      %v4191 = vld [vmem:[%s4167 + $0xb8] sm:$0xf]
      %v4192 = vmul.f32 %v4168, %v1561
      %v4193 = vmul.f32 %v4169, %v1561
      %v4194 = vmul.f32 %v4170, %v1561
      %v4195 = vmul.f32 %v4171, %v1561
      %v4196 = vmul.f32 %v4172, %v1561
      %v4197 = vmul.f32 %v4173, %v1561
      %v4198 = vmul.f32 %v4174, %v1561
      %v4199 = vmul.f32 %v4175, %v1561
      %v4200 = vmul.f32 %v4176, %v1561
      %v4201 = vmul.f32 %v4177, %v1561
      %v4202 = vmul.f32 %v4178, %v1561
      %v4203 = vmul.f32 %v4179, %v1561
      %v4204 = vmul.f32 %v4180, %v1561
      %v4205 = vmul.f32 %v4181, %v1561
      %v4206 = vmul.f32 %v4182, %v1561
      %v4207 = vmul.f32 %v4183, %v1561
      %v4208 = vmul.f32 %v4184, %v1561
      %v4209 = vmul.f32 %v4185, %v1561
      %v4210 = vmul.f32 %v4186, %v1561
      %v4211 = vmul.f32 %v4187, %v1561
      %v4212 = vmul.f32 %v4188, %v1561
      %v4213 = vmul.f32 %v4189, %v1561
      %v4214 = vmul.f32 %v4190, %v1561
      %v4215 = vmul.f32 %v4191, %v1561
      %v4216 = vadd.f32 %v4143, %v4192
      %v4217 = vadd.f32 %v4144, %v4193
      %v4218 = vadd.f32 %v4145, %v4194
      %v4219 = vadd.f32 %v4146, %v4195
      %v4220 = vadd.f32 %v4147, %v4196
      %v4221 = vadd.f32 %v4148, %v4197
      %v4222 = vadd.f32 %v4149, %v4198
      %v4223 = vadd.f32 %v4150, %v4199
      %v4224 = vadd.f32 %v4151, %v4200
      %v4225 = vadd.f32 %v4152, %v4201
      %v4226 = vadd.f32 %v4153, %v4202
      %v4227 = vadd.f32 %v4154, %v4203
      %v4228 = vadd.f32 %v4155, %v4204
      %v4229 = vadd.f32 %v4156, %v4205
      %v4230 = vadd.f32 %v4157, %v4206
      %v4231 = vadd.f32 %v4158, %v4207
      %v4232 = vadd.f32 %v4159, %v4208
      %v4233 = vadd.f32 %v4160, %v4209
      %v4234 = vadd.f32 %v4161, %v4210
      %v4235 = vadd.f32 %v4162, %v4211
      %v4236 = vadd.f32 %v4163, %v4212
      %v4237 = vadd.f32 %v4164, %v4213
      %v4238 = vadd.f32 %v4165, %v4214
      %v4239 = vadd.f32 %v4166, %v4215
      %s4240 = scalar_lea.vmem %s0, 704
      %v4241 = vld [vmem:[%s4240] sm:$0xff]
      %v4242 = vld [vmem:[%s4240 + $0x8] sm:$0xf]
      %v4243 = vld [vmem:[%s4240 + $0x10] sm:$0xff]
      %v4244 = vld [vmem:[%s4240 + $0x18] sm:$0xf]
      %v4245 = vld [vmem:[%s4240 + $0x20] sm:$0xff]
      %v4246 = vld [vmem:[%s4240 + $0x28] sm:$0xf]
      %v4247 = vld [vmem:[%s4240 + $0x30] sm:$0xff]
      %v4248 = vld [vmem:[%s4240 + $0x38] sm:$0xf]
      %v4249 = vld [vmem:[%s4240 + $0x40] sm:$0xff]
      %v4250 = vld [vmem:[%s4240 + $0x48] sm:$0xf]
      %v4251 = vld [vmem:[%s4240 + $0x50] sm:$0xff]
      %v4252 = vld [vmem:[%s4240 + $0x58] sm:$0xf]
      %v4253 = vld [vmem:[%s4240 + $0x60] sm:$0xff]
      %v4254 = vld [vmem:[%s4240 + $0x68] sm:$0xf]
      %v4255 = vld [vmem:[%s4240 + $0x70] sm:$0xff]
      %v4256 = vld [vmem:[%s4240 + $0x78] sm:$0xf]
      %v4257 = vld [vmem:[%s4240 + $0x80] sm:$0xff]
      %v4258 = vld [vmem:[%s4240 + $0x88] sm:$0xf]
      %v4259 = vld [vmem:[%s4240 + $0x90] sm:$0xff]
      %v4260 = vld [vmem:[%s4240 + $0x98] sm:$0xf]
      %v4261 = vld [vmem:[%s4240 + $0xa0] sm:$0xff]
      %v4262 = vld [vmem:[%s4240 + $0xa8] sm:$0xf]
      %v4263 = vld [vmem:[%s4240 + $0xb0] sm:$0xff]
      %v4264 = vld [vmem:[%s4240 + $0xb8] sm:$0xf]
      %v4265 = vmul.f32 %v4241, %v1637
      %v4266 = vmul.f32 %v4242, %v1637
      %v4267 = vmul.f32 %v4243, %v1637
      %v4268 = vmul.f32 %v4244, %v1637
      %v4269 = vmul.f32 %v4245, %v1637
      %v4270 = vmul.f32 %v4246, %v1637
      %v4271 = vmul.f32 %v4247, %v1637
      %v4272 = vmul.f32 %v4248, %v1637
      %v4273 = vmul.f32 %v4249, %v1637
      %v4274 = vmul.f32 %v4250, %v1637
      %v4275 = vmul.f32 %v4251, %v1637
      %v4276 = vmul.f32 %v4252, %v1637
      %v4277 = vmul.f32 %v4253, %v1637
      %v4278 = vmul.f32 %v4254, %v1637
      %v4279 = vmul.f32 %v4255, %v1637
      %v4280 = vmul.f32 %v4256, %v1637
      %v4281 = vmul.f32 %v4257, %v1637
      %v4282 = vmul.f32 %v4258, %v1637
      %v4283 = vmul.f32 %v4259, %v1637
      %v4284 = vmul.f32 %v4260, %v1637
      %v4285 = vmul.f32 %v4261, %v1637
      %v4286 = vmul.f32 %v4262, %v1637
      %v4287 = vmul.f32 %v4263, %v1637
      %v4288 = vmul.f32 %v4264, %v1637
      %v4289 = vadd.f32 %v4216, %v4265
      %v4290 = vadd.f32 %v4217, %v4266
      %v4291 = vadd.f32 %v4218, %v4267
      %v4292 = vadd.f32 %v4219, %v4268
      %v4293 = vadd.f32 %v4220, %v4269
      %v4294 = vadd.f32 %v4221, %v4270
      %v4295 = vadd.f32 %v4222, %v4271
      %v4296 = vadd.f32 %v4223, %v4272
      %v4297 = vadd.f32 %v4224, %v4273
      %v4298 = vadd.f32 %v4225, %v4274
      %v4299 = vadd.f32 %v4226, %v4275
      %v4300 = vadd.f32 %v4227, %v4276
      %v4301 = vadd.f32 %v4228, %v4277
      %v4302 = vadd.f32 %v4229, %v4278
      %v4303 = vadd.f32 %v4230, %v4279
      %v4304 = vadd.f32 %v4231, %v4280
      %v4305 = vadd.f32 %v4232, %v4281
      %v4306 = vadd.f32 %v4233, %v4282
      %v4307 = vadd.f32 %v4234, %v4283
      %v4308 = vadd.f32 %v4235, %v4284
      %v4309 = vadd.f32 %v4236, %v4285
      %v4310 = vadd.f32 %v4237, %v4286
      %v4311 = vadd.f32 %v4238, %v4287
      %v4312 = vadd.f32 %v4239, %v4288
      %v4313 = vld [vmem:[%s4167 + $0x1] sm:$0xff]
      %v4314 = vld [vmem:[%s4167 + $0x9] sm:$0xf]
      %v4315 = vld [vmem:[%s4167 + $0x11] sm:$0xff]
      %v4316 = vld [vmem:[%s4167 + $0x19] sm:$0xf]
      %v4317 = vld [vmem:[%s4167 + $0x21] sm:$0xff]
      %v4318 = vld [vmem:[%s4167 + $0x29] sm:$0xf]
      %v4319 = vld [vmem:[%s4167 + $0x31] sm:$0xff]
      %v4320 = vld [vmem:[%s4167 + $0x39] sm:$0xf]
      %v4321 = vld [vmem:[%s4167 + $0x41] sm:$0xff]
      %v4322 = vld [vmem:[%s4167 + $0x49] sm:$0xf]
      %v4323 = vld [vmem:[%s4167 + $0x51] sm:$0xff]
      %v4324 = vld [vmem:[%s4167 + $0x59] sm:$0xf]
      %v4325 = vld [vmem:[%s4167 + $0x61] sm:$0xff]
      %v4326 = vld [vmem:[%s4167 + $0x69] sm:$0xf]
      %v4327 = vld [vmem:[%s4167 + $0x71] sm:$0xff]
      %v4328 = vld [vmem:[%s4167 + $0x79] sm:$0xf]
      %v4329 = vld [vmem:[%s4167 + $0x81] sm:$0xff]
      %v4330 = vld [vmem:[%s4167 + $0x89] sm:$0xf]
      %v4331 = vld [vmem:[%s4167 + $0x91] sm:$0xff]
      %v4332 = vld [vmem:[%s4167 + $0x99] sm:$0xf]
      %v4333 = vld [vmem:[%s4167 + $0xa1] sm:$0xff]
      %v4334 = vld [vmem:[%s4167 + $0xa9] sm:$0xf]
      %v4335 = vld [vmem:[%s4167 + $0xb1] sm:$0xff]
      %v4336 = vld [vmem:[%s4167 + $0xb9] sm:$0xf]
      %v4337 = vmul.f32 %v4313, %v1712
      %v4338 = vmul.f32 %v4314, %v1712
      %v4339 = vmul.f32 %v4315, %v1712
      %v4340 = vmul.f32 %v4316, %v1712
      %v4341 = vmul.f32 %v4317, %v1712
      %v4342 = vmul.f32 %v4318, %v1712
      %v4343 = vmul.f32 %v4319, %v1712
      %v4344 = vmul.f32 %v4320, %v1712
      %v4345 = vmul.f32 %v4321, %v1712
      %v4346 = vmul.f32 %v4322, %v1712
      %v4347 = vmul.f32 %v4323, %v1712
      %v4348 = vmul.f32 %v4324, %v1712
      %v4349 = vmul.f32 %v4325, %v1712
      %v4350 = vmul.f32 %v4326, %v1712
      %v4351 = vmul.f32 %v4327, %v1712
      %v4352 = vmul.f32 %v4328, %v1712
      %v4353 = vmul.f32 %v4329, %v1712
      %v4354 = vmul.f32 %v4330, %v1712
      %v4355 = vmul.f32 %v4331, %v1712
      %v4356 = vmul.f32 %v4332, %v1712
      %v4357 = vmul.f32 %v4333, %v1712
      %v4358 = vmul.f32 %v4334, %v1712
      %v4359 = vmul.f32 %v4335, %v1712
      %v4360 = vmul.f32 %v4336, %v1712
      %v4361 = vadd.f32 %v4289, %v4337
      %v4362 = vadd.f32 %v4290, %v4338
      %v4363 = vadd.f32 %v4291, %v4339
      %v4364 = vadd.f32 %v4292, %v4340
      %v4365 = vadd.f32 %v4293, %v4341
      %v4366 = vadd.f32 %v4294, %v4342
      %v4367 = vadd.f32 %v4295, %v4343
      %v4368 = vadd.f32 %v4296, %v4344
      %v4369 = vadd.f32 %v4297, %v4345
      %v4370 = vadd.f32 %v4298, %v4346
      %v4371 = vadd.f32 %v4299, %v4347
      %v4372 = vadd.f32 %v4300, %v4348
      %v4373 = vadd.f32 %v4301, %v4349
      %v4374 = vadd.f32 %v4302, %v4350
      %v4375 = vadd.f32 %v4303, %v4351
      %v4376 = vadd.f32 %v4304, %v4352
      %v4377 = vadd.f32 %v4305, %v4353
      %v4378 = vadd.f32 %v4306, %v4354
      %v4379 = vadd.f32 %v4307, %v4355
      %v4380 = vadd.f32 %v4308, %v4356
      %v4381 = vadd.f32 %v4309, %v4357
      %v4382 = vadd.f32 %v4310, %v4358
      %v4383 = vadd.f32 %v4311, %v4359
      %v4384 = vadd.f32 %v4312, %v4360
      %v4385 = vld [vmem:[%s4240 + $0x1] sm:$0xff]
      %v4386 = vld [vmem:[%s4240 + $0x9] sm:$0xf]
      %v4387 = vld [vmem:[%s4240 + $0x11] sm:$0xff]
      %v4388 = vld [vmem:[%s4240 + $0x19] sm:$0xf]
      %v4389 = vld [vmem:[%s4240 + $0x21] sm:$0xff]
      %v4390 = vld [vmem:[%s4240 + $0x29] sm:$0xf]
      %v4391 = vld [vmem:[%s4240 + $0x31] sm:$0xff]
      %v4392 = vld [vmem:[%s4240 + $0x39] sm:$0xf]
      %v4393 = vld [vmem:[%s4240 + $0x41] sm:$0xff]
      %v4394 = vld [vmem:[%s4240 + $0x49] sm:$0xf]
      %v4395 = vld [vmem:[%s4240 + $0x51] sm:$0xff]
      %v4396 = vld [vmem:[%s4240 + $0x59] sm:$0xf]
      %v4397 = vld [vmem:[%s4240 + $0x61] sm:$0xff]
      %v4398 = vld [vmem:[%s4240 + $0x69] sm:$0xf]
      %v4399 = vld [vmem:[%s4240 + $0x71] sm:$0xff]
      %v4400 = vld [vmem:[%s4240 + $0x79] sm:$0xf]
      %v4401 = vld [vmem:[%s4240 + $0x81] sm:$0xff]
      %v4402 = vld [vmem:[%s4240 + $0x89] sm:$0xf]
      %v4403 = vld [vmem:[%s4240 + $0x91] sm:$0xff]
      %v4404 = vld [vmem:[%s4240 + $0x99] sm:$0xf]
      %v4405 = vld [vmem:[%s4240 + $0xa1] sm:$0xff]
      %v4406 = vld [vmem:[%s4240 + $0xa9] sm:$0xf]
      %v4407 = vld [vmem:[%s4240 + $0xb1] sm:$0xff]
      %v4408 = vld [vmem:[%s4240 + $0xb9] sm:$0xf]
      %v4409 = vmul.f32 %v4385, %v1787
      %v4410 = vmul.f32 %v4386, %v1787
      %v4411 = vmul.f32 %v4387, %v1787
      %v4412 = vmul.f32 %v4388, %v1787
      %v4413 = vmul.f32 %v4389, %v1787
      %v4414 = vmul.f32 %v4390, %v1787
      %v4415 = vmul.f32 %v4391, %v1787
      %v4416 = vmul.f32 %v4392, %v1787
      %v4417 = vmul.f32 %v4393, %v1787
      %v4418 = vmul.f32 %v4394, %v1787
      %v4419 = vmul.f32 %v4395, %v1787
      %v4420 = vmul.f32 %v4396, %v1787
      %v4421 = vmul.f32 %v4397, %v1787
      %v4422 = vmul.f32 %v4398, %v1787
      %v4423 = vmul.f32 %v4399, %v1787
      %v4424 = vmul.f32 %v4400, %v1787
      %v4425 = vmul.f32 %v4401, %v1787
      %v4426 = vmul.f32 %v4402, %v1787
      %v4427 = vmul.f32 %v4403, %v1787
      %v4428 = vmul.f32 %v4404, %v1787
      %v4429 = vmul.f32 %v4405, %v1787
      %v4430 = vmul.f32 %v4406, %v1787
      %v4431 = vmul.f32 %v4407, %v1787
      %v4432 = vmul.f32 %v4408, %v1787
      %v4433 = vadd.f32 %v4361, %v4409
      %v4434 = vadd.f32 %v4362, %v4410
      %v4435 = vadd.f32 %v4363, %v4411
      %v4436 = vadd.f32 %v4364, %v4412
      %v4437 = vadd.f32 %v4365, %v4413
      %v4438 = vadd.f32 %v4366, %v4414
      %v4439 = vadd.f32 %v4367, %v4415
      %v4440 = vadd.f32 %v4368, %v4416
      %v4441 = vadd.f32 %v4369, %v4417
      %v4442 = vadd.f32 %v4370, %v4418
      %v4443 = vadd.f32 %v4371, %v4419
      %v4444 = vadd.f32 %v4372, %v4420
      %v4445 = vadd.f32 %v4373, %v4421
      %v4446 = vadd.f32 %v4374, %v4422
      %v4447 = vadd.f32 %v4375, %v4423
      %v4448 = vadd.f32 %v4376, %v4424
      %v4449 = vadd.f32 %v4377, %v4425
      %v4450 = vadd.f32 %v4378, %v4426
      %v4451 = vadd.f32 %v4379, %v4427
      %v4452 = vadd.f32 %v4380, %v4428
      %v4453 = vadd.f32 %v4381, %v4429
      %v4454 = vadd.f32 %v4382, %v4430
      %v4455 = vadd.f32 %v4383, %v4431
      %v4456 = vadd.f32 %v4384, %v4432
      %v4457 = vld [vmem:[%s4167 + $0x2] sm:$0xff]
      %v4458 = vld [vmem:[%s4167 + $0xa] sm:$0xf]
      %v4459 = vld [vmem:[%s4167 + $0x12] sm:$0xff]
      %v4460 = vld [vmem:[%s4167 + $0x1a] sm:$0xf]
      %v4461 = vld [vmem:[%s4167 + $0x22] sm:$0xff]
      %v4462 = vld [vmem:[%s4167 + $0x2a] sm:$0xf]
      %v4463 = vld [vmem:[%s4167 + $0x32] sm:$0xff]
      %v4464 = vld [vmem:[%s4167 + $0x3a] sm:$0xf]
      %v4465 = vld [vmem:[%s4167 + $0x42] sm:$0xff]
      %v4466 = vld [vmem:[%s4167 + $0x4a] sm:$0xf]
      %v4467 = vld [vmem:[%s4167 + $0x52] sm:$0xff]
      %v4468 = vld [vmem:[%s4167 + $0x5a] sm:$0xf]
      %v4469 = vld [vmem:[%s4167 + $0x62] sm:$0xff]
      %v4470 = vld [vmem:[%s4167 + $0x6a] sm:$0xf]
      %v4471 = vld [vmem:[%s4167 + $0x72] sm:$0xff]
      %v4472 = vld [vmem:[%s4167 + $0x7a] sm:$0xf]
      %v4473 = vld [vmem:[%s4167 + $0x82] sm:$0xff]
      %v4474 = vld [vmem:[%s4167 + $0x8a] sm:$0xf]
      %v4475 = vld [vmem:[%s4167 + $0x92] sm:$0xff]
      %v4476 = vld [vmem:[%s4167 + $0x9a] sm:$0xf]
      %v4477 = vld [vmem:[%s4167 + $0xa2] sm:$0xff]
      %v4478 = vld [vmem:[%s4167 + $0xaa] sm:$0xf]
      %v4479 = vld [vmem:[%s4167 + $0xb2] sm:$0xff]
      %v4480 = vld [vmem:[%s4167 + $0xba] sm:$0xf]
      %v4481 = vmul.f32 %v4457, %v1862
      %v4482 = vmul.f32 %v4458, %v1862
      %v4483 = vmul.f32 %v4459, %v1862
      %v4484 = vmul.f32 %v4460, %v1862
      %v4485 = vmul.f32 %v4461, %v1862
      %v4486 = vmul.f32 %v4462, %v1862
      %v4487 = vmul.f32 %v4463, %v1862
      %v4488 = vmul.f32 %v4464, %v1862
      %v4489 = vmul.f32 %v4465, %v1862
      %v4490 = vmul.f32 %v4466, %v1862
      %v4491 = vmul.f32 %v4467, %v1862
      %v4492 = vmul.f32 %v4468, %v1862
      %v4493 = vmul.f32 %v4469, %v1862
      %v4494 = vmul.f32 %v4470, %v1862
      %v4495 = vmul.f32 %v4471, %v1862
      %v4496 = vmul.f32 %v4472, %v1862
      %v4497 = vmul.f32 %v4473, %v1862
      %v4498 = vmul.f32 %v4474, %v1862
      %v4499 = vmul.f32 %v4475, %v1862
      %v4500 = vmul.f32 %v4476, %v1862
      %v4501 = vmul.f32 %v4477, %v1862
      %v4502 = vmul.f32 %v4478, %v1862
      %v4503 = vmul.f32 %v4479, %v1862
      %v4504 = vmul.f32 %v4480, %v1862
      %v4505 = vadd.f32 %v4433, %v4481
      %v4506 = vadd.f32 %v4434, %v4482
      %v4507 = vadd.f32 %v4435, %v4483
      %v4508 = vadd.f32 %v4436, %v4484
      %v4509 = vadd.f32 %v4437, %v4485
      %v4510 = vadd.f32 %v4438, %v4486
      %v4511 = vadd.f32 %v4439, %v4487
      %v4512 = vadd.f32 %v4440, %v4488
      %v4513 = vadd.f32 %v4441, %v4489
      %v4514 = vadd.f32 %v4442, %v4490
      %v4515 = vadd.f32 %v4443, %v4491
      %v4516 = vadd.f32 %v4444, %v4492
      %v4517 = vadd.f32 %v4445, %v4493
      %v4518 = vadd.f32 %v4446, %v4494
      %v4519 = vadd.f32 %v4447, %v4495
      %v4520 = vadd.f32 %v4448, %v4496
      %v4521 = vadd.f32 %v4449, %v4497
      %v4522 = vadd.f32 %v4450, %v4498
      %v4523 = vadd.f32 %v4451, %v4499
      %v4524 = vadd.f32 %v4452, %v4500
      %v4525 = vadd.f32 %v4453, %v4501
      %v4526 = vadd.f32 %v4454, %v4502
      %v4527 = vadd.f32 %v4455, %v4503
      %v4528 = vadd.f32 %v4456, %v4504
      %v4529 = vmax.f32 %v3207, %v4505
      %v4530 = vmax.f32 %v3208, %v4506
      %v4531 = vmax.f32 %v3209, %v4507
      %v4532 = vmax.f32 %v3210, %v4508
      %v4533 = vmax.f32 %v3211, %v4509
      %v4534 = vmax.f32 %v3212, %v4510
      %v4535 = vmax.f32 %v3213, %v4511
      %v4536 = vmax.f32 %v3214, %v4512
      %v4537 = vmax.f32 %v3215, %v4513
      %v4538 = vmax.f32 %v3216, %v4514
      %v4539 = vmax.f32 %v3217, %v4515
      %v4540 = vmax.f32 %v3218, %v4516
      %v4541 = vmax.f32 %v3219, %v4517
      %v4542 = vmax.f32 %v3220, %v4518
      %v4543 = vmax.f32 %v3221, %v4519
      %v4544 = vmax.f32 %v3222, %v4520
      %v4545 = vmax.f32 %v3223, %v4521
      %v4546 = vmax.f32 %v3224, %v4522
      %v4547 = vmax.f32 %v3225, %v4523
      %v4548 = vmax.f32 %v3226, %v4524
      %v4549 = vmax.f32 %v3227, %v4525
      %v4550 = vmax.f32 %v3228, %v4526
      %v4551 = vmax.f32 %v3229, %v4527
      %v4552 = vmax.f32 %v3230, %v4528
      %v4553 = vmul.f32 %v480, %v77
      %v4554 = vmul.f32 %v481, %v77
      %v4555 = vmul.f32 %v482, %v77
      %v4556 = vmul.f32 %v483, %v77
      %v4557 = vmul.f32 %v484, %v77
      %v4558 = vmul.f32 %v485, %v77
      %v4559 = vmul.f32 %v486, %v77
      %v4560 = vmul.f32 %v487, %v77
      %v4561 = vmul.f32 %v488, %v77
      %v4562 = vmul.f32 %v489, %v77
      %v4563 = vmul.f32 %v490, %v77
      %v4564 = vmul.f32 %v491, %v77
      %v4565 = vmul.f32 %v492, %v77
      %v4566 = vmul.f32 %v493, %v77
      %v4567 = vmul.f32 %v494, %v77
      %v4568 = vmul.f32 %v495, %v77
      %v4569 = vmul.f32 %v496, %v77
      %v4570 = vmul.f32 %v497, %v77
      %v4571 = vmul.f32 %v498, %v77
      %v4572 = vmul.f32 %v499, %v77
      %v4573 = vmul.f32 %v500, %v77
      %v4574 = vmul.f32 %v501, %v77
      %v4575 = vmul.f32 %v502, %v77
      %v4576 = vmul.f32 %v503, %v77
      %v4577 = vmul.f32 %v555, %v129
      %v4578 = vmul.f32 %v556, %v129
      %v4579 = vmul.f32 %v557, %v129
      %v4580 = vmul.f32 %v558, %v129
      %v4581 = vmul.f32 %v559, %v129
      %v4582 = vmul.f32 %v560, %v129
      %v4583 = vmul.f32 %v561, %v129
      %v4584 = vmul.f32 %v562, %v129
      %v4585 = vmul.f32 %v563, %v129
      %v4586 = vmul.f32 %v564, %v129
      %v4587 = vmul.f32 %v565, %v129
      %v4588 = vmul.f32 %v566, %v129
      %v4589 = vmul.f32 %v567, %v129
      %v4590 = vmul.f32 %v568, %v129
      %v4591 = vmul.f32 %v569, %v129
      %v4592 = vmul.f32 %v570, %v129
      %v4593 = vmul.f32 %v571, %v129
      %v4594 = vmul.f32 %v572, %v129
      %v4595 = vmul.f32 %v573, %v129
      %v4596 = vmul.f32 %v574, %v129
      %v4597 = vmul.f32 %v575, %v129
      %v4598 = vmul.f32 %v576, %v129
      %v4599 = vmul.f32 %v577, %v129
      %v4600 = vmul.f32 %v578, %v129
      %v4601 = vadd.f32 %v4553, %v4577
      %v4602 = vadd.f32 %v4554, %v4578
      %v4603 = vadd.f32 %v4555, %v4579
      %v4604 = vadd.f32 %v4556, %v4580
      %v4605 = vadd.f32 %v4557, %v4581
      %v4606 = vadd.f32 %v4558, %v4582
      %v4607 = vadd.f32 %v4559, %v4583
      %v4608 = vadd.f32 %v4560, %v4584
      %v4609 = vadd.f32 %v4561, %v4585
      %v4610 = vadd.f32 %v4562, %v4586
      %v4611 = vadd.f32 %v4563, %v4587
      %v4612 = vadd.f32 %v4564, %v4588
      %v4613 = vadd.f32 %v4565, %v4589
      %v4614 = vadd.f32 %v4566, %v4590
      %v4615 = vadd.f32 %v4567, %v4591
      %v4616 = vadd.f32 %v4568, %v4592
      %v4617 = vadd.f32 %v4569, %v4593
      %v4618 = vadd.f32 %v4570, %v4594
      %v4619 = vadd.f32 %v4571, %v4595
      %v4620 = vadd.f32 %v4572, %v4596
      %v4621 = vadd.f32 %v4573, %v4597
      %v4622 = vadd.f32 %v4574, %v4598
      %v4623 = vadd.f32 %v4575, %v4599
      %v4624 = vadd.f32 %v4576, %v4600
      %v4625 = vmul.f32 %v630, %v204
      %v4626 = vmul.f32 %v631, %v204
      %v4627 = vmul.f32 %v632, %v204
      %v4628 = vmul.f32 %v633, %v204
      %v4629 = vmul.f32 %v634, %v204
      %v4630 = vmul.f32 %v635, %v204
      %v4631 = vmul.f32 %v636, %v204
      %v4632 = vmul.f32 %v637, %v204
      %v4633 = vmul.f32 %v638, %v204
      %v4634 = vmul.f32 %v639, %v204
      %v4635 = vmul.f32 %v640, %v204
      %v4636 = vmul.f32 %v641, %v204
      %v4637 = vmul.f32 %v642, %v204
      %v4638 = vmul.f32 %v643, %v204
      %v4639 = vmul.f32 %v644, %v204
      %v4640 = vmul.f32 %v645, %v204
      %v4641 = vmul.f32 %v646, %v204
      %v4642 = vmul.f32 %v647, %v204
      %v4643 = vmul.f32 %v648, %v204
      %v4644 = vmul.f32 %v649, %v204
      %v4645 = vmul.f32 %v650, %v204
      %v4646 = vmul.f32 %v651, %v204
      %v4647 = vmul.f32 %v652, %v204
      %v4648 = vmul.f32 %v653, %v204
      %v4649 = vadd.f32 %v4601, %v4625
      %v4650 = vadd.f32 %v4602, %v4626
      %v4651 = vadd.f32 %v4603, %v4627
      %v4652 = vadd.f32 %v4604, %v4628
      %v4653 = vadd.f32 %v4605, %v4629
      %v4654 = vadd.f32 %v4606, %v4630
      %v4655 = vadd.f32 %v4607, %v4631
      %v4656 = vadd.f32 %v4608, %v4632
      %v4657 = vadd.f32 %v4609, %v4633
      %v4658 = vadd.f32 %v4610, %v4634
      %v4659 = vadd.f32 %v4611, %v4635
      %v4660 = vadd.f32 %v4612, %v4636
      %v4661 = vadd.f32 %v4613, %v4637
      %v4662 = vadd.f32 %v4614, %v4638
      %v4663 = vadd.f32 %v4615, %v4639
      %v4664 = vadd.f32 %v4616, %v4640
      %v4665 = vadd.f32 %v4617, %v4641
      %v4666 = vadd.f32 %v4618, %v4642
      %v4667 = vadd.f32 %v4619, %v4643
      %v4668 = vadd.f32 %v4620, %v4644
      %v4669 = vadd.f32 %v4621, %v4645
      %v4670 = vadd.f32 %v4622, %v4646
      %v4671 = vadd.f32 %v4623, %v4647
      %v4672 = vadd.f32 %v4624, %v4648
      %v4673 = vmul.f32 %v705, %v279
      %v4674 = vmul.f32 %v706, %v279
      %v4675 = vmul.f32 %v707, %v279
      %v4676 = vmul.f32 %v708, %v279
      %v4677 = vmul.f32 %v709, %v279
      %v4678 = vmul.f32 %v710, %v279
      %v4679 = vmul.f32 %v711, %v279
      %v4680 = vmul.f32 %v712, %v279
      %v4681 = vmul.f32 %v713, %v279
      %v4682 = vmul.f32 %v714, %v279
      %v4683 = vmul.f32 %v715, %v279
      %v4684 = vmul.f32 %v716, %v279
      %v4685 = vmul.f32 %v717, %v279
      %v4686 = vmul.f32 %v718, %v279
      %v4687 = vmul.f32 %v719, %v279
      %v4688 = vmul.f32 %v720, %v279
      %v4689 = vmul.f32 %v721, %v279
      %v4690 = vmul.f32 %v722, %v279
      %v4691 = vmul.f32 %v723, %v279
      %v4692 = vmul.f32 %v724, %v279
      %v4693 = vmul.f32 %v725, %v279
      %v4694 = vmul.f32 %v726, %v279
      %v4695 = vmul.f32 %v727, %v279
      %v4696 = vmul.f32 %v728, %v279
      %v4697 = vadd.f32 %v4649, %v4673
      %v4698 = vadd.f32 %v4650, %v4674
      %v4699 = vadd.f32 %v4651, %v4675
      %v4700 = vadd.f32 %v4652, %v4676
      %v4701 = vadd.f32 %v4653, %v4677
      %v4702 = vadd.f32 %v4654, %v4678
      %v4703 = vadd.f32 %v4655, %v4679
      %v4704 = vadd.f32 %v4656, %v4680
      %v4705 = vadd.f32 %v4657, %v4681
      %v4706 = vadd.f32 %v4658, %v4682
      %v4707 = vadd.f32 %v4659, %v4683
      %v4708 = vadd.f32 %v4660, %v4684
      %v4709 = vadd.f32 %v4661, %v4685
      %v4710 = vadd.f32 %v4662, %v4686
      %v4711 = vadd.f32 %v4663, %v4687
      %v4712 = vadd.f32 %v4664, %v4688
      %v4713 = vadd.f32 %v4665, %v4689
      %v4714 = vadd.f32 %v4666, %v4690
      %v4715 = vadd.f32 %v4667, %v4691
      %v4716 = vadd.f32 %v4668, %v4692
      %v4717 = vadd.f32 %v4669, %v4693
      %v4718 = vadd.f32 %v4670, %v4694
      %v4719 = vadd.f32 %v4671, %v4695
      %v4720 = vadd.f32 %v4672, %v4696
      %v4721 = vmul.f32 %v2343, %v354
      %v4722 = vmul.f32 %v2344, %v354
      %v4723 = vmul.f32 %v2345, %v354
      %v4724 = vmul.f32 %v2346, %v354
      %v4725 = vmul.f32 %v2347, %v354
      %v4726 = vmul.f32 %v2348, %v354
      %v4727 = vmul.f32 %v2349, %v354
      %v4728 = vmul.f32 %v2350, %v354
      %v4729 = vmul.f32 %v2351, %v354
      %v4730 = vmul.f32 %v2352, %v354
      %v4731 = vmul.f32 %v2353, %v354
      %v4732 = vmul.f32 %v2354, %v354
      %v4733 = vmul.f32 %v2355, %v354
      %v4734 = vmul.f32 %v2356, %v354
      %v4735 = vmul.f32 %v2357, %v354
      %v4736 = vmul.f32 %v2358, %v354
      %v4737 = vmul.f32 %v2359, %v354
      %v4738 = vmul.f32 %v2360, %v354
      %v4739 = vmul.f32 %v2361, %v354
      %v4740 = vmul.f32 %v2362, %v354
      %v4741 = vmul.f32 %v2363, %v354
      %v4742 = vmul.f32 %v2364, %v354
      %v4743 = vmul.f32 %v2365, %v354
      %v4744 = vmul.f32 %v2366, %v354
      %v4745 = vadd.f32 %v4697, %v4721
      %v4746 = vadd.f32 %v4698, %v4722
      %v4747 = vadd.f32 %v4699, %v4723
      %v4748 = vadd.f32 %v4700, %v4724
      %v4749 = vadd.f32 %v4701, %v4725
      %v4750 = vadd.f32 %v4702, %v4726
      %v4751 = vadd.f32 %v4703, %v4727
      %v4752 = vadd.f32 %v4704, %v4728
      %v4753 = vadd.f32 %v4705, %v4729
      %v4754 = vadd.f32 %v4706, %v4730
      %v4755 = vadd.f32 %v4707, %v4731
      %v4756 = vadd.f32 %v4708, %v4732
      %v4757 = vadd.f32 %v4709, %v4733
      %v4758 = vadd.f32 %v4710, %v4734
      %v4759 = vadd.f32 %v4711, %v4735
      %v4760 = vadd.f32 %v4712, %v4736
      %v4761 = vadd.f32 %v4713, %v4737
      %v4762 = vadd.f32 %v4714, %v4738
      %v4763 = vadd.f32 %v4715, %v4739
      %v4764 = vadd.f32 %v4716, %v4740
      %v4765 = vadd.f32 %v4717, %v4741
      %v4766 = vadd.f32 %v4718, %v4742
      %v4767 = vadd.f32 %v4719, %v4743
      %v4768 = vadd.f32 %v4720, %v4744
      %v4769 = vmul.f32 %v857, %v430
      %v4770 = vmul.f32 %v858, %v430
      %v4771 = vmul.f32 %v859, %v430
      %v4772 = vmul.f32 %v860, %v430
      %v4773 = vmul.f32 %v861, %v430
      %v4774 = vmul.f32 %v862, %v430
      %v4775 = vmul.f32 %v863, %v430
      %v4776 = vmul.f32 %v864, %v430
      %v4777 = vmul.f32 %v865, %v430
      %v4778 = vmul.f32 %v866, %v430
      %v4779 = vmul.f32 %v867, %v430
      %v4780 = vmul.f32 %v868, %v430
      %v4781 = vmul.f32 %v869, %v430
      %v4782 = vmul.f32 %v870, %v430
      %v4783 = vmul.f32 %v871, %v430
      %v4784 = vmul.f32 %v872, %v430
      %v4785 = vmul.f32 %v873, %v430
      %v4786 = vmul.f32 %v874, %v430
      %v4787 = vmul.f32 %v875, %v430
      %v4788 = vmul.f32 %v876, %v430
      %v4789 = vmul.f32 %v877, %v430
      %v4790 = vmul.f32 %v878, %v430
      %v4791 = vmul.f32 %v879, %v430
      %v4792 = vmul.f32 %v880, %v430
      %v4793 = vadd.f32 %v4745, %v4769
      %v4794 = vadd.f32 %v4746, %v4770
      %v4795 = vadd.f32 %v4747, %v4771
      %v4796 = vadd.f32 %v4748, %v4772
      %v4797 = vadd.f32 %v4749, %v4773
      %v4798 = vadd.f32 %v4750, %v4774
      %v4799 = vadd.f32 %v4751, %v4775
      %v4800 = vadd.f32 %v4752, %v4776
      %v4801 = vadd.f32 %v4753, %v4777
      %v4802 = vadd.f32 %v4754, %v4778
      %v4803 = vadd.f32 %v4755, %v4779
      %v4804 = vadd.f32 %v4756, %v4780
      %v4805 = vadd.f32 %v4757, %v4781
      %v4806 = vadd.f32 %v4758, %v4782
      %v4807 = vadd.f32 %v4759, %v4783
      %v4808 = vadd.f32 %v4760, %v4784
      %v4809 = vadd.f32 %v4761, %v4785
      %v4810 = vadd.f32 %v4762, %v4786
      %v4811 = vadd.f32 %v4763, %v4787
      %v4812 = vadd.f32 %v4764, %v4788
      %v4813 = vadd.f32 %v4765, %v4789
      %v4814 = vadd.f32 %v4766, %v4790
      %v4815 = vadd.f32 %v4767, %v4791
      %v4816 = vadd.f32 %v4768, %v4792
      %v4817 = vmul.f32 %v932, %v506
      %v4818 = vmul.f32 %v933, %v506
      %v4819 = vmul.f32 %v934, %v506
      %v4820 = vmul.f32 %v935, %v506
      %v4821 = vmul.f32 %v936, %v506
      %v4822 = vmul.f32 %v937, %v506
      %v4823 = vmul.f32 %v938, %v506
      %v4824 = vmul.f32 %v939, %v506
      %v4825 = vmul.f32 %v940, %v506
      %v4826 = vmul.f32 %v941, %v506
      %v4827 = vmul.f32 %v942, %v506
      %v4828 = vmul.f32 %v943, %v506
      %v4829 = vmul.f32 %v944, %v506
      %v4830 = vmul.f32 %v945, %v506
      %v4831 = vmul.f32 %v946, %v506
      %v4832 = vmul.f32 %v947, %v506
      %v4833 = vmul.f32 %v948, %v506
      %v4834 = vmul.f32 %v949, %v506
      %v4835 = vmul.f32 %v950, %v506
      %v4836 = vmul.f32 %v951, %v506
      %v4837 = vmul.f32 %v952, %v506
      %v4838 = vmul.f32 %v953, %v506
      %v4839 = vmul.f32 %v954, %v506
      %v4840 = vmul.f32 %v955, %v506
      %v4841 = vadd.f32 %v4793, %v4817
      %v4842 = vadd.f32 %v4794, %v4818
      %v4843 = vadd.f32 %v4795, %v4819
      %v4844 = vadd.f32 %v4796, %v4820
      %v4845 = vadd.f32 %v4797, %v4821
      %v4846 = vadd.f32 %v4798, %v4822
      %v4847 = vadd.f32 %v4799, %v4823
      %v4848 = vadd.f32 %v4800, %v4824
      %v4849 = vadd.f32 %v4801, %v4825
      %v4850 = vadd.f32 %v4802, %v4826
      %v4851 = vadd.f32 %v4803, %v4827
      %v4852 = vadd.f32 %v4804, %v4828
      %v4853 = vadd.f32 %v4805, %v4829
      %v4854 = vadd.f32 %v4806, %v4830
      %v4855 = vadd.f32 %v4807, %v4831
      %v4856 = vadd.f32 %v4808, %v4832
      %v4857 = vadd.f32 %v4809, %v4833
      %v4858 = vadd.f32 %v4810, %v4834
      %v4859 = vadd.f32 %v4811, %v4835
      %v4860 = vadd.f32 %v4812, %v4836
      %v4861 = vadd.f32 %v4813, %v4837
      %v4862 = vadd.f32 %v4814, %v4838
      %v4863 = vadd.f32 %v4815, %v4839
      %v4864 = vadd.f32 %v4816, %v4840
      %v4865 = vmul.f32 %v1007, %v581
      %v4866 = vmul.f32 %v1008, %v581
      %v4867 = vmul.f32 %v1009, %v581
      %v4868 = vmul.f32 %v1010, %v581
      %v4869 = vmul.f32 %v1011, %v581
      %v4870 = vmul.f32 %v1012, %v581
      %v4871 = vmul.f32 %v1013, %v581
      %v4872 = vmul.f32 %v1014, %v581
      %v4873 = vmul.f32 %v1015, %v581
      %v4874 = vmul.f32 %v1016, %v581
      %v4875 = vmul.f32 %v1017, %v581
      %v4876 = vmul.f32 %v1018, %v581
      %v4877 = vmul.f32 %v1019, %v581
      %v4878 = vmul.f32 %v1020, %v581
      %v4879 = vmul.f32 %v1021, %v581
      %v4880 = vmul.f32 %v1022, %v581
      %v4881 = vmul.f32 %v1023, %v581
      %v4882 = vmul.f32 %v1024, %v581
      %v4883 = vmul.f32 %v1025, %v581
      %v4884 = vmul.f32 %v1026, %v581
      %v4885 = vmul.f32 %v1027, %v581
      %v4886 = vmul.f32 %v1028, %v581
      %v4887 = vmul.f32 %v1029, %v581
      %v4888 = vmul.f32 %v1030, %v581
      %v4889 = vadd.f32 %v4841, %v4865
      %v4890 = vadd.f32 %v4842, %v4866
      %v4891 = vadd.f32 %v4843, %v4867
      %v4892 = vadd.f32 %v4844, %v4868
      %v4893 = vadd.f32 %v4845, %v4869
      %v4894 = vadd.f32 %v4846, %v4870
      %v4895 = vadd.f32 %v4847, %v4871
      %v4896 = vadd.f32 %v4848, %v4872
      %v4897 = vadd.f32 %v4849, %v4873
      %v4898 = vadd.f32 %v4850, %v4874
      %v4899 = vadd.f32 %v4851, %v4875
      %v4900 = vadd.f32 %v4852, %v4876
      %v4901 = vadd.f32 %v4853, %v4877
      %v4902 = vadd.f32 %v4854, %v4878
      %v4903 = vadd.f32 %v4855, %v4879
      %v4904 = vadd.f32 %v4856, %v4880
      %v4905 = vadd.f32 %v4857, %v4881
      %v4906 = vadd.f32 %v4858, %v4882
      %v4907 = vadd.f32 %v4859, %v4883
      %v4908 = vadd.f32 %v4860, %v4884
      %v4909 = vadd.f32 %v4861, %v4885
      %v4910 = vadd.f32 %v4862, %v4886
      %v4911 = vadd.f32 %v4863, %v4887
      %v4912 = vadd.f32 %v4864, %v4888
      %v4913 = vmul.f32 %v1082, %v656
      %v4914 = vmul.f32 %v1083, %v656
      %v4915 = vmul.f32 %v1084, %v656
      %v4916 = vmul.f32 %v1085, %v656
      %v4917 = vmul.f32 %v1086, %v656
      %v4918 = vmul.f32 %v1087, %v656
      %v4919 = vmul.f32 %v1088, %v656
      %v4920 = vmul.f32 %v1089, %v656
      %v4921 = vmul.f32 %v1090, %v656
      %v4922 = vmul.f32 %v1091, %v656
      %v4923 = vmul.f32 %v1092, %v656
      %v4924 = vmul.f32 %v1093, %v656
      %v4925 = vmul.f32 %v1094, %v656
      %v4926 = vmul.f32 %v1095, %v656
      %v4927 = vmul.f32 %v1096, %v656
      %v4928 = vmul.f32 %v1097, %v656
      %v4929 = vmul.f32 %v1098, %v656
      %v4930 = vmul.f32 %v1099, %v656
      %v4931 = vmul.f32 %v1100, %v656
      %v4932 = vmul.f32 %v1101, %v656
      %v4933 = vmul.f32 %v1102, %v656
      %v4934 = vmul.f32 %v1103, %v656
      %v4935 = vmul.f32 %v1104, %v656
      %v4936 = vmul.f32 %v1105, %v656
      %v4937 = vadd.f32 %v4889, %v4913
      %v4938 = vadd.f32 %v4890, %v4914
      %v4939 = vadd.f32 %v4891, %v4915
      %v4940 = vadd.f32 %v4892, %v4916
      %v4941 = vadd.f32 %v4893, %v4917
      %v4942 = vadd.f32 %v4894, %v4918
      %v4943 = vadd.f32 %v4895, %v4919
      %v4944 = vadd.f32 %v4896, %v4920
      %v4945 = vadd.f32 %v4897, %v4921
      %v4946 = vadd.f32 %v4898, %v4922
      %v4947 = vadd.f32 %v4899, %v4923
      %v4948 = vadd.f32 %v4900, %v4924
      %v4949 = vadd.f32 %v4901, %v4925
      %v4950 = vadd.f32 %v4902, %v4926
      %v4951 = vadd.f32 %v4903, %v4927
      %v4952 = vadd.f32 %v4904, %v4928
      %v4953 = vadd.f32 %v4905, %v4929
      %v4954 = vadd.f32 %v4906, %v4930
      %v4955 = vadd.f32 %v4907, %v4931
      %v4956 = vadd.f32 %v4908, %v4932
      %v4957 = vadd.f32 %v4909, %v4933
      %v4958 = vadd.f32 %v4910, %v4934
      %v4959 = vadd.f32 %v4911, %v4935
      %v4960 = vadd.f32 %v4912, %v4936
      %v4961 = vmul.f32 %v2607, %v731
      %v4962 = vmul.f32 %v2608, %v731
      %v4963 = vmul.f32 %v2609, %v731
      %v4964 = vmul.f32 %v2610, %v731
      %v4965 = vmul.f32 %v2611, %v731
      %v4966 = vmul.f32 %v2612, %v731
      %v4967 = vmul.f32 %v2613, %v731
      %v4968 = vmul.f32 %v2614, %v731
      %v4969 = vmul.f32 %v2615, %v731
      %v4970 = vmul.f32 %v2616, %v731
      %v4971 = vmul.f32 %v2617, %v731
      %v4972 = vmul.f32 %v2618, %v731
      %v4973 = vmul.f32 %v2619, %v731
      %v4974 = vmul.f32 %v2620, %v731
      %v4975 = vmul.f32 %v2621, %v731
      %v4976 = vmul.f32 %v2622, %v731
      %v4977 = vmul.f32 %v2623, %v731
      %v4978 = vmul.f32 %v2624, %v731
      %v4979 = vmul.f32 %v2625, %v731
      %v4980 = vmul.f32 %v2626, %v731
      %v4981 = vmul.f32 %v2627, %v731
      %v4982 = vmul.f32 %v2628, %v731
      %v4983 = vmul.f32 %v2629, %v731
      %v4984 = vmul.f32 %v2630, %v731
      %v4985 = vadd.f32 %v4937, %v4961
      %v4986 = vadd.f32 %v4938, %v4962
      %v4987 = vadd.f32 %v4939, %v4963
      %v4988 = vadd.f32 %v4940, %v4964
      %v4989 = vadd.f32 %v4941, %v4965
      %v4990 = vadd.f32 %v4942, %v4966
      %v4991 = vadd.f32 %v4943, %v4967
      %v4992 = vadd.f32 %v4944, %v4968
      %v4993 = vadd.f32 %v4945, %v4969
      %v4994 = vadd.f32 %v4946, %v4970
      %v4995 = vadd.f32 %v4947, %v4971
      %v4996 = vadd.f32 %v4948, %v4972
      %v4997 = vadd.f32 %v4949, %v4973
      %v4998 = vadd.f32 %v4950, %v4974
      %v4999 = vadd.f32 %v4951, %v4975
      %v5000 = vadd.f32 %v4952, %v4976
      %v5001 = vadd.f32 %v4953, %v4977
      %v5002 = vadd.f32 %v4954, %v4978
      %v5003 = vadd.f32 %v4955, %v4979
      %v5004 = vadd.f32 %v4956, %v4980
      %v5005 = vadd.f32 %v4957, %v4981
      %v5006 = vadd.f32 %v4958, %v4982
      %v5007 = vadd.f32 %v4959, %v4983
      %v5008 = vadd.f32 %v4960, %v4984
      %v5009 = vmul.f32 %v1234, %v807
      %v5010 = vmul.f32 %v1235, %v807
      %v5011 = vmul.f32 %v1236, %v807
      %v5012 = vmul.f32 %v1237, %v807
      %v5013 = vmul.f32 %v1238, %v807
      %v5014 = vmul.f32 %v1239, %v807
      %v5015 = vmul.f32 %v1240, %v807
      %v5016 = vmul.f32 %v1241, %v807
      %v5017 = vmul.f32 %v1242, %v807
      %v5018 = vmul.f32 %v1243, %v807
      %v5019 = vmul.f32 %v1244, %v807
      %v5020 = vmul.f32 %v1245, %v807
      %v5021 = vmul.f32 %v1246, %v807
      %v5022 = vmul.f32 %v1247, %v807
      %v5023 = vmul.f32 %v1248, %v807
      %v5024 = vmul.f32 %v1249, %v807
      %v5025 = vmul.f32 %v1250, %v807
      %v5026 = vmul.f32 %v1251, %v807
      %v5027 = vmul.f32 %v1252, %v807
      %v5028 = vmul.f32 %v1253, %v807
      %v5029 = vmul.f32 %v1254, %v807
      %v5030 = vmul.f32 %v1255, %v807
      %v5031 = vmul.f32 %v1256, %v807
      %v5032 = vmul.f32 %v1257, %v807
      %v5033 = vadd.f32 %v4985, %v5009
      %v5034 = vadd.f32 %v4986, %v5010
      %v5035 = vadd.f32 %v4987, %v5011
      %v5036 = vadd.f32 %v4988, %v5012
      %v5037 = vadd.f32 %v4989, %v5013
      %v5038 = vadd.f32 %v4990, %v5014
      %v5039 = vadd.f32 %v4991, %v5015
      %v5040 = vadd.f32 %v4992, %v5016
      %v5041 = vadd.f32 %v4993, %v5017
      %v5042 = vadd.f32 %v4994, %v5018
      %v5043 = vadd.f32 %v4995, %v5019
      %v5044 = vadd.f32 %v4996, %v5020
      %v5045 = vadd.f32 %v4997, %v5021
      %v5046 = vadd.f32 %v4998, %v5022
      %v5047 = vadd.f32 %v4999, %v5023
      %v5048 = vadd.f32 %v5000, %v5024
      %v5049 = vadd.f32 %v5001, %v5025
      %v5050 = vadd.f32 %v5002, %v5026
      %v5051 = vadd.f32 %v5003, %v5027
      %v5052 = vadd.f32 %v5004, %v5028
      %v5053 = vadd.f32 %v5005, %v5029
      %v5054 = vadd.f32 %v5006, %v5030
      %v5055 = vadd.f32 %v5007, %v5031
      %v5056 = vadd.f32 %v5008, %v5032
      %v5057 = vmul.f32 %v1309, %v883
      %v5058 = vmul.f32 %v1310, %v883
      %v5059 = vmul.f32 %v1311, %v883
      %v5060 = vmul.f32 %v1312, %v883
      %v5061 = vmul.f32 %v1313, %v883
      %v5062 = vmul.f32 %v1314, %v883
      %v5063 = vmul.f32 %v1315, %v883
      %v5064 = vmul.f32 %v1316, %v883
      %v5065 = vmul.f32 %v1317, %v883
      %v5066 = vmul.f32 %v1318, %v883
      %v5067 = vmul.f32 %v1319, %v883
      %v5068 = vmul.f32 %v1320, %v883
      %v5069 = vmul.f32 %v1321, %v883
      %v5070 = vmul.f32 %v1322, %v883
      %v5071 = vmul.f32 %v1323, %v883
      %v5072 = vmul.f32 %v1324, %v883
      %v5073 = vmul.f32 %v1325, %v883
      %v5074 = vmul.f32 %v1326, %v883
      %v5075 = vmul.f32 %v1327, %v883
      %v5076 = vmul.f32 %v1328, %v883
      %v5077 = vmul.f32 %v1329, %v883
      %v5078 = vmul.f32 %v1330, %v883
      %v5079 = vmul.f32 %v1331, %v883
      %v5080 = vmul.f32 %v1332, %v883
      %v5081 = vadd.f32 %v5033, %v5057
      %v5082 = vadd.f32 %v5034, %v5058
      %v5083 = vadd.f32 %v5035, %v5059
      %v5084 = vadd.f32 %v5036, %v5060
      %v5085 = vadd.f32 %v5037, %v5061
      %v5086 = vadd.f32 %v5038, %v5062
      %v5087 = vadd.f32 %v5039, %v5063
      %v5088 = vadd.f32 %v5040, %v5064
      %v5089 = vadd.f32 %v5041, %v5065
      %v5090 = vadd.f32 %v5042, %v5066
      %v5091 = vadd.f32 %v5043, %v5067
      %v5092 = vadd.f32 %v5044, %v5068
      %v5093 = vadd.f32 %v5045, %v5069
      %v5094 = vadd.f32 %v5046, %v5070
      %v5095 = vadd.f32 %v5047, %v5071
      %v5096 = vadd.f32 %v5048, %v5072
      %v5097 = vadd.f32 %v5049, %v5073
      %v5098 = vadd.f32 %v5050, %v5074
      %v5099 = vadd.f32 %v5051, %v5075
      %v5100 = vadd.f32 %v5052, %v5076
      %v5101 = vadd.f32 %v5053, %v5077
      %v5102 = vadd.f32 %v5054, %v5078
      %v5103 = vadd.f32 %v5055, %v5079
      %v5104 = vadd.f32 %v5056, %v5080
      %v5105 = vmul.f32 %v1384, %v958
      %v5106 = vmul.f32 %v1385, %v958
      %v5107 = vmul.f32 %v1386, %v958
      %v5108 = vmul.f32 %v1387, %v958
      %v5109 = vmul.f32 %v1388, %v958
      %v5110 = vmul.f32 %v1389, %v958
      %v5111 = vmul.f32 %v1390, %v958
      %v5112 = vmul.f32 %v1391, %v958
      %v5113 = vmul.f32 %v1392, %v958
      %v5114 = vmul.f32 %v1393, %v958
      %v5115 = vmul.f32 %v1394, %v958
      %v5116 = vmul.f32 %v1395, %v958
      %v5117 = vmul.f32 %v1396, %v958
      %v5118 = vmul.f32 %v1397, %v958
      %v5119 = vmul.f32 %v1398, %v958
      %v5120 = vmul.f32 %v1399, %v958
      %v5121 = vmul.f32 %v1400, %v958
      %v5122 = vmul.f32 %v1401, %v958
      %v5123 = vmul.f32 %v1402, %v958
      %v5124 = vmul.f32 %v1403, %v958
      %v5125 = vmul.f32 %v1404, %v958
      %v5126 = vmul.f32 %v1405, %v958
      %v5127 = vmul.f32 %v1406, %v958
      %v5128 = vmul.f32 %v1407, %v958
      %v5129 = vadd.f32 %v5081, %v5105
      %v5130 = vadd.f32 %v5082, %v5106
      %v5131 = vadd.f32 %v5083, %v5107
      %v5132 = vadd.f32 %v5084, %v5108
      %v5133 = vadd.f32 %v5085, %v5109
      %v5134 = vadd.f32 %v5086, %v5110
      %v5135 = vadd.f32 %v5087, %v5111
      %v5136 = vadd.f32 %v5088, %v5112
      %v5137 = vadd.f32 %v5089, %v5113
      %v5138 = vadd.f32 %v5090, %v5114
      %v5139 = vadd.f32 %v5091, %v5115
      %v5140 = vadd.f32 %v5092, %v5116
      %v5141 = vadd.f32 %v5093, %v5117
      %v5142 = vadd.f32 %v5094, %v5118
      %v5143 = vadd.f32 %v5095, %v5119
      %v5144 = vadd.f32 %v5096, %v5120
      %v5145 = vadd.f32 %v5097, %v5121
      %v5146 = vadd.f32 %v5098, %v5122
      %v5147 = vadd.f32 %v5099, %v5123
      %v5148 = vadd.f32 %v5100, %v5124
      %v5149 = vadd.f32 %v5101, %v5125
      %v5150 = vadd.f32 %v5102, %v5126
      %v5151 = vadd.f32 %v5103, %v5127
      %v5152 = vadd.f32 %v5104, %v5128
      %v5153 = vmul.f32 %v1459, %v1033
      %v5154 = vmul.f32 %v1460, %v1033
      %v5155 = vmul.f32 %v1461, %v1033
      %v5156 = vmul.f32 %v1462, %v1033
      %v5157 = vmul.f32 %v1463, %v1033
      %v5158 = vmul.f32 %v1464, %v1033
      %v5159 = vmul.f32 %v1465, %v1033
      %v5160 = vmul.f32 %v1466, %v1033
      %v5161 = vmul.f32 %v1467, %v1033
      %v5162 = vmul.f32 %v1468, %v1033
      %v5163 = vmul.f32 %v1469, %v1033
      %v5164 = vmul.f32 %v1470, %v1033
      %v5165 = vmul.f32 %v1471, %v1033
      %v5166 = vmul.f32 %v1472, %v1033
      %v5167 = vmul.f32 %v1473, %v1033
      %v5168 = vmul.f32 %v1474, %v1033
      %v5169 = vmul.f32 %v1475, %v1033
      %v5170 = vmul.f32 %v1476, %v1033
      %v5171 = vmul.f32 %v1477, %v1033
      %v5172 = vmul.f32 %v1478, %v1033
      %v5173 = vmul.f32 %v1479, %v1033
      %v5174 = vmul.f32 %v1480, %v1033
      %v5175 = vmul.f32 %v1481, %v1033
      %v5176 = vmul.f32 %v1482, %v1033
      %v5177 = vadd.f32 %v5129, %v5153
      %v5178 = vadd.f32 %v5130, %v5154
      %v5179 = vadd.f32 %v5131, %v5155
      %v5180 = vadd.f32 %v5132, %v5156
      %v5181 = vadd.f32 %v5133, %v5157
      %v5182 = vadd.f32 %v5134, %v5158
      %v5183 = vadd.f32 %v5135, %v5159
      %v5184 = vadd.f32 %v5136, %v5160
      %v5185 = vadd.f32 %v5137, %v5161
      %v5186 = vadd.f32 %v5138, %v5162
      %v5187 = vadd.f32 %v5139, %v5163
      %v5188 = vadd.f32 %v5140, %v5164
      %v5189 = vadd.f32 %v5141, %v5165
      %v5190 = vadd.f32 %v5142, %v5166
      %v5191 = vadd.f32 %v5143, %v5167
      %v5192 = vadd.f32 %v5144, %v5168
      %v5193 = vadd.f32 %v5145, %v5169
      %v5194 = vadd.f32 %v5146, %v5170
      %v5195 = vadd.f32 %v5147, %v5171
      %v5196 = vadd.f32 %v5148, %v5172
      %v5197 = vadd.f32 %v5149, %v5173
      %v5198 = vadd.f32 %v5150, %v5174
      %v5199 = vadd.f32 %v5151, %v5175
      %v5200 = vadd.f32 %v5152, %v5176
      %v5201 = vmul.f32 %v2871, %v1108
      %v5202 = vmul.f32 %v2872, %v1108
      %v5203 = vmul.f32 %v2873, %v1108
      %v5204 = vmul.f32 %v2874, %v1108
      %v5205 = vmul.f32 %v2875, %v1108
      %v5206 = vmul.f32 %v2876, %v1108
      %v5207 = vmul.f32 %v2877, %v1108
      %v5208 = vmul.f32 %v2878, %v1108
      %v5209 = vmul.f32 %v2879, %v1108
      %v5210 = vmul.f32 %v2880, %v1108
      %v5211 = vmul.f32 %v2881, %v1108
      %v5212 = vmul.f32 %v2882, %v1108
      %v5213 = vmul.f32 %v2883, %v1108
      %v5214 = vmul.f32 %v2884, %v1108
      %v5215 = vmul.f32 %v2885, %v1108
      %v5216 = vmul.f32 %v2886, %v1108
      %v5217 = vmul.f32 %v2887, %v1108
      %v5218 = vmul.f32 %v2888, %v1108
      %v5219 = vmul.f32 %v2889, %v1108
      %v5220 = vmul.f32 %v2890, %v1108
      %v5221 = vmul.f32 %v2891, %v1108
      %v5222 = vmul.f32 %v2892, %v1108
      %v5223 = vmul.f32 %v2893, %v1108
      %v5224 = vmul.f32 %v2894, %v1108
      %v5225 = vadd.f32 %v5177, %v5201
      %v5226 = vadd.f32 %v5178, %v5202
      %v5227 = vadd.f32 %v5179, %v5203
      %v5228 = vadd.f32 %v5180, %v5204
      %v5229 = vadd.f32 %v5181, %v5205
      %v5230 = vadd.f32 %v5182, %v5206
      %v5231 = vadd.f32 %v5183, %v5207
      %v5232 = vadd.f32 %v5184, %v5208
      %v5233 = vadd.f32 %v5185, %v5209
      %v5234 = vadd.f32 %v5186, %v5210
      %v5235 = vadd.f32 %v5187, %v5211
      %v5236 = vadd.f32 %v5188, %v5212
      %v5237 = vadd.f32 %v5189, %v5213
      %v5238 = vadd.f32 %v5190, %v5214
      %v5239 = vadd.f32 %v5191, %v5215
      %v5240 = vadd.f32 %v5192, %v5216
      %v5241 = vadd.f32 %v5193, %v5217
      %v5242 = vadd.f32 %v5194, %v5218
      %v5243 = vadd.f32 %v5195, %v5219
      %v5244 = vadd.f32 %v5196, %v5220
      %v5245 = vadd.f32 %v5197, %v5221
      %v5246 = vadd.f32 %v5198, %v5222
      %v5247 = vadd.f32 %v5199, %v5223
      %v5248 = vadd.f32 %v5200, %v5224
      %v5249 = vmul.f32 %v1611, %v1184
      %v5250 = vmul.f32 %v1612, %v1184
      %v5251 = vmul.f32 %v1613, %v1184
      %v5252 = vmul.f32 %v1614, %v1184
      %v5253 = vmul.f32 %v1615, %v1184
      %v5254 = vmul.f32 %v1616, %v1184
      %v5255 = vmul.f32 %v1617, %v1184
      %v5256 = vmul.f32 %v1618, %v1184
      %v5257 = vmul.f32 %v1619, %v1184
      %v5258 = vmul.f32 %v1620, %v1184
      %v5259 = vmul.f32 %v1621, %v1184
      %v5260 = vmul.f32 %v1622, %v1184
      %v5261 = vmul.f32 %v1623, %v1184
      %v5262 = vmul.f32 %v1624, %v1184
      %v5263 = vmul.f32 %v1625, %v1184
      %v5264 = vmul.f32 %v1626, %v1184
      %v5265 = vmul.f32 %v1627, %v1184
      %v5266 = vmul.f32 %v1628, %v1184
      %v5267 = vmul.f32 %v1629, %v1184
      %v5268 = vmul.f32 %v1630, %v1184
      %v5269 = vmul.f32 %v1631, %v1184
      %v5270 = vmul.f32 %v1632, %v1184
      %v5271 = vmul.f32 %v1633, %v1184
      %v5272 = vmul.f32 %v1634, %v1184
      %v5273 = vadd.f32 %v5225, %v5249
      %v5274 = vadd.f32 %v5226, %v5250
      %v5275 = vadd.f32 %v5227, %v5251
      %v5276 = vadd.f32 %v5228, %v5252
      %v5277 = vadd.f32 %v5229, %v5253
      %v5278 = vadd.f32 %v5230, %v5254
      %v5279 = vadd.f32 %v5231, %v5255
      %v5280 = vadd.f32 %v5232, %v5256
      %v5281 = vadd.f32 %v5233, %v5257
      %v5282 = vadd.f32 %v5234, %v5258
      %v5283 = vadd.f32 %v5235, %v5259
      %v5284 = vadd.f32 %v5236, %v5260
      %v5285 = vadd.f32 %v5237, %v5261
      %v5286 = vadd.f32 %v5238, %v5262
      %v5287 = vadd.f32 %v5239, %v5263
      %v5288 = vadd.f32 %v5240, %v5264
      %v5289 = vadd.f32 %v5241, %v5265
      %v5290 = vadd.f32 %v5242, %v5266
      %v5291 = vadd.f32 %v5243, %v5267
      %v5292 = vadd.f32 %v5244, %v5268
      %v5293 = vadd.f32 %v5245, %v5269
      %v5294 = vadd.f32 %v5246, %v5270
      %v5295 = vadd.f32 %v5247, %v5271
      %v5296 = vadd.f32 %v5248, %v5272
      %v5297 = vmul.f32 %v1686, %v1260
      %v5298 = vmul.f32 %v1687, %v1260
      %v5299 = vmul.f32 %v1688, %v1260
      %v5300 = vmul.f32 %v1689, %v1260
      %v5301 = vmul.f32 %v1690, %v1260
      %v5302 = vmul.f32 %v1691, %v1260
      %v5303 = vmul.f32 %v1692, %v1260
      %v5304 = vmul.f32 %v1693, %v1260
      %v5305 = vmul.f32 %v1694, %v1260
      %v5306 = vmul.f32 %v1695, %v1260
      %v5307 = vmul.f32 %v1696, %v1260
      %v5308 = vmul.f32 %v1697, %v1260
      %v5309 = vmul.f32 %v1698, %v1260
      %v5310 = vmul.f32 %v1699, %v1260
      %v5311 = vmul.f32 %v1700, %v1260
      %v5312 = vmul.f32 %v1701, %v1260
      %v5313 = vmul.f32 %v1702, %v1260
      %v5314 = vmul.f32 %v1703, %v1260
      %v5315 = vmul.f32 %v1704, %v1260
      %v5316 = vmul.f32 %v1705, %v1260
      %v5317 = vmul.f32 %v1706, %v1260
      %v5318 = vmul.f32 %v1707, %v1260
      %v5319 = vmul.f32 %v1708, %v1260
      %v5320 = vmul.f32 %v1709, %v1260
      %v5321 = vadd.f32 %v5273, %v5297
      %v5322 = vadd.f32 %v5274, %v5298
      %v5323 = vadd.f32 %v5275, %v5299
      %v5324 = vadd.f32 %v5276, %v5300
      %v5325 = vadd.f32 %v5277, %v5301
      %v5326 = vadd.f32 %v5278, %v5302
      %v5327 = vadd.f32 %v5279, %v5303
      %v5328 = vadd.f32 %v5280, %v5304
      %v5329 = vadd.f32 %v5281, %v5305
      %v5330 = vadd.f32 %v5282, %v5306
      %v5331 = vadd.f32 %v5283, %v5307
      %v5332 = vadd.f32 %v5284, %v5308
      %v5333 = vadd.f32 %v5285, %v5309
      %v5334 = vadd.f32 %v5286, %v5310
      %v5335 = vadd.f32 %v5287, %v5311
      %v5336 = vadd.f32 %v5288, %v5312
      %v5337 = vadd.f32 %v5289, %v5313
      %v5338 = vadd.f32 %v5290, %v5314
      %v5339 = vadd.f32 %v5291, %v5315
      %v5340 = vadd.f32 %v5292, %v5316
      %v5341 = vadd.f32 %v5293, %v5317
      %v5342 = vadd.f32 %v5294, %v5318
      %v5343 = vadd.f32 %v5295, %v5319
      %v5344 = vadd.f32 %v5296, %v5320
      %v5345 = vmul.f32 %v1761, %v1335
      %v5346 = vmul.f32 %v1762, %v1335
      %v5347 = vmul.f32 %v1763, %v1335
      %v5348 = vmul.f32 %v1764, %v1335
      %v5349 = vmul.f32 %v1765, %v1335
      %v5350 = vmul.f32 %v1766, %v1335
      %v5351 = vmul.f32 %v1767, %v1335
      %v5352 = vmul.f32 %v1768, %v1335
      %v5353 = vmul.f32 %v1769, %v1335
      %v5354 = vmul.f32 %v1770, %v1335
      %v5355 = vmul.f32 %v1771, %v1335
      %v5356 = vmul.f32 %v1772, %v1335
      %v5357 = vmul.f32 %v1773, %v1335
      %v5358 = vmul.f32 %v1774, %v1335
      %v5359 = vmul.f32 %v1775, %v1335
      %v5360 = vmul.f32 %v1776, %v1335
      %v5361 = vmul.f32 %v1777, %v1335
      %v5362 = vmul.f32 %v1778, %v1335
      %v5363 = vmul.f32 %v1779, %v1335
      %v5364 = vmul.f32 %v1780, %v1335
      %v5365 = vmul.f32 %v1781, %v1335
      %v5366 = vmul.f32 %v1782, %v1335
      %v5367 = vmul.f32 %v1783, %v1335
      %v5368 = vmul.f32 %v1784, %v1335
      %v5369 = vadd.f32 %v5321, %v5345
      %v5370 = vadd.f32 %v5322, %v5346
      %v5371 = vadd.f32 %v5323, %v5347
      %v5372 = vadd.f32 %v5324, %v5348
      %v5373 = vadd.f32 %v5325, %v5349
      %v5374 = vadd.f32 %v5326, %v5350
      %v5375 = vadd.f32 %v5327, %v5351
      %v5376 = vadd.f32 %v5328, %v5352
      %v5377 = vadd.f32 %v5329, %v5353
      %v5378 = vadd.f32 %v5330, %v5354
      %v5379 = vadd.f32 %v5331, %v5355
      %v5380 = vadd.f32 %v5332, %v5356
      %v5381 = vadd.f32 %v5333, %v5357
      %v5382 = vadd.f32 %v5334, %v5358
      %v5383 = vadd.f32 %v5335, %v5359
      %v5384 = vadd.f32 %v5336, %v5360
      %v5385 = vadd.f32 %v5337, %v5361
      %v5386 = vadd.f32 %v5338, %v5362
      %v5387 = vadd.f32 %v5339, %v5363
      %v5388 = vadd.f32 %v5340, %v5364
      %v5389 = vadd.f32 %v5341, %v5365
      %v5390 = vadd.f32 %v5342, %v5366
      %v5391 = vadd.f32 %v5343, %v5367
      %v5392 = vadd.f32 %v5344, %v5368
      %v5393 = vmul.f32 %v1836, %v1410
      %v5394 = vmul.f32 %v1837, %v1410
      %v5395 = vmul.f32 %v1838, %v1410
      %v5396 = vmul.f32 %v1839, %v1410
      %v5397 = vmul.f32 %v1840, %v1410
      %v5398 = vmul.f32 %v1841, %v1410
      %v5399 = vmul.f32 %v1842, %v1410
      %v5400 = vmul.f32 %v1843, %v1410
      %v5401 = vmul.f32 %v1844, %v1410
      %v5402 = vmul.f32 %v1845, %v1410
      %v5403 = vmul.f32 %v1846, %v1410
      %v5404 = vmul.f32 %v1847, %v1410
      %v5405 = vmul.f32 %v1848, %v1410
      %v5406 = vmul.f32 %v1849, %v1410
      %v5407 = vmul.f32 %v1850, %v1410
      %v5408 = vmul.f32 %v1851, %v1410
      %v5409 = vmul.f32 %v1852, %v1410
      %v5410 = vmul.f32 %v1853, %v1410
      %v5411 = vmul.f32 %v1854, %v1410
      %v5412 = vmul.f32 %v1855, %v1410
      %v5413 = vmul.f32 %v1856, %v1410
      %v5414 = vmul.f32 %v1857, %v1410
      %v5415 = vmul.f32 %v1858, %v1410
      %v5416 = vmul.f32 %v1859, %v1410
      %v5417 = vadd.f32 %v5369, %v5393
      %v5418 = vadd.f32 %v5370, %v5394
      %v5419 = vadd.f32 %v5371, %v5395
      %v5420 = vadd.f32 %v5372, %v5396
      %v5421 = vadd.f32 %v5373, %v5397
      %v5422 = vadd.f32 %v5374, %v5398
      %v5423 = vadd.f32 %v5375, %v5399
      %v5424 = vadd.f32 %v5376, %v5400
      %v5425 = vadd.f32 %v5377, %v5401
      %v5426 = vadd.f32 %v5378, %v5402
      %v5427 = vadd.f32 %v5379, %v5403
      %v5428 = vadd.f32 %v5380, %v5404
      %v5429 = vadd.f32 %v5381, %v5405
      %v5430 = vadd.f32 %v5382, %v5406
      %v5431 = vadd.f32 %v5383, %v5407
      %v5432 = vadd.f32 %v5384, %v5408
      %v5433 = vadd.f32 %v5385, %v5409
      %v5434 = vadd.f32 %v5386, %v5410
      %v5435 = vadd.f32 %v5387, %v5411
      %v5436 = vadd.f32 %v5388, %v5412
      %v5437 = vadd.f32 %v5389, %v5413
      %v5438 = vadd.f32 %v5390, %v5414
      %v5439 = vadd.f32 %v5391, %v5415
      %v5440 = vadd.f32 %v5392, %v5416
      %v5441 = vmul.f32 %v3135, %v1485
      %v5442 = vmul.f32 %v3136, %v1485
      %v5443 = vmul.f32 %v3137, %v1485
      %v5444 = vmul.f32 %v3138, %v1485
      %v5445 = vmul.f32 %v3139, %v1485
      %v5446 = vmul.f32 %v3140, %v1485
      %v5447 = vmul.f32 %v3141, %v1485
      %v5448 = vmul.f32 %v3142, %v1485
      %v5449 = vmul.f32 %v3143, %v1485
      %v5450 = vmul.f32 %v3144, %v1485
      %v5451 = vmul.f32 %v3145, %v1485
      %v5452 = vmul.f32 %v3146, %v1485
      %v5453 = vmul.f32 %v3147, %v1485
      %v5454 = vmul.f32 %v3148, %v1485
      %v5455 = vmul.f32 %v3149, %v1485
      %v5456 = vmul.f32 %v3150, %v1485
      %v5457 = vmul.f32 %v3151, %v1485
      %v5458 = vmul.f32 %v3152, %v1485
      %v5459 = vmul.f32 %v3153, %v1485
      %v5460 = vmul.f32 %v3154, %v1485
      %v5461 = vmul.f32 %v3155, %v1485
      %v5462 = vmul.f32 %v3156, %v1485
      %v5463 = vmul.f32 %v3157, %v1485
      %v5464 = vmul.f32 %v3158, %v1485
      %v5465 = vadd.f32 %v5417, %v5441
      %v5466 = vadd.f32 %v5418, %v5442
      %v5467 = vadd.f32 %v5419, %v5443
      %v5468 = vadd.f32 %v5420, %v5444
      %v5469 = vadd.f32 %v5421, %v5445
      %v5470 = vadd.f32 %v5422, %v5446
      %v5471 = vadd.f32 %v5423, %v5447
      %v5472 = vadd.f32 %v5424, %v5448
      %v5473 = vadd.f32 %v5425, %v5449
      %v5474 = vadd.f32 %v5426, %v5450
      %v5475 = vadd.f32 %v5427, %v5451
      %v5476 = vadd.f32 %v5428, %v5452
      %v5477 = vadd.f32 %v5429, %v5453
      %v5478 = vadd.f32 %v5430, %v5454
      %v5479 = vadd.f32 %v5431, %v5455
      %v5480 = vadd.f32 %v5432, %v5456
      %v5481 = vadd.f32 %v5433, %v5457
      %v5482 = vadd.f32 %v5434, %v5458
      %v5483 = vadd.f32 %v5435, %v5459
      %v5484 = vadd.f32 %v5436, %v5460
      %v5485 = vadd.f32 %v5437, %v5461
      %v5486 = vadd.f32 %v5438, %v5462
      %v5487 = vadd.f32 %v5439, %v5463
      %v5488 = vadd.f32 %v5440, %v5464
      %v5489 = vmul.f32 %v4241, %v1561
      %v5490 = vmul.f32 %v4242, %v1561
      %v5491 = vmul.f32 %v4243, %v1561
      %v5492 = vmul.f32 %v4244, %v1561
      %v5493 = vmul.f32 %v4245, %v1561
      %v5494 = vmul.f32 %v4246, %v1561
      %v5495 = vmul.f32 %v4247, %v1561
      %v5496 = vmul.f32 %v4248, %v1561
      %v5497 = vmul.f32 %v4249, %v1561
      %v5498 = vmul.f32 %v4250, %v1561
      %v5499 = vmul.f32 %v4251, %v1561
      %v5500 = vmul.f32 %v4252, %v1561
      %v5501 = vmul.f32 %v4253, %v1561
      %v5502 = vmul.f32 %v4254, %v1561
      %v5503 = vmul.f32 %v4255, %v1561
      %v5504 = vmul.f32 %v4256, %v1561
      %v5505 = vmul.f32 %v4257, %v1561
      %v5506 = vmul.f32 %v4258, %v1561
      %v5507 = vmul.f32 %v4259, %v1561
      %v5508 = vmul.f32 %v4260, %v1561
      %v5509 = vmul.f32 %v4261, %v1561
      %v5510 = vmul.f32 %v4262, %v1561
      %v5511 = vmul.f32 %v4263, %v1561
      %v5512 = vmul.f32 %v4264, %v1561
      %v5513 = vadd.f32 %v5465, %v5489
      %v5514 = vadd.f32 %v5466, %v5490
      %v5515 = vadd.f32 %v5467, %v5491
      %v5516 = vadd.f32 %v5468, %v5492
      %v5517 = vadd.f32 %v5469, %v5493
      %v5518 = vadd.f32 %v5470, %v5494
      %v5519 = vadd.f32 %v5471, %v5495
      %v5520 = vadd.f32 %v5472, %v5496
      %v5521 = vadd.f32 %v5473, %v5497
      %v5522 = vadd.f32 %v5474, %v5498
      %v5523 = vadd.f32 %v5475, %v5499
      %v5524 = vadd.f32 %v5476, %v5500
      %v5525 = vadd.f32 %v5477, %v5501
      %v5526 = vadd.f32 %v5478, %v5502
      %v5527 = vadd.f32 %v5479, %v5503
      %v5528 = vadd.f32 %v5480, %v5504
      %v5529 = vadd.f32 %v5481, %v5505
      %v5530 = vadd.f32 %v5482, %v5506
      %v5531 = vadd.f32 %v5483, %v5507
      %v5532 = vadd.f32 %v5484, %v5508
      %v5533 = vadd.f32 %v5485, %v5509
      %v5534 = vadd.f32 %v5486, %v5510
      %v5535 = vadd.f32 %v5487, %v5511
      %v5536 = vadd.f32 %v5488, %v5512
      %v5537 = vmul.f32 %v4313, %v1637
      %v5538 = vmul.f32 %v4314, %v1637
      %v5539 = vmul.f32 %v4315, %v1637
      %v5540 = vmul.f32 %v4316, %v1637
      %v5541 = vmul.f32 %v4317, %v1637
      %v5542 = vmul.f32 %v4318, %v1637
      %v5543 = vmul.f32 %v4319, %v1637
      %v5544 = vmul.f32 %v4320, %v1637
      %v5545 = vmul.f32 %v4321, %v1637
      %v5546 = vmul.f32 %v4322, %v1637
      %v5547 = vmul.f32 %v4323, %v1637
      %v5548 = vmul.f32 %v4324, %v1637
      %v5549 = vmul.f32 %v4325, %v1637
      %v5550 = vmul.f32 %v4326, %v1637
      %v5551 = vmul.f32 %v4327, %v1637
      %v5552 = vmul.f32 %v4328, %v1637
      %v5553 = vmul.f32 %v4329, %v1637
      %v5554 = vmul.f32 %v4330, %v1637
      %v5555 = vmul.f32 %v4331, %v1637
      %v5556 = vmul.f32 %v4332, %v1637
      %v5557 = vmul.f32 %v4333, %v1637
      %v5558 = vmul.f32 %v4334, %v1637
      %v5559 = vmul.f32 %v4335, %v1637
      %v5560 = vmul.f32 %v4336, %v1637
      %v5561 = vadd.f32 %v5513, %v5537
      %v5562 = vadd.f32 %v5514, %v5538
      %v5563 = vadd.f32 %v5515, %v5539
      %v5564 = vadd.f32 %v5516, %v5540
      %v5565 = vadd.f32 %v5517, %v5541
      %v5566 = vadd.f32 %v5518, %v5542
      %v5567 = vadd.f32 %v5519, %v5543
      %v5568 = vadd.f32 %v5520, %v5544
      %v5569 = vadd.f32 %v5521, %v5545
      %v5570 = vadd.f32 %v5522, %v5546
      %v5571 = vadd.f32 %v5523, %v5547
      %v5572 = vadd.f32 %v5524, %v5548
      %v5573 = vadd.f32 %v5525, %v5549
      %v5574 = vadd.f32 %v5526, %v5550
      %v5575 = vadd.f32 %v5527, %v5551
      %v5576 = vadd.f32 %v5528, %v5552
      %v5577 = vadd.f32 %v5529, %v5553
      %v5578 = vadd.f32 %v5530, %v5554
      %v5579 = vadd.f32 %v5531, %v5555
      %v5580 = vadd.f32 %v5532, %v5556
      %v5581 = vadd.f32 %v5533, %v5557
      %v5582 = vadd.f32 %v5534, %v5558
      %v5583 = vadd.f32 %v5535, %v5559
      %v5584 = vadd.f32 %v5536, %v5560
      %v5585 = vmul.f32 %v4385, %v1712
      %v5586 = vmul.f32 %v4386, %v1712
      %v5587 = vmul.f32 %v4387, %v1712
      %v5588 = vmul.f32 %v4388, %v1712
      %v5589 = vmul.f32 %v4389, %v1712
      %v5590 = vmul.f32 %v4390, %v1712
      %v5591 = vmul.f32 %v4391, %v1712
      %v5592 = vmul.f32 %v4392, %v1712
      %v5593 = vmul.f32 %v4393, %v1712
      %v5594 = vmul.f32 %v4394, %v1712
      %v5595 = vmul.f32 %v4395, %v1712
      %v5596 = vmul.f32 %v4396, %v1712
      %v5597 = vmul.f32 %v4397, %v1712
      %v5598 = vmul.f32 %v4398, %v1712
      %v5599 = vmul.f32 %v4399, %v1712
      %v5600 = vmul.f32 %v4400, %v1712
      %v5601 = vmul.f32 %v4401, %v1712
      %v5602 = vmul.f32 %v4402, %v1712
      %v5603 = vmul.f32 %v4403, %v1712
      %v5604 = vmul.f32 %v4404, %v1712
      %v5605 = vmul.f32 %v4405, %v1712
      %v5606 = vmul.f32 %v4406, %v1712
      %v5607 = vmul.f32 %v4407, %v1712
      %v5608 = vmul.f32 %v4408, %v1712
      %v5609 = vadd.f32 %v5561, %v5585
      %v5610 = vadd.f32 %v5562, %v5586
      %v5611 = vadd.f32 %v5563, %v5587
      %v5612 = vadd.f32 %v5564, %v5588
      %v5613 = vadd.f32 %v5565, %v5589
      %v5614 = vadd.f32 %v5566, %v5590
      %v5615 = vadd.f32 %v5567, %v5591
      %v5616 = vadd.f32 %v5568, %v5592
      %v5617 = vadd.f32 %v5569, %v5593
      %v5618 = vadd.f32 %v5570, %v5594
      %v5619 = vadd.f32 %v5571, %v5595
      %v5620 = vadd.f32 %v5572, %v5596
      %v5621 = vadd.f32 %v5573, %v5597
      %v5622 = vadd.f32 %v5574, %v5598
      %v5623 = vadd.f32 %v5575, %v5599
      %v5624 = vadd.f32 %v5576, %v5600
      %v5625 = vadd.f32 %v5577, %v5601
      %v5626 = vadd.f32 %v5578, %v5602
      %v5627 = vadd.f32 %v5579, %v5603
      %v5628 = vadd.f32 %v5580, %v5604
      %v5629 = vadd.f32 %v5581, %v5605
      %v5630 = vadd.f32 %v5582, %v5606
      %v5631 = vadd.f32 %v5583, %v5607
      %v5632 = vadd.f32 %v5584, %v5608
      %v5633 = vmul.f32 %v4457, %v1787
      %v5634 = vmul.f32 %v4458, %v1787
      %v5635 = vmul.f32 %v4459, %v1787
      %v5636 = vmul.f32 %v4460, %v1787
      %v5637 = vmul.f32 %v4461, %v1787
      %v5638 = vmul.f32 %v4462, %v1787
      %v5639 = vmul.f32 %v4463, %v1787
      %v5640 = vmul.f32 %v4464, %v1787
      %v5641 = vmul.f32 %v4465, %v1787
      %v5642 = vmul.f32 %v4466, %v1787
      %v5643 = vmul.f32 %v4467, %v1787
      %v5644 = vmul.f32 %v4468, %v1787
      %v5645 = vmul.f32 %v4469, %v1787
      %v5646 = vmul.f32 %v4470, %v1787
      %v5647 = vmul.f32 %v4471, %v1787
      %v5648 = vmul.f32 %v4472, %v1787
      %v5649 = vmul.f32 %v4473, %v1787
      %v5650 = vmul.f32 %v4474, %v1787
      %v5651 = vmul.f32 %v4475, %v1787
      %v5652 = vmul.f32 %v4476, %v1787
      %v5653 = vmul.f32 %v4477, %v1787
      %v5654 = vmul.f32 %v4478, %v1787
      %v5655 = vmul.f32 %v4479, %v1787
      %v5656 = vmul.f32 %v4480, %v1787
      %v5657 = vadd.f32 %v5609, %v5633
      %v5658 = vadd.f32 %v5610, %v5634
      %v5659 = vadd.f32 %v5611, %v5635
      %v5660 = vadd.f32 %v5612, %v5636
      %v5661 = vadd.f32 %v5613, %v5637
      %v5662 = vadd.f32 %v5614, %v5638
      %v5663 = vadd.f32 %v5615, %v5639
      %v5664 = vadd.f32 %v5616, %v5640
      %v5665 = vadd.f32 %v5617, %v5641
      %v5666 = vadd.f32 %v5618, %v5642
      %v5667 = vadd.f32 %v5619, %v5643
      %v5668 = vadd.f32 %v5620, %v5644
      %v5669 = vadd.f32 %v5621, %v5645
      %v5670 = vadd.f32 %v5622, %v5646
      %v5671 = vadd.f32 %v5623, %v5647
      %v5672 = vadd.f32 %v5624, %v5648
      %v5673 = vadd.f32 %v5625, %v5649
      %v5674 = vadd.f32 %v5626, %v5650
      %v5675 = vadd.f32 %v5627, %v5651
      %v5676 = vadd.f32 %v5628, %v5652
      %v5677 = vadd.f32 %v5629, %v5653
      %v5678 = vadd.f32 %v5630, %v5654
      %v5679 = vadd.f32 %v5631, %v5655
      %v5680 = vadd.f32 %v5632, %v5656
      %v5681 = vld [vmem:[%s4240 + $0x2] sm:$0xff]
      %v5682 = vld [vmem:[%s4240 + $0xa] sm:$0xf]
      %v5683 = vld [vmem:[%s4240 + $0x12] sm:$0xff]
      %v5684 = vld [vmem:[%s4240 + $0x1a] sm:$0xf]
      %v5685 = vld [vmem:[%s4240 + $0x22] sm:$0xff]
      %v5686 = vld [vmem:[%s4240 + $0x2a] sm:$0xf]
      %v5687 = vld [vmem:[%s4240 + $0x32] sm:$0xff]
      %v5688 = vld [vmem:[%s4240 + $0x3a] sm:$0xf]
      %v5689 = vld [vmem:[%s4240 + $0x42] sm:$0xff]
      %v5690 = vld [vmem:[%s4240 + $0x4a] sm:$0xf]
      %v5691 = vld [vmem:[%s4240 + $0x52] sm:$0xff]
      %v5692 = vld [vmem:[%s4240 + $0x5a] sm:$0xf]
      %v5693 = vld [vmem:[%s4240 + $0x62] sm:$0xff]
      %v5694 = vld [vmem:[%s4240 + $0x6a] sm:$0xf]
      %v5695 = vld [vmem:[%s4240 + $0x72] sm:$0xff]
      %v5696 = vld [vmem:[%s4240 + $0x7a] sm:$0xf]
      %v5697 = vld [vmem:[%s4240 + $0x82] sm:$0xff]
      %v5698 = vld [vmem:[%s4240 + $0x8a] sm:$0xf]
      %v5699 = vld [vmem:[%s4240 + $0x92] sm:$0xff]
      %v5700 = vld [vmem:[%s4240 + $0x9a] sm:$0xf]
      %v5701 = vld [vmem:[%s4240 + $0xa2] sm:$0xff]
      %v5702 = vld [vmem:[%s4240 + $0xaa] sm:$0xf]
      %v5703 = vld [vmem:[%s4240 + $0xb2] sm:$0xff]
      %v5704 = vld [vmem:[%s4240 + $0xba] sm:$0xf]
      %v5705 = vmul.f32 %v5681, %v1862
      %v5706 = vmul.f32 %v5682, %v1862
      %v5707 = vmul.f32 %v5683, %v1862
      %v5708 = vmul.f32 %v5684, %v1862
      %v5709 = vmul.f32 %v5685, %v1862
      %v5710 = vmul.f32 %v5686, %v1862
      %v5711 = vmul.f32 %v5687, %v1862
      %v5712 = vmul.f32 %v5688, %v1862
      %v5713 = vmul.f32 %v5689, %v1862
      %v5714 = vmul.f32 %v5690, %v1862
      %v5715 = vmul.f32 %v5691, %v1862
      %v5716 = vmul.f32 %v5692, %v1862
      %v5717 = vmul.f32 %v5693, %v1862
      %v5718 = vmul.f32 %v5694, %v1862
      %v5719 = vmul.f32 %v5695, %v1862
      %v5720 = vmul.f32 %v5696, %v1862
      %v5721 = vmul.f32 %v5697, %v1862
      %v5722 = vmul.f32 %v5698, %v1862
      %v5723 = vmul.f32 %v5699, %v1862
      %v5724 = vmul.f32 %v5700, %v1862
      %v5725 = vmul.f32 %v5701, %v1862
      %v5726 = vmul.f32 %v5702, %v1862
      %v5727 = vmul.f32 %v5703, %v1862
      %v5728 = vmul.f32 %v5704, %v1862
      %v5729 = vadd.f32 %v5657, %v5705
      %v5730 = vadd.f32 %v5658, %v5706
      %v5731 = vadd.f32 %v5659, %v5707
      %v5732 = vadd.f32 %v5660, %v5708
      %v5733 = vadd.f32 %v5661, %v5709
      %v5734 = vadd.f32 %v5662, %v5710
      %v5735 = vadd.f32 %v5663, %v5711
      %v5736 = vadd.f32 %v5664, %v5712
      %v5737 = vadd.f32 %v5665, %v5713
      %v5738 = vadd.f32 %v5666, %v5714
      %v5739 = vadd.f32 %v5667, %v5715
      %v5740 = vadd.f32 %v5668, %v5716
      %v5741 = vadd.f32 %v5669, %v5717
      %v5742 = vadd.f32 %v5670, %v5718
      %v5743 = vadd.f32 %v5671, %v5719
      %v5744 = vadd.f32 %v5672, %v5720
      %v5745 = vadd.f32 %v5673, %v5721
      %v5746 = vadd.f32 %v5674, %v5722
      %v5747 = vadd.f32 %v5675, %v5723
      %v5748 = vadd.f32 %v5676, %v5724
      %v5749 = vadd.f32 %v5677, %v5725
      %v5750 = vadd.f32 %v5678, %v5726
      %v5751 = vadd.f32 %v5679, %v5727
      %v5752 = vadd.f32 %v5680, %v5728
      %v5753 = vmax.f32 %v4529, %v5729
      %v5754 = vmax.f32 %v4530, %v5730
      %v5755 = vmax.f32 %v4531, %v5731
      %v5756 = vmax.f32 %v4532, %v5732
      %v5757 = vmax.f32 %v4533, %v5733
      %v5758 = vmax.f32 %v4534, %v5734
      %v5759 = vmax.f32 %v4535, %v5735
      %v5760 = vmax.f32 %v4536, %v5736
      %v5761 = vmax.f32 %v4537, %v5737
      %v5762 = vmax.f32 %v4538, %v5738
      %v5763 = vmax.f32 %v4539, %v5739
      %v5764 = vmax.f32 %v4540, %v5740
      %v5765 = vmax.f32 %v4541, %v5741
      %v5766 = vmax.f32 %v4542, %v5742
      %v5767 = vmax.f32 %v4543, %v5743
      %v5768 = vmax.f32 %v4544, %v5744
      %v5769 = vmax.f32 %v4545, %v5745
      %v5770 = vmax.f32 %v4546, %v5746
      %v5771 = vmax.f32 %v4547, %v5747
      %v5772 = vmax.f32 %v4548, %v5748
      %v5773 = vmax.f32 %v4549, %v5749
      %v5774 = vmax.f32 %v4550, %v5750
      %v5775 = vmax.f32 %v4551, %v5751
      %v5776 = vmax.f32 %v4552, %v5752
      %s5777 = sadd.s32 %s75, 25
      %s5778 = sld [smem:[#allocation3 + %s5777]]
      %v5779 = vstv %s5778
      %v5780 = vadd.f32 %v5753, %v5779
      %v5781 = vadd.f32 %v5754, %v5779
      %v5782 = vadd.f32 %v5755, %v5779
      %v5783 = vadd.f32 %v5756, %v5779
      %v5784 = vadd.f32 %v5757, %v5779
      %v5785 = vadd.f32 %v5758, %v5779
      %v5786 = vadd.f32 %v5759, %v5779
      %v5787 = vadd.f32 %v5760, %v5779
      %v5788 = vadd.f32 %v5761, %v5779
      %v5789 = vadd.f32 %v5762, %v5779
      %v5790 = vadd.f32 %v5763, %v5779
      %v5791 = vadd.f32 %v5764, %v5779
      %v5792 = vadd.f32 %v5765, %v5779
      %v5793 = vadd.f32 %v5766, %v5779
      %v5794 = vadd.f32 %v5767, %v5779
      %v5795 = vadd.f32 %v5768, %v5779
      %v5796 = vadd.f32 %v5769, %v5779
      %v5797 = vadd.f32 %v5770, %v5779
      %v5798 = vadd.f32 %v5771, %v5779
      %v5799 = vadd.f32 %v5772, %v5779
      %v5800 = vadd.f32 %v5773, %v5779
      %v5801 = vadd.f32 %v5774, %v5779
      %v5802 = vadd.f32 %v5775, %v5779
      %v5803 = vadd.f32 %v5776, %v5779
      %v5804 = vmax.f32 %v5780, 0.0
      %v5805 = vmax.f32 %v5781, 0.0
      %v5806 = vmax.f32 %v5782, 0.0
      %v5807 = vmax.f32 %v5783, 0.0
      %v5808 = vmax.f32 %v5784, 0.0
      %v5809 = vmax.f32 %v5785, 0.0
      %v5810 = vmax.f32 %v5786, 0.0
      %v5811 = vmax.f32 %v5787, 0.0
      %v5812 = vmax.f32 %v5788, 0.0
      %v5813 = vmax.f32 %v5789, 0.0
      %v5814 = vmax.f32 %v5790, 0.0
      %v5815 = vmax.f32 %v5791, 0.0
      %v5816 = vmax.f32 %v5792, 0.0
      %v5817 = vmax.f32 %v5793, 0.0
      %v5818 = vmax.f32 %v5794, 0.0
      %v5819 = vmax.f32 %v5795, 0.0
      %v5820 = vmax.f32 %v5796, 0.0
      %v5821 = vmax.f32 %v5797, 0.0
      %v5822 = vmax.f32 %v5798, 0.0
      %v5823 = vmax.f32 %v5799, 0.0
      %v5824 = vmax.f32 %v5800, 0.0
      %v5825 = vmax.f32 %v5801, 0.0
      %v5826 = vmax.f32 %v5802, 0.0
      %v5827 = vmax.f32 %v5803, 0.0
      %vm5828 = vcmask 1043456
      %v5829 = vsel %vm5828, %v5805, 0.0
      %v5830 = vsel %vm5828, %v5807, 0.0
      %v5831 = vsel %vm5828, %v5809, 0.0
      %v5832 = vsel %vm5828, %v5811, 0.0
      %v5833 = vsel %vm5828, %v5813, 0.0
      %v5834 = vsel %vm5828, %v5815, 0.0
      %v5835 = vsel %vm5828, %v5817, 0.0
      %v5836 = vsel %vm5828, %v5819, 0.0
      %v5837 = vsel %vm5828, %v5821, 0.0
      %v5838 = vsel %vm5828, %v5823, 0.0
      %v5839 = vsel %vm5828, %v5825, 0.0
      %v5840 = vsel %vm5828, %v5827, 0.0
      %v5841 = vpack.c.bf16 %v5829, %v5804
      %v5842 = vpack.c.bf16 %v5830, %v5806
      %v5843 = vpack.c.bf16 %v5831, %v5808
      %v5844 = vpack.c.bf16 %v5832, %v5810
      %v5845 = vpack.c.bf16 %v5833, %v5812
      %v5846 = vpack.c.bf16 %v5834, %v5814
      %v5847 = vpack.c.bf16 %v5835, %v5816
      %v5848 = vpack.c.bf16 %v5836, %v5818
      %v5849 = vpack.c.bf16 %v5837, %v5820
      %v5850 = vpack.c.bf16 %v5838, %v5822
      %v5851 = vpack.c.bf16 %v5839, %v5824
      %v5852 = vpack.c.bf16 %v5840, %v5826
      %s5853 = smul.u32 %s46, 12
      %s5854 = smul.addr %s5853, 8
      %s5855 = scalar_lea.vmem [#allocation2], %s5854
      %5856 = vst [vmem:[%s5855] sm:$0xff] %v5841
      %5857 = vst [vmem:[%s5855 + $0x8] sm:$0xff] %v5842
      %5858 = vst [vmem:[%s5855 + $0x10] sm:$0xff] %v5843
      %5859 = vst [vmem:[%s5855 + $0x18] sm:$0xff] %v5844
      %5860 = vst [vmem:[%s5855 + $0x20] sm:$0xff] %v5845
      %5861 = vst [vmem:[%s5855 + $0x28] sm:$0xff] %v5846
      %5862 = vst [vmem:[%s5855 + $0x30] sm:$0xff] %v5847
      %5863 = vst [vmem:[%s5855 + $0x38] sm:$0xff] %v5848
      %5864 = vst [vmem:[%s5855 + $0x40] sm:$0xff] %v5849
      %5865 = vst [vmem:[%s5855 + $0x48] sm:$0xff] %v5850
      %5866 = vst [vmem:[%s5855 + $0x50] sm:$0xff] %v5851
      %5867 = vst [vmem:[%s5855 + $0x58] sm:$0xff] %v5852
    $region42: #{net_forward.1} parent=1 // loop_footer
      %s50 = sadd.s32 1, %s46
    $region43: #{net_forward.1} parent=1 // loop_footer_branch
      %45 = sbr.rel target = $region39
    $region44: #{net_forward.1} parent=1 // loop_exit
      _
    %v5868 = vld [vmem:[%s2] sm:$0xff]
    %v5869 = vld [vmem:[%s2 + $0x8] sm:$0xff]
    %v5870 = vld [vmem:[%s2 + $0x10] sm:$0xff]
    %v5871 = vld [vmem:[%s2 + $0x18] sm:$0xf]
    %v5872 = vld [vmem:[%s2 + $0x1c] sm:$0xff]
    %v5873 = vld [vmem:[%s2 + $0x24] sm:$0xff]
    %v5874 = vld [vmem:[%s2 + $0x2c] sm:$0xff]
    %v5875 = vld [vmem:[%s2 + $0x34] sm:$0xf]
    %v5876 = vld [vmem:[%s2 + $0x38] sm:$0xff]
    %v5877 = vld [vmem:[%s2 + $0x40] sm:$0xff]
    %v5878 = vld [vmem:[%s2 + $0x48] sm:$0xff]
    %v5879 = vld [vmem:[%s2 + $0x50] sm:$0xf]
    %v5880 = vld [vmem:[%s2 + $0x54] sm:$0xff]
    %v5881 = vld [vmem:[%s2 + $0x5c] sm:$0xff]
    %v5882 = vld [vmem:[%s2 + $0x64] sm:$0xff]
    %v5883 = vld [vmem:[%s2 + $0x6c] sm:$0xf]
    %v5884 = vld [vmem:[%s2 + $0x70] sm:$0xff]
    %v5885 = vld [vmem:[%s2 + $0x78] sm:$0xff]
    %v5886 = vld [vmem:[%s2 + $0x80] sm:$0xff]
    %v5887 = vld [vmem:[%s2 + $0x88] sm:$0xf]
    %v5888 = vld [vmem:[%s2 + $0x8c] sm:$0xff]
    %v5889 = vld [vmem:[%s2 + $0x94] sm:$0xff]
    %v5890 = vld [vmem:[%s2 + $0x9c] sm:$0xff]
    %v5891 = vld [vmem:[%s2 + $0xa4] sm:$0xf]
    %v5892 = vld [vmem:[%s2 + $0xa8] sm:$0xff]
    %v5893 = vld [vmem:[%s2 + $0xb0] sm:$0xff]
    %v5894 = vld [vmem:[%s2 + $0xb8] sm:$0xff]
    %v5895 = vld [vmem:[%s2 + $0xc0] sm:$0xf]
    %v5896 = vld [vmem:[%s2 + $0xc4] sm:$0xff]
    %v5897 = vld [vmem:[%s2 + $0xcc] sm:$0xff]
    %v5898 = vld [vmem:[%s2 + $0xd4] sm:$0xff]
    %v5899 = vld [vmem:[%s2 + $0xdc] sm:$0xf]
    %v5900 = vld [vmem:[%s2 + $0xe0] sm:$0xff]
    %v5901 = vld [vmem:[%s2 + $0xe8] sm:$0xff]
    %v5902 = vld [vmem:[%s2 + $0xf0] sm:$0xff]
    %v5903 = vld [vmem:[%s2 + $0xf8] sm:$0xf]
    %v5904 = vld [vmem:[%s2 + $0xfc] sm:$0xff]
    %v5905 = vld [vmem:[%s2 + $0x104] sm:$0xff]
    %v5906 = vld [vmem:[%s2 + $0x10c] sm:$0xff]
    %v5907 = vld [vmem:[%s2 + $0x114] sm:$0xf]
    %v5908 = vld [vmem:[%s2 + $0x118] sm:$0xff]
    %v5909 = vld [vmem:[%s2 + $0x120] sm:$0xff]
    %v5910 = vld [vmem:[%s2 + $0x128] sm:$0xff]
    %v5911 = vld [vmem:[%s2 + $0x130] sm:$0xf]
    %v5912 = vld [vmem:[%s2 + $0x134] sm:$0xff]
    %v5913 = vld [vmem:[%s2 + $0x13c] sm:$0xff]
    %v5914 = vld [vmem:[%s2 + $0x144] sm:$0xff]
    %v5915 = vld [vmem:[%s2 + $0x14c] sm:$0xf]
    %v5916 = vld [vmem:[%s2 + $0x150] sm:$0xff]
    %v5917 = vld [vmem:[%s2 + $0x158] sm:$0xff]
    %v5918 = vld [vmem:[%s2 + $0x160] sm:$0xff]
    %v5919 = vld [vmem:[%s2 + $0x168] sm:$0xf]
    %v5920 = vld [vmem:[%s2 + $0x16c] sm:$0xff]
    %v5921 = vld [vmem:[%s2 + $0x174] sm:$0xff]
    %v5922 = vld [vmem:[%s2 + $0x17c] sm:$0xff]
    %v5923 = vld [vmem:[%s2 + $0x184] sm:$0xf]
    %v5924 = vld [vmem:[%s2 + $0x188] sm:$0xff]
    %v5925 = vld [vmem:[%s2 + $0x190] sm:$0xff]
    %v5926 = vld [vmem:[%s2 + $0x198] sm:$0xff]
    %v5927 = vld [vmem:[%s2 + $0x1a0] sm:$0xf]
    %v5928 = vld [vmem:[%s2 + $0x1a4] sm:$0xff]
    %v5929 = vld [vmem:[%s2 + $0x1ac] sm:$0xff]
    %v5930 = vld [vmem:[%s2 + $0x1b4] sm:$0xff]
    %v5931 = vld [vmem:[%s2 + $0x1bc] sm:$0xf]
    %v5932 = vld [vmem:[%s2 + $0x1c0] sm:$0xff]
    %v5933 = vld [vmem:[%s2 + $0x1c8] sm:$0xff]
    %v5934 = vld [vmem:[%s2 + $0x1d0] sm:$0xff]
    %v5935 = vld [vmem:[%s2 + $0x1d8] sm:$0xf]
    %v5936 = vld [vmem:[%s2 + $0x1dc] sm:$0xff]
    %v5937 = vld [vmem:[%s2 + $0x1e4] sm:$0xff]
    %v5938 = vld [vmem:[%s2 + $0x1ec] sm:$0xff]
    %v5939 = vld [vmem:[%s2 + $0x1f4] sm:$0xf]
    %v5940 = vld [vmem:[%s2 + $0x1f8] sm:$0xff]
    %v5941 = vld [vmem:[%s2 + $0x200] sm:$0xff]
    %v5942 = vld [vmem:[%s2 + $0x208] sm:$0xff]
    %v5943 = vld [vmem:[%s2 + $0x210] sm:$0xf]
    %v5944 = vld [vmem:[%s2 + $0x214] sm:$0xff]
    %v5945 = vld [vmem:[%s2 + $0x21c] sm:$0xff]
    %v5946 = vld [vmem:[%s2 + $0x224] sm:$0xff]
    %v5947 = vld [vmem:[%s2 + $0x22c] sm:$0xf]
    %v5948 = vld [vmem:[#allocation2] sm:$0xff]
    %v5949 = vld [vmem:[#allocation2 + $0x8] sm:$0xff]
    %v5950 = vld [vmem:[#allocation2 + $0x10] sm:$0xff]
    %v5951 = vld [vmem:[#allocation2 + $0x18] sm:$0xff]
    %v5952 = vld [vmem:[#allocation2 + $0x20] sm:$0xff]
    %v5953 = vld [vmem:[#allocation2 + $0x60] sm:$0xff]
    %v5954 = vld [vmem:[#allocation2 + $0x68] sm:$0xff]
    %v5955 = vld [vmem:[#allocation2 + $0x70] sm:$0xff]
    %v5956 = vld [vmem:[#allocation2 + $0x78] sm:$0xff]
    %v5957 = vld [vmem:[#allocation2 + $0x80] sm:$0xff]
    %v5958 = vld [vmem:[#allocation2 + $0xc0] sm:$0xff]
    %v5959 = vld [vmem:[#allocation2 + $0xc8] sm:$0xff]
    %v5960 = vld [vmem:[#allocation2 + $0xd0] sm:$0xff]
    %v5961 = vld [vmem:[#allocation2 + $0xd8] sm:$0xff]
    %v5962 = vld [vmem:[#allocation2 + $0xe0] sm:$0xff]
    %v5963 = vld [vmem:[#allocation2 + $0x120] sm:$0xff]
    %v5964 = vld [vmem:[#allocation2 + $0x128] sm:$0xff]
    %v5965 = vld [vmem:[#allocation2 + $0x130] sm:$0xff]
    %v5966 = vld [vmem:[#allocation2 + $0x138] sm:$0xff]
    %v5967 = vld [vmem:[#allocation2 + $0x140] sm:$0xff]
    %v5968 = vld [vmem:[#allocation2 + $0x180] sm:$0xff]
    %v5969 = vld [vmem:[#allocation2 + $0x188] sm:$0xff]
    %v5970 = vld [vmem:[#allocation2 + $0x190] sm:$0xff]
    %v5971 = vld [vmem:[#allocation2 + $0x198] sm:$0xff]
    %v5972 = vld [vmem:[#allocation2 + $0x1a0] sm:$0xff]
    %v5973 = vld [vmem:[#allocation2 + $0x1e0] sm:$0xff]
    %v5974 = vld [vmem:[#allocation2 + $0x1e8] sm:$0xff]
    %v5975 = vld [vmem:[#allocation2 + $0x1f0] sm:$0xff]
    %v5976 = vld [vmem:[#allocation2 + $0x1f8] sm:$0xff]
    %v5977 = vld [vmem:[#allocation2 + $0x200] sm:$0xff]
    %v5978 = vld [vmem:[#allocation2 + $0x240] sm:$0xff]
    %v5979 = vld [vmem:[#allocation2 + $0x248] sm:$0xff]
    %v5980 = vld [vmem:[#allocation2 + $0x250] sm:$0xff]
    %v5981 = vld [vmem:[#allocation2 + $0x258] sm:$0xff]
    %v5982 = vld [vmem:[#allocation2 + $0x260] sm:$0xff]
    %v5983 = vld [vmem:[#allocation2 + $0x2a0] sm:$0xff]
    %v5984 = vld [vmem:[#allocation2 + $0x2a8] sm:$0xff]
    %v5985 = vld [vmem:[#allocation2 + $0x2b0] sm:$0xff]
    %v5986 = vld [vmem:[#allocation2 + $0x2b8] sm:$0xff]
    %v5987 = vld [vmem:[#allocation2 + $0x2c0] sm:$0xff]
    %v5988 = vld [vmem:[#allocation2 + $0x300] sm:$0xff]
    %v5989 = vld [vmem:[#allocation2 + $0x308] sm:$0xff]
    %v5990 = vld [vmem:[#allocation2 + $0x310] sm:$0xff]
    %v5991 = vld [vmem:[#allocation2 + $0x318] sm:$0xff]
    %v5992 = vld [vmem:[#allocation2 + $0x320] sm:$0xff]
    %v5993 = vld [vmem:[#allocation2 + $0x360] sm:$0xff]
    %v5994 = vld [vmem:[#allocation2 + $0x368] sm:$0xff]
    %v5995 = vld [vmem:[#allocation2 + $0x370] sm:$0xff]
    %v5996 = vld [vmem:[#allocation2 + $0x378] sm:$0xff]
    %v5997 = vld [vmem:[#allocation2 + $0x380] sm:$0xff]
    %s5998 = scalar_lea.vmem [#allocation2], 8
    %v5999 = vld [vmem:[%s5998] sm:$0xff]
    %v6000 = vld [vmem:[%s5998 + $0x8] sm:$0xff]
    %v6001 = vld [vmem:[%s5998 + $0x10] sm:$0xff]
    %v6002 = vld [vmem:[%s5998 + $0x18] sm:$0xff]
    %v6003 = vld [vmem:[%s5998 + $0x20] sm:$0xff]
    %v6004 = vld [vmem:[%s5998 + $0x60] sm:$0xff]
    %v6005 = vld [vmem:[%s5998 + $0x68] sm:$0xff]
    %v6006 = vld [vmem:[%s5998 + $0x70] sm:$0xff]
    %v6007 = vld [vmem:[%s5998 + $0x78] sm:$0xff]
    %v6008 = vld [vmem:[%s5998 + $0x80] sm:$0xff]
    %v6009 = vld [vmem:[%s5998 + $0xc0] sm:$0xff]
    %v6010 = vld [vmem:[%s5998 + $0xc8] sm:$0xff]
    %v6011 = vld [vmem:[%s5998 + $0xd0] sm:$0xff]
    %v6012 = vld [vmem:[%s5998 + $0xd8] sm:$0xff]
    %v6013 = vld [vmem:[%s5998 + $0xe0] sm:$0xff]
    %v6014 = vld [vmem:[%s5998 + $0x120] sm:$0xff]
    %v6015 = vld [vmem:[%s5998 + $0x128] sm:$0xff]
    %v6016 = vld [vmem:[%s5998 + $0x130] sm:$0xff]
    %v6017 = vld [vmem:[%s5998 + $0x138] sm:$0xff]
    %v6018 = vld [vmem:[%s5998 + $0x140] sm:$0xff]
    %v6019 = vld [vmem:[%s5998 + $0x180] sm:$0xff]
    %v6020 = vld [vmem:[%s5998 + $0x188] sm:$0xff]
    %v6021 = vld [vmem:[%s5998 + $0x190] sm:$0xff]
    %v6022 = vld [vmem:[%s5998 + $0x198] sm:$0xff]
    %v6023 = vld [vmem:[%s5998 + $0x1a0] sm:$0xff]
    %v6024 = vld [vmem:[%s5998 + $0x1e0] sm:$0xff]
    %v6025 = vld [vmem:[%s5998 + $0x1e8] sm:$0xff]
    %v6026 = vld [vmem:[%s5998 + $0x1f0] sm:$0xff]
    %v6027 = vld [vmem:[%s5998 + $0x1f8] sm:$0xff]
    %v6028 = vld [vmem:[%s5998 + $0x200] sm:$0xff]
    %v6029 = vld [vmem:[%s5998 + $0x240] sm:$0xff]
    %v6030 = vld [vmem:[%s5998 + $0x248] sm:$0xff]
    %v6031 = vld [vmem:[%s5998 + $0x250] sm:$0xff]
    %v6032 = vld [vmem:[%s5998 + $0x258] sm:$0xff]
    %v6033 = vld [vmem:[%s5998 + $0x260] sm:$0xff]
    %v6034 = vld [vmem:[%s5998 + $0x2a0] sm:$0xff]
    %v6035 = vld [vmem:[%s5998 + $0x2a8] sm:$0xff]
    %v6036 = vld [vmem:[%s5998 + $0x2b0] sm:$0xff]
    %v6037 = vld [vmem:[%s5998 + $0x2b8] sm:$0xff]
    %v6038 = vld [vmem:[%s5998 + $0x2c0] sm:$0xff]
    %v6039 = vld [vmem:[%s5998 + $0x300] sm:$0xff]
    %v6040 = vld [vmem:[%s5998 + $0x308] sm:$0xff]
    %v6041 = vld [vmem:[%s5998 + $0x310] sm:$0xff]
    %v6042 = vld [vmem:[%s5998 + $0x318] sm:$0xff]
    %v6043 = vld [vmem:[%s5998 + $0x320] sm:$0xff]
    %v6044 = vld [vmem:[%s5998 + $0x360] sm:$0xff]
    %v6045 = vld [vmem:[%s5998 + $0x368] sm:$0xff]
    %v6046 = vld [vmem:[%s5998 + $0x370] sm:$0xff]
    %v6047 = vld [vmem:[%s5998 + $0x378] sm:$0xff]
    %v6048 = vld [vmem:[%s5998 + $0x380] sm:$0xff]
    %s6049 = scalar_lea.vmem [#allocation2], 16
    %v6050 = vld [vmem:[%s6049] sm:$0xff]
    %v6051 = vld [vmem:[%s6049 + $0x8] sm:$0xff]
    %v6052 = vld [vmem:[%s6049 + $0x10] sm:$0xff]
    %v6053 = vld [vmem:[%s6049 + $0x18] sm:$0xff]
    %v6054 = vld [vmem:[%s6049 + $0x20] sm:$0xff]
    %v6055 = vld [vmem:[%s6049 + $0x60] sm:$0xff]
    %v6056 = vld [vmem:[%s6049 + $0x68] sm:$0xff]
    %v6057 = vld [vmem:[%s6049 + $0x70] sm:$0xff]
    %v6058 = vld [vmem:[%s6049 + $0x78] sm:$0xff]
    %v6059 = vld [vmem:[%s6049 + $0x80] sm:$0xff]
    %v6060 = vld [vmem:[%s6049 + $0xc0] sm:$0xff]
    %v6061 = vld [vmem:[%s6049 + $0xc8] sm:$0xff]
    %v6062 = vld [vmem:[%s6049 + $0xd0] sm:$0xff]
    %v6063 = vld [vmem:[%s6049 + $0xd8] sm:$0xff]
    %v6064 = vld [vmem:[%s6049 + $0xe0] sm:$0xff]
    %v6065 = vld [vmem:[%s6049 + $0x120] sm:$0xff]
    %v6066 = vld [vmem:[%s6049 + $0x128] sm:$0xff]
    %v6067 = vld [vmem:[%s6049 + $0x130] sm:$0xff]
    %v6068 = vld [vmem:[%s6049 + $0x138] sm:$0xff]
    %v6069 = vld [vmem:[%s6049 + $0x140] sm:$0xff]
    %v6070 = vld [vmem:[%s6049 + $0x180] sm:$0xff]
    %v6071 = vld [vmem:[%s6049 + $0x188] sm:$0xff]
    %v6072 = vld [vmem:[%s6049 + $0x190] sm:$0xff]
    %v6073 = vld [vmem:[%s6049 + $0x198] sm:$0xff]
    %v6074 = vld [vmem:[%s6049 + $0x1a0] sm:$0xff]
    %v6075 = vld [vmem:[%s6049 + $0x1e0] sm:$0xff]
    %v6076 = vld [vmem:[%s6049 + $0x1e8] sm:$0xff]
    %v6077 = vld [vmem:[%s6049 + $0x1f0] sm:$0xff]
    %v6078 = vld [vmem:[%s6049 + $0x1f8] sm:$0xff]
    %v6079 = vld [vmem:[%s6049 + $0x200] sm:$0xff]
    %v6080 = vld [vmem:[%s6049 + $0x240] sm:$0xff]
    %v6081 = vld [vmem:[%s6049 + $0x248] sm:$0xff]
    %v6082 = vld [vmem:[%s6049 + $0x250] sm:$0xff]
    %v6083 = vld [vmem:[%s6049 + $0x258] sm:$0xff]
    %v6084 = vld [vmem:[%s6049 + $0x260] sm:$0xff]
    %v6085 = vld [vmem:[%s6049 + $0x2a0] sm:$0xff]
    %v6086 = vld [vmem:[%s6049 + $0x2a8] sm:$0xff]
    %v6087 = vld [vmem:[%s6049 + $0x2b0] sm:$0xff]
    %v6088 = vld [vmem:[%s6049 + $0x2b8] sm:$0xff]
    %v6089 = vld [vmem:[%s6049 + $0x2c0] sm:$0xff]
    %v6090 = vld [vmem:[%s6049 + $0x300] sm:$0xff]
    %v6091 = vld [vmem:[%s6049 + $0x308] sm:$0xff]
    %v6092 = vld [vmem:[%s6049 + $0x310] sm:$0xff]
    %v6093 = vld [vmem:[%s6049 + $0x318] sm:$0xff]
    %v6094 = vld [vmem:[%s6049 + $0x320] sm:$0xff]
    %v6095 = vld [vmem:[%s6049 + $0x360] sm:$0xff]
    %v6096 = vld [vmem:[%s6049 + $0x368] sm:$0xff]
    %v6097 = vld [vmem:[%s6049 + $0x370] sm:$0xff]
    %v6098 = vld [vmem:[%s6049 + $0x378] sm:$0xff]
    %v6099 = vld [vmem:[%s6049 + $0x380] sm:$0xff]
    %s6100 = scalar_lea.vmem [#allocation2], 24
    %v6101 = vld [vmem:[%s6100] sm:$0xff]
    %v6102 = vld [vmem:[%s6100 + $0x8] sm:$0xff]
    %v6103 = vld [vmem:[%s6100 + $0x10] sm:$0xff]
    %v6104 = vld [vmem:[%s6100 + $0x18] sm:$0xff]
    %v6105 = vld [vmem:[%s6100 + $0x20] sm:$0xff]
    %v6106 = vld [vmem:[%s6100 + $0x60] sm:$0xff]
    %v6107 = vld [vmem:[%s6100 + $0x68] sm:$0xff]
    %v6108 = vld [vmem:[%s6100 + $0x70] sm:$0xff]
    %v6109 = vld [vmem:[%s6100 + $0x78] sm:$0xff]
    %v6110 = vld [vmem:[%s6100 + $0x80] sm:$0xff]
    %v6111 = vld [vmem:[%s6100 + $0xc0] sm:$0xff]
    %v6112 = vld [vmem:[%s6100 + $0xc8] sm:$0xff]
    %v6113 = vld [vmem:[%s6100 + $0xd0] sm:$0xff]
    %v6114 = vld [vmem:[%s6100 + $0xd8] sm:$0xff]
    %v6115 = vld [vmem:[%s6100 + $0xe0] sm:$0xff]
    %v6116 = vld [vmem:[%s6100 + $0x120] sm:$0xff]
    %v6117 = vld [vmem:[%s6100 + $0x128] sm:$0xff]
    %v6118 = vld [vmem:[%s6100 + $0x130] sm:$0xff]
    %v6119 = vld [vmem:[%s6100 + $0x138] sm:$0xff]
    %v6120 = vld [vmem:[%s6100 + $0x140] sm:$0xff]
    %v6121 = vld [vmem:[%s6100 + $0x180] sm:$0xff]
    %v6122 = vld [vmem:[%s6100 + $0x188] sm:$0xff]
    %v6123 = vld [vmem:[%s6100 + $0x190] sm:$0xff]
    %v6124 = vld [vmem:[%s6100 + $0x198] sm:$0xff]
    %v6125 = vld [vmem:[%s6100 + $0x1a0] sm:$0xff]
    %v6126 = vld [vmem:[%s6100 + $0x1e0] sm:$0xff]
    %v6127 = vld [vmem:[%s6100 + $0x1e8] sm:$0xff]
    %v6128 = vld [vmem:[%s6100 + $0x1f0] sm:$0xff]
    %v6129 = vld [vmem:[%s6100 + $0x1f8] sm:$0xff]
    %v6130 = vld [vmem:[%s6100 + $0x200] sm:$0xff]
    %v6131 = vld [vmem:[%s6100 + $0x240] sm:$0xff]
    %v6132 = vld [vmem:[%s6100 + $0x248] sm:$0xff]
    %v6133 = vld [vmem:[%s6100 + $0x250] sm:$0xff]
    %v6134 = vld [vmem:[%s6100 + $0x258] sm:$0xff]
    %v6135 = vld [vmem:[%s6100 + $0x260] sm:$0xff]
    %v6136 = vld [vmem:[%s6100 + $0x2a0] sm:$0xff]
    %v6137 = vld [vmem:[%s6100 + $0x2a8] sm:$0xff]
    %v6138 = vld [vmem:[%s6100 + $0x2b0] sm:$0xff]
    %v6139 = vld [vmem:[%s6100 + $0x2b8] sm:$0xff]
    %v6140 = vld [vmem:[%s6100 + $0x2c0] sm:$0xff]
    %v6141 = vld [vmem:[%s6100 + $0x300] sm:$0xff]
    %v6142 = vld [vmem:[%s6100 + $0x308] sm:$0xff]
    %v6143 = vld [vmem:[%s6100 + $0x310] sm:$0xff]
    %v6144 = vld [vmem:[%s6100 + $0x318] sm:$0xff]
    %v6145 = vld [vmem:[%s6100 + $0x320] sm:$0xff]
    %v6146 = vld [vmem:[%s6100 + $0x360] sm:$0xff]
    %v6147 = vld [vmem:[%s6100 + $0x368] sm:$0xff]
    %v6148 = vld [vmem:[%s6100 + $0x370] sm:$0xff]
    %v6149 = vld [vmem:[%s6100 + $0x378] sm:$0xff]
    %v6150 = vld [vmem:[%s6100 + $0x380] sm:$0xff]
    %s6151 = scalar_lea.vmem [#allocation2], 32
    %v6152 = vld [vmem:[%s6151] sm:$0xff]
    %v6153 = vld [vmem:[%s6151 + $0x8] sm:$0xff]
    %v6154 = vld [vmem:[%s6151 + $0x10] sm:$0xff]
    %v6155 = vld [vmem:[%s6151 + $0x18] sm:$0xff]
    %v6156 = vld [vmem:[%s6151 + $0x20] sm:$0xff]
    %v6157 = vld [vmem:[%s6151 + $0x60] sm:$0xff]
    %v6158 = vld [vmem:[%s6151 + $0x68] sm:$0xff]
    %v6159 = vld [vmem:[%s6151 + $0x70] sm:$0xff]
    %v6160 = vld [vmem:[%s6151 + $0x78] sm:$0xff]
    %v6161 = vld [vmem:[%s6151 + $0x80] sm:$0xff]
    %v6162 = vld [vmem:[%s6151 + $0xc0] sm:$0xff]
    %v6163 = vld [vmem:[%s6151 + $0xc8] sm:$0xff]
    %v6164 = vld [vmem:[%s6151 + $0xd0] sm:$0xff]
    %v6165 = vld [vmem:[%s6151 + $0xd8] sm:$0xff]
    %v6166 = vld [vmem:[%s6151 + $0xe0] sm:$0xff]
    %v6167 = vld [vmem:[%s6151 + $0x120] sm:$0xff]
    %v6168 = vld [vmem:[%s6151 + $0x128] sm:$0xff]
    %v6169 = vld [vmem:[%s6151 + $0x130] sm:$0xff]
    %v6170 = vld [vmem:[%s6151 + $0x138] sm:$0xff]
    %v6171 = vld [vmem:[%s6151 + $0x140] sm:$0xff]
    %v6172 = vld [vmem:[%s6151 + $0x180] sm:$0xff]
    %v6173 = vld [vmem:[%s6151 + $0x188] sm:$0xff]
    %v6174 = vld [vmem:[%s6151 + $0x190] sm:$0xff]
    %v6175 = vld [vmem:[%s6151 + $0x198] sm:$0xff]
    %v6176 = vld [vmem:[%s6151 + $0x1a0] sm:$0xff]
    %v6177 = vld [vmem:[%s6151 + $0x1e0] sm:$0xff]
    %v6178 = vld [vmem:[%s6151 + $0x1e8] sm:$0xff]
    %v6179 = vld [vmem:[%s6151 + $0x1f0] sm:$0xff]
    %v6180 = vld [vmem:[%s6151 + $0x1f8] sm:$0xff]
    %v6181 = vld [vmem:[%s6151 + $0x200] sm:$0xff]
    %v6182 = vld [vmem:[%s6151 + $0x240] sm:$0xff]
    %v6183 = vld [vmem:[%s6151 + $0x248] sm:$0xff]
    %v6184 = vld [vmem:[%s6151 + $0x250] sm:$0xff]
    %v6185 = vld [vmem:[%s6151 + $0x258] sm:$0xff]
    %v6186 = vld [vmem:[%s6151 + $0x260] sm:$0xff]
    %v6187 = vld [vmem:[%s6151 + $0x2a0] sm:$0xff]
    %v6188 = vld [vmem:[%s6151 + $0x2a8] sm:$0xff]
    %v6189 = vld [vmem:[%s6151 + $0x2b0] sm:$0xff]
    %v6190 = vld [vmem:[%s6151 + $0x2b8] sm:$0xff]
    %v6191 = vld [vmem:[%s6151 + $0x2c0] sm:$0xff]
    %v6192 = vld [vmem:[%s6151 + $0x300] sm:$0xff]
    %v6193 = vld [vmem:[%s6151 + $0x308] sm:$0xff]
    %v6194 = vld [vmem:[%s6151 + $0x310] sm:$0xff]
    %v6195 = vld [vmem:[%s6151 + $0x318] sm:$0xff]
    %v6196 = vld [vmem:[%s6151 + $0x320] sm:$0xff]
    %v6197 = vld [vmem:[%s6151 + $0x360] sm:$0xff]
    %v6198 = vld [vmem:[%s6151 + $0x368] sm:$0xff]
    %v6199 = vld [vmem:[%s6151 + $0x370] sm:$0xff]
    %v6200 = vld [vmem:[%s6151 + $0x378] sm:$0xff]
    %v6201 = vld [vmem:[%s6151 + $0x380] sm:$0xff]
    %s6202 = scalar_lea.vmem [#allocation2], 40
    %v6203 = vld [vmem:[%s6202] sm:$0xff]
    %v6204 = vld [vmem:[%s6202 + $0x8] sm:$0xff]
    %v6205 = vld [vmem:[%s6202 + $0x10] sm:$0xff]
    %v6206 = vld [vmem:[%s6202 + $0x18] sm:$0xff]
    %v6207 = vld [vmem:[%s6202 + $0x20] sm:$0xff]
    %v6208 = vld [vmem:[%s6202 + $0x60] sm:$0xff]
    %v6209 = vld [vmem:[%s6202 + $0x68] sm:$0xff]
    %v6210 = vld [vmem:[%s6202 + $0x70] sm:$0xff]
    %v6211 = vld [vmem:[%s6202 + $0x78] sm:$0xff]
    %v6212 = vld [vmem:[%s6202 + $0x80] sm:$0xff]
    %v6213 = vld [vmem:[%s6202 + $0xc0] sm:$0xff]
    %v6214 = vld [vmem:[%s6202 + $0xc8] sm:$0xff]
    %v6215 = vld [vmem:[%s6202 + $0xd0] sm:$0xff]
    %v6216 = vld [vmem:[%s6202 + $0xd8] sm:$0xff]
    %v6217 = vld [vmem:[%s6202 + $0xe0] sm:$0xff]
    %v6218 = vld [vmem:[%s6202 + $0x120] sm:$0xff]
    %v6219 = vld [vmem:[%s6202 + $0x128] sm:$0xff]
    %v6220 = vld [vmem:[%s6202 + $0x130] sm:$0xff]
    %v6221 = vld [vmem:[%s6202 + $0x138] sm:$0xff]
    %v6222 = vld [vmem:[%s6202 + $0x140] sm:$0xff]
    %v6223 = vld [vmem:[%s6202 + $0x180] sm:$0xff]
    %v6224 = vld [vmem:[%s6202 + $0x188] sm:$0xff]
    %v6225 = vld [vmem:[%s6202 + $0x190] sm:$0xff]
    %v6226 = vld [vmem:[%s6202 + $0x198] sm:$0xff]
    %v6227 = vld [vmem:[%s6202 + $0x1a0] sm:$0xff]
    %v6228 = vld [vmem:[%s6202 + $0x1e0] sm:$0xff]
    %v6229 = vld [vmem:[%s6202 + $0x1e8] sm:$0xff]
    %v6230 = vld [vmem:[%s6202 + $0x1f0] sm:$0xff]
    %v6231 = vld [vmem:[%s6202 + $0x1f8] sm:$0xff]
    %v6232 = vld [vmem:[%s6202 + $0x200] sm:$0xff]
    %v6233 = vld [vmem:[%s6202 + $0x240] sm:$0xff]
    %v6234 = vld [vmem:[%s6202 + $0x248] sm:$0xff]
    %v6235 = vld [vmem:[%s6202 + $0x250] sm:$0xff]
    %v6236 = vld [vmem:[%s6202 + $0x258] sm:$0xff]
    %v6237 = vld [vmem:[%s6202 + $0x260] sm:$0xff]
    %v6238 = vld [vmem:[%s6202 + $0x2a0] sm:$0xff]
    %v6239 = vld [vmem:[%s6202 + $0x2a8] sm:$0xff]
    %v6240 = vld [vmem:[%s6202 + $0x2b0] sm:$0xff]
    %v6241 = vld [vmem:[%s6202 + $0x2b8] sm:$0xff]
    %v6242 = vld [vmem:[%s6202 + $0x2c0] sm:$0xff]
    %v6243 = vld [vmem:[%s6202 + $0x300] sm:$0xff]
    %v6244 = vld [vmem:[%s6202 + $0x308] sm:$0xff]
    %v6245 = vld [vmem:[%s6202 + $0x310] sm:$0xff]
    %v6246 = vld [vmem:[%s6202 + $0x318] sm:$0xff]
    %v6247 = vld [vmem:[%s6202 + $0x320] sm:$0xff]
    %v6248 = vld [vmem:[%s6202 + $0x360] sm:$0xff]
    %v6249 = vld [vmem:[%s6202 + $0x368] sm:$0xff]
    %v6250 = vld [vmem:[%s6202 + $0x370] sm:$0xff]
    %v6251 = vld [vmem:[%s6202 + $0x378] sm:$0xff]
    %v6252 = vld [vmem:[%s6202 + $0x380] sm:$0xff]
    %s6253 = scalar_lea.vmem [#allocation2], 48
    %v6254 = vld [vmem:[%s6253] sm:$0xff]
    %v6255 = vld [vmem:[%s6253 + $0x8] sm:$0xff]
    %v6256 = vld [vmem:[%s6253 + $0x10] sm:$0xff]
    %v6257 = vld [vmem:[%s6253 + $0x18] sm:$0xff]
    %v6258 = vld [vmem:[%s6253 + $0x20] sm:$0xff]
    %v6259 = vld [vmem:[%s6253 + $0x60] sm:$0xff]
    %v6260 = vld [vmem:[%s6253 + $0x68] sm:$0xff]
    %v6261 = vld [vmem:[%s6253 + $0x70] sm:$0xff]
    %v6262 = vld [vmem:[%s6253 + $0x78] sm:$0xff]
    %v6263 = vld [vmem:[%s6253 + $0x80] sm:$0xff]
    %v6264 = vld [vmem:[%s6253 + $0xc0] sm:$0xff]
    %v6265 = vld [vmem:[%s6253 + $0xc8] sm:$0xff]
    %v6266 = vld [vmem:[%s6253 + $0xd0] sm:$0xff]
    %v6267 = vld [vmem:[%s6253 + $0xd8] sm:$0xff]
    %v6268 = vld [vmem:[%s6253 + $0xe0] sm:$0xff]
    %v6269 = vld [vmem:[%s6253 + $0x120] sm:$0xff]
    %v6270 = vld [vmem:[%s6253 + $0x128] sm:$0xff]
    %v6271 = vld [vmem:[%s6253 + $0x130] sm:$0xff]
    %v6272 = vld [vmem:[%s6253 + $0x138] sm:$0xff]
    %v6273 = vld [vmem:[%s6253 + $0x140] sm:$0xff]
    %v6274 = vld [vmem:[%s6253 + $0x180] sm:$0xff]
    %v6275 = vld [vmem:[%s6253 + $0x188] sm:$0xff]
    %v6276 = vld [vmem:[%s6253 + $0x190] sm:$0xff]
    %v6277 = vld [vmem:[%s6253 + $0x198] sm:$0xff]
    %v6278 = vld [vmem:[%s6253 + $0x1a0] sm:$0xff]
    %v6279 = vld [vmem:[%s6253 + $0x1e0] sm:$0xff]
    %v6280 = vld [vmem:[%s6253 + $0x1e8] sm:$0xff]
    %v6281 = vld [vmem:[%s6253 + $0x1f0] sm:$0xff]
    %v6282 = vld [vmem:[%s6253 + $0x1f8] sm:$0xff]
    %v6283 = vld [vmem:[%s6253 + $0x200] sm:$0xff]
    %v6284 = vld [vmem:[%s6253 + $0x240] sm:$0xff]
    %v6285 = vld [vmem:[%s6253 + $0x248] sm:$0xff]
    %v6286 = vld [vmem:[%s6253 + $0x250] sm:$0xff]
    %v6287 = vld [vmem:[%s6253 + $0x258] sm:$0xff]
    %v6288 = vld [vmem:[%s6253 + $0x260] sm:$0xff]
    %v6289 = vld [vmem:[%s6253 + $0x2a0] sm:$0xff]
    %v6290 = vld [vmem:[%s6253 + $0x2a8] sm:$0xff]
    %v6291 = vld [vmem:[%s6253 + $0x2b0] sm:$0xff]
    %v6292 = vld [vmem:[%s6253 + $0x2b8] sm:$0xff]
    %v6293 = vld [vmem:[%s6253 + $0x2c0] sm:$0xff]
    %v6294 = vld [vmem:[%s6253 + $0x300] sm:$0xff]
    %v6295 = vld [vmem:[%s6253 + $0x308] sm:$0xff]
    %v6296 = vld [vmem:[%s6253 + $0x310] sm:$0xff]
    %v6297 = vld [vmem:[%s6253 + $0x318] sm:$0xff]
    %v6298 = vld [vmem:[%s6253 + $0x320] sm:$0xff]
    %v6299 = vld [vmem:[%s6253 + $0x360] sm:$0xff]
    %v6300 = vld [vmem:[%s6253 + $0x368] sm:$0xff]
    %v6301 = vld [vmem:[%s6253 + $0x370] sm:$0xff]
    %v6302 = vld [vmem:[%s6253 + $0x378] sm:$0xff]
    %v6303 = vld [vmem:[%s6253 + $0x380] sm:$0xff]
    %s6304 = scalar_lea.vmem [#allocation2], 56
    %v6305 = vld [vmem:[%s6304] sm:$0xff]
    %v6306 = vld [vmem:[%s6304 + $0x8] sm:$0xff]
    %v6307 = vld [vmem:[%s6304 + $0x10] sm:$0xff]
    %v6308 = vld [vmem:[%s6304 + $0x18] sm:$0xff]
    %v6309 = vld [vmem:[%s6304 + $0x20] sm:$0xff]
    %v6310 = vld [vmem:[%s6304 + $0x60] sm:$0xff]
    %v6311 = vld [vmem:[%s6304 + $0x68] sm:$0xff]
    %v6312 = vld [vmem:[%s6304 + $0x70] sm:$0xff]
    %v6313 = vld [vmem:[%s6304 + $0x78] sm:$0xff]
    %v6314 = vld [vmem:[%s6304 + $0x80] sm:$0xff]
    %v6315 = vld [vmem:[%s6304 + $0xc0] sm:$0xff]
    %v6316 = vld [vmem:[%s6304 + $0xc8] sm:$0xff]
    %v6317 = vld [vmem:[%s6304 + $0xd0] sm:$0xff]
    %v6318 = vld [vmem:[%s6304 + $0xd8] sm:$0xff]
    %v6319 = vld [vmem:[%s6304 + $0xe0] sm:$0xff]
    %v6320 = vld [vmem:[%s6304 + $0x120] sm:$0xff]
    %v6321 = vld [vmem:[%s6304 + $0x128] sm:$0xff]
    %v6322 = vld [vmem:[%s6304 + $0x130] sm:$0xff]
    %v6323 = vld [vmem:[%s6304 + $0x138] sm:$0xff]
    %v6324 = vld [vmem:[%s6304 + $0x140] sm:$0xff]
    %v6325 = vld [vmem:[%s6304 + $0x180] sm:$0xff]
    %v6326 = vld [vmem:[%s6304 + $0x188] sm:$0xff]
    %v6327 = vld [vmem:[%s6304 + $0x190] sm:$0xff]
    %v6328 = vld [vmem:[%s6304 + $0x198] sm:$0xff]
    %v6329 = vld [vmem:[%s6304 + $0x1a0] sm:$0xff]
    %v6330 = vld [vmem:[%s6304 + $0x1e0] sm:$0xff]
    %v6331 = vld [vmem:[%s6304 + $0x1e8] sm:$0xff]
    %v6332 = vld [vmem:[%s6304 + $0x1f0] sm:$0xff]
    %v6333 = vld [vmem:[%s6304 + $0x1f8] sm:$0xff]
    %v6334 = vld [vmem:[%s6304 + $0x200] sm:$0xff]
    %v6335 = vld [vmem:[%s6304 + $0x240] sm:$0xff]
    %v6336 = vld [vmem:[%s6304 + $0x248] sm:$0xff]
    %v6337 = vld [vmem:[%s6304 + $0x250] sm:$0xff]
    %v6338 = vld [vmem:[%s6304 + $0x258] sm:$0xff]
    %v6339 = vld [vmem:[%s6304 + $0x260] sm:$0xff]
    %v6340 = vld [vmem:[%s6304 + $0x2a0] sm:$0xff]
    %v6341 = vld [vmem:[%s6304 + $0x2a8] sm:$0xff]
    %v6342 = vld [vmem:[%s6304 + $0x2b0] sm:$0xff]
    %v6343 = vld [vmem:[%s6304 + $0x2b8] sm:$0xff]
    %v6344 = vld [vmem:[%s6304 + $0x2c0] sm:$0xff]
    %v6345 = vld [vmem:[%s6304 + $0x300] sm:$0xff]
    %v6346 = vld [vmem:[%s6304 + $0x308] sm:$0xff]
    %v6347 = vld [vmem:[%s6304 + $0x310] sm:$0xff]
    %v6348 = vld [vmem:[%s6304 + $0x318] sm:$0xff]
    %v6349 = vld [vmem:[%s6304 + $0x320] sm:$0xff]
    %v6350 = vld [vmem:[%s6304 + $0x360] sm:$0xff]
    %v6351 = vld [vmem:[%s6304 + $0x368] sm:$0xff]
    %v6352 = vld [vmem:[%s6304 + $0x370] sm:$0xff]
    %v6353 = vld [vmem:[%s6304 + $0x378] sm:$0xff]
    %v6354 = vld [vmem:[%s6304 + $0x380] sm:$0xff]
    %v6435 = vunpack.c.l.b16 %v5868
    %v6436 = vunpack.c.h.b16 %v5868
    %v6437 = vunpack.c.l.b16 %v5869
    %v6438 = vunpack.c.h.b16 %v5869
    %v6439 = vunpack.c.l.b16 %v5870
    %v6440 = vunpack.c.h.b16 %v5870
    %v6441 = vunpack.c.l.b16 %v5871
    %v6442 = vunpack.c.l.b16 %v5872
    %v6443 = vunpack.c.h.b16 %v5872
    %v6444 = vunpack.c.l.b16 %v5873
    %v6445 = vunpack.c.h.b16 %v5873
    %v6446 = vunpack.c.l.b16 %v5874
    %v6447 = vunpack.c.h.b16 %v5874
    %v6448 = vunpack.c.l.b16 %v5875
    %v6449 = vunpack.c.l.b16 %v5876
    %v6450 = vunpack.c.h.b16 %v5876
    %v6451 = vunpack.c.l.b16 %v5877
    %v6452 = vunpack.c.h.b16 %v5877
    %v6453 = vunpack.c.l.b16 %v5878
    %v6454 = vunpack.c.h.b16 %v5878
    %v6455 = vunpack.c.l.b16 %v5879
    %v6456 = vunpack.c.l.b16 %v5880
    %v6457 = vunpack.c.h.b16 %v5880
    %v6458 = vunpack.c.l.b16 %v5881
    %v6459 = vunpack.c.h.b16 %v5881
    %v6460 = vunpack.c.l.b16 %v5882
    %v6461 = vunpack.c.h.b16 %v5882
    %v6462 = vunpack.c.l.b16 %v5883
    %v6463 = vunpack.c.l.b16 %v5884
    %v6464 = vunpack.c.h.b16 %v5884
    %v6465 = vunpack.c.l.b16 %v5885
    %v6466 = vunpack.c.h.b16 %v5885
    %v6467 = vunpack.c.l.b16 %v5886
    %v6468 = vunpack.c.h.b16 %v5886
    %v6469 = vunpack.c.l.b16 %v5887
    %v6470 = vunpack.c.l.b16 %v5888
    %v6471 = vunpack.c.h.b16 %v5888
    %v6472 = vunpack.c.l.b16 %v5889
    %v6473 = vunpack.c.h.b16 %v5889
    %v6474 = vunpack.c.l.b16 %v5890
    %v6475 = vunpack.c.h.b16 %v5890
    %v6476 = vunpack.c.l.b16 %v5891
    %v6477 = vunpack.c.l.b16 %v5892
    %v6478 = vunpack.c.h.b16 %v5892
    %v6479 = vunpack.c.l.b16 %v5893
    %v6480 = vunpack.c.h.b16 %v5893
    %v6481 = vunpack.c.l.b16 %v5894
    %v6482 = vunpack.c.h.b16 %v5894
    %v6483 = vunpack.c.l.b16 %v5895
    %v6484 = vunpack.c.l.b16 %v5896
    %v6485 = vunpack.c.h.b16 %v5896
    %v6486 = vunpack.c.l.b16 %v5897
    %v6487 = vunpack.c.h.b16 %v5897
    %v6488 = vunpack.c.l.b16 %v5898
    %v6489 = vunpack.c.h.b16 %v5898
    %v6490 = vunpack.c.l.b16 %v5899
    %v6491 = vunpack.c.l.b16 %v5900
    %v6492 = vunpack.c.h.b16 %v5900
    %v6493 = vunpack.c.l.b16 %v5901
    %v6494 = vunpack.c.h.b16 %v5901
    %v6495 = vunpack.c.l.b16 %v5902
    %v6496 = vunpack.c.h.b16 %v5902
    %v6497 = vunpack.c.l.b16 %v5903
    %v6498 = vunpack.c.l.b16 %v5904
    %v6499 = vunpack.c.h.b16 %v5904
    %v6500 = vunpack.c.l.b16 %v5905
    %v6501 = vunpack.c.h.b16 %v5905
    %v6502 = vunpack.c.l.b16 %v5906
    %v6503 = vunpack.c.h.b16 %v5906
    %v6504 = vunpack.c.l.b16 %v5907
    %v6505 = vunpack.c.l.b16 %v5908
    %v6506 = vunpack.c.h.b16 %v5908
    %v6507 = vunpack.c.l.b16 %v5909
    %v6508 = vunpack.c.h.b16 %v5909
    %v6509 = vunpack.c.l.b16 %v5910
    %v6510 = vunpack.c.h.b16 %v5910
    %v6511 = vunpack.c.l.b16 %v5911
    %v6512 = vunpack.c.l.b16 %v5912
    %v6513 = vunpack.c.h.b16 %v5912
    %v6514 = vunpack.c.l.b16 %v5913
    %v6515 = vunpack.c.h.b16 %v5913
    %v6516 = vunpack.c.l.b16 %v5914
    %v6517 = vunpack.c.h.b16 %v5914
    %v6518 = vunpack.c.l.b16 %v5915
    %v6519 = vunpack.c.l.b16 %v5916
    %v6520 = vunpack.c.h.b16 %v5916
    %v6521 = vunpack.c.l.b16 %v5917
    %v6522 = vunpack.c.h.b16 %v5917
    %v6523 = vunpack.c.l.b16 %v5918
    %v6524 = vunpack.c.h.b16 %v5918
    %v6525 = vunpack.c.l.b16 %v5919
    %v6526 = vunpack.c.l.b16 %v5920
    %v6527 = vunpack.c.h.b16 %v5920
    %v6528 = vunpack.c.l.b16 %v5921
    %v6529 = vunpack.c.h.b16 %v5921
    %v6530 = vunpack.c.l.b16 %v5922
    %v6531 = vunpack.c.h.b16 %v5922
    %v6532 = vunpack.c.l.b16 %v5923
    %v6533 = vunpack.c.l.b16 %v5924
    %v6534 = vunpack.c.h.b16 %v5924
    %v6535 = vunpack.c.l.b16 %v5925
    %v6536 = vunpack.c.h.b16 %v5925
    %v6537 = vunpack.c.l.b16 %v5926
    %v6538 = vunpack.c.h.b16 %v5926
    %v6539 = vunpack.c.l.b16 %v5927
    %v6540 = vunpack.c.l.b16 %v5928
    %v6541 = vunpack.c.h.b16 %v5928
    %v6542 = vunpack.c.l.b16 %v5929
    %v6543 = vunpack.c.h.b16 %v5929
    %v6544 = vunpack.c.l.b16 %v5930
    %v6545 = vunpack.c.h.b16 %v5930
    %v6546 = vunpack.c.l.b16 %v5931
    %v6547 = vunpack.c.l.b16 %v5932
    %v6548 = vunpack.c.h.b16 %v5932
    %v6549 = vunpack.c.l.b16 %v5933
    %v6550 = vunpack.c.h.b16 %v5933
    %v6551 = vunpack.c.l.b16 %v5934
    %v6552 = vunpack.c.h.b16 %v5934
    %v6553 = vunpack.c.l.b16 %v5935
    %v6554 = vunpack.c.l.b16 %v5936
    %v6555 = vunpack.c.h.b16 %v5936
    %v6556 = vunpack.c.l.b16 %v5937
    %v6557 = vunpack.c.h.b16 %v5937
    %v6558 = vunpack.c.l.b16 %v5938
    %v6559 = vunpack.c.h.b16 %v5938
    %v6560 = vunpack.c.l.b16 %v5939
    %v6561 = vunpack.c.l.b16 %v5940
    %v6562 = vunpack.c.h.b16 %v5940
    %v6563 = vunpack.c.l.b16 %v5941
    %v6564 = vunpack.c.h.b16 %v5941
    %v6565 = vunpack.c.l.b16 %v5942
    %v6566 = vunpack.c.h.b16 %v5942
    %v6567 = vunpack.c.l.b16 %v5943
    %v6568 = vunpack.c.l.b16 %v5944
    %v6569 = vunpack.c.h.b16 %v5944
    %v6570 = vunpack.c.l.b16 %v5945
    %v6571 = vunpack.c.h.b16 %v5945
    %v6572 = vunpack.c.l.b16 %v5946
    %v6573 = vunpack.c.h.b16 %v5946
    %v6574 = vunpack.c.l.b16 %v5947
    %v6575 = vpack.c.b16 %v6442, %v6435
    %v6576 = vpack.c.b16 %v6443, %v6436
    %v6577 = vpack.c.b16 %v6444, %v6437
    %v6578 = vpack.c.b16 %v6445, %v6438
    %v6579 = vpack.c.b16 %v6446, %v6439
    %v6580 = vpack.c.b16 %v6447, %v6440
    %v6581 = vpack.c.b16 %v6448, %v6441
    %v6582 = vpack.c.b16 %v6456, %v6449
    %v6583 = vpack.c.b16 %v6457, %v6450
    %v6584 = vpack.c.b16 %v6458, %v6451
    %v6585 = vpack.c.b16 %v6459, %v6452
    %v6586 = vpack.c.b16 %v6460, %v6453
    %v6587 = vpack.c.b16 %v6461, %v6454
    %v6588 = vpack.c.b16 %v6462, %v6455
    %v6589 = vpack.c.b16 %v6470, %v6463
    %v6590 = vpack.c.b16 %v6471, %v6464
    %v6591 = vpack.c.b16 %v6472, %v6465
    %v6592 = vpack.c.b16 %v6473, %v6466
    %v6593 = vpack.c.b16 %v6474, %v6467
    %v6594 = vpack.c.b16 %v6475, %v6468
    %v6595 = vpack.c.b16 %v6476, %v6469
    %v6596 = vpack.c.b16 %v6484, %v6477
    %v6597 = vpack.c.b16 %v6485, %v6478
    %v6598 = vpack.c.b16 %v6486, %v6479
    %v6599 = vpack.c.b16 %v6487, %v6480
    %v6600 = vpack.c.b16 %v6488, %v6481
    %v6601 = vpack.c.b16 %v6489, %v6482
    %v6602 = vpack.c.b16 %v6490, %v6483
    %v6603 = vpack.c.b16 %v6498, %v6491
    %v6604 = vpack.c.b16 %v6499, %v6492
    %v6605 = vpack.c.b16 %v6500, %v6493
    %v6606 = vpack.c.b16 %v6501, %v6494
    %v6607 = vpack.c.b16 %v6502, %v6495
    %v6608 = vpack.c.b16 %v6503, %v6496
    %v6609 = vpack.c.b16 %v6504, %v6497
    %v6610 = vpack.c.b16 %v6512, %v6505
    %v6611 = vpack.c.b16 %v6513, %v6506
    %v6612 = vpack.c.b16 %v6514, %v6507
    %v6613 = vpack.c.b16 %v6515, %v6508
    %v6614 = vpack.c.b16 %v6516, %v6509
    %v6615 = vpack.c.b16 %v6517, %v6510
    %v6616 = vpack.c.b16 %v6518, %v6511
    %v6617 = vpack.c.b16 %v6526, %v6519
    %v6618 = vpack.c.b16 %v6527, %v6520
    %v6619 = vpack.c.b16 %v6528, %v6521
    %v6620 = vpack.c.b16 %v6529, %v6522
    %v6621 = vpack.c.b16 %v6530, %v6523
    %v6622 = vpack.c.b16 %v6531, %v6524
    %v6623 = vpack.c.b16 %v6532, %v6525
    %v6624 = vpack.c.b16 %v6540, %v6533
    %v6625 = vpack.c.b16 %v6541, %v6534
    %v6626 = vpack.c.b16 %v6542, %v6535
    %v6627 = vpack.c.b16 %v6543, %v6536
    %v6628 = vpack.c.b16 %v6544, %v6537
    %v6629 = vpack.c.b16 %v6545, %v6538
    %v6630 = vpack.c.b16 %v6546, %v6539
    %v6631 = vpack.c.b16 %v6554, %v6547
    %v6632 = vpack.c.b16 %v6555, %v6548
    %v6633 = vpack.c.b16 %v6556, %v6549
    %v6634 = vpack.c.b16 %v6557, %v6550
    %v6635 = vpack.c.b16 %v6558, %v6551
    %v6636 = vpack.c.b16 %v6559, %v6552
    %v6637 = vpack.c.b16 %v6560, %v6553
    %v6638 = vpack.c.b16 %v6568, %v6561
    %v6639 = vpack.c.b16 %v6569, %v6562
    %v6640 = vpack.c.b16 %v6570, %v6563
    %v6641 = vpack.c.b16 %v6571, %v6564
    %v6642 = vpack.c.b16 %v6572, %v6565
    %v6643 = vpack.c.b16 %v6573, %v6566
    %v6644 = vpack.c.b16 %v6574, %v6567
    %vm6705 = vcmask 261120
    %v6707 = vsel %vm6705, %v6581, 0
    %v6710 = vsel %vm6705, %v6588, 0
    %v6713 = vsel %vm6705, %v6595, 0
    %v6716 = vsel %vm6705, %v6602, 0
    %v6719 = vsel %vm6705, %v6609, 0
    %v6722 = vsel %vm6705, %v6616, 0
    %v6725 = vsel %vm6705, %v6623, 0
    %v6728 = vsel %vm6705, %v6630, 0
    %v6731 = vsel %vm6705, %v6637, 0
    %v6734 = vsel %vm6705, %v6644, 0
    %6736 = vmatprep.subr.bf16.mxu0 %v5999
    %6737 = vmatpush1.bf16.msra.mxu0 %v5948
    %6738 = vmatprep.subr.bf16.mxu0 %v6000
    %6739 = vmatpush1.bf16.msra.mxu0 %v5949
    %6740 = vmatprep.subr.bf16.mxu0 %v6001
    %6741 = vmatpush1.bf16.msra.mxu0 %v5950
    %6742 = vmatprep.subr.bf16.mxu0 %v6002
    %6743 = vmatpush1.bf16.msra.mxu0 %v5951
    %6744 = vmatprep.subr.bf16.mxu0 %v6003
    %6745 = vmatpush1.bf16.msra.mxu0 %v5952
    %6746 = vmatprep.subr.bf16.mxu0 %v6004
    %6747 = vmatpush1.bf16.msra.mxu0 %v5953
    %6748 = vmatprep.subr.bf16.mxu0 %v6005
    %6749 = vmatpush1.bf16.msra.mxu0 %v5954
    %6750 = vmatprep.subr.bf16.mxu0 %v6006
    %6751 = vmatpush1.bf16.msra.mxu0 %v5955
    %6752 = vmatprep.subr.bf16.mxu0 %v6007
    %6753 = vmatpush1.bf16.msra.mxu0 %v5956
    %6754 = vmatprep.subr.bf16.mxu0 %v6008
    %6755 = vmatpush1.bf16.msra.mxu0 %v5957
    %6756 = vmatprep.subr.bf16.mxu0 %v6009
    %6757 = vmatpush1.bf16.msra.mxu0 %v5958
    %6758 = vmatprep.subr.bf16.mxu0 %v6010
    %6759 = vmatpush1.bf16.msra.mxu0 %v5959
    %6760 = vmatprep.subr.bf16.mxu0 %v6011
    %6761 = vmatpush1.bf16.msra.mxu0 %v5960
    %6762 = vmatprep.subr.bf16.mxu0 %v6012
    %6763 = vmatpush1.bf16.msra.mxu0 %v5961
    %6764 = vmatprep.subr.bf16.mxu0 %v6013
    %6765 = vmatpush1.bf16.msra.mxu0 %v5962
    %6766 = vmatprep.subr.bf16.mxu0 %v6014
    %6767 = vmatpush1.bf16.msra.mxu0 %v5963
    %6768 = vmatprep.mubr.bf16.mxu0 %v6576
    %6769 = vmatmul.mubr.bf16.gmra.mrb[0].mxu0 %v6575
    %v6770 = vpop.f32.mrb[0].mxu0
    %v6771 = vadd.f32 0.0, %v6770
    %v6772 = vpop.f32.mrb[0].mxu0
    %v6773 = vadd.f32 0.0, %v6772
    %v6774 = vpop.f32.mrb[0].mxu0
    %v6775 = vadd.f32 0.0, %v6774
    %v6776 = vpop.f32.mrb[0].mxu0
    %v6777 = vadd.f32 0.0, %v6776
    %6778 = vmatprep.mubr.bf16.mxu0 %v6583
    %6779 = vmatmul.mubr.bf16.gmra.mrb[0].mxu0 %v6582
    %v6780 = vpop.f32.mrb[0].mxu0
    %v6781 = vadd.f32 0.0, %v6780
    %v6782 = vpop.f32.mrb[0].mxu0
    %v6783 = vadd.f32 0.0, %v6782
    %v6784 = vpop.f32.mrb[0].mxu0
    %v6785 = vadd.f32 0.0, %v6784
    %v6786 = vpop.f32.mrb[0].mxu0
    %v6787 = vadd.f32 0.0, %v6786
    %6788 = vmatprep.mubr.bf16.mxu0 %v6590
    %6789 = vmatmul.mubr.bf16.gmra.mrb[0].mxu0 %v6589
    %v6790 = vpop.f32.mrb[0].mxu0
    %v6791 = vadd.f32 0.0, %v6790
    %v6792 = vpop.f32.mrb[0].mxu0
    %v6793 = vadd.f32 0.0, %v6792
    %v6794 = vpop.f32.mrb[0].mxu0
    %v6795 = vadd.f32 0.0, %v6794
    %v6796 = vpop.f32.mrb[0].mxu0
    %v6797 = vadd.f32 0.0, %v6796
    %6798 = vmatprep.mubr.bf16.mxu0 %v6597
    %6799 = vmatmul.mubr.bf16.gmra.mrb[0].mxu0 %v6596
    %v6800 = vpop.f32.mrb[0].mxu0
    %v6801 = vadd.f32 0.0, %v6800
    %v6802 = vpop.f32.mrb[0].mxu0
    %v6803 = vadd.f32 0.0, %v6802
    %v6804 = vpop.f32.mrb[0].mxu0
    %v6805 = vadd.f32 0.0, %v6804
    %v6806 = vpop.f32.mrb[0].mxu0
    %v6807 = vadd.f32 0.0, %v6806
    %6808 = vmatprep.mubr.bf16.mxu0 %v6604
    %6809 = vmatmul.mubr.bf16.gmra.mrb[0].mxu0 %v6603
    %v6810 = vpop.f32.mrb[0].mxu0
    %v6811 = vadd.f32 0.0, %v6810
    %v6812 = vpop.f32.mrb[0].mxu0
    %v6813 = vadd.f32 0.0, %v6812
    %v6814 = vpop.f32.mrb[0].mxu0
    %v6815 = vadd.f32 0.0, %v6814
    %v6816 = vpop.f32.mrb[0].mxu0
    %v6817 = vadd.f32 0.0, %v6816
    %6818 = vmatprep.mubr.bf16.mxu0 %v6611
    %6819 = vmatmul.mubr.bf16.gmra.mrb[0].mxu0 %v6610
    %v6820 = vpop.f32.mrb[0].mxu0
    %v6821 = vadd.f32 0.0, %v6820
    %v6822 = vpop.f32.mrb[0].mxu0
    %v6823 = vadd.f32 0.0, %v6822
    %v6824 = vpop.f32.mrb[0].mxu0
    %v6825 = vadd.f32 0.0, %v6824
    %v6826 = vpop.f32.mrb[0].mxu0
    %v6827 = vadd.f32 0.0, %v6826
    %6828 = vmatprep.mubr.bf16.mxu0 %v6618
    %6829 = vmatmul.mubr.bf16.gmra.mrb[0].mxu0 %v6617
    %v6830 = vpop.f32.mrb[0].mxu0
    %v6831 = vadd.f32 0.0, %v6830
    %v6832 = vpop.f32.mrb[0].mxu0
    %v6833 = vadd.f32 0.0, %v6832
    %v6834 = vpop.f32.mrb[0].mxu0
    %v6835 = vadd.f32 0.0, %v6834
    %v6836 = vpop.f32.mrb[0].mxu0
    %v6837 = vadd.f32 0.0, %v6836
    %6838 = vmatprep.mubr.bf16.mxu0 %v6625
    %6839 = vmatmul.mubr.bf16.gmra.mrb[0].mxu0 %v6624
    %v6840 = vpop.f32.mrb[0].mxu0
    %v6841 = vadd.f32 0.0, %v6840
    %v6842 = vpop.f32.mrb[0].mxu0
    %v6843 = vadd.f32 0.0, %v6842
    %v6844 = vpop.f32.mrb[0].mxu0
    %v6845 = vadd.f32 0.0, %v6844
    %v6846 = vpop.f32.mrb[0].mxu0
    %v6847 = vadd.f32 0.0, %v6846
    %6848 = vmatprep.mubr.bf16.mxu0 %v6632
    %6849 = vmatmul.mubr.bf16.gmra.mrb[0].mxu0 %v6631
    %v6850 = vpop.f32.mrb[0].mxu0
    %v6851 = vadd.f32 0.0, %v6850
    %v6852 = vpop.f32.mrb[0].mxu0
    %v6853 = vadd.f32 0.0, %v6852
    %v6854 = vpop.f32.mrb[0].mxu0
    %v6855 = vadd.f32 0.0, %v6854
    %v6856 = vpop.f32.mrb[0].mxu0
    %v6857 = vadd.f32 0.0, %v6856
    %6858 = vmatprep.mubr.bf16.mxu0 %v6639
    %6859 = vmatmul.mubr.bf16.gmra.mrb[0].mxu0 %v6638
    %v6860 = vpop.f32.mrb[0].mxu0
    %v6861 = vadd.f32 0.0, %v6860
    %v6862 = vpop.f32.mrb[0].mxu0
    %v6863 = vadd.f32 0.0, %v6862
    %v6864 = vpop.f32.mrb[0].mxu0
    %v6865 = vadd.f32 0.0, %v6864
    %v6866 = vpop.f32.mrb[0].mxu0
    %v6867 = vadd.f32 0.0, %v6866
    %6868 = vdwg.mxu0
    %6869 = vmatprep.subr.bf16.mxu0 %v6015
    %6870 = vmatpush1.bf16.msra.mxu0 %v5964
    %6871 = vmatprep.subr.bf16.mxu0 %v6016
    %6872 = vmatpush1.bf16.msra.mxu0 %v5965
    %6873 = vmatprep.subr.bf16.mxu0 %v6017
    %6874 = vmatpush1.bf16.msra.mxu0 %v5966
    %6875 = vmatprep.subr.bf16.mxu0 %v6018
    %6876 = vmatpush1.bf16.msra.mxu0 %v5967
    %6877 = vmatprep.subr.bf16.mxu0 %v6019
    %6878 = vmatpush1.bf16.msra.mxu0 %v5968
    %6879 = vmatprep.subr.bf16.mxu0 %v6020
    %6880 = vmatpush1.bf16.msra.mxu0 %v5969
    %6881 = vmatprep.subr.bf16.mxu0 %v6021
    %6882 = vmatpush1.bf16.msra.mxu0 %v5970
    %6883 = vmatprep.subr.bf16.mxu0 %v6022
    %6884 = vmatpush1.bf16.msra.mxu0 %v5971
    %6885 = vmatprep.subr.bf16.mxu0 %v6023
    %6886 = vmatpush1.bf16.msra.mxu0 %v5972
    %6887 = vmatprep.subr.bf16.mxu0 %v6024
    %6888 = vmatpush1.bf16.msra.mxu0 %v5973
    %6889 = vmatprep.subr.bf16.mxu0 %v6025
    %6890 = vmatpush1.bf16.msra.mxu0 %v5974
    %6891 = vmatprep.subr.bf16.mxu0 %v6026
    %6892 = vmatpush1.bf16.msra.mxu0 %v5975
    %6893 = vmatprep.subr.bf16.mxu0 %v6027
    %6894 = vmatpush1.bf16.msra.mxu0 %v5976
    %6895 = vmatprep.subr.bf16.mxu0 %v6028
    %6896 = vmatpush1.bf16.msra.mxu0 %v5977
    %6897 = vmatprep.subr.bf16.mxu0 %v6029
    %6898 = vmatpush1.bf16.msra.mxu0 %v5978
    %6899 = vmatprep.subr.bf16.mxu0 %v6030
    %6900 = vmatpush1.bf16.msra.mxu0 %v5979
    %6901 = vmatprep.mubr.bf16.mxu0 %v6578
    %6902 = vmatmul.mubr.bf16.gmra.mrb[0].mxu0 %v6577
    %v6903 = vpop.f32.mrb[0].mxu0
    %v6904 = vadd.f32 %v6771, %v6903
    %v6905 = vpop.f32.mrb[0].mxu0
    %v6906 = vadd.f32 %v6773, %v6905
    %v6907 = vpop.f32.mrb[0].mxu0
    %v6908 = vadd.f32 %v6775, %v6907
    %v6909 = vpop.f32.mrb[0].mxu0
    %v6910 = vadd.f32 %v6777, %v6909
    %6911 = vmatprep.mubr.bf16.mxu0 %v6585
    %6912 = vmatmul.mubr.bf16.gmra.mrb[0].mxu0 %v6584
    %v6913 = vpop.f32.mrb[0].mxu0
    %v6914 = vadd.f32 %v6781, %v6913
    %v6915 = vpop.f32.mrb[0].mxu0
    %v6916 = vadd.f32 %v6783, %v6915
    %v6917 = vpop.f32.mrb[0].mxu0
    %v6918 = vadd.f32 %v6785, %v6917
    %v6919 = vpop.f32.mrb[0].mxu0
    %v6920 = vadd.f32 %v6787, %v6919
    %6921 = vmatprep.mubr.bf16.mxu0 %v6592
    %6922 = vmatmul.mubr.bf16.gmra.mrb[0].mxu0 %v6591
    %v6923 = vpop.f32.mrb[0].mxu0
    %v6924 = vadd.f32 %v6791, %v6923
    %v6925 = vpop.f32.mrb[0].mxu0
    %v6926 = vadd.f32 %v6793, %v6925
    %v6927 = vpop.f32.mrb[0].mxu0
    %v6928 = vadd.f32 %v6795, %v6927
    %v6929 = vpop.f32.mrb[0].mxu0
    %v6930 = vadd.f32 %v6797, %v6929
    %6931 = vmatprep.mubr.bf16.mxu0 %v6599
    %6932 = vmatmul.mubr.bf16.gmra.mrb[0].mxu0 %v6598
    %v6933 = vpop.f32.mrb[0].mxu0
    %v6934 = vadd.f32 %v6801, %v6933
    %v6935 = vpop.f32.mrb[0].mxu0
    %v6936 = vadd.f32 %v6803, %v6935
    %v6937 = vpop.f32.mrb[0].mxu0
    %v6938 = vadd.f32 %v6805, %v6937
    %v6939 = vpop.f32.mrb[0].mxu0
    %v6940 = vadd.f32 %v6807, %v6939
    %6941 = vmatprep.mubr.bf16.mxu0 %v6606
    %6942 = vmatmul.mubr.bf16.gmra.mrb[0].mxu0 %v6605
    %v6943 = vpop.f32.mrb[0].mxu0
    %v6944 = vadd.f32 %v6811, %v6943
    %v6945 = vpop.f32.mrb[0].mxu0
    %v6946 = vadd.f32 %v6813, %v6945
    %v6947 = vpop.f32.mrb[0].mxu0
    %v6948 = vadd.f32 %v6815, %v6947
    %v6949 = vpop.f32.mrb[0].mxu0
    %v6950 = vadd.f32 %v6817, %v6949
    %6951 = vmatprep.mubr.bf16.mxu0 %v6613
    %6952 = vmatmul.mubr.bf16.gmra.mrb[0].mxu0 %v6612
    %v6953 = vpop.f32.mrb[0].mxu0
    %v6954 = vadd.f32 %v6821, %v6953
    %v6955 = vpop.f32.mrb[0].mxu0
    %v6956 = vadd.f32 %v6823, %v6955
    %v6957 = vpop.f32.mrb[0].mxu0
    %v6958 = vadd.f32 %v6825, %v6957
    %v6959 = vpop.f32.mrb[0].mxu0
    %v6960 = vadd.f32 %v6827, %v6959
    %6961 = vmatprep.mubr.bf16.mxu0 %v6620
    %6962 = vmatmul.mubr.bf16.gmra.mrb[0].mxu0 %v6619
    %v6963 = vpop.f32.mrb[0].mxu0
    %v6964 = vadd.f32 %v6831, %v6963
    %v6965 = vpop.f32.mrb[0].mxu0
    %v6966 = vadd.f32 %v6833, %v6965
    %v6967 = vpop.f32.mrb[0].mxu0
    %v6968 = vadd.f32 %v6835, %v6967
    %v6969 = vpop.f32.mrb[0].mxu0
    %v6970 = vadd.f32 %v6837, %v6969
    %6971 = vmatprep.mubr.bf16.mxu0 %v6627
    %6972 = vmatmul.mubr.bf16.gmra.mrb[0].mxu0 %v6626
    %v6973 = vpop.f32.mrb[0].mxu0
    %v6974 = vadd.f32 %v6841, %v6973
    %v6975 = vpop.f32.mrb[0].mxu0
    %v6976 = vadd.f32 %v6843, %v6975
    %v6977 = vpop.f32.mrb[0].mxu0
    %v6978 = vadd.f32 %v6845, %v6977
    %v6979 = vpop.f32.mrb[0].mxu0
    %v6980 = vadd.f32 %v6847, %v6979
    %6981 = vmatprep.mubr.bf16.mxu0 %v6634
    %6982 = vmatmul.mubr.bf16.gmra.mrb[0].mxu0 %v6633
    %v6983 = vpop.f32.mrb[0].mxu0
    %v6984 = vadd.f32 %v6851, %v6983
    %v6985 = vpop.f32.mrb[0].mxu0
    %v6986 = vadd.f32 %v6853, %v6985
    %v6987 = vpop.f32.mrb[0].mxu0
    %v6988 = vadd.f32 %v6855, %v6987
    %v6989 = vpop.f32.mrb[0].mxu0
    %v6990 = vadd.f32 %v6857, %v6989
    %6991 = vmatprep.mubr.bf16.mxu0 %v6641
    %6992 = vmatmul.mubr.bf16.gmra.mrb[0].mxu0 %v6640
    %v6993 = vpop.f32.mrb[0].mxu0
    %v6994 = vadd.f32 %v6861, %v6993
    %v6995 = vpop.f32.mrb[0].mxu0
    %v6996 = vadd.f32 %v6863, %v6995
    %v6997 = vpop.f32.mrb[0].mxu0
    %v6998 = vadd.f32 %v6865, %v6997
    %v6999 = vpop.f32.mrb[0].mxu0
    %v7000 = vadd.f32 %v6867, %v6999
    %7001 = vdwg.mxu0
    %7002 = vmatprep.subr.bf16.mxu0 %v6031
    %7003 = vmatpush1.bf16.msra.mxu0 %v5980
    %7004 = vmatprep.subr.bf16.mxu0 %v6032
    %7005 = vmatpush1.bf16.msra.mxu0 %v5981
    %7006 = vmatprep.subr.bf16.mxu0 %v6033
    %7007 = vmatpush1.bf16.msra.mxu0 %v5982
    %7008 = vmatprep.subr.bf16.mxu0 %v6034
    %7009 = vmatpush1.bf16.msra.mxu0 %v5983
    %7010 = vmatprep.subr.bf16.mxu0 %v6035
    %7011 = vmatpush1.bf16.msra.mxu0 %v5984
    %7012 = vmatprep.subr.bf16.mxu0 %v6036
    %7013 = vmatpush1.bf16.msra.mxu0 %v5985
    %7014 = vmatprep.subr.bf16.mxu0 %v6037
    %7015 = vmatpush1.bf16.msra.mxu0 %v5986
    %7016 = vmatprep.subr.bf16.mxu0 %v6038
    %7017 = vmatpush1.bf16.msra.mxu0 %v5987
    %7018 = vmatprep.subr.bf16.mxu0 %v6039
    %7019 = vmatpush1.bf16.msra.mxu0 %v5988
    %7020 = vmatprep.subr.bf16.mxu0 %v6040
    %7021 = vmatpush1.bf16.msra.mxu0 %v5989
    %7022 = vmatprep.subr.bf16.mxu0 %v6041
    %7023 = vmatpush1.bf16.msra.mxu0 %v5990
    %7024 = vmatprep.subr.bf16.mxu0 %v6042
    %7025 = vmatpush1.bf16.msra.mxu0 %v5991
    %7026 = vmatprep.subr.bf16.mxu0 %v6043
    %7027 = vmatpush1.bf16.msra.mxu0 %v5992
    %7028 = vmatprep.subr.bf16.mxu0 %v6044
    %7029 = vmatpush1.bf16.msra.mxu0 %v5993
    %7030 = vmatprep.subr.bf16.mxu0 %v6045
    %7031 = vmatpush1.bf16.msra.mxu0 %v5994
    %7032 = vmatprep.subr.bf16.mxu0 %v6046
    %7033 = vmatpush1.bf16.msra.mxu0 %v5995
    %7034 = vmatprep.mubr.bf16.mxu0 %v6580
    %7035 = vmatmul.mubr.bf16.gmra.mrb[0].mxu0 %v6579
    %v7036 = vpop.f32.mrb[0].mxu0
    %v7037 = vadd.f32 %v6904, %v7036
    %v7038 = vpop.f32.mrb[0].mxu0
    %v7039 = vadd.f32 %v6906, %v7038
    %v7040 = vpop.f32.mrb[0].mxu0
    %v7041 = vadd.f32 %v6908, %v7040
    %v7042 = vpop.f32.mrb[0].mxu0
    %v7043 = vadd.f32 %v6910, %v7042
    %7044 = vmatprep.mubr.bf16.mxu0 %v6587
    %7045 = vmatmul.mubr.bf16.gmra.mrb[0].mxu0 %v6586
    %v7046 = vpop.f32.mrb[0].mxu0
    %v7047 = vadd.f32 %v6914, %v7046
    %v7048 = vpop.f32.mrb[0].mxu0
    %v7049 = vadd.f32 %v6916, %v7048
    %v7050 = vpop.f32.mrb[0].mxu0
    %v7051 = vadd.f32 %v6918, %v7050
    %v7052 = vpop.f32.mrb[0].mxu0
    %v7053 = vadd.f32 %v6920, %v7052
    %7054 = vmatprep.mubr.bf16.mxu0 %v6594
    %7055 = vmatmul.mubr.bf16.gmra.mrb[0].mxu0 %v6593
    %v7056 = vpop.f32.mrb[0].mxu0
    %v7057 = vadd.f32 %v6924, %v7056
    %v7058 = vpop.f32.mrb[0].mxu0
    %v7059 = vadd.f32 %v6926, %v7058
    %v7060 = vpop.f32.mrb[0].mxu0
    %v7061 = vadd.f32 %v6928, %v7060
    %v7062 = vpop.f32.mrb[0].mxu0
    %v7063 = vadd.f32 %v6930, %v7062
    %7064 = vmatprep.mubr.bf16.mxu0 %v6601
    %7065 = vmatmul.mubr.bf16.gmra.mrb[0].mxu0 %v6600
    %v7066 = vpop.f32.mrb[0].mxu0
    %v7067 = vadd.f32 %v6934, %v7066
    %v7068 = vpop.f32.mrb[0].mxu0
    %v7069 = vadd.f32 %v6936, %v7068
    %v7070 = vpop.f32.mrb[0].mxu0
    %v7071 = vadd.f32 %v6938, %v7070
    %v7072 = vpop.f32.mrb[0].mxu0
    %v7073 = vadd.f32 %v6940, %v7072
    %7074 = vmatprep.mubr.bf16.mxu0 %v6608
    %7075 = vmatmul.mubr.bf16.gmra.mrb[0].mxu0 %v6607
    %v7076 = vpop.f32.mrb[0].mxu0
    %v7077 = vadd.f32 %v6944, %v7076
    %v7078 = vpop.f32.mrb[0].mxu0
    %v7079 = vadd.f32 %v6946, %v7078
    %v7080 = vpop.f32.mrb[0].mxu0
    %v7081 = vadd.f32 %v6948, %v7080
    %v7082 = vpop.f32.mrb[0].mxu0
    %v7083 = vadd.f32 %v6950, %v7082
    %7084 = vmatprep.mubr.bf16.mxu0 %v6615
    %7085 = vmatmul.mubr.bf16.gmra.mrb[0].mxu0 %v6614
    %v7086 = vpop.f32.mrb[0].mxu0
    %v7087 = vadd.f32 %v6954, %v7086
    %v7088 = vpop.f32.mrb[0].mxu0
    %v7089 = vadd.f32 %v6956, %v7088
    %v7090 = vpop.f32.mrb[0].mxu0
    %v7091 = vadd.f32 %v6958, %v7090
    %v7092 = vpop.f32.mrb[0].mxu0
    %v7093 = vadd.f32 %v6960, %v7092
    %7094 = vmatprep.mubr.bf16.mxu0 %v6622
    %7095 = vmatmul.mubr.bf16.gmra.mrb[0].mxu0 %v6621
    %v7096 = vpop.f32.mrb[0].mxu0
    %v7097 = vadd.f32 %v6964, %v7096
    %v7098 = vpop.f32.mrb[0].mxu0
    %v7099 = vadd.f32 %v6966, %v7098
    %v7100 = vpop.f32.mrb[0].mxu0
    %v7101 = vadd.f32 %v6968, %v7100
    %v7102 = vpop.f32.mrb[0].mxu0
    %v7103 = vadd.f32 %v6970, %v7102
    %7104 = vmatprep.mubr.bf16.mxu0 %v6629
    %7105 = vmatmul.mubr.bf16.gmra.mrb[0].mxu0 %v6628
    %v7106 = vpop.f32.mrb[0].mxu0
    %v7107 = vadd.f32 %v6974, %v7106
    %v7108 = vpop.f32.mrb[0].mxu0
    %v7109 = vadd.f32 %v6976, %v7108
    %v7110 = vpop.f32.mrb[0].mxu0
    %v7111 = vadd.f32 %v6978, %v7110
    %v7112 = vpop.f32.mrb[0].mxu0
    %v7113 = vadd.f32 %v6980, %v7112
    %7114 = vmatprep.mubr.bf16.mxu0 %v6636
    %7115 = vmatmul.mubr.bf16.gmra.mrb[0].mxu0 %v6635
    %v7116 = vpop.f32.mrb[0].mxu0
    %v7117 = vadd.f32 %v6984, %v7116
    %v7118 = vpop.f32.mrb[0].mxu0
    %v7119 = vadd.f32 %v6986, %v7118
    %v7120 = vpop.f32.mrb[0].mxu0
    %v7121 = vadd.f32 %v6988, %v7120
    %v7122 = vpop.f32.mrb[0].mxu0
    %v7123 = vadd.f32 %v6990, %v7122
    %7124 = vmatprep.mubr.bf16.mxu0 %v6643
    %7125 = vmatmul.mubr.bf16.gmra.mrb[0].mxu0 %v6642
    %v7126 = vpop.f32.mrb[0].mxu0
    %v7127 = vadd.f32 %v6994, %v7126
    %v7128 = vpop.f32.mrb[0].mxu0
    %v7129 = vadd.f32 %v6996, %v7128
    %v7130 = vpop.f32.mrb[0].mxu0
    %v7131 = vadd.f32 %v6998, %v7130
    %v7132 = vpop.f32.mrb[0].mxu0
    %v7133 = vadd.f32 %v7000, %v7132
    %7134 = vdwg.mxu0
    %7135 = vmatprep.subr.bf16.mxu0 %v6047
    %7136 = vmatpush1.bf16.msra.mxu0 %v5996
    %7137 = vmatprep.subr.bf16.mxu0 %v6048
    %7138 = vmatpush1.bf16.msra.mxu0 %v5997
    %7139 = vmatprep.subr.bf16.mxu0 0
    %7140 = vmatpush1.bf16.msra.mxu0 0
    %7141 = vmatprep.subr.bf16.mxu0 0
    %7142 = vmatpush1.bf16.msra.mxu0 0
    %7143 = vmatprep.subr.bf16.mxu0 0
    %7144 = vmatpush1.bf16.msra.mxu0 0
    %7145 = vmatprep.subr.bf16.mxu0 0
    %7146 = vmatpush1.bf16.msra.mxu0 0
    %7147 = vmatprep.subr.bf16.mxu0 0
    %7148 = vmatpush1.bf16.msra.mxu0 0
    %7149 = vmatprep.subr.bf16.mxu0 0
    %7150 = vmatpush1.bf16.msra.mxu0 0
    %7151 = vmatprep.subr.bf16.mxu0 0
    %7152 = vmatpush1.bf16.msra.mxu0 0
    %7153 = vmatprep.subr.bf16.mxu0 0
    %7154 = vmatpush1.bf16.msra.mxu0 0
    %7155 = vmatprep.subr.bf16.mxu0 0
    %7156 = vmatpush1.bf16.msra.mxu0 0
    %7157 = vmatprep.subr.bf16.mxu0 0
    %7158 = vmatpush1.bf16.msra.mxu0 0
    %7159 = vmatprep.subr.bf16.mxu0 0
    %7160 = vmatpush1.bf16.msra.mxu0 0
    %7161 = vmatprep.subr.bf16.mxu0 0
    %7162 = vmatpush1.bf16.msra.mxu0 0
    %7163 = vmatprep.subr.bf16.mxu0 0
    %7164 = vmatpush1.bf16.msra.mxu0 0
    %7165 = vmatprep.subr.bf16.mxu0 0
    %7166 = vmatpush1.bf16.msra.mxu0 0
    %7167 = vmatprep.mubr.bf16.mxu0 0
    %7168 = vmatmul.mubr.bf16.gmra.mrb[0].mxu0 %v6707
    %v7169 = vpop.f32.mrb[0].mxu0
    %v7170 = vadd.f32 %v7037, %v7169
    %v7171 = vpop.f32.mrb[0].mxu0
    %v7172 = vadd.f32 %v7039, %v7171
    %v7173 = vpop.f32.mrb[0].mxu0
    %v7174 = vadd.f32 %v7041, %v7173
    %v7175 = vpop.f32.mrb[0].mxu0
    %v7176 = vadd.f32 %v7043, %v7175
    %7177 = vmatprep.mubr.bf16.mxu0 0
    %7178 = vmatmul.mubr.bf16.gmra.mrb[0].mxu0 %v6710
    %v7179 = vpop.f32.mrb[0].mxu0
    %v7180 = vadd.f32 %v7047, %v7179
    %v7181 = vpop.f32.mrb[0].mxu0
    %v7182 = vadd.f32 %v7049, %v7181
    %v7183 = vpop.f32.mrb[0].mxu0
    %v7184 = vadd.f32 %v7051, %v7183
    %v7185 = vpop.f32.mrb[0].mxu0
    %v7186 = vadd.f32 %v7053, %v7185
    %7187 = vmatprep.mubr.bf16.mxu0 0
    %7188 = vmatmul.mubr.bf16.gmra.mrb[0].mxu0 %v6713
    %v7189 = vpop.f32.mrb[0].mxu0
    %v7190 = vadd.f32 %v7057, %v7189
    %v7191 = vpop.f32.mrb[0].mxu0
    %v7192 = vadd.f32 %v7059, %v7191
    %v7193 = vpop.f32.mrb[0].mxu0
    %v7194 = vadd.f32 %v7061, %v7193
    %v7195 = vpop.f32.mrb[0].mxu0
    %v7196 = vadd.f32 %v7063, %v7195
    %7197 = vmatprep.mubr.bf16.mxu0 0
    %7198 = vmatmul.mubr.bf16.gmra.mrb[0].mxu0 %v6716
    %v7199 = vpop.f32.mrb[0].mxu0
    %v7200 = vadd.f32 %v7067, %v7199
    %v7201 = vpop.f32.mrb[0].mxu0
    %v7202 = vadd.f32 %v7069, %v7201
    %v7203 = vpop.f32.mrb[0].mxu0
    %v7204 = vadd.f32 %v7071, %v7203
    %v7205 = vpop.f32.mrb[0].mxu0
    %v7206 = vadd.f32 %v7073, %v7205
    %7207 = vmatprep.mubr.bf16.mxu0 0
    %7208 = vmatmul.mubr.bf16.gmra.mrb[0].mxu0 %v6719
    %v7209 = vpop.f32.mrb[0].mxu0
    %v7210 = vadd.f32 %v7077, %v7209
    %v7211 = vpop.f32.mrb[0].mxu0
    %v7212 = vadd.f32 %v7079, %v7211
    %v7213 = vpop.f32.mrb[0].mxu0
    %v7214 = vadd.f32 %v7081, %v7213
    %v7215 = vpop.f32.mrb[0].mxu0
    %v7216 = vadd.f32 %v7083, %v7215
    %7217 = vmatprep.mubr.bf16.mxu0 0
    %7218 = vmatmul.mubr.bf16.gmra.mrb[0].mxu0 %v6722
    %v7219 = vpop.f32.mrb[0].mxu0
    %v7220 = vadd.f32 %v7087, %v7219
    %v7221 = vpop.f32.mrb[0].mxu0
    %v7222 = vadd.f32 %v7089, %v7221
    %v7223 = vpop.f32.mrb[0].mxu0
    %v7224 = vadd.f32 %v7091, %v7223
    %v7225 = vpop.f32.mrb[0].mxu0
    %v7226 = vadd.f32 %v7093, %v7225
    %7227 = vmatprep.mubr.bf16.mxu0 0
    %7228 = vmatmul.mubr.bf16.gmra.mrb[0].mxu0 %v6725
    %v7229 = vpop.f32.mrb[0].mxu0
    %v7230 = vadd.f32 %v7097, %v7229
    %v7231 = vpop.f32.mrb[0].mxu0
    %v7232 = vadd.f32 %v7099, %v7231
    %v7233 = vpop.f32.mrb[0].mxu0
    %v7234 = vadd.f32 %v7101, %v7233
    %v7235 = vpop.f32.mrb[0].mxu0
    %v7236 = vadd.f32 %v7103, %v7235
    %7237 = vmatprep.mubr.bf16.mxu0 0
    %7238 = vmatmul.mubr.bf16.gmra.mrb[0].mxu0 %v6728
    %v7239 = vpop.f32.mrb[0].mxu0
    %v7240 = vadd.f32 %v7107, %v7239
    %v7241 = vpop.f32.mrb[0].mxu0
    %v7242 = vadd.f32 %v7109, %v7241
    %v7243 = vpop.f32.mrb[0].mxu0
    %v7244 = vadd.f32 %v7111, %v7243
    %v7245 = vpop.f32.mrb[0].mxu0
    %v7246 = vadd.f32 %v7113, %v7245
    %7247 = vmatprep.mubr.bf16.mxu0 0
    %7248 = vmatmul.mubr.bf16.gmra.mrb[0].mxu0 %v6731
    %v7249 = vpop.f32.mrb[0].mxu0
    %v7250 = vadd.f32 %v7117, %v7249
    %v7251 = vpop.f32.mrb[0].mxu0
    %v7252 = vadd.f32 %v7119, %v7251
    %v7253 = vpop.f32.mrb[0].mxu0
    %v7254 = vadd.f32 %v7121, %v7253
    %v7255 = vpop.f32.mrb[0].mxu0
    %v7256 = vadd.f32 %v7123, %v7255
    %7257 = vmatprep.mubr.bf16.mxu0 0
    %7258 = vmatmul.mubr.bf16.gmra.mrb[0].mxu0 %v6734
    %v7259 = vpop.f32.mrb[0].mxu0
    %v7260 = vadd.f32 %v7127, %v7259
    %v7261 = vpop.f32.mrb[0].mxu0
    %v7262 = vadd.f32 %v7129, %v7261
    %v7263 = vpop.f32.mrb[0].mxu0
    %v7264 = vadd.f32 %v7131, %v7263
    %v7265 = vpop.f32.mrb[0].mxu0
    %v7266 = vadd.f32 %v7133, %v7265
    %7267 = vdwg.mxu0
    %7268 = vmatprep.subr.bf16.mxu0 %v6101
    %7269 = vmatpush1.bf16.msra.mxu0 %v6050
    %7270 = vmatprep.subr.bf16.mxu0 %v6102
    %7271 = vmatpush1.bf16.msra.mxu0 %v6051
    %7272 = vmatprep.subr.bf16.mxu0 %v6103
    %7273 = vmatpush1.bf16.msra.mxu0 %v6052
    %7274 = vmatprep.subr.bf16.mxu0 %v6104
    %7275 = vmatpush1.bf16.msra.mxu0 %v6053
    %7276 = vmatprep.subr.bf16.mxu0 %v6105
    %7277 = vmatpush1.bf16.msra.mxu0 %v6054
    %7278 = vmatprep.subr.bf16.mxu0 %v6106
    %7279 = vmatpush1.bf16.msra.mxu0 %v6055
    %7280 = vmatprep.subr.bf16.mxu0 %v6107
    %7281 = vmatpush1.bf16.msra.mxu0 %v6056
    %7282 = vmatprep.subr.bf16.mxu0 %v6108
    %7283 = vmatpush1.bf16.msra.mxu0 %v6057
    %7284 = vmatprep.subr.bf16.mxu0 %v6109
    %7285 = vmatpush1.bf16.msra.mxu0 %v6058
    %7286 = vmatprep.subr.bf16.mxu0 %v6110
    %7287 = vmatpush1.bf16.msra.mxu0 %v6059
    %7288 = vmatprep.subr.bf16.mxu0 %v6111
    %7289 = vmatpush1.bf16.msra.mxu0 %v6060
    %7290 = vmatprep.subr.bf16.mxu0 %v6112
    %7291 = vmatpush1.bf16.msra.mxu0 %v6061
    %7292 = vmatprep.subr.bf16.mxu0 %v6113
    %7293 = vmatpush1.bf16.msra.mxu0 %v6062
    %7294 = vmatprep.subr.bf16.mxu0 %v6114
    %7295 = vmatpush1.bf16.msra.mxu0 %v6063
    %7296 = vmatprep.subr.bf16.mxu0 %v6115
    %7297 = vmatpush1.bf16.msra.mxu0 %v6064
    %7298 = vmatprep.subr.bf16.mxu0 %v6116
    %7299 = vmatpush1.bf16.msra.mxu0 %v6065
    %7300 = vmatprep.mubr.bf16.mxu0 %v6576
    %7301 = vmatmul.mubr.bf16.gmra.mrb[0].mxu0 %v6575
    %v7302 = vpop.f32.mrb[0].mxu0
    %v7303 = vadd.f32 0.0, %v7302
    %v7304 = vpop.f32.mrb[0].mxu0
    %v7305 = vadd.f32 0.0, %v7304
    %v7306 = vpop.f32.mrb[0].mxu0
    %v7307 = vadd.f32 0.0, %v7306
    %v7308 = vpop.f32.mrb[0].mxu0
    %v7309 = vadd.f32 0.0, %v7308
    %7310 = vmatprep.mubr.bf16.mxu0 %v6583
    %7311 = vmatmul.mubr.bf16.gmra.mrb[0].mxu0 %v6582
    %v7312 = vpop.f32.mrb[0].mxu0
    %v7313 = vadd.f32 0.0, %v7312
    %v7314 = vpop.f32.mrb[0].mxu0
    %v7315 = vadd.f32 0.0, %v7314
    %v7316 = vpop.f32.mrb[0].mxu0
    %v7317 = vadd.f32 0.0, %v7316
    %v7318 = vpop.f32.mrb[0].mxu0
    %v7319 = vadd.f32 0.0, %v7318
    %7320 = vmatprep.mubr.bf16.mxu0 %v6590
    %7321 = vmatmul.mubr.bf16.gmra.mrb[0].mxu0 %v6589
    %v7322 = vpop.f32.mrb[0].mxu0
    %v7323 = vadd.f32 0.0, %v7322
    %v7324 = vpop.f32.mrb[0].mxu0
    %v7325 = vadd.f32 0.0, %v7324
    %v7326 = vpop.f32.mrb[0].mxu0
    %v7327 = vadd.f32 0.0, %v7326
    %v7328 = vpop.f32.mrb[0].mxu0
    %v7329 = vadd.f32 0.0, %v7328
    %7330 = vmatprep.mubr.bf16.mxu0 %v6597
    %7331 = vmatmul.mubr.bf16.gmra.mrb[0].mxu0 %v6596
    %v7332 = vpop.f32.mrb[0].mxu0
    %v7333 = vadd.f32 0.0, %v7332
    %v7334 = vpop.f32.mrb[0].mxu0
    %v7335 = vadd.f32 0.0, %v7334
    %v7336 = vpop.f32.mrb[0].mxu0
    %v7337 = vadd.f32 0.0, %v7336
    %v7338 = vpop.f32.mrb[0].mxu0
    %v7339 = vadd.f32 0.0, %v7338
    %7340 = vmatprep.mubr.bf16.mxu0 %v6604
    %7341 = vmatmul.mubr.bf16.gmra.mrb[0].mxu0 %v6603
    %v7342 = vpop.f32.mrb[0].mxu0
    %v7343 = vadd.f32 0.0, %v7342
    %v7344 = vpop.f32.mrb[0].mxu0
    %v7345 = vadd.f32 0.0, %v7344
    %v7346 = vpop.f32.mrb[0].mxu0
    %v7347 = vadd.f32 0.0, %v7346
    %v7348 = vpop.f32.mrb[0].mxu0
    %v7349 = vadd.f32 0.0, %v7348
    %7350 = vmatprep.mubr.bf16.mxu0 %v6611
    %7351 = vmatmul.mubr.bf16.gmra.mrb[0].mxu0 %v6610
    %v7352 = vpop.f32.mrb[0].mxu0
    %v7353 = vadd.f32 0.0, %v7352
    %v7354 = vpop.f32.mrb[0].mxu0
    %v7355 = vadd.f32 0.0, %v7354
    %v7356 = vpop.f32.mrb[0].mxu0
    %v7357 = vadd.f32 0.0, %v7356
    %v7358 = vpop.f32.mrb[0].mxu0
    %v7359 = vadd.f32 0.0, %v7358
    %7360 = vmatprep.mubr.bf16.mxu0 %v6618
    %7361 = vmatmul.mubr.bf16.gmra.mrb[0].mxu0 %v6617
    %v7362 = vpop.f32.mrb[0].mxu0
    %v7363 = vadd.f32 0.0, %v7362
    %v7364 = vpop.f32.mrb[0].mxu0
    %v7365 = vadd.f32 0.0, %v7364
    %v7366 = vpop.f32.mrb[0].mxu0
    %v7367 = vadd.f32 0.0, %v7366
    %v7368 = vpop.f32.mrb[0].mxu0
    %v7369 = vadd.f32 0.0, %v7368
    %7370 = vmatprep.mubr.bf16.mxu0 %v6625
    %7371 = vmatmul.mubr.bf16.gmra.mrb[0].mxu0 %v6624
    %v7372 = vpop.f32.mrb[0].mxu0
    %v7373 = vadd.f32 0.0, %v7372
    %v7374 = vpop.f32.mrb[0].mxu0
    %v7375 = vadd.f32 0.0, %v7374
    %v7376 = vpop.f32.mrb[0].mxu0
    %v7377 = vadd.f32 0.0, %v7376
    %v7378 = vpop.f32.mrb[0].mxu0
    %v7379 = vadd.f32 0.0, %v7378
    %7380 = vmatprep.mubr.bf16.mxu0 %v6632
    %7381 = vmatmul.mubr.bf16.gmra.mrb[0].mxu0 %v6631
    %v7382 = vpop.f32.mrb[0].mxu0
    %v7383 = vadd.f32 0.0, %v7382
    %v7384 = vpop.f32.mrb[0].mxu0
    %v7385 = vadd.f32 0.0, %v7384
    %v7386 = vpop.f32.mrb[0].mxu0
    %v7387 = vadd.f32 0.0, %v7386
    %v7388 = vpop.f32.mrb[0].mxu0
    %v7389 = vadd.f32 0.0, %v7388
    %7390 = vmatprep.mubr.bf16.mxu0 %v6639
    %7391 = vmatmul.mubr.bf16.gmra.mrb[0].mxu0 %v6638
    %v7392 = vpop.f32.mrb[0].mxu0
    %v7393 = vadd.f32 0.0, %v7392
    %v7394 = vpop.f32.mrb[0].mxu0
    %v7395 = vadd.f32 0.0, %v7394
    %v7396 = vpop.f32.mrb[0].mxu0
    %v7397 = vadd.f32 0.0, %v7396
    %v7398 = vpop.f32.mrb[0].mxu0
    %v7399 = vadd.f32 0.0, %v7398
    %7400 = vdwg.mxu0
    %7401 = vmatprep.subr.bf16.mxu0 %v6117
    %7402 = vmatpush1.bf16.msra.mxu0 %v6066
    %7403 = vmatprep.subr.bf16.mxu0 %v6118
    %7404 = vmatpush1.bf16.msra.mxu0 %v6067
    %7405 = vmatprep.subr.bf16.mxu0 %v6119
    %7406 = vmatpush1.bf16.msra.mxu0 %v6068
    %7407 = vmatprep.subr.bf16.mxu0 %v6120
    %7408 = vmatpush1.bf16.msra.mxu0 %v6069
    %7409 = vmatprep.subr.bf16.mxu0 %v6121
    %7410 = vmatpush1.bf16.msra.mxu0 %v6070
    %7411 = vmatprep.subr.bf16.mxu0 %v6122
    %7412 = vmatpush1.bf16.msra.mxu0 %v6071
    %7413 = vmatprep.subr.bf16.mxu0 %v6123
    %7414 = vmatpush1.bf16.msra.mxu0 %v6072
    %7415 = vmatprep.subr.bf16.mxu0 %v6124
    %7416 = vmatpush1.bf16.msra.mxu0 %v6073
    %7417 = vmatprep.subr.bf16.mxu0 %v6125
    %7418 = vmatpush1.bf16.msra.mxu0 %v6074
    %7419 = vmatprep.subr.bf16.mxu0 %v6126
    %7420 = vmatpush1.bf16.msra.mxu0 %v6075
    %7421 = vmatprep.subr.bf16.mxu0 %v6127
    %7422 = vmatpush1.bf16.msra.mxu0 %v6076
    %7423 = vmatprep.subr.bf16.mxu0 %v6128
    %7424 = vmatpush1.bf16.msra.mxu0 %v6077
    %7425 = vmatprep.subr.bf16.mxu0 %v6129
    %7426 = vmatpush1.bf16.msra.mxu0 %v6078
    %7427 = vmatprep.subr.bf16.mxu0 %v6130
    %7428 = vmatpush1.bf16.msra.mxu0 %v6079
    %7429 = vmatprep.subr.bf16.mxu0 %v6131
    %7430 = vmatpush1.bf16.msra.mxu0 %v6080
    %7431 = vmatprep.subr.bf16.mxu0 %v6132
    %7432 = vmatpush1.bf16.msra.mxu0 %v6081
    %7433 = vmatprep.mubr.bf16.mxu0 %v6578
    %7434 = vmatmul.mubr.bf16.gmra.mrb[0].mxu0 %v6577
    %v7435 = vpop.f32.mrb[0].mxu0
    %v7436 = vadd.f32 %v7303, %v7435
    %v7437 = vpop.f32.mrb[0].mxu0
    %v7438 = vadd.f32 %v7305, %v7437
    %v7439 = vpop.f32.mrb[0].mxu0
    %v7440 = vadd.f32 %v7307, %v7439
    %v7441 = vpop.f32.mrb[0].mxu0
    %v7442 = vadd.f32 %v7309, %v7441
    %7443 = vmatprep.mubr.bf16.mxu0 %v6585
    %7444 = vmatmul.mubr.bf16.gmra.mrb[0].mxu0 %v6584
    %v7445 = vpop.f32.mrb[0].mxu0
    %v7446 = vadd.f32 %v7313, %v7445
    %v7447 = vpop.f32.mrb[0].mxu0
    %v7448 = vadd.f32 %v7315, %v7447
    %v7449 = vpop.f32.mrb[0].mxu0
    %v7450 = vadd.f32 %v7317, %v7449
    %v7451 = vpop.f32.mrb[0].mxu0
    %v7452 = vadd.f32 %v7319, %v7451
    %7453 = vmatprep.mubr.bf16.mxu0 %v6592
    %7454 = vmatmul.mubr.bf16.gmra.mrb[0].mxu0 %v6591
    %v7455 = vpop.f32.mrb[0].mxu0
    %v7456 = vadd.f32 %v7323, %v7455
    %v7457 = vpop.f32.mrb[0].mxu0
    %v7458 = vadd.f32 %v7325, %v7457
    %v7459 = vpop.f32.mrb[0].mxu0
    %v7460 = vadd.f32 %v7327, %v7459
    %v7461 = vpop.f32.mrb[0].mxu0
    %v7462 = vadd.f32 %v7329, %v7461
    %7463 = vmatprep.mubr.bf16.mxu0 %v6599
    %7464 = vmatmul.mubr.bf16.gmra.mrb[0].mxu0 %v6598
    %v7465 = vpop.f32.mrb[0].mxu0
    %v7466 = vadd.f32 %v7333, %v7465
    %v7467 = vpop.f32.mrb[0].mxu0
    %v7468 = vadd.f32 %v7335, %v7467
    %v7469 = vpop.f32.mrb[0].mxu0
    %v7470 = vadd.f32 %v7337, %v7469
    %v7471 = vpop.f32.mrb[0].mxu0
    %v7472 = vadd.f32 %v7339, %v7471
    %7473 = vmatprep.mubr.bf16.mxu0 %v6606
    %7474 = vmatmul.mubr.bf16.gmra.mrb[0].mxu0 %v6605
    %v7475 = vpop.f32.mrb[0].mxu0
    %v7476 = vadd.f32 %v7343, %v7475
    %v7477 = vpop.f32.mrb[0].mxu0
    %v7478 = vadd.f32 %v7345, %v7477
    %v7479 = vpop.f32.mrb[0].mxu0
    %v7480 = vadd.f32 %v7347, %v7479
    %v7481 = vpop.f32.mrb[0].mxu0
    %v7482 = vadd.f32 %v7349, %v7481
    %7483 = vmatprep.mubr.bf16.mxu0 %v6613
    %7484 = vmatmul.mubr.bf16.gmra.mrb[0].mxu0 %v6612
    %v7485 = vpop.f32.mrb[0].mxu0
    %v7486 = vadd.f32 %v7353, %v7485
    %v7487 = vpop.f32.mrb[0].mxu0
    %v7488 = vadd.f32 %v7355, %v7487
    %v7489 = vpop.f32.mrb[0].mxu0
    %v7490 = vadd.f32 %v7357, %v7489
    %v7491 = vpop.f32.mrb[0].mxu0
    %v7492 = vadd.f32 %v7359, %v7491
    %7493 = vmatprep.mubr.bf16.mxu0 %v6620
    %7494 = vmatmul.mubr.bf16.gmra.mrb[0].mxu0 %v6619
    %v7495 = vpop.f32.mrb[0].mxu0
    %v7496 = vadd.f32 %v7363, %v7495
    %v7497 = vpop.f32.mrb[0].mxu0
    %v7498 = vadd.f32 %v7365, %v7497
    %v7499 = vpop.f32.mrb[0].mxu0
    %v7500 = vadd.f32 %v7367, %v7499
    %v7501 = vpop.f32.mrb[0].mxu0
    %v7502 = vadd.f32 %v7369, %v7501
    %7503 = vmatprep.mubr.bf16.mxu0 %v6627
    %7504 = vmatmul.mubr.bf16.gmra.mrb[0].mxu0 %v6626
    %v7505 = vpop.f32.mrb[0].mxu0
    %v7506 = vadd.f32 %v7373, %v7505
    %v7507 = vpop.f32.mrb[0].mxu0
    %v7508 = vadd.f32 %v7375, %v7507
    %v7509 = vpop.f32.mrb[0].mxu0
    %v7510 = vadd.f32 %v7377, %v7509
    %v7511 = vpop.f32.mrb[0].mxu0
    %v7512 = vadd.f32 %v7379, %v7511
    %7513 = vmatprep.mubr.bf16.mxu0 %v6634
    %7514 = vmatmul.mubr.bf16.gmra.mrb[0].mxu0 %v6633
    %v7515 = vpop.f32.mrb[0].mxu0
    %v7516 = vadd.f32 %v7383, %v7515
    %v7517 = vpop.f32.mrb[0].mxu0
    %v7518 = vadd.f32 %v7385, %v7517
    %v7519 = vpop.f32.mrb[0].mxu0
    %v7520 = vadd.f32 %v7387, %v7519
    %v7521 = vpop.f32.mrb[0].mxu0
    %v7522 = vadd.f32 %v7389, %v7521
    %7523 = vmatprep.mubr.bf16.mxu0 %v6641
    %7524 = vmatmul.mubr.bf16.gmra.mrb[0].mxu0 %v6640
    %v7525 = vpop.f32.mrb[0].mxu0
    %v7526 = vadd.f32 %v7393, %v7525
    %v7527 = vpop.f32.mrb[0].mxu0
    %v7528 = vadd.f32 %v7395, %v7527
    %v7529 = vpop.f32.mrb[0].mxu0
    %v7530 = vadd.f32 %v7397, %v7529
    %v7531 = vpop.f32.mrb[0].mxu0
    %v7532 = vadd.f32 %v7399, %v7531
    %7533 = vdwg.mxu0
    %7534 = vmatprep.subr.bf16.mxu0 %v6133
    %7535 = vmatpush1.bf16.msra.mxu0 %v6082
    %7536 = vmatprep.subr.bf16.mxu0 %v6134
    %7537 = vmatpush1.bf16.msra.mxu0 %v6083
    %7538 = vmatprep.subr.bf16.mxu0 %v6135
    %7539 = vmatpush1.bf16.msra.mxu0 %v6084
    %7540 = vmatprep.subr.bf16.mxu0 %v6136
    %7541 = vmatpush1.bf16.msra.mxu0 %v6085
    %7542 = vmatprep.subr.bf16.mxu0 %v6137
    %7543 = vmatpush1.bf16.msra.mxu0 %v6086
    %7544 = vmatprep.subr.bf16.mxu0 %v6138
    %7545 = vmatpush1.bf16.msra.mxu0 %v6087
    %7546 = vmatprep.subr.bf16.mxu0 %v6139
    %7547 = vmatpush1.bf16.msra.mxu0 %v6088
    %7548 = vmatprep.subr.bf16.mxu0 %v6140
    %7549 = vmatpush1.bf16.msra.mxu0 %v6089
    %7550 = vmatprep.subr.bf16.mxu0 %v6141
    %7551 = vmatpush1.bf16.msra.mxu0 %v6090
    %7552 = vmatprep.subr.bf16.mxu0 %v6142
    %7553 = vmatpush1.bf16.msra.mxu0 %v6091
    %7554 = vmatprep.subr.bf16.mxu0 %v6143
    %7555 = vmatpush1.bf16.msra.mxu0 %v6092
    %7556 = vmatprep.subr.bf16.mxu0 %v6144
    %7557 = vmatpush1.bf16.msra.mxu0 %v6093
    %7558 = vmatprep.subr.bf16.mxu0 %v6145
    %7559 = vmatpush1.bf16.msra.mxu0 %v6094
    %7560 = vmatprep.subr.bf16.mxu0 %v6146
    %7561 = vmatpush1.bf16.msra.mxu0 %v6095
    %7562 = vmatprep.subr.bf16.mxu0 %v6147
    %7563 = vmatpush1.bf16.msra.mxu0 %v6096
    %7564 = vmatprep.subr.bf16.mxu0 %v6148
    %7565 = vmatpush1.bf16.msra.mxu0 %v6097
    %7566 = vmatprep.mubr.bf16.mxu0 %v6580
    %7567 = vmatmul.mubr.bf16.gmra.mrb[0].mxu0 %v6579
    %v7568 = vpop.f32.mrb[0].mxu0
    %v7569 = vadd.f32 %v7436, %v7568
    %v7570 = vpop.f32.mrb[0].mxu0
    %v7571 = vadd.f32 %v7438, %v7570
    %v7572 = vpop.f32.mrb[0].mxu0
    %v7573 = vadd.f32 %v7440, %v7572
    %v7574 = vpop.f32.mrb[0].mxu0
    %v7575 = vadd.f32 %v7442, %v7574
    %7576 = vmatprep.mubr.bf16.mxu0 %v6587
    %7577 = vmatmul.mubr.bf16.gmra.mrb[0].mxu0 %v6586
    %v7578 = vpop.f32.mrb[0].mxu0
    %v7579 = vadd.f32 %v7446, %v7578
    %v7580 = vpop.f32.mrb[0].mxu0
    %v7581 = vadd.f32 %v7448, %v7580
    %v7582 = vpop.f32.mrb[0].mxu0
    %v7583 = vadd.f32 %v7450, %v7582
    %v7584 = vpop.f32.mrb[0].mxu0
    %v7585 = vadd.f32 %v7452, %v7584
    %7586 = vmatprep.mubr.bf16.mxu0 %v6594
    %7587 = vmatmul.mubr.bf16.gmra.mrb[0].mxu0 %v6593
    %v7588 = vpop.f32.mrb[0].mxu0
    %v7589 = vadd.f32 %v7456, %v7588
    %v7590 = vpop.f32.mrb[0].mxu0
    %v7591 = vadd.f32 %v7458, %v7590
    %v7592 = vpop.f32.mrb[0].mxu0
    %v7593 = vadd.f32 %v7460, %v7592
    %v7594 = vpop.f32.mrb[0].mxu0
    %v7595 = vadd.f32 %v7462, %v7594
    %7596 = vmatprep.mubr.bf16.mxu0 %v6601
    %7597 = vmatmul.mubr.bf16.gmra.mrb[0].mxu0 %v6600
    %v7598 = vpop.f32.mrb[0].mxu0
    %v7599 = vadd.f32 %v7466, %v7598
    %v7600 = vpop.f32.mrb[0].mxu0
    %v7601 = vadd.f32 %v7468, %v7600
    %v7602 = vpop.f32.mrb[0].mxu0
    %v7603 = vadd.f32 %v7470, %v7602
    %v7604 = vpop.f32.mrb[0].mxu0
    %v7605 = vadd.f32 %v7472, %v7604
    %7606 = vmatprep.mubr.bf16.mxu0 %v6608
    %7607 = vmatmul.mubr.bf16.gmra.mrb[0].mxu0 %v6607
    %v7608 = vpop.f32.mrb[0].mxu0
    %v7609 = vadd.f32 %v7476, %v7608
    %v7610 = vpop.f32.mrb[0].mxu0
    %v7611 = vadd.f32 %v7478, %v7610
    %v7612 = vpop.f32.mrb[0].mxu0
    %v7613 = vadd.f32 %v7480, %v7612
    %v7614 = vpop.f32.mrb[0].mxu0
    %v7615 = vadd.f32 %v7482, %v7614
    %7616 = vmatprep.mubr.bf16.mxu0 %v6615
    %7617 = vmatmul.mubr.bf16.gmra.mrb[0].mxu0 %v6614
    %v7618 = vpop.f32.mrb[0].mxu0
    %v7619 = vadd.f32 %v7486, %v7618
    %v7620 = vpop.f32.mrb[0].mxu0
    %v7621 = vadd.f32 %v7488, %v7620
    %v7622 = vpop.f32.mrb[0].mxu0
    %v7623 = vadd.f32 %v7490, %v7622
    %v7624 = vpop.f32.mrb[0].mxu0
    %v7625 = vadd.f32 %v7492, %v7624
    %7626 = vmatprep.mubr.bf16.mxu0 %v6622
    %7627 = vmatmul.mubr.bf16.gmra.mrb[0].mxu0 %v6621
    %v7628 = vpop.f32.mrb[0].mxu0
    %v7629 = vadd.f32 %v7496, %v7628
    %v7630 = vpop.f32.mrb[0].mxu0
    %v7631 = vadd.f32 %v7498, %v7630
    %v7632 = vpop.f32.mrb[0].mxu0
    %v7633 = vadd.f32 %v7500, %v7632
    %v7634 = vpop.f32.mrb[0].mxu0
    %v7635 = vadd.f32 %v7502, %v7634
    %7636 = vmatprep.mubr.bf16.mxu0 %v6629
    %7637 = vmatmul.mubr.bf16.gmra.mrb[0].mxu0 %v6628
    %v7638 = vpop.f32.mrb[0].mxu0
    %v7639 = vadd.f32 %v7506, %v7638
    %v7640 = vpop.f32.mrb[0].mxu0
    %v7641 = vadd.f32 %v7508, %v7640
    %v7642 = vpop.f32.mrb[0].mxu0
    %v7643 = vadd.f32 %v7510, %v7642
    %v7644 = vpop.f32.mrb[0].mxu0
    %v7645 = vadd.f32 %v7512, %v7644
    %7646 = vmatprep.mubr.bf16.mxu0 %v6636
    %7647 = vmatmul.mubr.bf16.gmra.mrb[0].mxu0 %v6635
    %v7648 = vpop.f32.mrb[0].mxu0
    %v7649 = vadd.f32 %v7516, %v7648
    %v7650 = vpop.f32.mrb[0].mxu0
    %v7651 = vadd.f32 %v7518, %v7650
    %v7652 = vpop.f32.mrb[0].mxu0
    %v7653 = vadd.f32 %v7520, %v7652
    %v7654 = vpop.f32.mrb[0].mxu0
    %v7655 = vadd.f32 %v7522, %v7654
    %7656 = vmatprep.mubr.bf16.mxu0 %v6643
    %7657 = vmatmul.mubr.bf16.gmra.mrb[0].mxu0 %v6642
    %v7658 = vpop.f32.mrb[0].mxu0
    %v7659 = vadd.f32 %v7526, %v7658
    %v7660 = vpop.f32.mrb[0].mxu0
    %v7661 = vadd.f32 %v7528, %v7660
    %v7662 = vpop.f32.mrb[0].mxu0
    %v7663 = vadd.f32 %v7530, %v7662
    %v7664 = vpop.f32.mrb[0].mxu0
    %v7665 = vadd.f32 %v7532, %v7664
    %7666 = vdwg.mxu0
    %7667 = vmatprep.subr.bf16.mxu0 %v6149
    %7668 = vmatpush1.bf16.msra.mxu0 %v6098
    %7669 = vmatprep.subr.bf16.mxu0 %v6150
    %7670 = vmatpush1.bf16.msra.mxu0 %v6099
    %7671 = vmatprep.subr.bf16.mxu0 0
    %7672 = vmatpush1.bf16.msra.mxu0 0
    %7673 = vmatprep.subr.bf16.mxu0 0
    %7674 = vmatpush1.bf16.msra.mxu0 0
    %7675 = vmatprep.subr.bf16.mxu0 0
    %7676 = vmatpush1.bf16.msra.mxu0 0
    %7677 = vmatprep.subr.bf16.mxu0 0
    %7678 = vmatpush1.bf16.msra.mxu0 0
    %7679 = vmatprep.subr.bf16.mxu0 0
    %7680 = vmatpush1.bf16.msra.mxu0 0
    %7681 = vmatprep.subr.bf16.mxu0 0
    %7682 = vmatpush1.bf16.msra.mxu0 0
    %7683 = vmatprep.subr.bf16.mxu0 0
    %7684 = vmatpush1.bf16.msra.mxu0 0
    %7685 = vmatprep.subr.bf16.mxu0 0
    %7686 = vmatpush1.bf16.msra.mxu0 0
    %7687 = vmatprep.subr.bf16.mxu0 0
    %7688 = vmatpush1.bf16.msra.mxu0 0
    %7689 = vmatprep.subr.bf16.mxu0 0
    %7690 = vmatpush1.bf16.msra.mxu0 0
    %7691 = vmatprep.subr.bf16.mxu0 0
    %7692 = vmatpush1.bf16.msra.mxu0 0
    %7693 = vmatprep.subr.bf16.mxu0 0
    %7694 = vmatpush1.bf16.msra.mxu0 0
    %7695 = vmatprep.subr.bf16.mxu0 0
    %7696 = vmatpush1.bf16.msra.mxu0 0
    %7697 = vmatprep.subr.bf16.mxu0 0
    %7698 = vmatpush1.bf16.msra.mxu0 0
    %7699 = vmatprep.mubr.bf16.mxu0 0
    %7700 = vmatmul.mubr.bf16.gmra.mrb[0].mxu0 %v6707
    %v7701 = vpop.f32.mrb[0].mxu0
    %v7702 = vadd.f32 %v7569, %v7701
    %v7703 = vpop.f32.mrb[0].mxu0
    %v7704 = vadd.f32 %v7571, %v7703
    %v7705 = vpop.f32.mrb[0].mxu0
    %v7706 = vadd.f32 %v7573, %v7705
    %v7707 = vpop.f32.mrb[0].mxu0
    %v7708 = vadd.f32 %v7575, %v7707
    %7709 = vmatprep.mubr.bf16.mxu0 0
    %7710 = vmatmul.mubr.bf16.gmra.mrb[0].mxu0 %v6710
    %v7711 = vpop.f32.mrb[0].mxu0
    %v7712 = vadd.f32 %v7579, %v7711
    %v7713 = vpop.f32.mrb[0].mxu0
    %v7714 = vadd.f32 %v7581, %v7713
    %v7715 = vpop.f32.mrb[0].mxu0
    %v7716 = vadd.f32 %v7583, %v7715
    %v7717 = vpop.f32.mrb[0].mxu0
    %v7718 = vadd.f32 %v7585, %v7717
    %7719 = vmatprep.mubr.bf16.mxu0 0
    %7720 = vmatmul.mubr.bf16.gmra.mrb[0].mxu0 %v6713
    %v7721 = vpop.f32.mrb[0].mxu0
    %v7722 = vadd.f32 %v7589, %v7721
    %v7723 = vpop.f32.mrb[0].mxu0
    %v7724 = vadd.f32 %v7591, %v7723
    %v7725 = vpop.f32.mrb[0].mxu0
    %v7726 = vadd.f32 %v7593, %v7725
    %v7727 = vpop.f32.mrb[0].mxu0
    %v7728 = vadd.f32 %v7595, %v7727
    %7729 = vmatprep.mubr.bf16.mxu0 0
    %7730 = vmatmul.mubr.bf16.gmra.mrb[0].mxu0 %v6716
    %v7731 = vpop.f32.mrb[0].mxu0
    %v7732 = vadd.f32 %v7599, %v7731
    %v7733 = vpop.f32.mrb[0].mxu0
    %v7734 = vadd.f32 %v7601, %v7733
    %v7735 = vpop.f32.mrb[0].mxu0
    %v7736 = vadd.f32 %v7603, %v7735
    %v7737 = vpop.f32.mrb[0].mxu0
    %v7738 = vadd.f32 %v7605, %v7737
    %7739 = vmatprep.mubr.bf16.mxu0 0
    %7740 = vmatmul.mubr.bf16.gmra.mrb[0].mxu0 %v6719
    %v7741 = vpop.f32.mrb[0].mxu0
    %v7742 = vadd.f32 %v7609, %v7741
    %v7743 = vpop.f32.mrb[0].mxu0
    %v7744 = vadd.f32 %v7611, %v7743
    %v7745 = vpop.f32.mrb[0].mxu0
    %v7746 = vadd.f32 %v7613, %v7745
    %v7747 = vpop.f32.mrb[0].mxu0
    %v7748 = vadd.f32 %v7615, %v7747
    %7749 = vmatprep.mubr.bf16.mxu0 0
    %7750 = vmatmul.mubr.bf16.gmra.mrb[0].mxu0 %v6722
    %v7751 = vpop.f32.mrb[0].mxu0
    %v7752 = vadd.f32 %v7619, %v7751
    %v7753 = vpop.f32.mrb[0].mxu0
    %v7754 = vadd.f32 %v7621, %v7753
    %v7755 = vpop.f32.mrb[0].mxu0
    %v7756 = vadd.f32 %v7623, %v7755
    %v7757 = vpop.f32.mrb[0].mxu0
    %v7758 = vadd.f32 %v7625, %v7757
    %7759 = vmatprep.mubr.bf16.mxu0 0
    %7760 = vmatmul.mubr.bf16.gmra.mrb[0].mxu0 %v6725
    %v7761 = vpop.f32.mrb[0].mxu0
    %v7762 = vadd.f32 %v7629, %v7761
    %v7763 = vpop.f32.mrb[0].mxu0
    %v7764 = vadd.f32 %v7631, %v7763
    %v7765 = vpop.f32.mrb[0].mxu0
    %v7766 = vadd.f32 %v7633, %v7765
    %v7767 = vpop.f32.mrb[0].mxu0
    %v7768 = vadd.f32 %v7635, %v7767
    %7769 = vmatprep.mubr.bf16.mxu0 0
    %7770 = vmatmul.mubr.bf16.gmra.mrb[0].mxu0 %v6728
    %v7771 = vpop.f32.mrb[0].mxu0
    %v7772 = vadd.f32 %v7639, %v7771
    %v7773 = vpop.f32.mrb[0].mxu0
    %v7774 = vadd.f32 %v7641, %v7773
    %v7775 = vpop.f32.mrb[0].mxu0
    %v7776 = vadd.f32 %v7643, %v7775
    %v7777 = vpop.f32.mrb[0].mxu0
    %v7778 = vadd.f32 %v7645, %v7777
    %7779 = vmatprep.mubr.bf16.mxu0 0
    %7780 = vmatmul.mubr.bf16.gmra.mrb[0].mxu0 %v6731
    %v7781 = vpop.f32.mrb[0].mxu0
    %v7782 = vadd.f32 %v7649, %v7781
    %v7783 = vpop.f32.mrb[0].mxu0
    %v7784 = vadd.f32 %v7651, %v7783
    %v7785 = vpop.f32.mrb[0].mxu0
    %v7786 = vadd.f32 %v7653, %v7785
    %v7787 = vpop.f32.mrb[0].mxu0
    %v7788 = vadd.f32 %v7655, %v7787
    %7789 = vmatprep.mubr.bf16.mxu0 0
    %7790 = vmatmul.mubr.bf16.gmra.mrb[0].mxu0 %v6734
    %v7791 = vpop.f32.mrb[0].mxu0
    %v7792 = vadd.f32 %v7659, %v7791
    %v7793 = vpop.f32.mrb[0].mxu0
    %v7794 = vadd.f32 %v7661, %v7793
    %v7795 = vpop.f32.mrb[0].mxu0
    %v7796 = vadd.f32 %v7663, %v7795
    %v7797 = vpop.f32.mrb[0].mxu0
    %v7798 = vadd.f32 %v7665, %v7797
    %7799 = vdwg.mxu0
    %7800 = vmatprep.subr.bf16.mxu0 %v6203
    %7801 = vmatpush1.bf16.msra.mxu0 %v6152
    %7802 = vmatprep.subr.bf16.mxu0 %v6204
    %7803 = vmatpush1.bf16.msra.mxu0 %v6153
    %7804 = vmatprep.subr.bf16.mxu0 %v6205
    %7805 = vmatpush1.bf16.msra.mxu0 %v6154
    %7806 = vmatprep.subr.bf16.mxu0 %v6206
    %7807 = vmatpush1.bf16.msra.mxu0 %v6155
    %7808 = vmatprep.subr.bf16.mxu0 %v6207
    %7809 = vmatpush1.bf16.msra.mxu0 %v6156
    %7810 = vmatprep.subr.bf16.mxu0 %v6208
    %7811 = vmatpush1.bf16.msra.mxu0 %v6157
    %7812 = vmatprep.subr.bf16.mxu0 %v6209
    %7813 = vmatpush1.bf16.msra.mxu0 %v6158
    %7814 = vmatprep.subr.bf16.mxu0 %v6210
    %7815 = vmatpush1.bf16.msra.mxu0 %v6159
    %7816 = vmatprep.subr.bf16.mxu0 %v6211
    %7817 = vmatpush1.bf16.msra.mxu0 %v6160
    %7818 = vmatprep.subr.bf16.mxu0 %v6212
    %7819 = vmatpush1.bf16.msra.mxu0 %v6161
    %7820 = vmatprep.subr.bf16.mxu0 %v6213
    %7821 = vmatpush1.bf16.msra.mxu0 %v6162
    %7822 = vmatprep.subr.bf16.mxu0 %v6214
    %7823 = vmatpush1.bf16.msra.mxu0 %v6163
    %7824 = vmatprep.subr.bf16.mxu0 %v6215
    %7825 = vmatpush1.bf16.msra.mxu0 %v6164
    %7826 = vmatprep.subr.bf16.mxu0 %v6216
    %7827 = vmatpush1.bf16.msra.mxu0 %v6165
    %7828 = vmatprep.subr.bf16.mxu0 %v6217
    %7829 = vmatpush1.bf16.msra.mxu0 %v6166
    %7830 = vmatprep.subr.bf16.mxu0 %v6218
    %7831 = vmatpush1.bf16.msra.mxu0 %v6167
    %7832 = vmatprep.mubr.bf16.mxu0 %v6576
    %7833 = vmatmul.mubr.bf16.gmra.mrb[0].mxu0 %v6575
    %v7834 = vpop.f32.mrb[0].mxu0
    %v7835 = vadd.f32 0.0, %v7834
    %v7836 = vpop.f32.mrb[0].mxu0
    %v7837 = vadd.f32 0.0, %v7836
    %v7838 = vpop.f32.mrb[0].mxu0
    %v7839 = vadd.f32 0.0, %v7838
    %v7840 = vpop.f32.mrb[0].mxu0
    %v7841 = vadd.f32 0.0, %v7840
    %7842 = vmatprep.mubr.bf16.mxu0 %v6583
    %7843 = vmatmul.mubr.bf16.gmra.mrb[0].mxu0 %v6582
    %v7844 = vpop.f32.mrb[0].mxu0
    %v7845 = vadd.f32 0.0, %v7844
    %v7846 = vpop.f32.mrb[0].mxu0
    %v7847 = vadd.f32 0.0, %v7846
    %v7848 = vpop.f32.mrb[0].mxu0
    %v7849 = vadd.f32 0.0, %v7848
    %v7850 = vpop.f32.mrb[0].mxu0
    %v7851 = vadd.f32 0.0, %v7850
    %7852 = vmatprep.mubr.bf16.mxu0 %v6590
    %7853 = vmatmul.mubr.bf16.gmra.mrb[0].mxu0 %v6589
    %v7854 = vpop.f32.mrb[0].mxu0
    %v7855 = vadd.f32 0.0, %v7854
    %v7856 = vpop.f32.mrb[0].mxu0
    %v7857 = vadd.f32 0.0, %v7856
    %v7858 = vpop.f32.mrb[0].mxu0
    %v7859 = vadd.f32 0.0, %v7858
    %v7860 = vpop.f32.mrb[0].mxu0
    %v7861 = vadd.f32 0.0, %v7860
    %7862 = vmatprep.mubr.bf16.mxu0 %v6597
    %7863 = vmatmul.mubr.bf16.gmra.mrb[0].mxu0 %v6596
    %v7864 = vpop.f32.mrb[0].mxu0
    %v7865 = vadd.f32 0.0, %v7864
    %v7866 = vpop.f32.mrb[0].mxu0
    %v7867 = vadd.f32 0.0, %v7866
    %v7868 = vpop.f32.mrb[0].mxu0
    %v7869 = vadd.f32 0.0, %v7868
    %v7870 = vpop.f32.mrb[0].mxu0
    %v7871 = vadd.f32 0.0, %v7870
    %7872 = vmatprep.mubr.bf16.mxu0 %v6604
    %7873 = vmatmul.mubr.bf16.gmra.mrb[0].mxu0 %v6603
    %v7874 = vpop.f32.mrb[0].mxu0
    %v7875 = vadd.f32 0.0, %v7874
    %v7876 = vpop.f32.mrb[0].mxu0
    %v7877 = vadd.f32 0.0, %v7876
    %v7878 = vpop.f32.mrb[0].mxu0
    %v7879 = vadd.f32 0.0, %v7878
    %v7880 = vpop.f32.mrb[0].mxu0
    %v7881 = vadd.f32 0.0, %v7880
    %7882 = vmatprep.mubr.bf16.mxu0 %v6611
    %7883 = vmatmul.mubr.bf16.gmra.mrb[0].mxu0 %v6610
    %v7884 = vpop.f32.mrb[0].mxu0
    %v7885 = vadd.f32 0.0, %v7884
    %v7886 = vpop.f32.mrb[0].mxu0
    %v7887 = vadd.f32 0.0, %v7886
    %v7888 = vpop.f32.mrb[0].mxu0
    %v7889 = vadd.f32 0.0, %v7888
    %v7890 = vpop.f32.mrb[0].mxu0
    %v7891 = vadd.f32 0.0, %v7890
    %7892 = vmatprep.mubr.bf16.mxu0 %v6618
    %7893 = vmatmul.mubr.bf16.gmra.mrb[0].mxu0 %v6617
    %v7894 = vpop.f32.mrb[0].mxu0
    %v7895 = vadd.f32 0.0, %v7894
    %v7896 = vpop.f32.mrb[0].mxu0
    %v7897 = vadd.f32 0.0, %v7896
    %v7898 = vpop.f32.mrb[0].mxu0
    %v7899 = vadd.f32 0.0, %v7898
    %v7900 = vpop.f32.mrb[0].mxu0
    %v7901 = vadd.f32 0.0, %v7900
    %7902 = vmatprep.mubr.bf16.mxu0 %v6625
    %7903 = vmatmul.mubr.bf16.gmra.mrb[0].mxu0 %v6624
    %v7904 = vpop.f32.mrb[0].mxu0
    %v7905 = vadd.f32 0.0, %v7904
    %v7906 = vpop.f32.mrb[0].mxu0
    %v7907 = vadd.f32 0.0, %v7906
    %v7908 = vpop.f32.mrb[0].mxu0
    %v7909 = vadd.f32 0.0, %v7908
    %v7910 = vpop.f32.mrb[0].mxu0
    %v7911 = vadd.f32 0.0, %v7910
    %7912 = vmatprep.mubr.bf16.mxu0 %v6632
    %7913 = vmatmul.mubr.bf16.gmra.mrb[0].mxu0 %v6631
    %v7914 = vpop.f32.mrb[0].mxu0
    %v7915 = vadd.f32 0.0, %v7914
    %v7916 = vpop.f32.mrb[0].mxu0
    %v7917 = vadd.f32 0.0, %v7916
    %v7918 = vpop.f32.mrb[0].mxu0
    %v7919 = vadd.f32 0.0, %v7918
    %v7920 = vpop.f32.mrb[0].mxu0
    %v7921 = vadd.f32 0.0, %v7920
    %7922 = vmatprep.mubr.bf16.mxu0 %v6639
    %7923 = vmatmul.mubr.bf16.gmra.mrb[0].mxu0 %v6638
    %v7924 = vpop.f32.mrb[0].mxu0
    %v7925 = vadd.f32 0.0, %v7924
    %v7926 = vpop.f32.mrb[0].mxu0
    %v7927 = vadd.f32 0.0, %v7926
    %v7928 = vpop.f32.mrb[0].mxu0
    %v7929 = vadd.f32 0.0, %v7928
    %v7930 = vpop.f32.mrb[0].mxu0
    %v7931 = vadd.f32 0.0, %v7930
    %7932 = vdwg.mxu0
    %7933 = vmatprep.subr.bf16.mxu0 %v6219
    %7934 = vmatpush1.bf16.msra.mxu0 %v6168
    %7935 = vmatprep.subr.bf16.mxu0 %v6220
    %7936 = vmatpush1.bf16.msra.mxu0 %v6169
    %7937 = vmatprep.subr.bf16.mxu0 %v6221
    %7938 = vmatpush1.bf16.msra.mxu0 %v6170
    %7939 = vmatprep.subr.bf16.mxu0 %v6222
    %7940 = vmatpush1.bf16.msra.mxu0 %v6171
    %7941 = vmatprep.subr.bf16.mxu0 %v6223
    %7942 = vmatpush1.bf16.msra.mxu0 %v6172
    %7943 = vmatprep.subr.bf16.mxu0 %v6224
    %7944 = vmatpush1.bf16.msra.mxu0 %v6173
    %7945 = vmatprep.subr.bf16.mxu0 %v6225
    %7946 = vmatpush1.bf16.msra.mxu0 %v6174
    %7947 = vmatprep.subr.bf16.mxu0 %v6226
    %7948 = vmatpush1.bf16.msra.mxu0 %v6175
    %7949 = vmatprep.subr.bf16.mxu0 %v6227
    %7950 = vmatpush1.bf16.msra.mxu0 %v6176
    %7951 = vmatprep.subr.bf16.mxu0 %v6228
    %7952 = vmatpush1.bf16.msra.mxu0 %v6177
    %7953 = vmatprep.subr.bf16.mxu0 %v6229
    %7954 = vmatpush1.bf16.msra.mxu0 %v6178
    %7955 = vmatprep.subr.bf16.mxu0 %v6230
    %7956 = vmatpush1.bf16.msra.mxu0 %v6179
    %7957 = vmatprep.subr.bf16.mxu0 %v6231
    %7958 = vmatpush1.bf16.msra.mxu0 %v6180
    %7959 = vmatprep.subr.bf16.mxu0 %v6232
    %7960 = vmatpush1.bf16.msra.mxu0 %v6181
    %7961 = vmatprep.subr.bf16.mxu0 %v6233
    %7962 = vmatpush1.bf16.msra.mxu0 %v6182
    %7963 = vmatprep.subr.bf16.mxu0 %v6234
    %7964 = vmatpush1.bf16.msra.mxu0 %v6183
    %7965 = vmatprep.mubr.bf16.mxu0 %v6578
    %7966 = vmatmul.mubr.bf16.gmra.mrb[0].mxu0 %v6577
    %v7967 = vpop.f32.mrb[0].mxu0
    %v7968 = vadd.f32 %v7835, %v7967
    %v7969 = vpop.f32.mrb[0].mxu0
    %v7970 = vadd.f32 %v7837, %v7969
    %v7971 = vpop.f32.mrb[0].mxu0
    %v7972 = vadd.f32 %v7839, %v7971
    %v7973 = vpop.f32.mrb[0].mxu0
    %v7974 = vadd.f32 %v7841, %v7973
    %7975 = vmatprep.mubr.bf16.mxu0 %v6585
    %7976 = vmatmul.mubr.bf16.gmra.mrb[0].mxu0 %v6584
    %v7977 = vpop.f32.mrb[0].mxu0
    %v7978 = vadd.f32 %v7845, %v7977
    %v7979 = vpop.f32.mrb[0].mxu0
    %v7980 = vadd.f32 %v7847, %v7979
    %v7981 = vpop.f32.mrb[0].mxu0
    %v7982 = vadd.f32 %v7849, %v7981
    %v7983 = vpop.f32.mrb[0].mxu0
    %v7984 = vadd.f32 %v7851, %v7983
    %7985 = vmatprep.mubr.bf16.mxu0 %v6592
    %7986 = vmatmul.mubr.bf16.gmra.mrb[0].mxu0 %v6591
    %v7987 = vpop.f32.mrb[0].mxu0
    %v7988 = vadd.f32 %v7855, %v7987
    %v7989 = vpop.f32.mrb[0].mxu0
    %v7990 = vadd.f32 %v7857, %v7989
    %v7991 = vpop.f32.mrb[0].mxu0
    %v7992 = vadd.f32 %v7859, %v7991
    %v7993 = vpop.f32.mrb[0].mxu0
    %v7994 = vadd.f32 %v7861, %v7993
    %7995 = vmatprep.mubr.bf16.mxu0 %v6599
    %7996 = vmatmul.mubr.bf16.gmra.mrb[0].mxu0 %v6598
    %v7997 = vpop.f32.mrb[0].mxu0
    %v7998 = vadd.f32 %v7865, %v7997
    %v7999 = vpop.f32.mrb[0].mxu0
    %v8000 = vadd.f32 %v7867, %v7999
    %v8001 = vpop.f32.mrb[0].mxu0
    %v8002 = vadd.f32 %v7869, %v8001
    %v8003 = vpop.f32.mrb[0].mxu0
    %v8004 = vadd.f32 %v7871, %v8003
    %8005 = vmatprep.mubr.bf16.mxu0 %v6606
    %8006 = vmatmul.mubr.bf16.gmra.mrb[0].mxu0 %v6605
    %v8007 = vpop.f32.mrb[0].mxu0
    %v8008 = vadd.f32 %v7875, %v8007
    %v8009 = vpop.f32.mrb[0].mxu0
    %v8010 = vadd.f32 %v7877, %v8009
    %v8011 = vpop.f32.mrb[0].mxu0
    %v8012 = vadd.f32 %v7879, %v8011
    %v8013 = vpop.f32.mrb[0].mxu0
    %v8014 = vadd.f32 %v7881, %v8013
    %8015 = vmatprep.mubr.bf16.mxu0 %v6613
    %8016 = vmatmul.mubr.bf16.gmra.mrb[0].mxu0 %v6612
    %v8017 = vpop.f32.mrb[0].mxu0
    %v8018 = vadd.f32 %v7885, %v8017
    %v8019 = vpop.f32.mrb[0].mxu0
    %v8020 = vadd.f32 %v7887, %v8019
    %v8021 = vpop.f32.mrb[0].mxu0
    %v8022 = vadd.f32 %v7889, %v8021
    %v8023 = vpop.f32.mrb[0].mxu0
    %v8024 = vadd.f32 %v7891, %v8023
    %8025 = vmatprep.mubr.bf16.mxu0 %v6620
    %8026 = vmatmul.mubr.bf16.gmra.mrb[0].mxu0 %v6619
    %v8027 = vpop.f32.mrb[0].mxu0
    %v8028 = vadd.f32 %v7895, %v8027
    %v8029 = vpop.f32.mrb[0].mxu0
    %v8030 = vadd.f32 %v7897, %v8029
    %v8031 = vpop.f32.mrb[0].mxu0
    %v8032 = vadd.f32 %v7899, %v8031
    %v8033 = vpop.f32.mrb[0].mxu0
    %v8034 = vadd.f32 %v7901, %v8033
    %8035 = vmatprep.mubr.bf16.mxu0 %v6627
    %8036 = vmatmul.mubr.bf16.gmra.mrb[0].mxu0 %v6626
    %v8037 = vpop.f32.mrb[0].mxu0
    %v8038 = vadd.f32 %v7905, %v8037
    %v8039 = vpop.f32.mrb[0].mxu0
    %v8040 = vadd.f32 %v7907, %v8039
    %v8041 = vpop.f32.mrb[0].mxu0
    %v8042 = vadd.f32 %v7909, %v8041
    %v8043 = vpop.f32.mrb[0].mxu0
    %v8044 = vadd.f32 %v7911, %v8043
    %8045 = vmatprep.mubr.bf16.mxu0 %v6634
    %8046 = vmatmul.mubr.bf16.gmra.mrb[0].mxu0 %v6633
    %v8047 = vpop.f32.mrb[0].mxu0
    %v8048 = vadd.f32 %v7915, %v8047
    %v8049 = vpop.f32.mrb[0].mxu0
    %v8050 = vadd.f32 %v7917, %v8049
    %v8051 = vpop.f32.mrb[0].mxu0
    %v8052 = vadd.f32 %v7919, %v8051
    %v8053 = vpop.f32.mrb[0].mxu0
    %v8054 = vadd.f32 %v7921, %v8053
    %8055 = vmatprep.mubr.bf16.mxu0 %v6641
    %8056 = vmatmul.mubr.bf16.gmra.mrb[0].mxu0 %v6640
    %v8057 = vpop.f32.mrb[0].mxu0
    %v8058 = vadd.f32 %v7925, %v8057
    %v8059 = vpop.f32.mrb[0].mxu0
    %v8060 = vadd.f32 %v7927, %v8059
    %v8061 = vpop.f32.mrb[0].mxu0
    %v8062 = vadd.f32 %v7929, %v8061
    %v8063 = vpop.f32.mrb[0].mxu0
    %v8064 = vadd.f32 %v7931, %v8063
    %8065 = vdwg.mxu0
    %8066 = vmatprep.subr.bf16.mxu0 %v6235
    %8067 = vmatpush1.bf16.msra.mxu0 %v6184
    %8068 = vmatprep.subr.bf16.mxu0 %v6236
    %8069 = vmatpush1.bf16.msra.mxu0 %v6185
    %8070 = vmatprep.subr.bf16.mxu0 %v6237
    %8071 = vmatpush1.bf16.msra.mxu0 %v6186
    %8072 = vmatprep.subr.bf16.mxu0 %v6238
    %8073 = vmatpush1.bf16.msra.mxu0 %v6187
    %8074 = vmatprep.subr.bf16.mxu0 %v6239
    %8075 = vmatpush1.bf16.msra.mxu0 %v6188
    %8076 = vmatprep.subr.bf16.mxu0 %v6240
    %8077 = vmatpush1.bf16.msra.mxu0 %v6189
    %8078 = vmatprep.subr.bf16.mxu0 %v6241
    %8079 = vmatpush1.bf16.msra.mxu0 %v6190
    %8080 = vmatprep.subr.bf16.mxu0 %v6242
    %8081 = vmatpush1.bf16.msra.mxu0 %v6191
    %8082 = vmatprep.subr.bf16.mxu0 %v6243
    %8083 = vmatpush1.bf16.msra.mxu0 %v6192
    %8084 = vmatprep.subr.bf16.mxu0 %v6244
    %8085 = vmatpush1.bf16.msra.mxu0 %v6193
    %8086 = vmatprep.subr.bf16.mxu0 %v6245
    %8087 = vmatpush1.bf16.msra.mxu0 %v6194
    %8088 = vmatprep.subr.bf16.mxu0 %v6246
    %8089 = vmatpush1.bf16.msra.mxu0 %v6195
    %8090 = vmatprep.subr.bf16.mxu0 %v6247
    %8091 = vmatpush1.bf16.msra.mxu0 %v6196
    %8092 = vmatprep.subr.bf16.mxu0 %v6248
    %8093 = vmatpush1.bf16.msra.mxu0 %v6197
    %8094 = vmatprep.subr.bf16.mxu0 %v6249
    %8095 = vmatpush1.bf16.msra.mxu0 %v6198
    %8096 = vmatprep.subr.bf16.mxu0 %v6250
    %8097 = vmatpush1.bf16.msra.mxu0 %v6199
    %8098 = vmatprep.mubr.bf16.mxu0 %v6580
    %8099 = vmatmul.mubr.bf16.gmra.mrb[0].mxu0 %v6579
    %v8100 = vpop.f32.mrb[0].mxu0
    %v8101 = vadd.f32 %v7968, %v8100
    %v8102 = vpop.f32.mrb[0].mxu0
    %v8103 = vadd.f32 %v7970, %v8102
    %v8104 = vpop.f32.mrb[0].mxu0
    %v8105 = vadd.f32 %v7972, %v8104
    %v8106 = vpop.f32.mrb[0].mxu0
    %v8107 = vadd.f32 %v7974, %v8106
    %8108 = vmatprep.mubr.bf16.mxu0 %v6587
    %8109 = vmatmul.mubr.bf16.gmra.mrb[0].mxu0 %v6586
    %v8110 = vpop.f32.mrb[0].mxu0
    %v8111 = vadd.f32 %v7978, %v8110
    %v8112 = vpop.f32.mrb[0].mxu0
    %v8113 = vadd.f32 %v7980, %v8112
    %v8114 = vpop.f32.mrb[0].mxu0
    %v8115 = vadd.f32 %v7982, %v8114
    %v8116 = vpop.f32.mrb[0].mxu0
    %v8117 = vadd.f32 %v7984, %v8116
    %8118 = vmatprep.mubr.bf16.mxu0 %v6594
    %8119 = vmatmul.mubr.bf16.gmra.mrb[0].mxu0 %v6593
    %v8120 = vpop.f32.mrb[0].mxu0
    %v8121 = vadd.f32 %v7988, %v8120
    %v8122 = vpop.f32.mrb[0].mxu0
    %v8123 = vadd.f32 %v7990, %v8122
    %v8124 = vpop.f32.mrb[0].mxu0
    %v8125 = vadd.f32 %v7992, %v8124
    %v8126 = vpop.f32.mrb[0].mxu0
    %v8127 = vadd.f32 %v7994, %v8126
    %8128 = vmatprep.mubr.bf16.mxu0 %v6601
    %8129 = vmatmul.mubr.bf16.gmra.mrb[0].mxu0 %v6600
    %v8130 = vpop.f32.mrb[0].mxu0
    %v8131 = vadd.f32 %v7998, %v8130
    %v8132 = vpop.f32.mrb[0].mxu0
    %v8133 = vadd.f32 %v8000, %v8132
    %v8134 = vpop.f32.mrb[0].mxu0
    %v8135 = vadd.f32 %v8002, %v8134
    %v8136 = vpop.f32.mrb[0].mxu0
    %v8137 = vadd.f32 %v8004, %v8136
    %8138 = vmatprep.mubr.bf16.mxu0 %v6608
    %8139 = vmatmul.mubr.bf16.gmra.mrb[0].mxu0 %v6607
    %v8140 = vpop.f32.mrb[0].mxu0
    %v8141 = vadd.f32 %v8008, %v8140
    %v8142 = vpop.f32.mrb[0].mxu0
    %v8143 = vadd.f32 %v8010, %v8142
    %v8144 = vpop.f32.mrb[0].mxu0
    %v8145 = vadd.f32 %v8012, %v8144
    %v8146 = vpop.f32.mrb[0].mxu0
    %v8147 = vadd.f32 %v8014, %v8146
    %8148 = vmatprep.mubr.bf16.mxu0 %v6615
    %8149 = vmatmul.mubr.bf16.gmra.mrb[0].mxu0 %v6614
    %v8150 = vpop.f32.mrb[0].mxu0
    %v8151 = vadd.f32 %v8018, %v8150
    %v8152 = vpop.f32.mrb[0].mxu0
    %v8153 = vadd.f32 %v8020, %v8152
    %v8154 = vpop.f32.mrb[0].mxu0
    %v8155 = vadd.f32 %v8022, %v8154
    %v8156 = vpop.f32.mrb[0].mxu0
    %v8157 = vadd.f32 %v8024, %v8156
    %8158 = vmatprep.mubr.bf16.mxu0 %v6622
    %8159 = vmatmul.mubr.bf16.gmra.mrb[0].mxu0 %v6621
    %v8160 = vpop.f32.mrb[0].mxu0
    %v8161 = vadd.f32 %v8028, %v8160
    %v8162 = vpop.f32.mrb[0].mxu0
    %v8163 = vadd.f32 %v8030, %v8162
    %v8164 = vpop.f32.mrb[0].mxu0
    %v8165 = vadd.f32 %v8032, %v8164
    %v8166 = vpop.f32.mrb[0].mxu0
    %v8167 = vadd.f32 %v8034, %v8166
    %8168 = vmatprep.mubr.bf16.mxu0 %v6629
    %8169 = vmatmul.mubr.bf16.gmra.mrb[0].mxu0 %v6628
    %v8170 = vpop.f32.mrb[0].mxu0
    %v8171 = vadd.f32 %v8038, %v8170
    %v8172 = vpop.f32.mrb[0].mxu0
    %v8173 = vadd.f32 %v8040, %v8172
    %v8174 = vpop.f32.mrb[0].mxu0
    %v8175 = vadd.f32 %v8042, %v8174
    %v8176 = vpop.f32.mrb[0].mxu0
    %v8177 = vadd.f32 %v8044, %v8176
    %8178 = vmatprep.mubr.bf16.mxu0 %v6636
    %8179 = vmatmul.mubr.bf16.gmra.mrb[0].mxu0 %v6635
    %v8180 = vpop.f32.mrb[0].mxu0
    %v8181 = vadd.f32 %v8048, %v8180
    %v8182 = vpop.f32.mrb[0].mxu0
    %v8183 = vadd.f32 %v8050, %v8182
    %v8184 = vpop.f32.mrb[0].mxu0
    %v8185 = vadd.f32 %v8052, %v8184
    %v8186 = vpop.f32.mrb[0].mxu0
    %v8187 = vadd.f32 %v8054, %v8186
    %8188 = vmatprep.mubr.bf16.mxu0 %v6643
    %8189 = vmatmul.mubr.bf16.gmra.mrb[0].mxu0 %v6642
    %v8190 = vpop.f32.mrb[0].mxu0
    %v8191 = vadd.f32 %v8058, %v8190
    %v8192 = vpop.f32.mrb[0].mxu0
    %v8193 = vadd.f32 %v8060, %v8192
    %v8194 = vpop.f32.mrb[0].mxu0
    %v8195 = vadd.f32 %v8062, %v8194
    %v8196 = vpop.f32.mrb[0].mxu0
    %v8197 = vadd.f32 %v8064, %v8196
    %8198 = vdwg.mxu0
    %8199 = vmatprep.subr.bf16.mxu0 %v6251
    %8200 = vmatpush1.bf16.msra.mxu0 %v6200
    %8201 = vmatprep.subr.bf16.mxu0 %v6252
    %8202 = vmatpush1.bf16.msra.mxu0 %v6201
    %8203 = vmatprep.subr.bf16.mxu0 0
    %8204 = vmatpush1.bf16.msra.mxu0 0
    %8205 = vmatprep.subr.bf16.mxu0 0
    %8206 = vmatpush1.bf16.msra.mxu0 0
    %8207 = vmatprep.subr.bf16.mxu0 0
    %8208 = vmatpush1.bf16.msra.mxu0 0
    %8209 = vmatprep.subr.bf16.mxu0 0
    %8210 = vmatpush1.bf16.msra.mxu0 0
    %8211 = vmatprep.subr.bf16.mxu0 0
    %8212 = vmatpush1.bf16.msra.mxu0 0
    %8213 = vmatprep.subr.bf16.mxu0 0
    %8214 = vmatpush1.bf16.msra.mxu0 0
    %8215 = vmatprep.subr.bf16.mxu0 0
    %8216 = vmatpush1.bf16.msra.mxu0 0
    %8217 = vmatprep.subr.bf16.mxu0 0
    %8218 = vmatpush1.bf16.msra.mxu0 0
    %8219 = vmatprep.subr.bf16.mxu0 0
    %8220 = vmatpush1.bf16.msra.mxu0 0
    %8221 = vmatprep.subr.bf16.mxu0 0
    %8222 = vmatpush1.bf16.msra.mxu0 0
    %8223 = vmatprep.subr.bf16.mxu0 0
    %8224 = vmatpush1.bf16.msra.mxu0 0
    %8225 = vmatprep.subr.bf16.mxu0 0
    %8226 = vmatpush1.bf16.msra.mxu0 0
    %8227 = vmatprep.subr.bf16.mxu0 0
    %8228 = vmatpush1.bf16.msra.mxu0 0
    %8229 = vmatprep.subr.bf16.mxu0 0
    %8230 = vmatpush1.bf16.msra.mxu0 0
    %8231 = vmatprep.mubr.bf16.mxu0 0
    %8232 = vmatmul.mubr.bf16.gmra.mrb[0].mxu0 %v6707
    %v8233 = vpop.f32.mrb[0].mxu0
    %v8234 = vadd.f32 %v8101, %v8233
    %v8235 = vpop.f32.mrb[0].mxu0
    %v8236 = vadd.f32 %v8103, %v8235
    %v8237 = vpop.f32.mrb[0].mxu0
    %v8238 = vadd.f32 %v8105, %v8237
    %v8239 = vpop.f32.mrb[0].mxu0
    %v8240 = vadd.f32 %v8107, %v8239
    %8241 = vmatprep.mubr.bf16.mxu0 0
    %8242 = vmatmul.mubr.bf16.gmra.mrb[0].mxu0 %v6710
    %v8243 = vpop.f32.mrb[0].mxu0
    %v8244 = vadd.f32 %v8111, %v8243
    %v8245 = vpop.f32.mrb[0].mxu0
    %v8246 = vadd.f32 %v8113, %v8245
    %v8247 = vpop.f32.mrb[0].mxu0
    %v8248 = vadd.f32 %v8115, %v8247
    %v8249 = vpop.f32.mrb[0].mxu0
    %v8250 = vadd.f32 %v8117, %v8249
    %8251 = vmatprep.mubr.bf16.mxu0 0
    %8252 = vmatmul.mubr.bf16.gmra.mrb[0].mxu0 %v6713
    %v8253 = vpop.f32.mrb[0].mxu0
    %v8254 = vadd.f32 %v8121, %v8253
    %v8255 = vpop.f32.mrb[0].mxu0
    %v8256 = vadd.f32 %v8123, %v8255
    %v8257 = vpop.f32.mrb[0].mxu0
    %v8258 = vadd.f32 %v8125, %v8257
    %v8259 = vpop.f32.mrb[0].mxu0
    %v8260 = vadd.f32 %v8127, %v8259
    %8261 = vmatprep.mubr.bf16.mxu0 0
    %8262 = vmatmul.mubr.bf16.gmra.mrb[0].mxu0 %v6716
    %v8263 = vpop.f32.mrb[0].mxu0
    %v8264 = vadd.f32 %v8131, %v8263
    %v8265 = vpop.f32.mrb[0].mxu0
    %v8266 = vadd.f32 %v8133, %v8265
    %v8267 = vpop.f32.mrb[0].mxu0
    %v8268 = vadd.f32 %v8135, %v8267
    %v8269 = vpop.f32.mrb[0].mxu0
    %v8270 = vadd.f32 %v8137, %v8269
    %8271 = vmatprep.mubr.bf16.mxu0 0
    %8272 = vmatmul.mubr.bf16.gmra.mrb[0].mxu0 %v6719
    %v8273 = vpop.f32.mrb[0].mxu0
    %v8274 = vadd.f32 %v8141, %v8273
    %v8275 = vpop.f32.mrb[0].mxu0
    %v8276 = vadd.f32 %v8143, %v8275
    %v8277 = vpop.f32.mrb[0].mxu0
    %v8278 = vadd.f32 %v8145, %v8277
    %v8279 = vpop.f32.mrb[0].mxu0
    %v8280 = vadd.f32 %v8147, %v8279
    %8281 = vmatprep.mubr.bf16.mxu0 0
    %8282 = vmatmul.mubr.bf16.gmra.mrb[0].mxu0 %v6722
    %v8283 = vpop.f32.mrb[0].mxu0
    %v8284 = vadd.f32 %v8151, %v8283
    %v8285 = vpop.f32.mrb[0].mxu0
    %v8286 = vadd.f32 %v8153, %v8285
    %v8287 = vpop.f32.mrb[0].mxu0
    %v8288 = vadd.f32 %v8155, %v8287
    %v8289 = vpop.f32.mrb[0].mxu0
    %v8290 = vadd.f32 %v8157, %v8289
    %8291 = vmatprep.mubr.bf16.mxu0 0
    %8292 = vmatmul.mubr.bf16.gmra.mrb[0].mxu0 %v6725
    %v8293 = vpop.f32.mrb[0].mxu0
    %v8294 = vadd.f32 %v8161, %v8293
    %v8295 = vpop.f32.mrb[0].mxu0
    %v8296 = vadd.f32 %v8163, %v8295
    %v8297 = vpop.f32.mrb[0].mxu0
    %v8298 = vadd.f32 %v8165, %v8297
    %v8299 = vpop.f32.mrb[0].mxu0
    %v8300 = vadd.f32 %v8167, %v8299
    %8301 = vmatprep.mubr.bf16.mxu0 0
    %8302 = vmatmul.mubr.bf16.gmra.mrb[0].mxu0 %v6728
    %v8303 = vpop.f32.mrb[0].mxu0
    %v8304 = vadd.f32 %v8171, %v8303
    %v8305 = vpop.f32.mrb[0].mxu0
    %v8306 = vadd.f32 %v8173, %v8305
    %v8307 = vpop.f32.mrb[0].mxu0
    %v8308 = vadd.f32 %v8175, %v8307
    %v8309 = vpop.f32.mrb[0].mxu0
    %v8310 = vadd.f32 %v8177, %v8309
    %8311 = vmatprep.mubr.bf16.mxu0 0
    %8312 = vmatmul.mubr.bf16.gmra.mrb[0].mxu0 %v6731
    %v8313 = vpop.f32.mrb[0].mxu0
    %v8314 = vadd.f32 %v8181, %v8313
    %v8315 = vpop.f32.mrb[0].mxu0
    %v8316 = vadd.f32 %v8183, %v8315
    %v8317 = vpop.f32.mrb[0].mxu0
    %v8318 = vadd.f32 %v8185, %v8317
    %v8319 = vpop.f32.mrb[0].mxu0
    %v8320 = vadd.f32 %v8187, %v8319
    %8321 = vmatprep.mubr.bf16.mxu0 0
    %8322 = vmatmul.mubr.bf16.gmra.mrb[0].mxu0 %v6734
    %v8323 = vpop.f32.mrb[0].mxu0
    %v8324 = vadd.f32 %v8191, %v8323
    %v8325 = vpop.f32.mrb[0].mxu0
    %v8326 = vadd.f32 %v8193, %v8325
    %v8327 = vpop.f32.mrb[0].mxu0
    %v8328 = vadd.f32 %v8195, %v8327
    %v8329 = vpop.f32.mrb[0].mxu0
    %v8330 = vadd.f32 %v8197, %v8329
    %8331 = vdwg.mxu0
    %8332 = vmatprep.subr.bf16.mxu0 %v6305
    %8333 = vmatpush1.bf16.msra.mxu0 %v6254
    %8334 = vmatprep.subr.bf16.mxu0 %v6306
    %8335 = vmatpush1.bf16.msra.mxu0 %v6255
    %8336 = vmatprep.subr.bf16.mxu0 %v6307
    %8337 = vmatpush1.bf16.msra.mxu0 %v6256
    %8338 = vmatprep.subr.bf16.mxu0 %v6308
    %8339 = vmatpush1.bf16.msra.mxu0 %v6257
    %8340 = vmatprep.subr.bf16.mxu0 %v6309
    %8341 = vmatpush1.bf16.msra.mxu0 %v6258
    %8342 = vmatprep.subr.bf16.mxu0 %v6310
    %8343 = vmatpush1.bf16.msra.mxu0 %v6259
    %8344 = vmatprep.subr.bf16.mxu0 %v6311
    %8345 = vmatpush1.bf16.msra.mxu0 %v6260
    %8346 = vmatprep.subr.bf16.mxu0 %v6312
    %8347 = vmatpush1.bf16.msra.mxu0 %v6261
    %8348 = vmatprep.subr.bf16.mxu0 %v6313
    %8349 = vmatpush1.bf16.msra.mxu0 %v6262
    %8350 = vmatprep.subr.bf16.mxu0 %v6314
    %8351 = vmatpush1.bf16.msra.mxu0 %v6263
    %8352 = vmatprep.subr.bf16.mxu0 %v6315
    %8353 = vmatpush1.bf16.msra.mxu0 %v6264
    %8354 = vmatprep.subr.bf16.mxu0 %v6316
    %8355 = vmatpush1.bf16.msra.mxu0 %v6265
    %8356 = vmatprep.subr.bf16.mxu0 %v6317
    %8357 = vmatpush1.bf16.msra.mxu0 %v6266
    %8358 = vmatprep.subr.bf16.mxu0 %v6318
    %8359 = vmatpush1.bf16.msra.mxu0 %v6267
    %8360 = vmatprep.subr.bf16.mxu0 %v6319
    %8361 = vmatpush1.bf16.msra.mxu0 %v6268
    %8362 = vmatprep.subr.bf16.mxu0 %v6320
    %8363 = vmatpush1.bf16.msra.mxu0 %v6269
    %8364 = vmatprep.mubr.bf16.mxu0 %v6576
    %8365 = vmatmul.mubr.bf16.gmra.mrb[0].mxu0 %v6575
    %v8366 = vpop.f32.mrb[0].mxu0
    %v8367 = vadd.f32 0.0, %v8366
    %v8368 = vpop.f32.mrb[0].mxu0
    %v8369 = vadd.f32 0.0, %v8368
    %v8370 = vpop.f32.mrb[0].mxu0
    %v8371 = vadd.f32 0.0, %v8370
    %v8372 = vpop.f32.mrb[0].mxu0
    %v8373 = vadd.f32 0.0, %v8372
    %8374 = vmatprep.mubr.bf16.mxu0 %v6583
    %8375 = vmatmul.mubr.bf16.gmra.mrb[0].mxu0 %v6582
    %v8376 = vpop.f32.mrb[0].mxu0
    %v8377 = vadd.f32 0.0, %v8376
    %v8378 = vpop.f32.mrb[0].mxu0
    %v8379 = vadd.f32 0.0, %v8378
    %v8380 = vpop.f32.mrb[0].mxu0
    %v8381 = vadd.f32 0.0, %v8380
    %v8382 = vpop.f32.mrb[0].mxu0
    %v8383 = vadd.f32 0.0, %v8382
    %8384 = vmatprep.mubr.bf16.mxu0 %v6590
    %8385 = vmatmul.mubr.bf16.gmra.mrb[0].mxu0 %v6589
    %v8386 = vpop.f32.mrb[0].mxu0
    %v8387 = vadd.f32 0.0, %v8386
    %v8388 = vpop.f32.mrb[0].mxu0
    %v8389 = vadd.f32 0.0, %v8388
    %v8390 = vpop.f32.mrb[0].mxu0
    %v8391 = vadd.f32 0.0, %v8390
    %v8392 = vpop.f32.mrb[0].mxu0
    %v8393 = vadd.f32 0.0, %v8392
    %8394 = vmatprep.mubr.bf16.mxu0 %v6597
    %8395 = vmatmul.mubr.bf16.gmra.mrb[0].mxu0 %v6596
    %v8396 = vpop.f32.mrb[0].mxu0
    %v8397 = vadd.f32 0.0, %v8396
    %v8398 = vpop.f32.mrb[0].mxu0
    %v8399 = vadd.f32 0.0, %v8398
    %v8400 = vpop.f32.mrb[0].mxu0
    %v8401 = vadd.f32 0.0, %v8400
    %v8402 = vpop.f32.mrb[0].mxu0
    %v8403 = vadd.f32 0.0, %v8402
    %8404 = vmatprep.mubr.bf16.mxu0 %v6604
    %8405 = vmatmul.mubr.bf16.gmra.mrb[0].mxu0 %v6603
    %v8406 = vpop.f32.mrb[0].mxu0
    %v8407 = vadd.f32 0.0, %v8406
    %v8408 = vpop.f32.mrb[0].mxu0
    %v8409 = vadd.f32 0.0, %v8408
    %v8410 = vpop.f32.mrb[0].mxu0
    %v8411 = vadd.f32 0.0, %v8410
    %v8412 = vpop.f32.mrb[0].mxu0
    %v8413 = vadd.f32 0.0, %v8412
    %8414 = vmatprep.mubr.bf16.mxu0 %v6611
    %8415 = vmatmul.mubr.bf16.gmra.mrb[0].mxu0 %v6610
    %v8416 = vpop.f32.mrb[0].mxu0
    %v8417 = vadd.f32 0.0, %v8416
    %v8418 = vpop.f32.mrb[0].mxu0
    %v8419 = vadd.f32 0.0, %v8418
    %v8420 = vpop.f32.mrb[0].mxu0
    %v8421 = vadd.f32 0.0, %v8420
    %v8422 = vpop.f32.mrb[0].mxu0
    %v8423 = vadd.f32 0.0, %v8422
    %8424 = vmatprep.mubr.bf16.mxu0 %v6618
    %8425 = vmatmul.mubr.bf16.gmra.mrb[0].mxu0 %v6617
    %v8426 = vpop.f32.mrb[0].mxu0
    %v8427 = vadd.f32 0.0, %v8426
    %v8428 = vpop.f32.mrb[0].mxu0
    %v8429 = vadd.f32 0.0, %v8428
    %v8430 = vpop.f32.mrb[0].mxu0
    %v8431 = vadd.f32 0.0, %v8430
    %v8432 = vpop.f32.mrb[0].mxu0
    %v8433 = vadd.f32 0.0, %v8432
    %8434 = vmatprep.mubr.bf16.mxu0 %v6625
    %8435 = vmatmul.mubr.bf16.gmra.mrb[0].mxu0 %v6624
    %v8436 = vpop.f32.mrb[0].mxu0
    %v8437 = vadd.f32 0.0, %v8436
    %v8438 = vpop.f32.mrb[0].mxu0
    %v8439 = vadd.f32 0.0, %v8438
    %v8440 = vpop.f32.mrb[0].mxu0
    %v8441 = vadd.f32 0.0, %v8440
    %v8442 = vpop.f32.mrb[0].mxu0
    %v8443 = vadd.f32 0.0, %v8442
    %8444 = vmatprep.mubr.bf16.mxu0 %v6632
    %8445 = vmatmul.mubr.bf16.gmra.mrb[0].mxu0 %v6631
    %v8446 = vpop.f32.mrb[0].mxu0
    %v8447 = vadd.f32 0.0, %v8446
    %v8448 = vpop.f32.mrb[0].mxu0
    %v8449 = vadd.f32 0.0, %v8448
    %v8450 = vpop.f32.mrb[0].mxu0
    %v8451 = vadd.f32 0.0, %v8450
    %v8452 = vpop.f32.mrb[0].mxu0
    %v8453 = vadd.f32 0.0, %v8452
    %8454 = vmatprep.mubr.bf16.mxu0 %v6639
    %8455 = vmatmul.mubr.bf16.gmra.mrb[0].mxu0 %v6638
    %v8456 = vpop.f32.mrb[0].mxu0
    %v8457 = vadd.f32 0.0, %v8456
    %v8458 = vpop.f32.mrb[0].mxu0
    %v8459 = vadd.f32 0.0, %v8458
    %v8460 = vpop.f32.mrb[0].mxu0
    %v8461 = vadd.f32 0.0, %v8460
    %v8462 = vpop.f32.mrb[0].mxu0
    %v8463 = vadd.f32 0.0, %v8462
    %8464 = vdwg.mxu0
    %8465 = vmatprep.subr.bf16.mxu0 %v6321
    %8466 = vmatpush1.bf16.msra.mxu0 %v6270
    %8467 = vmatprep.subr.bf16.mxu0 %v6322
    %8468 = vmatpush1.bf16.msra.mxu0 %v6271
    %8469 = vmatprep.subr.bf16.mxu0 %v6323
    %8470 = vmatpush1.bf16.msra.mxu0 %v6272
    %8471 = vmatprep.subr.bf16.mxu0 %v6324
    %8472 = vmatpush1.bf16.msra.mxu0 %v6273
    %8473 = vmatprep.subr.bf16.mxu0 %v6325
    %8474 = vmatpush1.bf16.msra.mxu0 %v6274
    %8475 = vmatprep.subr.bf16.mxu0 %v6326
    %8476 = vmatpush1.bf16.msra.mxu0 %v6275
    %8477 = vmatprep.subr.bf16.mxu0 %v6327
    %8478 = vmatpush1.bf16.msra.mxu0 %v6276
    %8479 = vmatprep.subr.bf16.mxu0 %v6328
    %8480 = vmatpush1.bf16.msra.mxu0 %v6277
    %8481 = vmatprep.subr.bf16.mxu0 %v6329
    %8482 = vmatpush1.bf16.msra.mxu0 %v6278
    %8483 = vmatprep.subr.bf16.mxu0 %v6330
    %8484 = vmatpush1.bf16.msra.mxu0 %v6279
    %8485 = vmatprep.subr.bf16.mxu0 %v6331
    %8486 = vmatpush1.bf16.msra.mxu0 %v6280
    %8487 = vmatprep.subr.bf16.mxu0 %v6332
    %8488 = vmatpush1.bf16.msra.mxu0 %v6281
    %8489 = vmatprep.subr.bf16.mxu0 %v6333
    %8490 = vmatpush1.bf16.msra.mxu0 %v6282
    %8491 = vmatprep.subr.bf16.mxu0 %v6334
    %8492 = vmatpush1.bf16.msra.mxu0 %v6283
    %8493 = vmatprep.subr.bf16.mxu0 %v6335
    %8494 = vmatpush1.bf16.msra.mxu0 %v6284
    %8495 = vmatprep.subr.bf16.mxu0 %v6336
    %8496 = vmatpush1.bf16.msra.mxu0 %v6285
    %8497 = vmatprep.mubr.bf16.mxu0 %v6578
    %8498 = vmatmul.mubr.bf16.gmra.mrb[0].mxu0 %v6577
    %v8499 = vpop.f32.mrb[0].mxu0
    %v8500 = vadd.f32 %v8367, %v8499
    %v8501 = vpop.f32.mrb[0].mxu0
    %v8502 = vadd.f32 %v8369, %v8501
    %v8503 = vpop.f32.mrb[0].mxu0
    %v8504 = vadd.f32 %v8371, %v8503
    %v8505 = vpop.f32.mrb[0].mxu0
    %v8506 = vadd.f32 %v8373, %v8505
    %8507 = vmatprep.mubr.bf16.mxu0 %v6585
    %8508 = vmatmul.mubr.bf16.gmra.mrb[0].mxu0 %v6584
    %v8509 = vpop.f32.mrb[0].mxu0
    %v8510 = vadd.f32 %v8377, %v8509
    %v8511 = vpop.f32.mrb[0].mxu0
    %v8512 = vadd.f32 %v8379, %v8511
    %v8513 = vpop.f32.mrb[0].mxu0
    %v8514 = vadd.f32 %v8381, %v8513
    %v8515 = vpop.f32.mrb[0].mxu0
    %v8516 = vadd.f32 %v8383, %v8515
    %8517 = vmatprep.mubr.bf16.mxu0 %v6592
    %8518 = vmatmul.mubr.bf16.gmra.mrb[0].mxu0 %v6591
    %v8519 = vpop.f32.mrb[0].mxu0
    %v8520 = vadd.f32 %v8387, %v8519
    %v8521 = vpop.f32.mrb[0].mxu0
    %v8522 = vadd.f32 %v8389, %v8521
    %v8523 = vpop.f32.mrb[0].mxu0
    %v8524 = vadd.f32 %v8391, %v8523
    %v8525 = vpop.f32.mrb[0].mxu0
    %v8526 = vadd.f32 %v8393, %v8525
    %8527 = vmatprep.mubr.bf16.mxu0 %v6599
    %8528 = vmatmul.mubr.bf16.gmra.mrb[0].mxu0 %v6598
    %v8529 = vpop.f32.mrb[0].mxu0
    %v8530 = vadd.f32 %v8397, %v8529
    %v8531 = vpop.f32.mrb[0].mxu0
    %v8532 = vadd.f32 %v8399, %v8531
    %v8533 = vpop.f32.mrb[0].mxu0
    %v8534 = vadd.f32 %v8401, %v8533
    %v8535 = vpop.f32.mrb[0].mxu0
    %v8536 = vadd.f32 %v8403, %v8535
    %8537 = vmatprep.mubr.bf16.mxu0 %v6606
    %8538 = vmatmul.mubr.bf16.gmra.mrb[0].mxu0 %v6605
    %v8539 = vpop.f32.mrb[0].mxu0
    %v8540 = vadd.f32 %v8407, %v8539
    %v8541 = vpop.f32.mrb[0].mxu0
    %v8542 = vadd.f32 %v8409, %v8541
    %v8543 = vpop.f32.mrb[0].mxu0
    %v8544 = vadd.f32 %v8411, %v8543
    %v8545 = vpop.f32.mrb[0].mxu0
    %v8546 = vadd.f32 %v8413, %v8545
    %8547 = vmatprep.mubr.bf16.mxu0 %v6613
    %8548 = vmatmul.mubr.bf16.gmra.mrb[0].mxu0 %v6612
    %v8549 = vpop.f32.mrb[0].mxu0
    %v8550 = vadd.f32 %v8417, %v8549
    %v8551 = vpop.f32.mrb[0].mxu0
    %v8552 = vadd.f32 %v8419, %v8551
    %v8553 = vpop.f32.mrb[0].mxu0
    %v8554 = vadd.f32 %v8421, %v8553
    %v8555 = vpop.f32.mrb[0].mxu0
    %v8556 = vadd.f32 %v8423, %v8555
    %8557 = vmatprep.mubr.bf16.mxu0 %v6620
    %8558 = vmatmul.mubr.bf16.gmra.mrb[0].mxu0 %v6619
    %v8559 = vpop.f32.mrb[0].mxu0
    %v8560 = vadd.f32 %v8427, %v8559
    %v8561 = vpop.f32.mrb[0].mxu0
    %v8562 = vadd.f32 %v8429, %v8561
    %v8563 = vpop.f32.mrb[0].mxu0
    %v8564 = vadd.f32 %v8431, %v8563
    %v8565 = vpop.f32.mrb[0].mxu0
    %v8566 = vadd.f32 %v8433, %v8565
    %8567 = vmatprep.mubr.bf16.mxu0 %v6627
    %8568 = vmatmul.mubr.bf16.gmra.mrb[0].mxu0 %v6626
    %v8569 = vpop.f32.mrb[0].mxu0
    %v8570 = vadd.f32 %v8437, %v8569
    %v8571 = vpop.f32.mrb[0].mxu0
    %v8572 = vadd.f32 %v8439, %v8571
    %v8573 = vpop.f32.mrb[0].mxu0
    %v8574 = vadd.f32 %v8441, %v8573
    %v8575 = vpop.f32.mrb[0].mxu0
    %v8576 = vadd.f32 %v8443, %v8575
    %8577 = vmatprep.mubr.bf16.mxu0 %v6634
    %8578 = vmatmul.mubr.bf16.gmra.mrb[0].mxu0 %v6633
    %v8579 = vpop.f32.mrb[0].mxu0
    %v8580 = vadd.f32 %v8447, %v8579
    %v8581 = vpop.f32.mrb[0].mxu0
    %v8582 = vadd.f32 %v8449, %v8581
    %v8583 = vpop.f32.mrb[0].mxu0
    %v8584 = vadd.f32 %v8451, %v8583
    %v8585 = vpop.f32.mrb[0].mxu0
    %v8586 = vadd.f32 %v8453, %v8585
    %8587 = vmatprep.mubr.bf16.mxu0 %v6641
    %8588 = vmatmul.mubr.bf16.gmra.mrb[0].mxu0 %v6640
    %v8589 = vpop.f32.mrb[0].mxu0
    %v8590 = vadd.f32 %v8457, %v8589
    %v8591 = vpop.f32.mrb[0].mxu0
    %v8592 = vadd.f32 %v8459, %v8591
    %v8593 = vpop.f32.mrb[0].mxu0
    %v8594 = vadd.f32 %v8461, %v8593
    %v8595 = vpop.f32.mrb[0].mxu0
    %v8596 = vadd.f32 %v8463, %v8595
    %8597 = vdwg.mxu0
    %8598 = vmatprep.subr.bf16.mxu0 %v6337
    %8599 = vmatpush1.bf16.msra.mxu0 %v6286
    %8600 = vmatprep.subr.bf16.mxu0 %v6338
    %8601 = vmatpush1.bf16.msra.mxu0 %v6287
    %8602 = vmatprep.subr.bf16.mxu0 %v6339
    %8603 = vmatpush1.bf16.msra.mxu0 %v6288
    %8604 = vmatprep.subr.bf16.mxu0 %v6340
    %8605 = vmatpush1.bf16.msra.mxu0 %v6289
    %8606 = vmatprep.subr.bf16.mxu0 %v6341
    %8607 = vmatpush1.bf16.msra.mxu0 %v6290
    %8608 = vmatprep.subr.bf16.mxu0 %v6342
    %8609 = vmatpush1.bf16.msra.mxu0 %v6291
    %8610 = vmatprep.subr.bf16.mxu0 %v6343
    %8611 = vmatpush1.bf16.msra.mxu0 %v6292
    %8612 = vmatprep.subr.bf16.mxu0 %v6344
    %8613 = vmatpush1.bf16.msra.mxu0 %v6293
    %8614 = vmatprep.subr.bf16.mxu0 %v6345
    %8615 = vmatpush1.bf16.msra.mxu0 %v6294
    %8616 = vmatprep.subr.bf16.mxu0 %v6346
    %8617 = vmatpush1.bf16.msra.mxu0 %v6295
    %8618 = vmatprep.subr.bf16.mxu0 %v6347
    %8619 = vmatpush1.bf16.msra.mxu0 %v6296
    %8620 = vmatprep.subr.bf16.mxu0 %v6348
    %8621 = vmatpush1.bf16.msra.mxu0 %v6297
    %8622 = vmatprep.subr.bf16.mxu0 %v6349
    %8623 = vmatpush1.bf16.msra.mxu0 %v6298
    %8624 = vmatprep.subr.bf16.mxu0 %v6350
    %8625 = vmatpush1.bf16.msra.mxu0 %v6299
    %8626 = vmatprep.subr.bf16.mxu0 %v6351
    %8627 = vmatpush1.bf16.msra.mxu0 %v6300
    %8628 = vmatprep.subr.bf16.mxu0 %v6352
    %8629 = vmatpush1.bf16.msra.mxu0 %v6301
    %8630 = vmatprep.mubr.bf16.mxu0 %v6580
    %8631 = vmatmul.mubr.bf16.gmra.mrb[0].mxu0 %v6579
    %v8632 = vpop.f32.mrb[0].mxu0
    %v8633 = vadd.f32 %v8500, %v8632
    %v8634 = vpop.f32.mrb[0].mxu0
    %v8635 = vadd.f32 %v8502, %v8634
    %v8636 = vpop.f32.mrb[0].mxu0
    %v8637 = vadd.f32 %v8504, %v8636
    %v8638 = vpop.f32.mrb[0].mxu0
    %v8639 = vadd.f32 %v8506, %v8638
    %8640 = vmatprep.mubr.bf16.mxu0 %v6587
    %8641 = vmatmul.mubr.bf16.gmra.mrb[0].mxu0 %v6586
    %v8642 = vpop.f32.mrb[0].mxu0
    %v8643 = vadd.f32 %v8510, %v8642
    %v8644 = vpop.f32.mrb[0].mxu0
    %v8645 = vadd.f32 %v8512, %v8644
    %v8646 = vpop.f32.mrb[0].mxu0
    %v8647 = vadd.f32 %v8514, %v8646
    %v8648 = vpop.f32.mrb[0].mxu0
    %v8649 = vadd.f32 %v8516, %v8648
    %8650 = vmatprep.mubr.bf16.mxu0 %v6594
    %8651 = vmatmul.mubr.bf16.gmra.mrb[0].mxu0 %v6593
    %v8652 = vpop.f32.mrb[0].mxu0
    %v8653 = vadd.f32 %v8520, %v8652
    %v8654 = vpop.f32.mrb[0].mxu0
    %v8655 = vadd.f32 %v8522, %v8654
    %v8656 = vpop.f32.mrb[0].mxu0
    %v8657 = vadd.f32 %v8524, %v8656
    %v8658 = vpop.f32.mrb[0].mxu0
    %v8659 = vadd.f32 %v8526, %v8658
    %8660 = vmatprep.mubr.bf16.mxu0 %v6601
    %8661 = vmatmul.mubr.bf16.gmra.mrb[0].mxu0 %v6600
    %v8662 = vpop.f32.mrb[0].mxu0
    %v8663 = vadd.f32 %v8530, %v8662
    %v8664 = vpop.f32.mrb[0].mxu0
    %v8665 = vadd.f32 %v8532, %v8664
    %v8666 = vpop.f32.mrb[0].mxu0
    %v8667 = vadd.f32 %v8534, %v8666
    %v8668 = vpop.f32.mrb[0].mxu0
    %v8669 = vadd.f32 %v8536, %v8668
    %8670 = vmatprep.mubr.bf16.mxu0 %v6608
    %8671 = vmatmul.mubr.bf16.gmra.mrb[0].mxu0 %v6607
    %v8672 = vpop.f32.mrb[0].mxu0
    %v8673 = vadd.f32 %v8540, %v8672
    %v8674 = vpop.f32.mrb[0].mxu0
    %v8675 = vadd.f32 %v8542, %v8674
    %v8676 = vpop.f32.mrb[0].mxu0
    %v8677 = vadd.f32 %v8544, %v8676
    %v8678 = vpop.f32.mrb[0].mxu0
    %v8679 = vadd.f32 %v8546, %v8678
    %8680 = vmatprep.mubr.bf16.mxu0 %v6615
    %8681 = vmatmul.mubr.bf16.gmra.mrb[0].mxu0 %v6614
    %v8682 = vpop.f32.mrb[0].mxu0
    %v8683 = vadd.f32 %v8550, %v8682
    %v8684 = vpop.f32.mrb[0].mxu0
    %v8685 = vadd.f32 %v8552, %v8684
    %v8686 = vpop.f32.mrb[0].mxu0
    %v8687 = vadd.f32 %v8554, %v8686
    %v8688 = vpop.f32.mrb[0].mxu0
    %v8689 = vadd.f32 %v8556, %v8688
    %8690 = vmatprep.mubr.bf16.mxu0 %v6622
    %8691 = vmatmul.mubr.bf16.gmra.mrb[0].mxu0 %v6621
    %v8692 = vpop.f32.mrb[0].mxu0
    %v8693 = vadd.f32 %v8560, %v8692
    %v8694 = vpop.f32.mrb[0].mxu0
    %v8695 = vadd.f32 %v8562, %v8694
    %v8696 = vpop.f32.mrb[0].mxu0
    %v8697 = vadd.f32 %v8564, %v8696
    %v8698 = vpop.f32.mrb[0].mxu0
    %v8699 = vadd.f32 %v8566, %v8698
    %8700 = vmatprep.mubr.bf16.mxu0 %v6629
    %8701 = vmatmul.mubr.bf16.gmra.mrb[0].mxu0 %v6628
    %v8702 = vpop.f32.mrb[0].mxu0
    %v8703 = vadd.f32 %v8570, %v8702
    %v8704 = vpop.f32.mrb[0].mxu0
    %v8705 = vadd.f32 %v8572, %v8704
    %v8706 = vpop.f32.mrb[0].mxu0
    %v8707 = vadd.f32 %v8574, %v8706
    %v8708 = vpop.f32.mrb[0].mxu0
    %v8709 = vadd.f32 %v8576, %v8708
    %8710 = vmatprep.mubr.bf16.mxu0 %v6636
    %8711 = vmatmul.mubr.bf16.gmra.mrb[0].mxu0 %v6635
    %v8712 = vpop.f32.mrb[0].mxu0
    %v8713 = vadd.f32 %v8580, %v8712
    %v8714 = vpop.f32.mrb[0].mxu0
    %v8715 = vadd.f32 %v8582, %v8714
    %v8716 = vpop.f32.mrb[0].mxu0
    %v8717 = vadd.f32 %v8584, %v8716
    %v8718 = vpop.f32.mrb[0].mxu0
    %v8719 = vadd.f32 %v8586, %v8718
    %8720 = vmatprep.mubr.bf16.mxu0 %v6643
    %8721 = vmatmul.mubr.bf16.gmra.mrb[0].mxu0 %v6642
    %v8722 = vpop.f32.mrb[0].mxu0
    %v8723 = vadd.f32 %v8590, %v8722
    %v8724 = vpop.f32.mrb[0].mxu0
    %v8725 = vadd.f32 %v8592, %v8724
    %v8726 = vpop.f32.mrb[0].mxu0
    %v8727 = vadd.f32 %v8594, %v8726
    %v8728 = vpop.f32.mrb[0].mxu0
    %v8729 = vadd.f32 %v8596, %v8728
    %8730 = vdwg.mxu0
    %8731 = vmatprep.subr.bf16.mxu0 %v6353
    %8732 = vmatpush1.bf16.msra.mxu0 %v6302
    %8733 = vmatprep.subr.bf16.mxu0 %v6354
    %8734 = vmatpush1.bf16.msra.mxu0 %v6303
    %8735 = vmatprep.subr.bf16.mxu0 0
    %8736 = vmatpush1.bf16.msra.mxu0 0
    %8737 = vmatprep.subr.bf16.mxu0 0
    %8738 = vmatpush1.bf16.msra.mxu0 0
    %8739 = vmatprep.subr.bf16.mxu0 0
    %8740 = vmatpush1.bf16.msra.mxu0 0
    %8741 = vmatprep.subr.bf16.mxu0 0
    %8742 = vmatpush1.bf16.msra.mxu0 0
    %8743 = vmatprep.subr.bf16.mxu0 0
    %8744 = vmatpush1.bf16.msra.mxu0 0
    %8745 = vmatprep.subr.bf16.mxu0 0
    %8746 = vmatpush1.bf16.msra.mxu0 0
    %8747 = vmatprep.subr.bf16.mxu0 0
    %8748 = vmatpush1.bf16.msra.mxu0 0
    %8749 = vmatprep.subr.bf16.mxu0 0
    %8750 = vmatpush1.bf16.msra.mxu0 0
    %8751 = vmatprep.subr.bf16.mxu0 0
    %8752 = vmatpush1.bf16.msra.mxu0 0
    %8753 = vmatprep.subr.bf16.mxu0 0
    %8754 = vmatpush1.bf16.msra.mxu0 0
    %8755 = vmatprep.subr.bf16.mxu0 0
    %8756 = vmatpush1.bf16.msra.mxu0 0
    %8757 = vmatprep.subr.bf16.mxu0 0
    %8758 = vmatpush1.bf16.msra.mxu0 0
    %8759 = vmatprep.subr.bf16.mxu0 0
    %8760 = vmatpush1.bf16.msra.mxu0 0
    %8761 = vmatprep.subr.bf16.mxu0 0
    %8762 = vmatpush1.bf16.msra.mxu0 0
    %8763 = vmatprep.mubr.bf16.mxu0 0
    %8764 = vmatmul.mubr.bf16.gmra.mrb[0].mxu0 %v6707
    %v8765 = vpop.f32.mrb[0].mxu0
    %v8766 = vadd.f32 %v8633, %v8765
    %v8767 = vpop.f32.mrb[0].mxu0
    %v8768 = vadd.f32 %v8635, %v8767
    %v8769 = vpop.f32.mrb[0].mxu0
    %v8770 = vadd.f32 %v8637, %v8769
    %v8771 = vpop.f32.mrb[0].mxu0
    %v8772 = vadd.f32 %v8639, %v8771
    %8773 = vmatprep.mubr.bf16.mxu0 0
    %8774 = vmatmul.mubr.bf16.gmra.mrb[0].mxu0 %v6710
    %v8775 = vpop.f32.mrb[0].mxu0
    %v8776 = vadd.f32 %v8643, %v8775
    %v8777 = vpop.f32.mrb[0].mxu0
    %v8778 = vadd.f32 %v8645, %v8777
    %v8779 = vpop.f32.mrb[0].mxu0
    %v8780 = vadd.f32 %v8647, %v8779
    %v8781 = vpop.f32.mrb[0].mxu0
    %v8782 = vadd.f32 %v8649, %v8781
    %8783 = vmatprep.mubr.bf16.mxu0 0
    %8784 = vmatmul.mubr.bf16.gmra.mrb[0].mxu0 %v6713
    %v8785 = vpop.f32.mrb[0].mxu0
    %v8786 = vadd.f32 %v8653, %v8785
    %v8787 = vpop.f32.mrb[0].mxu0
    %v8788 = vadd.f32 %v8655, %v8787
    %v8789 = vpop.f32.mrb[0].mxu0
    %v8790 = vadd.f32 %v8657, %v8789
    %v8791 = vpop.f32.mrb[0].mxu0
    %v8792 = vadd.f32 %v8659, %v8791
    %8793 = vmatprep.mubr.bf16.mxu0 0
    %8794 = vmatmul.mubr.bf16.gmra.mrb[0].mxu0 %v6716
    %v8795 = vpop.f32.mrb[0].mxu0
    %v8796 = vadd.f32 %v8663, %v8795
    %v8797 = vpop.f32.mrb[0].mxu0
    %v8798 = vadd.f32 %v8665, %v8797
    %v8799 = vpop.f32.mrb[0].mxu0
    %v8800 = vadd.f32 %v8667, %v8799
    %v8801 = vpop.f32.mrb[0].mxu0
    %v8802 = vadd.f32 %v8669, %v8801
    %8803 = vmatprep.mubr.bf16.mxu0 0
    %8804 = vmatmul.mubr.bf16.gmra.mrb[0].mxu0 %v6719
    %v8805 = vpop.f32.mrb[0].mxu0
    %v8806 = vadd.f32 %v8673, %v8805
    %v8807 = vpop.f32.mrb[0].mxu0
    %v8808 = vadd.f32 %v8675, %v8807
    %v8809 = vpop.f32.mrb[0].mxu0
    %v8810 = vadd.f32 %v8677, %v8809
    %v8811 = vpop.f32.mrb[0].mxu0
    %v8812 = vadd.f32 %v8679, %v8811
    %8813 = vmatprep.mubr.bf16.mxu0 0
    %8814 = vmatmul.mubr.bf16.gmra.mrb[0].mxu0 %v6722
    %v8815 = vpop.f32.mrb[0].mxu0
    %v8816 = vadd.f32 %v8683, %v8815
    %v8817 = vpop.f32.mrb[0].mxu0
    %v8818 = vadd.f32 %v8685, %v8817
    %v8819 = vpop.f32.mrb[0].mxu0
    %v8820 = vadd.f32 %v8687, %v8819
    %v8821 = vpop.f32.mrb[0].mxu0
    %v8822 = vadd.f32 %v8689, %v8821
    %8823 = vmatprep.mubr.bf16.mxu0 0
    %8824 = vmatmul.mubr.bf16.gmra.mrb[0].mxu0 %v6725
    %v8825 = vpop.f32.mrb[0].mxu0
    %v8826 = vadd.f32 %v8693, %v8825
    %v8827 = vpop.f32.mrb[0].mxu0
    %v8828 = vadd.f32 %v8695, %v8827
    %v8829 = vpop.f32.mrb[0].mxu0
    %v8830 = vadd.f32 %v8697, %v8829
    %v8831 = vpop.f32.mrb[0].mxu0
    %v8832 = vadd.f32 %v8699, %v8831
    %8833 = vmatprep.mubr.bf16.mxu0 0
    %8834 = vmatmul.mubr.bf16.gmra.mrb[0].mxu0 %v6728
    %v8835 = vpop.f32.mrb[0].mxu0
    %v8836 = vadd.f32 %v8703, %v8835
    %v8837 = vpop.f32.mrb[0].mxu0
    %v8838 = vadd.f32 %v8705, %v8837
    %v8839 = vpop.f32.mrb[0].mxu0
    %v8840 = vadd.f32 %v8707, %v8839
    %v8841 = vpop.f32.mrb[0].mxu0
    %v8842 = vadd.f32 %v8709, %v8841
    %8843 = vmatprep.mubr.bf16.mxu0 0
    %8844 = vmatmul.mubr.bf16.gmra.mrb[0].mxu0 %v6731
    %v8845 = vpop.f32.mrb[0].mxu0
    %v8846 = vadd.f32 %v8713, %v8845
    %v8847 = vpop.f32.mrb[0].mxu0
    %v8848 = vadd.f32 %v8715, %v8847
    %v8849 = vpop.f32.mrb[0].mxu0
    %v8850 = vadd.f32 %v8717, %v8849
    %v8851 = vpop.f32.mrb[0].mxu0
    %v8852 = vadd.f32 %v8719, %v8851
    %8853 = vmatprep.mubr.bf16.mxu0 0
    %8854 = vmatmul.mubr.bf16.gmra.mrb[0].mxu0 %v6734
    %v8855 = vpop.f32.mrb[0].mxu0
    %v8856 = vadd.f32 %v8723, %v8855
    %v8857 = vpop.f32.mrb[0].mxu0
    %v8858 = vadd.f32 %v8725, %v8857
    %v8859 = vpop.f32.mrb[0].mxu0
    %v8860 = vadd.f32 %v8727, %v8859
    %v8861 = vpop.f32.mrb[0].mxu0
    %v8862 = vadd.f32 %v8729, %v8861
    %8863 = vdwg.mxu0
    %v8864 = vmax.f32 %v7170, %v7220
    %v8865 = vmax.f32 %v7172, %v7222
    %v8866 = vmax.f32 %v7702, %v7752
    %v8867 = vmax.f32 %v7704, %v7754
    %v8868 = vmax.f32 %v8234, %v8284
    %v8869 = vmax.f32 %v8236, %v8286
    %v8870 = vmax.f32 %v8766, %v8816
    %v8871 = vmax.f32 %v8768, %v8818
    %v8872 = vmax.f32 %v7174, %v7224
    %v8873 = vmax.f32 %v7176, %v7226
    %v8874 = vmax.f32 %v7706, %v7756
    %v8875 = vmax.f32 %v7708, %v7758
    %v8876 = vmax.f32 %v8238, %v8288
    %v8877 = vmax.f32 %v8240, %v8290
    %v8878 = vmax.f32 %v8770, %v8820
    %v8879 = vmax.f32 %v8772, %v8822
    %v8880 = vmax.f32 %v7180, %v7230
    %v8881 = vmax.f32 %v7182, %v7232
    %v8882 = vmax.f32 %v7712, %v7762
    %v8883 = vmax.f32 %v7714, %v7764
    %v8884 = vmax.f32 %v8244, %v8294
    %v8885 = vmax.f32 %v8246, %v8296
    %v8886 = vmax.f32 %v8776, %v8826
    %v8887 = vmax.f32 %v8778, %v8828
    %v8888 = vmax.f32 %v7184, %v7234
    %v8889 = vmax.f32 %v7186, %v7236
    %v8890 = vmax.f32 %v7716, %v7766
    %v8891 = vmax.f32 %v7718, %v7768
    %v8892 = vmax.f32 %v8248, %v8298
    %v8893 = vmax.f32 %v8250, %v8300
    %v8894 = vmax.f32 %v8780, %v8830
    %v8895 = vmax.f32 %v8782, %v8832
    %v8896 = vmax.f32 %v7190, %v7240
    %v8897 = vmax.f32 %v7192, %v7242
    %v8898 = vmax.f32 %v7722, %v7772
    %v8899 = vmax.f32 %v7724, %v7774
    %v8900 = vmax.f32 %v8254, %v8304
    %v8901 = vmax.f32 %v8256, %v8306
    %v8902 = vmax.f32 %v8786, %v8836
    %v8903 = vmax.f32 %v8788, %v8838
    %v8904 = vmax.f32 %v7194, %v7244
    %v8905 = vmax.f32 %v7196, %v7246
    %v8906 = vmax.f32 %v7726, %v7776
    %v8907 = vmax.f32 %v7728, %v7778
    %v8908 = vmax.f32 %v8258, %v8308
    %v8909 = vmax.f32 %v8260, %v8310
    %v8910 = vmax.f32 %v8790, %v8840
    %v8911 = vmax.f32 %v8792, %v8842
    %v8912 = vmax.f32 %v7200, %v7250
    %v8913 = vmax.f32 %v7202, %v7252
    %v8914 = vmax.f32 %v7732, %v7782
    %v8915 = vmax.f32 %v7734, %v7784
    %v8916 = vmax.f32 %v8264, %v8314
    %v8917 = vmax.f32 %v8266, %v8316
    %v8918 = vmax.f32 %v8796, %v8846
    %v8919 = vmax.f32 %v8798, %v8848
    %v8920 = vmax.f32 %v7204, %v7254
    %v8921 = vmax.f32 %v7206, %v7256
    %v8922 = vmax.f32 %v7736, %v7786
    %v8923 = vmax.f32 %v7738, %v7788
    %v8924 = vmax.f32 %v8268, %v8318
    %v8925 = vmax.f32 %v8270, %v8320
    %v8926 = vmax.f32 %v8800, %v8850
    %v8927 = vmax.f32 %v8802, %v8852
    %v8928 = vmax.f32 %v7210, %v7260
    %v8929 = vmax.f32 %v7212, %v7262
    %v8930 = vmax.f32 %v7742, %v7792
    %v8931 = vmax.f32 %v7744, %v7794
    %v8932 = vmax.f32 %v8274, %v8324
    %v8933 = vmax.f32 %v8276, %v8326
    %v8934 = vmax.f32 %v8806, %v8856
    %v8935 = vmax.f32 %v8808, %v8858
    %v8936 = vmax.f32 %v7214, %v7264
    %v8937 = vmax.f32 %v7216, %v7266
    %v8938 = vmax.f32 %v7746, %v7796
    %v8939 = vmax.f32 %v7748, %v7798
    %v8940 = vmax.f32 %v8278, %v8328
    %v8941 = vmax.f32 %v8280, %v8330
    %v8942 = vmax.f32 %v8810, %v8860
    %v8943 = vmax.f32 %v8812, %v8862
    %v8944 = vmax.f32 %v8864, %v8865
    %v8945 = vmax.f32 %v8872, %v8873
    %v8946 = vmax.f32 %v8880, %v8881
    %v8947 = vmax.f32 %v8888, %v8889
    %v8948 = vmax.f32 %v8896, %v8897
    %v8949 = vmax.f32 %v8904, %v8905
    %v8950 = vmax.f32 %v8912, %v8913
    %v8951 = vmax.f32 %v8920, %v8921
    %v8952 = vmax.f32 %v8928, %v8929
    %v8953 = vmax.f32 %v8936, %v8937
    %v8954 = vmax.f32 %v8866, %v8867
    %v8955 = vmax.f32 %v8874, %v8875
    %v8956 = vmax.f32 %v8882, %v8883
    %v8957 = vmax.f32 %v8890, %v8891
    %v8958 = vmax.f32 %v8898, %v8899
    %v8959 = vmax.f32 %v8906, %v8907
    %v8960 = vmax.f32 %v8914, %v8915
    %v8961 = vmax.f32 %v8922, %v8923
    %v8962 = vmax.f32 %v8930, %v8931
    %v8963 = vmax.f32 %v8938, %v8939
    %v8964 = vmax.f32 %v8868, %v8869
    %v8965 = vmax.f32 %v8876, %v8877
    %v8966 = vmax.f32 %v8884, %v8885
    %v8967 = vmax.f32 %v8892, %v8893
    %v8968 = vmax.f32 %v8900, %v8901
    %v8969 = vmax.f32 %v8908, %v8909
    %v8970 = vmax.f32 %v8916, %v8917
    %v8971 = vmax.f32 %v8924, %v8925
    %v8972 = vmax.f32 %v8932, %v8933
    %v8973 = vmax.f32 %v8940, %v8941
    %v8974 = vmax.f32 %v8870, %v8871
    %v8975 = vmax.f32 %v8878, %v8879
    %v8976 = vmax.f32 %v8886, %v8887
    %v8977 = vmax.f32 %v8894, %v8895
    %v8978 = vmax.f32 %v8902, %v8903
    %v8979 = vmax.f32 %v8910, %v8911
    %v8980 = vmax.f32 %v8918, %v8919
    %v8981 = vmax.f32 %v8926, %v8927
    %v8982 = vmax.f32 %v8934, %v8935
    %v8983 = vmax.f32 %v8942, %v8943
    %v8984 = vld [vmem:[%s3] sm:$0xff]
    %v8985 = vld [vmem:[%s3 + $0x8] sm:$0xff]
    %v8986 = vld [vmem:[%s3 + $0x10] sm:$0xff]
    %v8987 = vld [vmem:[%s3 + $0x18] sm:$0xff]
    %v8988 = vld [vmem:[%s3 + $0x20] sm:$0xff]
    %v8989 = vld [vmem:[%s3 + $0x28] sm:$0xff]
    %v8990 = vld [vmem:[%s3 + $0x30] sm:$0xff]
    %v8991 = vld [vmem:[%s3 + $0x38] sm:$0xff]
    %v8992 = vld [vmem:[%s3 + $0x40] sm:$0xff]
    %v8993 = vld [vmem:[%s3 + $0x48] sm:$0xff]
    %v8994 = vld [vmem:[%s3 + $0x50] sm:$0xff]
    %v8995 = vld [vmem:[%s3 + $0x58] sm:$0xff]
    %v8996 = vld [vmem:[%s3 + $0x60] sm:$0xff]
    %v8997 = vld [vmem:[%s3 + $0x68] sm:$0xff]
    %v8998 = vld [vmem:[%s3 + $0x70] sm:$0xff]
    %v8999 = vld [vmem:[%s3 + $0x78] sm:$0xff]
    %v9000 = vld [vmem:[%s3 + $0x80] sm:$0xff]
    %v9001 = vld [vmem:[%s3 + $0x88] sm:$0xff]
    %v9002 = vld [vmem:[%s3 + $0x90] sm:$0xff]
    %v9003 = vld [vmem:[%s3 + $0x98] sm:$0xff]
    %v9004 = vld [vmem:[%s3 + $0xa0] sm:$0xff]
    %v9005 = vld [vmem:[%s3 + $0xa8] sm:$0xff]
    %v9006 = vld [vmem:[%s3 + $0xb0] sm:$0xff]
    %v9007 = vld [vmem:[%s3 + $0xb8] sm:$0xff]
    %v9008 = vld [vmem:[%s3 + $0xc0] sm:$0xff]
    %v9009 = vld [vmem:[%s3 + $0xc8] sm:$0xff]
    %v9010 = vld [vmem:[%s3 + $0xd0] sm:$0xff]
    %v9011 = vld [vmem:[%s3 + $0xd8] sm:$0xff]
    %v9012 = vld [vmem:[%s3 + $0xe0] sm:$0xff]
    %v9013 = vld [vmem:[%s3 + $0xe8] sm:$0xff]
    %v9014 = vld [vmem:[%s3 + $0xf0] sm:$0xff]
    %v9015 = vld [vmem:[%s3 + $0xf8] sm:$0xff]
    %v9016 = vld [vmem:[%s3 + $0x100] sm:$0xff]
    %v9017 = vld [vmem:[%s3 + $0x108] sm:$0xff]
    %v9018 = vld [vmem:[%s3 + $0x110] sm:$0xff]
    %v9019 = vld [vmem:[%s3 + $0x118] sm:$0xff]
    %v9020 = vld [vmem:[%s3 + $0x120] sm:$0xff]
    %v9021 = vld [vmem:[%s3 + $0x128] sm:$0xff]
    %v9022 = vld [vmem:[%s3 + $0x130] sm:$0xff]
    %v9023 = vld [vmem:[%s3 + $0x138] sm:$0xff]
    %9025 = vset.pattern.permute.xlu0 0
    %9026 = vperm.xlu0 %9025, %v8984
    %v9027 = vpop.permute.xlu0 %9026
    %9030 = vset.pattern.permute.xlu0 0
    %9031 = vperm.xlu0 %9030, %v8985
    %v9032 = vpop.permute.xlu0 %9031
    %9035 = vset.pattern.permute.xlu0 0
    %9036 = vperm.xlu0 %9035, %v8986
    %v9037 = vpop.permute.xlu0 %9036
    %9040 = vset.pattern.permute.xlu0 0
    %9041 = vperm.xlu0 %9040, %v8987
    %v9042 = vpop.permute.xlu0 %9041
    %9045 = vset.pattern.permute.xlu0 0
    %9046 = vperm.xlu0 %9045, %v8988
    %v9047 = vpop.permute.xlu0 %9046
    %9050 = vset.pattern.permute.xlu0 0
    %9051 = vperm.xlu0 %9050, %v8989
    %v9052 = vpop.permute.xlu0 %9051
    %9055 = vset.pattern.permute.xlu0 0
    %9056 = vperm.xlu0 %9055, %v8990
    %v9057 = vpop.permute.xlu0 %9056
    %9060 = vset.pattern.permute.xlu0 0
    %9061 = vperm.xlu0 %9060, %v8991
    %v9062 = vpop.permute.xlu0 %9061
    %9065 = vset.pattern.permute.xlu0 0
    %9066 = vperm.xlu0 %9065, %v8992
    %v9067 = vpop.permute.xlu0 %9066
    %9070 = vset.pattern.permute.xlu0 0
    %9071 = vperm.xlu0 %9070, %v8993
    %v9072 = vpop.permute.xlu0 %9071
    %9075 = vset.pattern.permute.xlu0 0
    %9076 = vperm.xlu0 %9075, %v8994
    %v9077 = vpop.permute.xlu0 %9076
    %9080 = vset.pattern.permute.xlu0 0
    %9081 = vperm.xlu0 %9080, %v8995
    %v9082 = vpop.permute.xlu0 %9081
    %9085 = vset.pattern.permute.xlu0 0
    %9086 = vperm.xlu0 %9085, %v8996
    %v9087 = vpop.permute.xlu0 %9086
    %9090 = vset.pattern.permute.xlu0 0
    %9091 = vperm.xlu0 %9090, %v8997
    %v9092 = vpop.permute.xlu0 %9091
    %9095 = vset.pattern.permute.xlu0 0
    %9096 = vperm.xlu0 %9095, %v8998
    %v9097 = vpop.permute.xlu0 %9096
    %9100 = vset.pattern.permute.xlu0 0
    %9101 = vperm.xlu0 %9100, %v8999
    %v9102 = vpop.permute.xlu0 %9101
    %9105 = vset.pattern.permute.xlu0 0
    %9106 = vperm.xlu0 %9105, %v9000
    %v9107 = vpop.permute.xlu0 %9106
    %9110 = vset.pattern.permute.xlu0 0
    %9111 = vperm.xlu0 %9110, %v9001
    %v9112 = vpop.permute.xlu0 %9111
    %9115 = vset.pattern.permute.xlu0 0
    %9116 = vperm.xlu0 %9115, %v9002
    %v9117 = vpop.permute.xlu0 %9116
    %9120 = vset.pattern.permute.xlu0 0
    %9121 = vperm.xlu0 %9120, %v9003
    %v9122 = vpop.permute.xlu0 %9121
    %9125 = vset.pattern.permute.xlu0 0
    %9126 = vperm.xlu0 %9125, %v9004
    %v9127 = vpop.permute.xlu0 %9126
    %9130 = vset.pattern.permute.xlu0 0
    %9131 = vperm.xlu0 %9130, %v9005
    %v9132 = vpop.permute.xlu0 %9131
    %9135 = vset.pattern.permute.xlu0 0
    %9136 = vperm.xlu0 %9135, %v9006
    %v9137 = vpop.permute.xlu0 %9136
    %9140 = vset.pattern.permute.xlu0 0
    %9141 = vperm.xlu0 %9140, %v9007
    %v9142 = vpop.permute.xlu0 %9141
    %9145 = vset.pattern.permute.xlu0 0
    %9146 = vperm.xlu0 %9145, %v9008
    %v9147 = vpop.permute.xlu0 %9146
    %9150 = vset.pattern.permute.xlu0 0
    %9151 = vperm.xlu0 %9150, %v9009
    %v9152 = vpop.permute.xlu0 %9151
    %9155 = vset.pattern.permute.xlu0 0
    %9156 = vperm.xlu0 %9155, %v9010
    %v9157 = vpop.permute.xlu0 %9156
    %9160 = vset.pattern.permute.xlu0 0
    %9161 = vperm.xlu0 %9160, %v9011
    %v9162 = vpop.permute.xlu0 %9161
    %9165 = vset.pattern.permute.xlu0 0
    %9166 = vperm.xlu0 %9165, %v9012
    %v9167 = vpop.permute.xlu0 %9166
    %9170 = vset.pattern.permute.xlu0 0
    %9171 = vperm.xlu0 %9170, %v9013
    %v9172 = vpop.permute.xlu0 %9171
    %9175 = vset.pattern.permute.xlu0 0
    %9176 = vperm.xlu0 %9175, %v9014
    %v9177 = vpop.permute.xlu0 %9176
    %9180 = vset.pattern.permute.xlu0 0
    %9181 = vperm.xlu0 %9180, %v9015
    %v9182 = vpop.permute.xlu0 %9181
    %9185 = vset.pattern.permute.xlu0 0
    %9186 = vperm.xlu0 %9185, %v9016
    %v9187 = vpop.permute.xlu0 %9186
    %9190 = vset.pattern.permute.xlu0 0
    %9191 = vperm.xlu0 %9190, %v9017
    %v9192 = vpop.permute.xlu0 %9191
    %9195 = vset.pattern.permute.xlu0 0
    %9196 = vperm.xlu0 %9195, %v9018
    %v9197 = vpop.permute.xlu0 %9196
    %9200 = vset.pattern.permute.xlu0 0
    %9201 = vperm.xlu0 %9200, %v9019
    %v9202 = vpop.permute.xlu0 %9201
    %9205 = vset.pattern.permute.xlu0 0
    %9206 = vperm.xlu0 %9205, %v9020
    %v9207 = vpop.permute.xlu0 %9206
    %9210 = vset.pattern.permute.xlu0 0
    %9211 = vperm.xlu0 %9210, %v9021
    %v9212 = vpop.permute.xlu0 %9211
    %9215 = vset.pattern.permute.xlu0 0
    %9216 = vperm.xlu0 %9215, %v9022
    %v9217 = vpop.permute.xlu0 %9216
    %9220 = vset.pattern.permute.xlu0 0
    %9221 = vperm.xlu0 %9220, %v9023
    %v9222 = vpop.permute.xlu0 %9221
    %v9224 = vadd.f32 %v8944, %v9027
    %v9225 = vadd.f32 %v8945, %v9032
    %v9226 = vadd.f32 %v8946, %v9037
    %v9227 = vadd.f32 %v8947, %v9042
    %v9228 = vadd.f32 %v8948, %v9047
    %v9229 = vadd.f32 %v8949, %v9052
    %v9230 = vadd.f32 %v8950, %v9057
    %v9231 = vadd.f32 %v8951, %v9062
    %v9232 = vadd.f32 %v8952, %v9067
    %v9233 = vadd.f32 %v8953, %v9072
    %v9234 = vadd.f32 %v8954, %v9077
    %v9235 = vadd.f32 %v8955, %v9082
    %v9236 = vadd.f32 %v8956, %v9087
    %v9237 = vadd.f32 %v8957, %v9092
    %v9238 = vadd.f32 %v8958, %v9097
    %v9239 = vadd.f32 %v8959, %v9102
    %v9240 = vadd.f32 %v8960, %v9107
    %v9241 = vadd.f32 %v8961, %v9112
    %v9242 = vadd.f32 %v8962, %v9117
    %v9243 = vadd.f32 %v8963, %v9122
    %v9244 = vadd.f32 %v8964, %v9127
    %v9245 = vadd.f32 %v8965, %v9132
    %v9246 = vadd.f32 %v8966, %v9137
    %v9247 = vadd.f32 %v8967, %v9142
    %v9248 = vadd.f32 %v8968, %v9147
    %v9249 = vadd.f32 %v8969, %v9152
    %v9250 = vadd.f32 %v8970, %v9157
    %v9251 = vadd.f32 %v8971, %v9162
    %v9252 = vadd.f32 %v8972, %v9167
    %v9253 = vadd.f32 %v8973, %v9172
    %v9254 = vadd.f32 %v8974, %v9177
    %v9255 = vadd.f32 %v8975, %v9182
    %v9256 = vadd.f32 %v8976, %v9187
    %v9257 = vadd.f32 %v8977, %v9192
    %v9258 = vadd.f32 %v8978, %v9197
    %v9259 = vadd.f32 %v8979, %v9202
    %v9260 = vadd.f32 %v8980, %v9207
    %v9261 = vadd.f32 %v8981, %v9212
    %v9262 = vadd.f32 %v8982, %v9217
    %v9263 = vadd.f32 %v8983, %v9222
    %v9264 = vmax.f32 %v9224, 0.0
    %v9265 = vmax.f32 %v9225, 0.0
    %v9266 = vmax.f32 %v9226, 0.0
    %v9267 = vmax.f32 %v9227, 0.0
    %v9268 = vmax.f32 %v9228, 0.0
    %v9269 = vmax.f32 %v9229, 0.0
    %v9270 = vmax.f32 %v9230, 0.0
    %v9271 = vmax.f32 %v9231, 0.0
    %v9272 = vmax.f32 %v9232, 0.0
    %v9273 = vmax.f32 %v9233, 0.0
    %v9274 = vmax.f32 %v9234, 0.0
    %v9275 = vmax.f32 %v9235, 0.0
    %v9276 = vmax.f32 %v9236, 0.0
    %v9277 = vmax.f32 %v9237, 0.0
    %v9278 = vmax.f32 %v9238, 0.0
    %v9279 = vmax.f32 %v9239, 0.0
    %v9280 = vmax.f32 %v9240, 0.0
    %v9281 = vmax.f32 %v9241, 0.0
    %v9282 = vmax.f32 %v9242, 0.0
    %v9283 = vmax.f32 %v9243, 0.0
    %v9284 = vmax.f32 %v9244, 0.0
    %v9285 = vmax.f32 %v9245, 0.0
    %v9286 = vmax.f32 %v9246, 0.0
    %v9287 = vmax.f32 %v9247, 0.0
    %v9288 = vmax.f32 %v9248, 0.0
    %v9289 = vmax.f32 %v9249, 0.0
    %v9290 = vmax.f32 %v9250, 0.0
    %v9291 = vmax.f32 %v9251, 0.0
    %v9292 = vmax.f32 %v9252, 0.0
    %v9293 = vmax.f32 %v9253, 0.0
    %v9294 = vmax.f32 %v9254, 0.0
    %v9295 = vmax.f32 %v9255, 0.0
    %v9296 = vmax.f32 %v9256, 0.0
    %v9297 = vmax.f32 %v9257, 0.0
    %v9298 = vmax.f32 %v9258, 0.0
    %v9299 = vmax.f32 %v9259, 0.0
    %v9300 = vmax.f32 %v9260, 0.0
    %v9301 = vmax.f32 %v9261, 0.0
    %v9302 = vmax.f32 %v9262, 0.0
    %v9303 = vmax.f32 %v9263, 0.0
    %v9304 = vld [vmem:[%s4] sm:$0xff]
    %v9305 = vld [vmem:[%s4 + $0x8] sm:$0xf]
    %v9306 = vld [vmem:[%s4 + $0xc] sm:$0xff]
    %v9307 = vld [vmem:[%s4 + $0x14] sm:$0xf]
    %v9308 = vld [vmem:[%s4 + $0x18] sm:$0xff]
    %v9309 = vld [vmem:[%s4 + $0x20] sm:$0xf]
    %v9310 = vld [vmem:[%s4 + $0x24] sm:$0xff]
    %v9311 = vld [vmem:[%s4 + $0x2c] sm:$0xf]
    %v9312 = vld [vmem:[%s4 + $0x30] sm:$0xff]
    %v9313 = vld [vmem:[%s4 + $0x38] sm:$0xf]
    %v9314 = vld [vmem:[%s4 + $0x3c] sm:$0xff]
    %v9315 = vld [vmem:[%s4 + $0x44] sm:$0xf]
    %v9316 = vld [vmem:[%s4 + $0x48] sm:$0x11]
    %v9317 = vld [vmem:[%s4 + $0x50] sm:$0x1]
    %v9318 = vpack.c.bf16 %v9265, %v9264
    %v9319 = vpack.c.bf16 %v9267, %v9266
    %v9320 = vpack.c.bf16 %v9269, %v9268
    %v9321 = vpack.c.bf16 %v9271, %v9270
    %v9322 = vpack.c.bf16 %v9273, %v9272
    %v9323 = vpack.c.bf16 %v9275, %v9274
    %v9324 = vpack.c.bf16 %v9277, %v9276
    %v9325 = vpack.c.bf16 %v9279, %v9278
    %v9326 = vpack.c.bf16 %v9281, %v9280
    %v9327 = vpack.c.bf16 %v9283, %v9282
    %v9328 = vpack.c.bf16 %v9285, %v9284
    %v9329 = vpack.c.bf16 %v9287, %v9286
    %v9330 = vpack.c.bf16 %v9289, %v9288
    %v9331 = vpack.c.bf16 %v9291, %v9290
    %v9332 = vpack.c.bf16 %v9293, %v9292
    %v9333 = vpack.c.bf16 %v9295, %v9294
    %v9334 = vpack.c.bf16 %v9297, %v9296
    %v9335 = vpack.c.bf16 %v9299, %v9298
    %v9336 = vpack.c.bf16 %v9301, %v9300
    %v9337 = vpack.c.bf16 %v9303, %v9302
    %v9338 = vld [vmem:[%s5] sm:$0xff]
    %v9339 = vld [vmem:[%s5 + $0x8] sm:$0xff]
    %v9340 = vld [vmem:[%s5 + $0x10] sm:$0xff]
    %v9341 = vld [vmem:[%s5 + $0x18] sm:$0xff]
    %v9342 = vld [vmem:[%s5 + $0x20] sm:$0xff]
    %v9343 = vld [vmem:[%s5 + $0x28] sm:$0xff]
    %v9344 = vld [vmem:[%s5 + $0x30] sm:$0x3]
    %9346 = vset.pattern.permute.xlu0 0
    %9347 = vperm.xlu0 %9346, %v9338
    %v9348 = vpop.permute.xlu0 %9347
    %9351 = vset.pattern.permute.xlu0 0
    %9352 = vperm.xlu0 %9351, %v9339
    %v9353 = vpop.permute.xlu0 %9352
    %9356 = vset.pattern.permute.xlu0 0
    %9357 = vperm.xlu0 %9356, %v9340
    %v9358 = vpop.permute.xlu0 %9357
    %9361 = vset.pattern.permute.xlu0 0
    %9362 = vperm.xlu0 %9361, %v9341
    %v9363 = vpop.permute.xlu0 %9362
    %9366 = vset.pattern.permute.xlu0 0
    %9367 = vperm.xlu0 %9366, %v9342
    %v9368 = vpop.permute.xlu0 %9367
    %9371 = vset.pattern.permute.xlu0 0
    %9372 = vperm.xlu0 %9371, %v9343
    %v9373 = vpop.permute.xlu0 %9372
    %9376 = vset.pattern.permute.xlu0 0
    %9377 = vperm.xlu0 %9376, %v9344
    %v9378 = vpop.permute.xlu0 %9377
    %v9394 = vunpack.c.l.b16 %v9304
    %v9395 = vunpack.c.h.b16 %v9304
    %v9396 = vunpack.c.l.b16 %v9305
    %v9397 = vunpack.c.l.b16 %v9306
    %v9398 = vunpack.c.h.b16 %v9306
    %v9399 = vunpack.c.l.b16 %v9307
    %v9400 = vunpack.c.l.b16 %v9308
    %v9401 = vunpack.c.h.b16 %v9308
    %v9402 = vunpack.c.l.b16 %v9309
    %v9403 = vunpack.c.l.b16 %v9310
    %v9404 = vunpack.c.h.b16 %v9310
    %v9405 = vunpack.c.l.b16 %v9311
    %v9406 = vunpack.c.l.b16 %v9312
    %v9407 = vunpack.c.h.b16 %v9312
    %v9408 = vunpack.c.l.b16 %v9313
    %v9409 = vunpack.c.l.b16 %v9314
    %v9410 = vunpack.c.h.b16 %v9314
    %v9411 = vunpack.c.l.b16 %v9315
    %v9412 = vunpack.c.l.b16 %v9316
    %v9413 = vunpack.c.h.b16 %v9316
    %v9414 = vunpack.c.l.b16 %v9317
    %v9415 = vpack.c.b16 %v9397, %v9394
    %v9416 = vpack.c.b16 %v9398, %v9395
    %v9417 = vpack.c.b16 %v9399, %v9396
    %v9418 = vpack.c.b16 %v9403, %v9400
    %v9419 = vpack.c.b16 %v9404, %v9401
    %v9420 = vpack.c.b16 %v9405, %v9402
    %v9421 = vpack.c.b16 %v9409, %v9406
    %v9422 = vpack.c.b16 %v9410, %v9407
    %v9423 = vpack.c.b16 %v9411, %v9408
    %v9424 = vpack.c.b16 %v9412, %v9412
    %v9425 = vpack.c.b16 %v9413, %v9413
    %v9426 = vpack.c.b16 %v9414, %v9414
    %vm9435 = vcmask 523264
    %v9437 = vsel %vm9435, %v9417, 0
    %v9440 = vsel %vm9435, %v9420, 0
    %v9443 = vsel %vm9435, %v9423, 0
    %v9446 = vsel %vm9435, %v9426, 0
    %9448 = vmatprep.subr.bf16.mxu0 0
    %9449 = vmatpush1.bf16.msra.mxu0 %v9318
    %9450 = vmatprep.subr.bf16.mxu0 0
    %9451 = vmatpush1.bf16.msra.mxu0 %v9319
    %9452 = vmatprep.subr.bf16.mxu0 0
    %9453 = vmatpush1.bf16.msra.mxu0 %v9320
    %9454 = vmatprep.subr.bf16.mxu0 0
    %9455 = vmatpush1.bf16.msra.mxu0 %v9321
    %9456 = vmatprep.subr.bf16.mxu0 0
    %9457 = vmatpush1.bf16.msra.mxu0 %v9322
    %9458 = vmatprep.subr.bf16.mxu0 0
    %9459 = vmatpush1.bf16.msra.mxu0 %v9323
    %9460 = vmatprep.subr.bf16.mxu0 0
    %9461 = vmatpush1.bf16.msra.mxu0 %v9324
    %9462 = vmatprep.subr.bf16.mxu0 0
    %9463 = vmatpush1.bf16.msra.mxu0 %v9325
    %9464 = vmatprep.subr.bf16.mxu0 0
    %9465 = vmatpush1.bf16.msra.mxu0 %v9326
    %9466 = vmatprep.subr.bf16.mxu0 0
    %9467 = vmatpush1.bf16.msra.mxu0 %v9327
    %9468 = vmatprep.subr.bf16.mxu0 0
    %9469 = vmatpush1.bf16.msra.mxu0 %v9328
    %9470 = vmatprep.subr.bf16.mxu0 0
    %9471 = vmatpush1.bf16.msra.mxu0 %v9329
    %9472 = vmatprep.subr.bf16.mxu0 0
    %9473 = vmatpush1.bf16.msra.mxu0 %v9330
    %9474 = vmatprep.subr.bf16.mxu0 0
    %9475 = vmatpush1.bf16.msra.mxu0 %v9331
    %9476 = vmatprep.subr.bf16.mxu0 0
    %9477 = vmatpush1.bf16.msra.mxu0 %v9332
    %9478 = vmatprep.subr.bf16.mxu0 0
    %9479 = vmatpush1.bf16.msra.mxu0 %v9333
    %9480 = vmatprep.mubr.bf16.mxu0 %v9416
    %9481 = vmatmul.mubr.bf16.gmra.mrb[0].mxu0 %v9415
    %v9482 = vpop.f32.mrb[0].mxu0
    %v9483 = vadd.f32 %v9348, %v9482
    %v9484 = vpop.f32.mrb[0].mxu0
    %v9485 = vpop.f32.mrb[0].mxu0
    %v9486 = vadd.f32 %v9353, %v9485
    %v9487 = vpop.f32.mrb[0].mxu0
    %9488 = vmatprep.mubr.bf16.mxu0 %v9419
    %9489 = vmatmul.mubr.bf16.gmra.mrb[0].mxu0 %v9418
    %v9490 = vpop.f32.mrb[0].mxu0
    %v9491 = vadd.f32 %v9358, %v9490
    %v9492 = vpop.f32.mrb[0].mxu0
    %v9493 = vpop.f32.mrb[0].mxu0
    %v9494 = vadd.f32 %v9363, %v9493
    %v9495 = vpop.f32.mrb[0].mxu0
    %9496 = vmatprep.mubr.bf16.mxu0 %v9422
    %9497 = vmatmul.mubr.bf16.gmra.mrb[0].mxu0 %v9421
    %v9498 = vpop.f32.mrb[0].mxu0
    %v9499 = vadd.f32 %v9368, %v9498
    %v9500 = vpop.f32.mrb[0].mxu0
    %v9501 = vpop.f32.mrb[0].mxu0
    %v9502 = vadd.f32 %v9373, %v9501
    %v9503 = vpop.f32.mrb[0].mxu0
    %9504 = vmatprep.mubr.bf16.mxu0 %v9425
    %9505 = vmatmul.mubr.bf16.gmra.mrb[0].mxu0 %v9424
    %v9506 = vpop.f32.mrb[0].mxu0
    %v9507 = vadd.f32 %v9378, %v9506
    %v9508 = vpop.f32.mrb[0].mxu0
    %v9509 = vpop.f32.mrb[0].mxu0
    %v9510 = vpop.f32.mrb[0].mxu0
    %9511 = vdwg.mxu0
    %9512 = vmatprep.subr.bf16.mxu0 0
    %9513 = vmatpush1.bf16.msra.mxu0 %v9334
    %9514 = vmatprep.subr.bf16.mxu0 0
    %9515 = vmatpush1.bf16.msra.mxu0 %v9335
    %9516 = vmatprep.subr.bf16.mxu0 0
    %9517 = vmatpush1.bf16.msra.mxu0 %v9336
    %9518 = vmatprep.subr.bf16.mxu0 0
    %9519 = vmatpush1.bf16.msra.mxu0 %v9337
    %9520 = vmatprep.subr.bf16.mxu0 0
    %9521 = vmatpush1.bf16.msra.mxu0 0
    %9522 = vmatprep.subr.bf16.mxu0 0
    %9523 = vmatpush1.bf16.msra.mxu0 0
    %9524 = vmatprep.subr.bf16.mxu0 0
    %9525 = vmatpush1.bf16.msra.mxu0 0
    %9526 = vmatprep.subr.bf16.mxu0 0
    %9527 = vmatpush1.bf16.msra.mxu0 0
    %9528 = vmatprep.subr.bf16.mxu0 0
    %9529 = vmatpush1.bf16.msra.mxu0 0
    %9530 = vmatprep.subr.bf16.mxu0 0
    %9531 = vmatpush1.bf16.msra.mxu0 0
    %9532 = vmatprep.subr.bf16.mxu0 0
    %9533 = vmatpush1.bf16.msra.mxu0 0
    %9534 = vmatprep.subr.bf16.mxu0 0
    %9535 = vmatpush1.bf16.msra.mxu0 0
    %9536 = vmatprep.subr.bf16.mxu0 0
    %9537 = vmatpush1.bf16.msra.mxu0 0
    %9538 = vmatprep.subr.bf16.mxu0 0
    %9539 = vmatpush1.bf16.msra.mxu0 0
    %9540 = vmatprep.subr.bf16.mxu0 0
    %9541 = vmatpush1.bf16.msra.mxu0 0
    %9542 = vmatprep.subr.bf16.mxu0 0
    %9543 = vmatpush1.bf16.msra.mxu0 0
    %9544 = vmatprep.mubr.bf16.mxu0 0
    %9545 = vmatmul.mubr.bf16.gmra.mrb[0].mxu0 %v9437
    %v9546 = vpop.f32.mrb[0].mxu0
    %v9547 = vadd.f32 %v9483, %v9546
    %v9548 = vpop.f32.mrb[0].mxu0
    %v9549 = vpop.f32.mrb[0].mxu0
    %v9550 = vadd.f32 %v9486, %v9549
    %v9551 = vpop.f32.mrb[0].mxu0
    %9552 = vmatprep.mubr.bf16.mxu0 0
    %9553 = vmatmul.mubr.bf16.gmra.mrb[0].mxu0 %v9440
    %v9554 = vpop.f32.mrb[0].mxu0
    %v9555 = vadd.f32 %v9491, %v9554
    %v9556 = vpop.f32.mrb[0].mxu0
    %v9557 = vpop.f32.mrb[0].mxu0
    %v9558 = vadd.f32 %v9494, %v9557
    %v9559 = vpop.f32.mrb[0].mxu0
    %9560 = vmatprep.mubr.bf16.mxu0 0
    %9561 = vmatmul.mubr.bf16.gmra.mrb[0].mxu0 %v9443
    %v9562 = vpop.f32.mrb[0].mxu0
    %v9563 = vadd.f32 %v9499, %v9562
    %v9564 = vpop.f32.mrb[0].mxu0
    %v9565 = vpop.f32.mrb[0].mxu0
    %v9566 = vadd.f32 %v9502, %v9565
    %v9567 = vpop.f32.mrb[0].mxu0
    %9568 = vmatprep.mubr.bf16.mxu0 0
    %9569 = vmatmul.mubr.bf16.gmra.mrb[0].mxu0 %v9446
    %v9570 = vpop.f32.mrb[0].mxu0
    %v9571 = vadd.f32 %v9507, %v9570
    %v9572 = vpop.f32.mrb[0].mxu0
    %v9573 = vpop.f32.mrb[0].mxu0
    %v9574 = vpop.f32.mrb[0].mxu0
    %9575 = vdwg.mxu0
    %v9576 = vmax.f32 %v9547, 0.0
    %v9577 = vmax.f32 %v9550, 0.0
    %v9578 = vmax.f32 %v9555, 0.0
    %v9579 = vmax.f32 %v9558, 0.0
    %v9580 = vmax.f32 %v9563, 0.0
    %v9581 = vmax.f32 %v9566, 0.0
    %v9582 = vmax.f32 %v9571, 0.0
    %v9583 = vld [vmem:[%s6] sm:$0xf]
    %v9584 = vld [vmem:[%s6 + $0x4] sm:$0x1]
    %v9585 = vpack.c.bf16 %v9577, %v9576
    %v9586 = vpack.c.bf16 %v9579, %v9578
    %v9587 = vpack.c.bf16 %v9581, %v9580
    %v9588 = vpack.c.bf16 %v9582, %v9582
    %v9589 = vld [vmem:[%s7] sm:$0xff]
    %v9590 = vld [vmem:[%s7 + $0x8] sm:$0x3]
    %9592 = vset.pattern.permute.xlu0 0
    %9593 = vperm.xlu0 %9592, %v9589
    %v9594 = vpop.permute.xlu0 %9593
    %9597 = vset.pattern.permute.xlu0 0
    %9598 = vperm.xlu0 %9597, %v9590
    %v9599 = vpop.permute.xlu0 %9598
    %v9603 = vunpack.c.l.b16 %v9583
    %v9604 = vunpack.c.l.b16 %v9584
    %v9605 = vpack.c.b16 %v9604, %v9603
    %vm9606 = vcmask 408576
    %v9608 = vsel %vm9606, %v9605, 0
    %vm9610 = vcmask 1040384
    %v9612 = vsel %vm9610, %v9588, 0
    %9614 = vmatprep.subr.bf16.mxu0 0
    %9615 = vmatpush1.bf16.msra.mxu0 %v9585
    %9616 = vmatprep.subr.bf16.mxu0 0
    %9617 = vmatpush1.bf16.msra.mxu0 %v9586
    %9618 = vmatprep.subr.bf16.mxu0 0
    %9619 = vmatpush1.bf16.msra.mxu0 %v9587
    %9620 = vmatprep.subr.bf16.mxu0 0
    %9621 = vmatpush1.bf16.msra.mxu0 %v9612
    %9622 = vmatprep.subr.bf16.mxu0 0
    %9623 = vmatpush1.bf16.msra.mxu0 0
    %9624 = vmatprep.subr.bf16.mxu0 0
    %9625 = vmatpush1.bf16.msra.mxu0 0
    %9626 = vmatprep.subr.bf16.mxu0 0
    %9627 = vmatpush1.bf16.msra.mxu0 0
    %9628 = vmatprep.subr.bf16.mxu0 0
    %9629 = vmatpush1.bf16.msra.mxu0 0
    %9630 = vmatprep.subr.bf16.mxu0 0
    %9631 = vmatpush1.bf16.msra.mxu0 0
    %9632 = vmatprep.subr.bf16.mxu0 0
    %9633 = vmatpush1.bf16.msra.mxu0 0
    %9634 = vmatprep.subr.bf16.mxu0 0
    %9635 = vmatpush1.bf16.msra.mxu0 0
    %9636 = vmatprep.subr.bf16.mxu0 0
    %9637 = vmatpush1.bf16.msra.mxu0 0
    %9638 = vmatprep.subr.bf16.mxu0 0
    %9639 = vmatpush1.bf16.msra.mxu0 0
    %9640 = vmatprep.subr.bf16.mxu0 0
    %9641 = vmatpush1.bf16.msra.mxu0 0
    %9642 = vmatprep.subr.bf16.mxu0 0
    %9643 = vmatpush1.bf16.msra.mxu0 0
    %9644 = vmatprep.subr.bf16.mxu0 0
    %9645 = vmatpush1.bf16.msra.mxu0 0
    %9646 = vmatprep.mubr.bf16.mxu0 0
    %9647 = vmatmul.mubr.bf16.gmra.mrb[0].mxu0 %v9608
    %v9648 = vpop.f32.mrb[0].mxu0
    %v9649 = vadd.f32 %v9594, %v9648
    %v9650 = vpop.f32.mrb[0].mxu0
    %v9651 = vpop.f32.mrb[0].mxu0
    %v9652 = vadd.f32 %v9599, %v9651
    %v9653 = vpop.f32.mrb[0].mxu0
    %9654 = vdwg.mxu0
    %vm9655 = vcmask 1041408
    %v9656 = vsel %vm9655, %v9652, -inf
    %v9657 = vmax.f32 %v9649, %v9656
    %v9658 = vrot.slane %v9657, 4
    %v9659 = vmax.f32 %v9657, %v9658
    %v9660 = vrot.slane %v9659, 2
    %v9661 = vmax.f32 %v9659, %v9660
    %v9662 = vrot.slane %v9661, 1
    %v9663 = vmax.f32 %v9661, %v9662
    %v9664 = vsub.f32 %v9649, %v9663
    %v9665 = vsub.f32 %v9652, %v9663
    %v9666 = vmul.f32 %v9664, 1.442695
    %v9667 = vpow.pop %v9666
    %v9668 = vmul.f32 %v9665, 1.442695
    %v9669 = vpow.pop %v9668
    %v9670 = vsel %vm9655, %v9669, 0.0
    %v9671 = vadd.f32 %v9667, %v9670
    %v9672 = vrot.slane %v9671, 4
    %v9673 = vadd.f32 %v9671, %v9672
    %v9674 = vrot.slane %v9673, 2
    %v9675 = vadd.f32 %v9673, %v9674
    %v9676 = vrot.slane %v9675, 1
    %v9677 = vadd.f32 %v9675, %v9676
    %v9678 = vlog2.pop %v9677
    %v9679 = vmul.f32 %v9678, 0.6931472
    %v9680 = vsub.f32 %v9664, %v9679
    %v9681 = vsub.f32 %v9665, %v9679
    %9682 = vst [vmem:[%s8] sm:$0xff] %v9680
    %9683 = vst [vmem:[%s8 + $0x8] sm:$0x3] %v9681
    // Predicated region
    $region45: #{net_forward.1} parent=1 // pred_check
      _
    $region46: #{net_forward.1} parent=1 // pred_check_branch
      %9685 = sbr.rel (0) target = $region48
    $region47: #{net_forward.1} parent=1 // pred_region
      _
    $region48: #{net_forward.1} parent=1 // pred_fallthru
      _
    // Predicated region
    $region49: #{net_forward.1} parent=1 // pred_check
      _
    $region50: #{net_forward.1} parent=1 // pred_check_branch
      %9687 = sbr.rel (0) target = $region52
    $region51: #{net_forward.1} parent=1 // pred_region
      _
    $region52: #{net_forward.1} parent=1 // pred_fallthru
      _
    %9688 = vsyncpa [#allocation4], 1

</llo_original>
